<compile_context>
chip_gen: v5e
topology: v5e:2x2
jax: 0.10.0
libtpu: 0.0.40
codegen_flags: <defaults>
</compile_context>

<pallas_src>
import functools

import jax
import jax.numpy as jnp
from jax.experimental import pallas as pl
from jax.experimental.pallas import tpu as pltpu


def _round_up(x, m):
    return (x + m - 1) // m * m


def _pick_bt(batch, m_valid):
    """Samples per grid step so the matmul M dimension is >= ~256 (must divide B)."""
    want = max(1, -(-256 // max(1, m_valid)))
    bt = min(batch, want)
    while batch % bt:
        bt -= 1
    return bt


# ----------------------------------------------------------------------------
# Fused BasicBlock kernel (one grid step == Bt batch samples)
# ----------------------------------------------------------------------------
def _basic_block_kernel(*refs, s, H1, W1, Wp2, Hn_p, Bt, Cp, Pp, has_sc):
    if has_sc:
        (x_ref, mask_ref, w1_ref, w2_ref, shift_ref, wsc_ref,
         o_ref, col_ref, pad_ref) = refs
    else:
        (x_ref, mask_ref, w1_ref, w2_ref, shift_ref,
         o_ref, col_ref, pad_ref) = refs
        wsc_ref = None

    M1e = H1 * Wp2                 # per-sample rows of the row-padded output layout
    plane_sz = Hn_p * Wp2          # rows per stride-phase plane of the input
    pad_sz = (H1 + 3) * Wp2        # rows per sample in the conv2 padded buffer

    # ---- conv1: K-packed im2col (9 contiguous flat-offset slices) + ONE MXU dot ---
    for b in range(Bt):
        for kh in range(3):
            for kw in range(3):
                t = kh * 3 + kw
                p = (kh % s) * s + (kw % s)                      # stride-phase plane
                off = p * plane_sz + (kh // s) * Wp2 + (kw // s)  # flat tap offset
                col_ref[b * M1e:(b + 1) * M1e, t * Cp:(t + 1) * Cp] = (
                    x_ref[b, pl.ds(off, M1e), :])
    acc1 = jnp.dot(col_ref[:, :9 * Cp], w1_ref[...],
                   preferred_element_type=jnp.float32)
    # BN1 scale already folded into w1; shift + ReLU + zero the wrap columns in one
    # fused VPU pass (mask kills the columns that would leak into conv2's borders).
    h = (jnp.maximum(acc1 + shift_ref[0:1, :], 0.0) * mask_ref[...]
         ).astype(pad_ref.dtype)

    # ---- conv2 input: zero-padded bf16 buffer --------------------------------------
    # Every cell of the per-sample pad region is rewritten each step: the interior
    # (plus left/right border columns, via the masked wrap columns of h) by one
    # contiguous store, the top/bottom borders by two tiny contiguous zero stores.
    for b in range(Bt):
        base = b * pad_sz
        pad_ref[pl.ds(base, Wp2 + 1), :] = jnp.zeros((Wp2 + 1, Pp), pad_ref.dtype)
        pad_ref[pl.ds(base + (H1 + 1) * Wp2 + 1, 2 * Wp2 - 1), :] = (
            jnp.zeros((2 * Wp2 - 1, Pp), pad_ref.dtype))
        pad_ref[pl.ds(base + Wp2 + 1, M1e), :] = h[b * M1e:(b + 1) * M1e, :]

    # ---- conv2 (stride 1): K-packed im2col + ONE MXU dot ---------------------------
    for b in range(Bt):
        for kh in range(3):
            for kw in range(3):
                t = kh * 3 + kw
                col_ref[b * M1e:(b + 1) * M1e, t * Pp:(t + 1) * Pp] = (
                    pad_ref[pl.ds(b * pad_sz + kh * Wp2 + kw, M1e), :])
    out2 = jnp.dot(col_ref[:, :9 * Pp], w2_ref[...],
                   preferred_element_type=jnp.float32) + shift_ref[1:2, :]

    # ---- shortcut + residual add + final ReLU ---------------------------------------
    sp, so = 1 % s, 1 // s
    sc_off = (sp * s + sp) * plane_sz + so * Wp2 + so
    for b in range(Bt):
        x_sc = x_ref[b, pl.ds(sc_off, M1e), :]
        if has_sc:                          # 1x1 conv (stride s) with folded BN scale
            sc = jnp.dot(x_sc, wsc_ref[...],
                         preferred_element_type=jnp.float32) + shift_ref[2:3, :]
        else:                               # identity shortcut (Cp == Pp)
            sc = x_sc.astype(jnp.float32)
        o_ref[b] = jnp.maximum(out2[b * M1e:(b + 1) * M1e, :] + sc, 0.0
                               ).astype(o_ref.dtype)


# ----------------------------------------------------------------------------
# Forward pass wrapper
# ----------------------------------------------------------------------------
def basic_block_forward(x_nchw, params, stride=1):
    B, Cin, H, W = x_nchw.shape
    planes = params["conv1_w"].shape[0]
    s = int(stride)
    H1 = (H - 1) // s + 1                  # conv1 (3x3, pad 1, stride s) output size
    W1 = (W - 1) // s + 1
    Cp = _round_up(Cin, 128)               # lane-dense / MXU-friendly channel pads
    Pp = _round_up(planes, 128)
    Pmax = max(Cp, Pp)
    has_sc = (s != 1) or (Cin != planes)

    Wp2 = W1 + 2                           # row width of every in-kernel 2-D layout
    Hn = H1 + (3 - 1) // s                 # real rows per stride-phase plane
    Wn = W1 + (3 - 1) // s
    Hn_p = Hn + 1                          # +1 zero row: OOB guard for flat taps
    M1e = H1 * Wp2
    plane_sz = Hn_p * Wp2
    samp_rows = s * s * plane_sz
    pad_rows = (H1 + 3) * Wp2

    Bt = _pick_bt(B, H1 * W1)
    grid = (B // Bt,)

    # ---- input prep (layout glue, fused by XLA): NCHW->NHWC, bf16, channel pad,
    #      spatial pad 1, stride-phase decomposition, flatten rows to (rows, Cp). ---
    x = jnp.transpose(x_nchw.astype(jnp.bfloat16), (0, 2, 3, 1))
    x = jnp.pad(x, ((0, 0), (0, 0), (0, 0), (0, Cp - Cin)))
    xpad = jnp.pad(x, ((0, 0), (1, 1), (1, 1), (0, 0)))
    phase_planes = []
    for ph in range(s):
        for pw in range(s):
            p = xpad[:, ph::s, pw::s, :][:, :Hn, :Wn, :]
            p = jnp.pad(p, ((0, 0), (0, Hn_p - p.shape[1]),
                            (0, Wp2 - p.shape[2]), (0, 0)))
            phase_planes.append(p)
    x_flat = jnp.stack(phase_planes, axis=1).reshape(B, samp_rows, Cp)

    # Mask that zeroes the (Wp2 - W1) wrap columns of the row-padded conv1 output.
    mask = jnp.tile(jnp.arange(Wp2) < W1, (Bt * H1,)).astype(jnp.float32)[:, None]

    # ---- weights: BN scale folded in, tap-(K)-packed, bf16; shifts stay f32 --------
    def bn_fold(prefix):
        scale = params[f"{prefix}_gamma"] / jnp.sqrt(params[f"{prefix}_var"] + 1e-5)
        shift = params[f"{prefix}_beta"] - params[f"{prefix}_mean"] * scale
        return scale, jnp.pad(shift, (0, Pp - shift.shape[0])).astype(jnp.float32)

    def pack3x3(w, scale, cin_p):
        cout, cin = w.shape[0], w.shape[1]
        w = w * scale[:, None, None, None]
        m = jnp.transpose(w, (2, 3, 1, 0)).reshape(9, cin, cout)   # tap-major
        m = jnp.pad(m, ((0, 0), (0, cin_p - cin), (0, Pp - cout)))
        return m.reshape(9 * cin_p, Pp).astype(jnp.bfloat16)

    sc1, shift1 = bn_fold("bn1")
    sc2, shift2 = bn_fold("bn2")
    w1 = pack3x3(params["conv1_w"], sc1, Cp)                       # (9*Cp, Pp)
    w2 = pack3x3(params["conv2_w"], sc2, Pp)                       # (9*Pp, Pp)
    if has_sc:
        scs, shiftsc = bn_fold("sc_bn")
        wsc = (params["sc_w"][:, :, 0, 0] * scs[:, None]).T        # (Cin, Cout)
        wsc = jnp.pad(wsc, ((0, Cp - Cin), (0, Pp - planes))).astype(jnp.bfloat16)
    else:
        shiftsc = jnp.zeros((Pp,), jnp.float32)
    shifts = jnp.stack([shift1, shift2, shiftsc], axis=0)          # (3, Pp) f32

    inputs = [x_flat, mask, w1, w2, shifts]
    # TODO(synk): single-buffer these constant operands for large-channel stages
    #             (pipeline_mode=pl.Buffered(1) or a one-shot DMA into scratch).
    in_specs = [
        pl.BlockSpec((Bt, samp_rows, Cp), lambda g: (g, 0, 0)),
        pl.BlockSpec((Bt * M1e, 1), lambda g: (0, 0)),
        pl.BlockSpec((9 * Cp, Pp), lambda g: (0, 0)),
        pl.BlockSpec((9 * Pp, Pp), lambda g: (0, 0)),
        pl.BlockSpec((3, Pp), lambda g: (0, 0)),
    ]
    if has_sc:
        inputs.append(wsc)
        in_specs.append(pl.BlockSpec((Cp, Pp), lambda g: (0, 0)))

    # Per-generation VMEM budgeting: raise the scoped limit only when the tile
    # actually needs it (v7x: 64 MiB physical / 32 MiB default; v5e default 16 MiB).
    est_vmem = (2 * Bt * samp_rows * Cp * 2 + 2 * Bt * M1e * Pp * 2
                + Bt * M1e * 9 * Pmax * 2 + Bt * pad_rows * Pp * 2
                + 2 * (9 * Cp + 9 * Pp + Cp + 8) * Pp * 2
                + 2 * Bt * M1e * Pp * 4)
    cparams = dict(dimension_semantics=("parallel",))
    if est_vmem > 12 * 1024 * 1024:
        cparams["vmem_limit_bytes"] = int(min(1.5 * est_vmem, 56 * 1024 * 1024))

    kernel = functools.partial(_basic_block_kernel, s=s, H1=H1, W1=W1, Wp2=Wp2,
                               Hn_p=Hn_p, Bt=Bt, Cp=Cp, Pp=Pp, has_sc=has_sc)
    out = pl.pallas_call(
        kernel,
        out_shape=jax.ShapeDtypeStruct((B, M1e, Pp), jnp.bfloat16),
        grid=grid,
        in_specs=in_specs,
        out_specs=pl.BlockSpec((Bt, M1e, Pp), lambda g: (g, 0, 0)),
        scratch_shapes=[pltpu.VMEM((Bt * M1e, 9 * Pmax), jnp.bfloat16),   # im2col
                        pltpu.VMEM((Bt * pad_rows, Pp), jnp.bfloat16)],   # conv2 pad
        compiler_params=pltpu.CompilerParams(**cparams),
    )(*inputs)

    # Drop the wrap columns + lane padding, restore f32 NCHW to match the PyTorch API.
    out = out.reshape(B, H1, Wp2, Pp)[:, :, :W1, :planes].astype(jnp.float32)
    return jnp.transpose(out, (0, 3, 1, 2))


# ----------------------------------------------------------------------------
# Pure-JAX reference (f32) for correctness checking
# ----------------------------------------------------------------------------
def basic_block_reference(x, params, stride=1):
    hp = jax.lax.Precision.HIGHEST

    def conv(inp, w, s, pad):
        return jax.lax.conv_general_dilated(
            inp, w, window_strides=(s, s), padding=[(pad, pad), (pad, pad)],
            dimension_numbers=("NCHW", "OIHW", "NCHW"), precision=hp)

    def bn(inp, g, b, m, v, eps=1e-5):
        g, b, m, v = (t[None, :, None, None] for t in (g, b, m, v))
        return g * (inp - m) / jnp.sqrt(v + eps) + b

    out = conv(x, params["conv1_w"], stride, 1)
    out = jax.nn.relu(bn(out, params["bn1_gamma"], params["bn1_beta"],
                         params["bn1_mean"], params["bn1_var"]))
    out = conv(out, params["conv2_w"], 1, 1)
    out = bn(out, params["bn2_gamma"], params["bn2_beta"],
             params["bn2_mean"], params["bn2_var"])
    if "sc_w" in params:
        sc = conv(x, params["sc_w"], stride, 0)
        sc = bn(sc, params["sc_bn_gamma"], params["sc_bn_beta"],
                params["sc_bn_mean"], params["sc_bn_var"])
    else:
        sc = x
    return jax.nn.relu(out + sc)


# ----------------------------------------------------------------------------
# Deterministic parameters / smoke test
# ----------------------------------------------------------------------------
def _make_params(key, in_planes, planes, stride):
    ks = iter(jax.random.split(key, 16))

    def bn_params(prefix, n):
        return {
            f"{prefix}_gamma": 1.0 + 0.1 * jax.random.normal(next(ks), (n,), jnp.float32),
            f"{prefix}_beta": 0.1 * jax.random.normal(next(ks), (n,), jnp.float32),
            f"{prefix}_mean": 0.1 * jax.random.normal(next(ks), (n,), jnp.float32),
            f"{prefix}_var": 0.5 + jnp.abs(jax.random.normal(next(ks), (n,), jnp.float32)),
        }

    params = {
        "conv1_w": 0.1 * jax.random.normal(next(ks), (planes, in_planes, 3, 3), jnp.float32),
        "conv2_w": 0.1 * jax.random.normal(next(ks), (planes, planes, 3, 3), jnp.float32),
    }
    params.update(bn_params("bn1", planes))
    params.update(bn_params("bn2", planes))
    if stride != 1 or in_planes != planes:
        params["sc_w"] = 0.1 * jax.random.normal(next(ks), (planes, in_planes, 1, 1), jnp.float32)
        params.update(bn_params("sc_bn", planes))
    return params


def _check(out, ref, tag):
    assert jnp.all(jnp.isfinite(out)), tag
    err = float(jnp.max(jnp.abs(out - ref)))
    tol = 5e-2 * (1.0 + float(jnp.max(jnp.abs(ref))))      # loose: bf16 path
    assert err < tol, (tag, err, tol)


if __name__ == "__main__":
    key = jax.random.PRNGKey(0)
    k_in, k_p1, k_p2 = jax.random.split(key, 3)

    # Config A: down-sampling block (stride=2, channel expansion -> conv shortcut)
    B, Cin, H, W, planes, stride = 2, 4, 16, 16, 8, 2
    x = jax.random.normal(k_in, (B, Cin, H, W), jnp.float32)
    params = _make_params(k_p1, Cin, planes, stride)
    fwd = jax.jit(functools.partial(basic_block_forward, stride=stride))
    out = jax.block_until_ready(fwd(x, params))
    assert out.shape == (B, planes, H // stride, W // stride), out.shape
    _check(out, basic_block_reference(x, params, stride), "stride2_conv_shortcut")

    # Config B: identity-shortcut block (stride=1, in_planes == planes)
    B2, C2 = 2, 8
    x2 = jax.random.normal(k_in, (B2, C2, H, W), jnp.float32)
    params2 = _make_params(k_p2, C2, C2, 1)
    fwd2 = jax.jit(functools.partial(basic_block_forward, stride=1))
    out2 = jax.block_until_ready(fwd2(x2, params2))
    assert out2.shape == (B2, C2, H, W), out2.shape
    _check(out2, basic_block_reference(x2, params2, 1), "identity_shortcut")

    print("KERNEL_OK")
</pallas_src>

<mosaic_0001>
module attributes {stable_mosaic.version = 11 : i64} {
  func.func @_basic_block_kernel(%arg0: i32, %arg1: memref<2x400x128xbf16, #tpu.memory_space<vmem>>, %arg2: memref<160x1xf32, #tpu.memory_space<vmem>>, %arg3: memref<1152x128xbf16, #tpu.memory_space<vmem>>, %arg4: memref<1152x128xbf16, #tpu.memory_space<vmem>>, %arg5: memref<3x128xf32, #tpu.memory_space<vmem>>, %arg6: memref<128x128xbf16, #tpu.memory_space<vmem>>, %arg7: memref<2x80x128xbf16, #tpu.memory_space<vmem>>, %arg8: memref<160x1152xbf16, #tpu.memory_space<vmem>>, %arg9: memref<220x128xbf16, #tpu.memory_space<vmem>>) attributes {dimension_semantics = [#tpu.dimension_semantics<parallel>], iteration_bounds = array<i64: 1>, scalar_prefetch = 0 : i64, scratch_operands = 2 : i64, tpu.core_type = #tpu.core_type<tc>, window_params = [{transform_indices = @transform_0, window_bounds = array<i64: 2, 400, 128>}, {pipeline_mode = #tpu.pipeline_mode<synchronous>, transform_indices = @transform_1, window_bounds = array<i64: 160, 1>}, {pipeline_mode = #tpu.pipeline_mode<synchronous>, transform_indices = @transform_2, window_bounds = array<i64: 1152, 128>}, {pipeline_mode = #tpu.pipeline_mode<synchronous>, transform_indices = @transform_3, window_bounds = array<i64: 1152, 128>}, {pipeline_mode = #tpu.pipeline_mode<synchronous>, transform_indices = @transform_4, window_bounds = array<i64: 3, 128>}, {pipeline_mode = #tpu.pipeline_mode<synchronous>, transform_indices = @transform_5, window_bounds = array<i64: 128, 128>}, {transform_indices = @transform_6, window_bounds = array<i64: 2, 80, 128>}]} {
    %c0 = arith.constant 0 : index
    %c0_0 = arith.constant 0 : index
    %c0_1 = arith.constant 0 : index
    %0 = vector.load %arg1[%c0, %c0_0, %c0_1] : memref<2x400x128xbf16, #tpu.memory_space<vmem>>, vector<1x80x128xbf16>
    %1 = vector.shape_cast %0 : vector<1x80x128xbf16> to vector<80x128xbf16>
    %c0_2 = arith.constant 0 : index
    %c0_3 = arith.constant 0 : index
    %2 = vector.load %arg8[%c0_2, %c0_3] : memref<160x1152xbf16, #tpu.memory_space<vmem>>, vector<80x128xbf16>
    tpu.vector_store %arg8[%c0_2, %c0_3], %1 {strides = array<i32>} : memref<160x1152xbf16, #tpu.memory_space<vmem>>, vector<80x128xbf16>,
    %c0_4 = arith.constant 0 : index
    %c100 = arith.constant 100 : index
    %c0_5 = arith.constant 0 : index
    %3 = vector.load %arg1[%c0_4, %c100, %c0_5] : memref<2x400x128xbf16, #tpu.memory_space<vmem>>, vector<1x80x128xbf16>
    %4 = vector.shape_cast %3 : vector<1x80x128xbf16> to vector<80x128xbf16>
    %c0_6 = arith.constant 0 : index
    %c128 = arith.constant 128 : index
    %5 = vector.load %arg8[%c0_6, %c128] : memref<160x1152xbf16, #tpu.memory_space<vmem>>, vector<80x128xbf16>
    tpu.vector_store %arg8[%c0_6, %c128], %4 {strides = array<i32>} : memref<160x1152xbf16, #tpu.memory_space<vmem>>, vector<80x128xbf16>,
    %c0_7 = arith.constant 0 : index
    %c1 = arith.constant 1 : index
    %c0_8 = arith.constant 0 : index
    %6 = vector.load %arg1[%c0_7, %c1, %c0_8] : memref<2x400x128xbf16, #tpu.memory_space<vmem>>, vector<1x80x128xbf16>
    %7 = vector.shape_cast %6 : vector<1x80x128xbf16> to vector<80x128xbf16>
    %c0_9 = arith.constant 0 : index
    %c256 = arith.constant 256 : index
    %8 = vector.load %arg8[%c0_9, %c256] : memref<160x1152xbf16, #tpu.memory_space<vmem>>, vector<80x128xbf16>
    tpu.vector_store %arg8[%c0_9, %c256], %7 {strides = array<i32>} : memref<160x1152xbf16, #tpu.memory_space<vmem>>, vector<80x128xbf16>,
    %c0_10 = arith.constant 0 : index
    %c200 = arith.constant 200 : index
    %c0_11 = arith.constant 0 : index
    %9 = vector.load %arg1[%c0_10, %c200, %c0_11] : memref<2x400x128xbf16, #tpu.memory_space<vmem>>, vector<1x80x128xbf16>
    %10 = vector.shape_cast %9 : vector<1x80x128xbf16> to vector<80x128xbf16>
    %c0_12 = arith.constant 0 : index
    %c384 = arith.constant 384 : index
    %11 = vector.load %arg8[%c0_12, %c384] : memref<160x1152xbf16, #tpu.memory_space<vmem>>, vector<80x128xbf16>
    tpu.vector_store %arg8[%c0_12, %c384], %10 {strides = array<i32>} : memref<160x1152xbf16, #tpu.memory_space<vmem>>, vector<80x128xbf16>,
    %c0_13 = arith.constant 0 : index
    %c300 = arith.constant 300 : index
    %c0_14 = arith.constant 0 : index
    %12 = vector.load %arg1[%c0_13, %c300, %c0_14] : memref<2x400x128xbf16, #tpu.memory_space<vmem>>, vector<1x80x128xbf16>
    %13 = vector.shape_cast %12 : vector<1x80x128xbf16> to vector<80x128xbf16>
    %c0_15 = arith.constant 0 : index
    %c512 = arith.constant 512 : index
    %14 = vector.load %arg8[%c0_15, %c512] : memref<160x1152xbf16, #tpu.memory_space<vmem>>, vector<80x128xbf16>
    tpu.vector_store %arg8[%c0_15, %c512], %13 {strides = array<i32>} : memref<160x1152xbf16, #tpu.memory_space<vmem>>, vector<80x128xbf16>,
    %c0_16 = arith.constant 0 : index
    %c201 = arith.constant 201 : index
    %c0_17 = arith.constant 0 : index
    %15 = vector.load %arg1[%c0_16, %c201, %c0_17] : memref<2x400x128xbf16, #tpu.memory_space<vmem>>, vector<1x80x128xbf16>
    %16 = vector.shape_cast %15 : vector<1x80x128xbf16> to vector<80x128xbf16>
    %c0_18 = arith.constant 0 : index
    %c640 = arith.constant 640 : index
    %17 = vector.load %arg8[%c0_18, %c640] : memref<160x1152xbf16, #tpu.memory_space<vmem>>, vector<80x128xbf16>
    tpu.vector_store %arg8[%c0_18, %c640], %16 {strides = array<i32>} : memref<160x1152xbf16, #tpu.memory_space<vmem>>, vector<80x128xbf16>,
    %c0_19 = arith.constant 0 : index
    %c10 = arith.constant 10 : index
    %c0_20 = arith.constant 0 : index
    %18 = vector.load %arg1[%c0_19, %c10, %c0_20] : memref<2x400x128xbf16, #tpu.memory_space<vmem>>, vector<1x80x128xbf16>
    %19 = vector.shape_cast %18 : vector<1x80x128xbf16> to vector<80x128xbf16>
    %c0_21 = arith.constant 0 : index
    %c768 = arith.constant 768 : index
    %20 = vector.load %arg8[%c0_21, %c768] : memref<160x1152xbf16, #tpu.memory_space<vmem>>, vector<80x128xbf16>
    tpu.vector_store %arg8[%c0_21, %c768], %19 {strides = array<i32>} : memref<160x1152xbf16, #tpu.memory_space<vmem>>, vector<80x128xbf16>,
    %c0_22 = arith.constant 0 : index
    %c110 = arith.constant 110 : index
    %c0_23 = arith.constant 0 : index
    %21 = vector.load %arg1[%c0_22, %c110, %c0_23] : memref<2x400x128xbf16, #tpu.memory_space<vmem>>, vector<1x80x128xbf16>
    %22 = vector.shape_cast %21 : vector<1x80x128xbf16> to vector<80x128xbf16>
    %c0_24 = arith.constant 0 : index
    %c896 = arith.constant 896 : index
    %23 = vector.load %arg8[%c0_24, %c896] : memref<160x1152xbf16, #tpu.memory_space<vmem>>, vector<80x128xbf16>
    tpu.vector_store %arg8[%c0_24, %c896], %22 {strides = array<i32>} : memref<160x1152xbf16, #tpu.memory_space<vmem>>, vector<80x128xbf16>,
    %c0_25 = arith.constant 0 : index
    %c11 = arith.constant 11 : index
    %c0_26 = arith.constant 0 : index
    %24 = vector.load %arg1[%c0_25, %c11, %c0_26] : memref<2x400x128xbf16, #tpu.memory_space<vmem>>, vector<1x80x128xbf16>
    %25 = vector.shape_cast %24 : vector<1x80x128xbf16> to vector<80x128xbf16>
    %c0_27 = arith.constant 0 : index
    %c1024 = arith.constant 1024 : index
    %26 = vector.load %arg8[%c0_27, %c1024] : memref<160x1152xbf16, #tpu.memory_space<vmem>>, vector<80x128xbf16>
    tpu.vector_store %arg8[%c0_27, %c1024], %25 {strides = array<i32>} : memref<160x1152xbf16, #tpu.memory_space<vmem>>, vector<80x128xbf16>,
    %c1_28 = arith.constant 1 : index
    %c0_29 = arith.constant 0 : index
    %c0_30 = arith.constant 0 : index
    %27 = vector.load %arg1[%c1_28, %c0_29, %c0_30] : memref<2x400x128xbf16, #tpu.memory_space<vmem>>, vector<1x80x128xbf16>
    %28 = vector.shape_cast %27 : vector<1x80x128xbf16> to vector<80x128xbf16>
    %c80 = arith.constant 80 : index
    %c0_31 = arith.constant 0 : index
    %29 = vector.load %arg8[%c80, %c0_31] : memref<160x1152xbf16, #tpu.memory_space<vmem>>, vector<80x128xbf16>
    tpu.vector_store %arg8[%c80, %c0_31], %28 {strides = array<i32>} : memref<160x1152xbf16, #tpu.memory_space<vmem>>, vector<80x128xbf16>,
    %c1_32 = arith.constant 1 : index
    %c100_33 = arith.constant 100 : index
    %c0_34 = arith.constant 0 : index
    %30 = vector.load %arg1[%c1_32, %c100_33, %c0_34] : memref<2x400x128xbf16, #tpu.memory_space<vmem>>, vector<1x80x128xbf16>
    %31 = vector.shape_cast %30 : vector<1x80x128xbf16> to vector<80x128xbf16>
    %c80_35 = arith.constant 80 : index
    %c128_36 = arith.constant 128 : index
    %32 = vector.load %arg8[%c80_35, %c128_36] : memref<160x1152xbf16, #tpu.memory_space<vmem>>, vector<80x128xbf16>
    tpu.vector_store %arg8[%c80_35, %c128_36], %31 {strides = array<i32>} : memref<160x1152xbf16, #tpu.memory_space<vmem>>, vector<80x128xbf16>,
    %c1_37 = arith.constant 1 : index
    %c1_38 = arith.constant 1 : index
    %c0_39 = arith.constant 0 : index
    %33 = vector.load %arg1[%c1_37, %c1_38, %c0_39] : memref<2x400x128xbf16, #tpu.memory_space<vmem>>, vector<1x80x128xbf16>
    %34 = vector.shape_cast %33 : vector<1x80x128xbf16> to vector<80x128xbf16>
    %c80_40 = arith.constant 80 : index
    %c256_41 = arith.constant 256 : index
    %35 = vector.load %arg8[%c80_40, %c256_41] : memref<160x1152xbf16, #tpu.memory_space<vmem>>, vector<80x128xbf16>
    tpu.vector_store %arg8[%c80_40, %c256_41], %34 {strides = array<i32>} : memref<160x1152xbf16, #tpu.memory_space<vmem>>, vector<80x128xbf16>,
    %c1_42 = arith.constant 1 : index
    %c200_43 = arith.constant 200 : index
    %c0_44 = arith.constant 0 : index
    %36 = vector.load %arg1[%c1_42, %c200_43, %c0_44] : memref<2x400x128xbf16, #tpu.memory_space<vmem>>, vector<1x80x128xbf16>
    %37 = vector.shape_cast %36 : vector<1x80x128xbf16> to vector<80x128xbf16>
    %c80_45 = arith.constant 80 : index
    %c384_46 = arith.constant 384 : index
    %38 = vector.load %arg8[%c80_45, %c384_46] : memref<160x1152xbf16, #tpu.memory_space<vmem>>, vector<80x128xbf16>
    tpu.vector_store %arg8[%c80_45, %c384_46], %37 {strides = array<i32>} : memref<160x1152xbf16, #tpu.memory_space<vmem>>, vector<80x128xbf16>,
    %c1_47 = arith.constant 1 : index
    %c300_48 = arith.constant 300 : index
    %c0_49 = arith.constant 0 : index
    %39 = vector.load %arg1[%c1_47, %c300_48, %c0_49] : memref<2x400x128xbf16, #tpu.memory_space<vmem>>, vector<1x80x128xbf16>
    %40 = vector.shape_cast %39 : vector<1x80x128xbf16> to vector<80x128xbf16>
    %c80_50 = arith.constant 80 : index
    %c512_51 = arith.constant 512 : index
    %41 = vector.load %arg8[%c80_50, %c512_51] : memref<160x1152xbf16, #tpu.memory_space<vmem>>, vector<80x128xbf16>
    tpu.vector_store %arg8[%c80_50, %c512_51], %40 {strides = array<i32>} : memref<160x1152xbf16, #tpu.memory_space<vmem>>, vector<80x128xbf16>,
    %c1_52 = arith.constant 1 : index
    %c201_53 = arith.constant 201 : index
    %c0_54 = arith.constant 0 : index
    %42 = vector.load %arg1[%c1_52, %c201_53, %c0_54] : memref<2x400x128xbf16, #tpu.memory_space<vmem>>, vector<1x80x128xbf16>
    %43 = vector.shape_cast %42 : vector<1x80x128xbf16> to vector<80x128xbf16>
    %c80_55 = arith.constant 80 : index
    %c640_56 = arith.constant 640 : index
    %44 = vector.load %arg8[%c80_55, %c640_56] : memref<160x1152xbf16, #tpu.memory_space<vmem>>, vector<80x128xbf16>
    tpu.vector_store %arg8[%c80_55, %c640_56], %43 {strides = array<i32>} : memref<160x1152xbf16, #tpu.memory_space<vmem>>, vector<80x128xbf16>,
    %c1_57 = arith.constant 1 : index
    %c10_58 = arith.constant 10 : index
    %c0_59 = arith.constant 0 : index
    %45 = vector.load %arg1[%c1_57, %c10_58, %c0_59] : memref<2x400x128xbf16, #tpu.memory_space<vmem>>, vector<1x80x128xbf16>
    %46 = vector.shape_cast %45 : vector<1x80x128xbf16> to vector<80x128xbf16>
    %c80_60 = arith.constant 80 : index
    %c768_61 = arith.constant 768 : index
    %47 = vector.load %arg8[%c80_60, %c768_61] : memref<160x1152xbf16, #tpu.memory_space<vmem>>, vector<80x128xbf16>
    tpu.vector_store %arg8[%c80_60, %c768_61], %46 {strides = array<i32>} : memref<160x1152xbf16, #tpu.memory_space<vmem>>, vector<80x128xbf16>,
    %c1_62 = arith.constant 1 : index
    %c110_63 = arith.constant 110 : index
    %c0_64 = arith.constant 0 : index
    %48 = vector.load %arg1[%c1_62, %c110_63, %c0_64] : memref<2x400x128xbf16, #tpu.memory_space<vmem>>, vector<1x80x128xbf16>
    %49 = vector.shape_cast %48 : vector<1x80x128xbf16> to vector<80x128xbf16>
    %c80_65 = arith.constant 80 : index
    %c896_66 = arith.constant 896 : index
    %50 = vector.load %arg8[%c80_65, %c896_66] : memref<160x1152xbf16, #tpu.memory_space<vmem>>, vector<80x128xbf16>
    tpu.vector_store %arg8[%c80_65, %c896_66], %49 {strides = array<i32>} : memref<160x1152xbf16, #tpu.memory_space<vmem>>, vector<80x128xbf16>,
    %c1_67 = arith.constant 1 : index
    %c11_68 = arith.constant 11 : index
    %c0_69 = arith.constant 0 : index
    %51 = vector.load %arg1[%c1_67, %c11_68, %c0_69] : memref<2x400x128xbf16, #tpu.memory_space<vmem>>, vector<1x80x128xbf16>
    %52 = vector.shape_cast %51 : vector<1x80x128xbf16> to vector<80x128xbf16>
    %c80_70 = arith.constant 80 : index
    %c1024_71 = arith.constant 1024 : index
    %53 = vector.load %arg8[%c80_70, %c1024_71] : memref<160x1152xbf16, #tpu.memory_space<vmem>>, vector<80x128xbf16>
    tpu.vector_store %arg8[%c80_70, %c1024_71], %52 {strides = array<i32>} : memref<160x1152xbf16, #tpu.memory_space<vmem>>, vector<80x128xbf16>,
    %c0_72 = arith.constant 0 : index
    %c0_73 = arith.constant 0 : index
    %54 = vector.load %arg8[%c0_72, %c0_73] : memref<160x1152xbf16, #tpu.memory_space<vmem>>, vector<160x1152xbf16>
    %c0_74 = arith.constant 0 : index
    %c0_75 = arith.constant 0 : index
    %55 = vector.load %arg3[%c0_74, %c0_75] : memref<1152x128xbf16, #tpu.memory_space<vmem>>, vector<1152x128xbf16>
    %cst = arith.constant dense<0.000000e+00> : vector<160x128xf32>
    %56 = tpu.matmul %54, %55, %cst {dimension_numbers = #tpu.dot_dimension_numbers<[1], [0], [0], [1], [0, 0, 1, 1], [], []>} : vector<160x1152xbf16>, vector<1152x128xbf16>, vector<160x128xf32> -> vector<160x128xf32>
    %c0_76 = arith.constant 0 : index
    %c0_77 = arith.constant 0 : index
    %57 = vector.load %arg5[%c0_76, %c0_77] : memref<3x128xf32, #tpu.memory_space<vmem>>, vector<1x128xf32>
    %58 = vector.broadcast %57 : vector<1x128xf32> to vector<160x128xf32>
    %59 = arith.addf %56, %58 : vector<160x128xf32>
    %cst_78 = arith.constant 0.000000e+00 : f32
    %60 = vector.broadcast %cst_78 : f32 to vector<160x128xf32>
    %61 = arith.maximumf %59, %60 : vector<160x128xf32>
    %c0_79 = arith.constant 0 : index
    %c0_80 = arith.constant 0 : index
    %62 = vector.load %arg2[%c0_79, %c0_80] : memref<160x1xf32, #tpu.memory_space<vmem>>, vector<160x1xf32>
    %63 = vector.broadcast %62 : vector<160x1xf32> to vector<160x128xf32>
    %64 = arith.mulf %61, %63 : vector<160x128xf32>
    %65 = arith.truncf %64 : vector<160x128xf32> to vector<160x128xbf16>
    %cst_81 = arith.constant 0.000000e+00 : bf16
    %66 = vector.broadcast %cst_81 : bf16 to vector<11x128xbf16>
    %c0_82 = arith.constant 0 : index
    %c0_83 = arith.constant 0 : index
    %67 = vector.load %arg9[%c0_82, %c0_83] : memref<220x128xbf16, #tpu.memory_space<vmem>>, vector<11x128xbf16>
    tpu.vector_store %arg9[%c0_82, %c0_83], %66 {strides = array<i32>} : memref<220x128xbf16, #tpu.memory_space<vmem>>, vector<11x128xbf16>,
    %cst_84 = arith.constant 0.000000e+00 : bf16
    %68 = vector.broadcast %cst_84 : bf16 to vector<19x128xbf16>
    %c91 = arith.constant 91 : index
    %c0_85 = arith.constant 0 : index
    %69 = vector.load %arg9[%c91, %c0_85] : memref<220x128xbf16, #tpu.memory_space<vmem>>, vector<19x128xbf16>
    tpu.vector_store %arg9[%c91, %c0_85], %68 {strides = array<i32>} : memref<220x128xbf16, #tpu.memory_space<vmem>>, vector<19x128xbf16>,
    %70 = vector.extract_strided_slice %65 {offsets = [0, 0], sizes = [80, 128], strides = [1, 1]} : vector<160x128xbf16> to vector<80x128xbf16>
    %c11_86 = arith.constant 11 : index
    %c0_87 = arith.constant 0 : index
    %71 = vector.load %arg9[%c11_86, %c0_87] : memref<220x128xbf16, #tpu.memory_space<vmem>>, vector<80x128xbf16>
    tpu.vector_store %arg9[%c11_86, %c0_87], %70 {strides = array<i32>} : memref<220x128xbf16, #tpu.memory_space<vmem>>, vector<80x128xbf16>,
    %cst_88 = arith.constant 0.000000e+00 : bf16
    %72 = vector.broadcast %cst_88 : bf16 to vector<11x128xbf16>
    %c110_89 = arith.constant 110 : index
    %c0_90 = arith.constant 0 : index
    %73 = vector.load %arg9[%c110_89, %c0_90] : memref<220x128xbf16, #tpu.memory_space<vmem>>, vector<11x128xbf16>
    tpu.vector_store %arg9[%c110_89, %c0_90], %72 {strides = array<i32>} : memref<220x128xbf16, #tpu.memory_space<vmem>>, vector<11x128xbf16>,
    %cst_91 = arith.constant 0.000000e+00 : bf16
    %74 = vector.broadcast %cst_91 : bf16 to vector<19x128xbf16>
    %c201_92 = arith.constant 201 : index
    %c0_93 = arith.constant 0 : index
    %75 = vector.load %arg9[%c201_92, %c0_93] : memref<220x128xbf16, #tpu.memory_space<vmem>>, vector<19x128xbf16>
    tpu.vector_store %arg9[%c201_92, %c0_93], %74 {strides = array<i32>} : memref<220x128xbf16, #tpu.memory_space<vmem>>, vector<19x128xbf16>,
    %76 = vector.extract_strided_slice %65 {offsets = [80, 0], sizes = [80, 128], strides = [1, 1]} : vector<160x128xbf16> to vector<80x128xbf16>
    %c121 = arith.constant 121 : index
    %c0_94 = arith.constant 0 : index
    %77 = vector.load %arg9[%c121, %c0_94] : memref<220x128xbf16, #tpu.memory_space<vmem>>, vector<80x128xbf16>
    tpu.vector_store %arg9[%c121, %c0_94], %76 {strides = array<i32>} : memref<220x128xbf16, #tpu.memory_space<vmem>>, vector<80x128xbf16>,
    %c0_95 = arith.constant 0 : index
    %c0_96 = arith.constant 0 : index
    %78 = vector.load %arg9[%c0_95, %c0_96] : memref<220x128xbf16, #tpu.memory_space<vmem>>, vector<80x128xbf16>
    %c0_97 = arith.constant 0 : index
    %c0_98 = arith.constant 0 : index
    %79 = vector.load %arg8[%c0_97, %c0_98] : memref<160x1152xbf16, #tpu.memory_space<vmem>>, vector<80x128xbf16>
    tpu.vector_store %arg8[%c0_97, %c0_98], %78 {strides = array<i32>} : memref<160x1152xbf16, #tpu.memory_space<vmem>>, vector<80x128xbf16>,
    %c1_99 = arith.constant 1 : index
    %c0_100 = arith.constant 0 : index
    %80 = vector.load %arg9[%c1_99, %c0_100] : memref<220x128xbf16, #tpu.memory_space<vmem>>, vector<80x128xbf16>
    %c0_101 = arith.constant 0 : index
    %c128_102 = arith.constant 128 : index
    %81 = vector.load %arg8[%c0_101, %c128_102] : memref<160x1152xbf16, #tpu.memory_space<vmem>>, vector<80x128xbf16>
    tpu.vector_store %arg8[%c0_101, %c128_102], %80 {strides = array<i32>} : memref<160x1152xbf16, #tpu.memory_space<vmem>>, vector<80x128xbf16>,
    %c2 = arith.constant 2 : index
    %c0_103 = arith.constant 0 : index
    %82 = vector.load %arg9[%c2, %c0_103] : memref<220x128xbf16, #tpu.memory_space<vmem>>, vector<80x128xbf16>
    %c0_104 = arith.constant 0 : index
    %c256_105 = arith.constant 256 : index
    %83 = vector.load %arg8[%c0_104, %c256_105] : memref<160x1152xbf16, #tpu.memory_space<vmem>>, vector<80x128xbf16>
    tpu.vector_store %arg8[%c0_104, %c256_105], %82 {strides = array<i32>} : memref<160x1152xbf16, #tpu.memory_space<vmem>>, vector<80x128xbf16>,
    %c10_106 = arith.constant 10 : index
    %c0_107 = arith.constant 0 : index
    %84 = vector.load %arg9[%c10_106, %c0_107] : memref<220x128xbf16, #tpu.memory_space<vmem>>, vector<80x128xbf16>
    %c0_108 = arith.constant 0 : index
    %c384_109 = arith.constant 384 : index
    %85 = vector.load %arg8[%c0_108, %c384_109] : memref<160x1152xbf16, #tpu.memory_space<vmem>>, vector<80x128xbf16>
    tpu.vector_store %arg8[%c0_108, %c384_109], %84 {strides = array<i32>} : memref<160x1152xbf16, #tpu.memory_space<vmem>>, vector<80x128xbf16>,
    %c11_110 = arith.constant 11 : index
    %c0_111 = arith.constant 0 : index
    %86 = vector.load %arg9[%c11_110, %c0_111] : memref<220x128xbf16, #tpu.memory_space<vmem>>, vector<80x128xbf16>
    %c0_112 = arith.constant 0 : index
    %c512_113 = arith.constant 512 : index
    %87 = vector.load %arg8[%c0_112, %c512_113] : memref<160x1152xbf16, #tpu.memory_space<vmem>>, vector<80x128xbf16>
    tpu.vector_store %arg8[%c0_112, %c512_113], %86 {strides = array<i32>} : memref<160x1152xbf16, #tpu.memory_space<vmem>>, vector<80x128xbf16>,
    %c12 = arith.constant 12 : index
    %c0_114 = arith.constant 0 : index
    %88 = vector.load %arg9[%c12, %c0_114] : memref<220x128xbf16, #tpu.memory_space<vmem>>, vector<80x128xbf16>
    %c0_115 = arith.constant 0 : index
    %c640_116 = arith.constant 640 : index
    %89 = vector.load %arg8[%c0_115, %c640_116] : memref<160x1152xbf16, #tpu.memory_space<vmem>>, vector<80x128xbf16>
    tpu.vector_store %arg8[%c0_115, %c640_116], %88 {strides = array<i32>} : memref<160x1152xbf16, #tpu.memory_space<vmem>>, vector<80x128xbf16>,
    %c20 = arith.constant 20 : index
    %c0_117 = arith.constant 0 : index
    %90 = vector.load %arg9[%c20, %c0_117] : memref<220x128xbf16, #tpu.memory_space<vmem>>, vector<80x128xbf16>
    %c0_118 = arith.constant 0 : index
    %c768_119 = arith.constant 768 : index
    %91 = vector.load %arg8[%c0_118, %c768_119] : memref<160x1152xbf16, #tpu.memory_space<vmem>>, vector<80x128xbf16>
    tpu.vector_store %arg8[%c0_118, %c768_119], %90 {strides = array<i32>} : memref<160x1152xbf16, #tpu.memory_space<vmem>>, vector<80x128xbf16>,
    %c21 = arith.constant 21 : index
    %c0_120 = arith.constant 0 : index
    %92 = vector.load %arg9[%c21, %c0_120] : memref<220x128xbf16, #tpu.memory_space<vmem>>, vector<80x128xbf16>
    %c0_121 = arith.constant 0 : index
    %c896_122 = arith.constant 896 : index
    %93 = vector.load %arg8[%c0_121, %c896_122] : memref<160x1152xbf16, #tpu.memory_space<vmem>>, vector<80x128xbf16>
    tpu.vector_store %arg8[%c0_121, %c896_122], %92 {strides = array<i32>} : memref<160x1152xbf16, #tpu.memory_space<vmem>>, vector<80x128xbf16>,
    %c22 = arith.constant 22 : index
    %c0_123 = arith.constant 0 : index
    %94 = vector.load %arg9[%c22, %c0_123] : memref<220x128xbf16, #tpu.memory_space<vmem>>, vector<80x128xbf16>
    %c0_124 = arith.constant 0 : index
    %c1024_125 = arith.constant 1024 : index
    %95 = vector.load %arg8[%c0_124, %c1024_125] : memref<160x1152xbf16, #tpu.memory_space<vmem>>, vector<80x128xbf16>
    tpu.vector_store %arg8[%c0_124, %c1024_125], %94 {strides = array<i32>} : memref<160x1152xbf16, #tpu.memory_space<vmem>>, vector<80x128xbf16>,
    %c110_126 = arith.constant 110 : index
    %c0_127 = arith.constant 0 : index
    %96 = vector.load %arg9[%c110_126, %c0_127] : memref<220x128xbf16, #tpu.memory_space<vmem>>, vector<80x128xbf16>
    %c80_128 = arith.constant 80 : index
    %c0_129 = arith.constant 0 : index
    %97 = vector.load %arg8[%c80_128, %c0_129] : memref<160x1152xbf16, #tpu.memory_space<vmem>>, vector<80x128xbf16>
    tpu.vector_store %arg8[%c80_128, %c0_129], %96 {strides = array<i32>} : memref<160x1152xbf16, #tpu.memory_space<vmem>>, vector<80x128xbf16>,
    %c111 = arith.constant 111 : index
    %c0_130 = arith.constant 0 : index
    %98 = vector.load %arg9[%c111, %c0_130] : memref<220x128xbf16, #tpu.memory_space<vmem>>, vector<80x128xbf16>
    %c80_131 = arith.constant 80 : index
    %c128_132 = arith.constant 128 : index
    %99 = vector.load %arg8[%c80_131, %c128_132] : memref<160x1152xbf16, #tpu.memory_space<vmem>>, vector<80x128xbf16>
    tpu.vector_store %arg8[%c80_131, %c128_132], %98 {strides = array<i32>} : memref<160x1152xbf16, #tpu.memory_space<vmem>>, vector<80x128xbf16>,
    %c112 = arith.constant 112 : index
    %c0_133 = arith.constant 0 : index
    %100 = vector.load %arg9[%c112, %c0_133] : memref<220x128xbf16, #tpu.memory_space<vmem>>, vector<80x128xbf16>
    %c80_134 = arith.constant 80 : index
    %c256_135 = arith.constant 256 : index
    %101 = vector.load %arg8[%c80_134, %c256_135] : memref<160x1152xbf16, #tpu.memory_space<vmem>>, vector<80x128xbf16>
    tpu.vector_store %arg8[%c80_134, %c256_135], %100 {strides = array<i32>} : memref<160x1152xbf16, #tpu.memory_space<vmem>>, vector<80x128xbf16>,
    %c120 = arith.constant 120 : index
    %c0_136 = arith.constant 0 : index
    %102 = vector.load %arg9[%c120, %c0_136] : memref<220x128xbf16, #tpu.memory_space<vmem>>, vector<80x128xbf16>
    %c80_137 = arith.constant 80 : index
    %c384_138 = arith.constant 384 : index
    %103 = vector.load %arg8[%c80_137, %c384_138] : memref<160x1152xbf16, #tpu.memory_space<vmem>>, vector<80x128xbf16>
    tpu.vector_store %arg8[%c80_137, %c384_138], %102 {strides = array<i32>} : memref<160x1152xbf16, #tpu.memory_space<vmem>>, vector<80x128xbf16>,
    %c121_139 = arith.constant 121 : index
    %c0_140 = arith.constant 0 : index
    %104 = vector.load %arg9[%c121_139, %c0_140] : memref<220x128xbf16, #tpu.memory_space<vmem>>, vector<80x128xbf16>
    %c80_141 = arith.constant 80 : index
    %c512_142 = arith.constant 512 : index
    %105 = vector.load %arg8[%c80_141, %c512_142] : memref<160x1152xbf16, #tpu.memory_space<vmem>>, vector<80x128xbf16>
    tpu.vector_store %arg8[%c80_141, %c512_142], %104 {strides = array<i32>} : memref<160x1152xbf16, #tpu.memory_space<vmem>>, vector<80x128xbf16>,
    %c122 = arith.constant 122 : index
    %c0_143 = arith.constant 0 : index
    %106 = vector.load %arg9[%c122, %c0_143] : memref<220x128xbf16, #tpu.memory_space<vmem>>, vector<80x128xbf16>
    %c80_144 = arith.constant 80 : index
    %c640_145 = arith.constant 640 : index
    %107 = vector.load %arg8[%c80_144, %c640_145] : memref<160x1152xbf16, #tpu.memory_space<vmem>>, vector<80x128xbf16>
    tpu.vector_store %arg8[%c80_144, %c640_145], %106 {strides = array<i32>} : memref<160x1152xbf16, #tpu.memory_space<vmem>>, vector<80x128xbf16>,
    %c130 = arith.constant 130 : index
    %c0_146 = arith.constant 0 : index
    %108 = vector.load %arg9[%c130, %c0_146] : memref<220x128xbf16, #tpu.memory_space<vmem>>, vector<80x128xbf16>
    %c80_147 = arith.constant 80 : index
    %c768_148 = arith.constant 768 : index
    %109 = vector.load %arg8[%c80_147, %c768_148] : memref<160x1152xbf16, #tpu.memory_space<vmem>>, vector<80x128xbf16>
    tpu.vector_store %arg8[%c80_147, %c768_148], %108 {strides = array<i32>} : memref<160x1152xbf16, #tpu.memory_space<vmem>>, vector<80x128xbf16>,
    %c131 = arith.constant 131 : index
    %c0_149 = arith.constant 0 : index
    %110 = vector.load %arg9[%c131, %c0_149] : memref<220x128xbf16, #tpu.memory_space<vmem>>, vector<80x128xbf16>
    %c80_150 = arith.constant 80 : index
    %c896_151 = arith.constant 896 : index
    %111 = vector.load %arg8[%c80_150, %c896_151] : memref<160x1152xbf16, #tpu.memory_space<vmem>>, vector<80x128xbf16>
    tpu.vector_store %arg8[%c80_150, %c896_151], %110 {strides = array<i32>} : memref<160x1152xbf16, #tpu.memory_space<vmem>>, vector<80x128xbf16>,
    %c132 = arith.constant 132 : index
    %c0_152 = arith.constant 0 : index
    %112 = vector.load %arg9[%c132, %c0_152] : memref<220x128xbf16, #tpu.memory_space<vmem>>, vector<80x128xbf16>
    %c80_153 = arith.constant 80 : index
    %c1024_154 = arith.constant 1024 : index
    %113 = vector.load %arg8[%c80_153, %c1024_154] : memref<160x1152xbf16, #tpu.memory_space<vmem>>, vector<80x128xbf16>
    tpu.vector_store %arg8[%c80_153, %c1024_154], %112 {strides = array<i32>} : memref<160x1152xbf16, #tpu.memory_space<vmem>>, vector<80x128xbf16>,
    %c0_155 = arith.constant 0 : index
    %c0_156 = arith.constant 0 : index
    %114 = vector.load %arg8[%c0_155, %c0_156] : memref<160x1152xbf16, #tpu.memory_space<vmem>>, vector<160x1152xbf16>
    %c0_157 = arith.constant 0 : index
    %c0_158 = arith.constant 0 : index
    %115 = vector.load %arg4[%c0_157, %c0_158] : memref<1152x128xbf16, #tpu.memory_space<vmem>>, vector<1152x128xbf16>
    %cst_159 = arith.constant dense<0.000000e+00> : vector<160x128xf32>
    %116 = tpu.matmul %114, %115, %cst_159 {dimension_numbers = #tpu.dot_dimension_numbers<[1], [0], [0], [1], [0, 0, 1, 1], [], []>} : vector<160x1152xbf16>, vector<1152x128xbf16>, vector<160x128xf32> -> vector<160x128xf32>
    %c1_160 = arith.constant 1 : index
    %c0_161 = arith.constant 0 : index
    %117 = vector.load %arg5[%c1_160, %c0_161] : memref<3x128xf32, #tpu.memory_space<vmem>>, vector<1x128xf32>
    %118 = vector.broadcast %117 : vector<1x128xf32> to vector<160x128xf32>
    %119 = arith.addf %116, %118 : vector<160x128xf32>
    %c0_162 = arith.constant 0 : index
    %c300_163 = arith.constant 300 : index
    %c0_164 = arith.constant 0 : index
    %120 = vector.load %arg1[%c0_162, %c300_163, %c0_164] : memref<2x400x128xbf16, #tpu.memory_space<vmem>>, vector<1x80x128xbf16>
    %121 = vector.shape_cast %120 : vector<1x80x128xbf16> to vector<80x128xbf16>
    %c0_165 = arith.constant 0 : index
    %c0_166 = arith.constant 0 : index
    %122 = vector.load %arg6[%c0_165, %c0_166] : memref<128x128xbf16, #tpu.memory_space<vmem>>, vector<128x128xbf16>
    %cst_167 = arith.constant dense<0.000000e+00> : vector<80x128xf32>
    %123 = tpu.matmul %121, %122, %cst_167 {dimension_numbers = #tpu.dot_dimension_numbers<[1], [0], [0], [1], [0, 0, 1, 1], [], []>} : vector<80x128xbf16>, vector<128x128xbf16>, vector<80x128xf32> -> vector<80x128xf32>
    %c2_168 = arith.constant 2 : index
    %c0_169 = arith.constant 0 : index
    %124 = vector.load %arg5[%c2_168, %c0_169] : memref<3x128xf32, #tpu.memory_space<vmem>>, vector<1x128xf32>
    %125 = vector.broadcast %124 : vector<1x128xf32> to vector<80x128xf32>
    %126 = arith.addf %123, %125 : vector<80x128xf32>
    %127 = vector.extract_strided_slice %119 {offsets = [0, 0], sizes = [80, 128], strides = [1, 1]} : vector<160x128xf32> to vector<80x128xf32>
    %128 = arith.addf %127, %126 : vector<80x128xf32>
    %cst_170 = arith.constant 0.000000e+00 : f32
    %129 = vector.broadcast %cst_170 : f32 to vector<80x128xf32>
    %130 = arith.maximumf %128, %129 : vector<80x128xf32>
    %131 = arith.truncf %130 : vector<80x128xf32> to vector<80x128xbf16>
    %c0_171 = arith.constant 0 : index
    %c0_172 = arith.constant 0 : index
    %c0_173 = arith.constant 0 : index
    %132 = vector.load %arg7[%c0_171, %c0_172, %c0_173] : memref<2x80x128xbf16, #tpu.memory_space<vmem>>, vector<1x80x128xbf16>
    %133 = vector.shape_cast %132 : vector<1x80x128xbf16> to vector<80x128xbf16>
    %134 = vector.shape_cast %131 : vector<80x128xbf16> to vector<1x80x128xbf16>
    tpu.vector_store %arg7[%c0_171, %c0_172, %c0_173], %134 {strides = array<i32>} : memref<2x80x128xbf16, #tpu.memory_space<vmem>>, vector<1x80x128xbf16>,
    %c1_174 = arith.constant 1 : index
    %c300_175 = arith.constant 300 : index
    %c0_176 = arith.constant 0 : index
    %135 = vector.load %arg1[%c1_174, %c300_175, %c0_176] : memref<2x400x128xbf16, #tpu.memory_space<vmem>>, vector<1x80x128xbf16>
    %136 = vector.shape_cast %135 : vector<1x80x128xbf16> to vector<80x128xbf16>
    %c0_177 = arith.constant 0 : index
    %c0_178 = arith.constant 0 : index
    %137 = vector.load %arg6[%c0_177, %c0_178] : memref<128x128xbf16, #tpu.memory_space<vmem>>, vector<128x128xbf16>
    %cst_179 = arith.constant dense<0.000000e+00> : vector<80x128xf32>
    %138 = tpu.matmul %136, %137, %cst_179 {dimension_numbers = #tpu.dot_dimension_numbers<[1], [0], [0], [1], [0, 0, 1, 1], [], []>} : vector<80x128xbf16>, vector<128x128xbf16>, vector<80x128xf32> -> vector<80x128xf32>
    %c2_180 = arith.constant 2 : index
    %c0_181 = arith.constant 0 : index
    %139 = vector.load %arg5[%c2_180, %c0_181] : memref<3x128xf32, #tpu.memory_space<vmem>>, vector<1x128xf32>
    %140 = vector.broadcast %139 : vector<1x128xf32> to vector<80x128xf32>
    %141 = arith.addf %138, %140 : vector<80x128xf32>
    %142 = vector.extract_strided_slice %119 {offsets = [80, 0], sizes = [80, 128], strides = [1, 1]} : vector<160x128xf32> to vector<80x128xf32>
    %143 = arith.addf %142, %141 : vector<80x128xf32>
    %cst_182 = arith.constant 0.000000e+00 : f32
    %144 = vector.broadcast %cst_182 : f32 to vector<80x128xf32>
    %145 = arith.maximumf %143, %144 : vector<80x128xf32>
    %146 = arith.truncf %145 : vector<80x128xf32> to vector<80x128xbf16>
    %c1_183 = arith.constant 1 : index
    %c0_184 = arith.constant 0 : index
    %c0_185 = arith.constant 0 : index
    %147 = vector.load %arg7[%c1_183, %c0_184, %c0_185] : memref<2x80x128xbf16, #tpu.memory_space<vmem>>, vector<1x80x128xbf16>
    %148 = vector.shape_cast %147 : vector<1x80x128xbf16> to vector<80x128xbf16>
    %149 = vector.shape_cast %146 : vector<80x128xbf16> to vector<1x80x128xbf16>
    tpu.vector_store %arg7[%c1_183, %c0_184, %c0_185], %149 {strides = array<i32>} : memref<2x80x128xbf16, #tpu.memory_space<vmem>>, vector<1x80x128xbf16>,
    return
  }
  func.func @transform_0(%arg0: i32) -> (i32, i32, i32) {
    %c0_i32 = arith.constant 0 : i32
    %c0_i32_0 = arith.constant 0 : i32
    %c0_i32_1 = arith.constant 0 : i32
    return %arg0, %c0_i32, %c0_i32_0 : i32, i32, i32
  }
  func.func @transform_1(%arg0: i32) -> (i32, i32) {
    %c0_i32 = arith.constant 0 : i32
    %c0_i32_0 = arith.constant 0 : i32
    %c0_i32_1 = arith.constant 0 : i32
    return %c0_i32, %c0_i32_0 : i32, i32
  }
  func.func @transform_2(%arg0: i32) -> (i32, i32) {
    %c0_i32 = arith.constant 0 : i32
    %c0_i32_0 = arith.constant 0 : i32
    %c0_i32_1 = arith.constant 0 : i32
    return %c0_i32, %c0_i32_0 : i32, i32
  }
  func.func @transform_3(%arg0: i32) -> (i32, i32) {
    %c0_i32 = arith.constant 0 : i32
    %c0_i32_0 = arith.constant 0 : i32
    %c0_i32_1 = arith.constant 0 : i32
    return %c0_i32, %c0_i32_0 : i32, i32
  }
  func.func @transform_4(%arg0: i32) -> (i32, i32) {
    %c0_i32 = arith.constant 0 : i32
    %c0_i32_0 = arith.constant 0 : i32
    %c0_i32_1 = arith.constant 0 : i32
    return %c0_i32, %c0_i32_0 : i32, i32
  }
  func.func @transform_5(%arg0: i32) -> (i32, i32) {
    %c0_i32 = arith.constant 0 : i32
    %c0_i32_0 = arith.constant 0 : i32
    %c0_i32_1 = arith.constant 0 : i32
    return %c0_i32, %c0_i32_0 : i32, i32
  }
  func.func @transform_6(%arg0: i32) -> (i32, i32, i32) {
    %c0_i32 = arith.constant 0 : i32
    %c0_i32_0 = arith.constant 0 : i32
    %c0_i32_1 = arith.constant 0 : i32
    return %arg0, %c0_i32, %c0_i32_0 : i32, i32, i32
  }
}

</mosaic_0001>

<llo_original>
// kernel: basic_block_forward.1
$region0: #{basic_block_forward.1}
  #allocation0 [shape = 'u32[]', space=smem, size = 0x4, offset = 0x4, fixed_abs, tag = 'smem constant byte address 0x4 - core index']
  #allocation1 [shape = 'u32[72,128]{1,0:T(1,128)}', space=vmem, size = 0x9000, scoped, tag = 'internal scratch']
  #allocation2 [shape = 'bf16[160,1152]{1,0:T(8,128)(2,1)}', space=vmem, size = 0x5a000, scoped, tag = 'scratch operand']
  #allocation3 [shape = 'bf16[220,128]{1,0:T(8,128)(2,1)}', space=vmem, size = 0xe000, scoped, tag = 'scratch operand']
  %s0 = inlined_call_operand.vmem [shape: bf16[2,400,128], index: 0, kind: input, shape index: {}]
  %s1 = inlined_call_operand.vmem [shape: f32[160,1], index: 1, kind: input, shape index: {}]
  %s2 = inlined_call_operand.vmem [shape: bf16[1152,128], index: 2, kind: input, shape index: {}]
  %s3 = inlined_call_operand.vmem [shape: bf16[1152,128], index: 3, kind: input, shape index: {}]
  %s4 = inlined_call_operand.vmem [shape: f32[3,128], index: 4, kind: input, shape index: {}]
  %s5 = inlined_call_operand.vmem [shape: bf16[128,128], index: 5, kind: input, shape index: {}]
  %s6 = inlined_call_operand.vmem [shape: bf16[2,80,128], index: 6, kind: output, shape index: {}]
  %s7 = sld [smem:[#allocation0]]
  $region34: #{basic_block_forward.1} parent=0
    _
  %s9 = ssub.s32 1, %s7
  %s10 = scalar_select 0, %s9, %s7
  // Predicated region
  $region2: #{basic_block_forward.1} parent=0 // pred_check
    _
  $region3: #{basic_block_forward.1} parent=0 // pred_check_branch
    %12 = sbr.rel (0) target = $region5
  $region4: #{basic_block_forward.1} parent=0 // pred_region
    _
  $region5: #{basic_block_forward.1} parent=0 // pred_fallthru
    _
  // Predicated region
  $region6: #{basic_block_forward.1} parent=0 // pred_check
    _
  $region7: #{basic_block_forward.1} parent=0 // pred_check_branch
    %14 = sbr.rel (0) target = $region9
  $region8: #{basic_block_forward.1} parent=0 // pred_region
    _
  $region9: #{basic_block_forward.1} parent=0 // pred_fallthru
    _
  // Predicated region
  $region10: #{basic_block_forward.1} parent=0 // pred_check
    _
  $region11: #{basic_block_forward.1} parent=0 // pred_check_branch
    %16 = sbr.rel (0) target = $region13
  $region12: #{basic_block_forward.1} parent=0 // pred_region
    _
  $region13: #{basic_block_forward.1} parent=0 // pred_fallthru
    _
  // Predicated region
  $region14: #{basic_block_forward.1} parent=0 // pred_check
    _
  $region15: #{basic_block_forward.1} parent=0 // pred_check_branch
    %18 = sbr.rel (0) target = $region17
  $region16: #{basic_block_forward.1} parent=0 // pred_region
    _
  $region17: #{basic_block_forward.1} parent=0 // pred_fallthru
    _
  // Predicated region
  $region18: #{basic_block_forward.1} parent=0 // pred_check
    _
  $region19: #{basic_block_forward.1} parent=0 // pred_check_branch
    %20 = sbr.rel (0) target = $region21
  $region20: #{basic_block_forward.1} parent=0 // pred_region
    _
  $region21: #{basic_block_forward.1} parent=0 // pred_fallthru
    _
  // Predicated region
  $region22: #{basic_block_forward.1} parent=0 // pred_check
    _
  $region23: #{basic_block_forward.1} parent=0 // pred_check_branch
    %22 = sbr.rel (0) target = $region25
  $region24: #{basic_block_forward.1} parent=0 // pred_region
    _
  $region25: #{basic_block_forward.1} parent=0 // pred_fallthru
    _
  %v24 = vld [vmem:[%s0] sm:$0xf]
  %v25 = vld [vmem:[%s0 + $0x4] sm:$0xf]
  %v26 = vld [vmem:[%s0 + $0x8] sm:$0xf]
  %v27 = vld [vmem:[%s0 + $0xc] sm:$0xf]
  %v28 = vld [vmem:[%s0 + $0x10] sm:$0xf]
  %v29 = vld [vmem:[%s0 + $0x14] sm:$0xf]
  %v30 = vld [vmem:[%s0 + $0x18] sm:$0xf]
  %v31 = vld [vmem:[%s0 + $0x1c] sm:$0xf]
  %v32 = vld [vmem:[%s0 + $0x20] sm:$0xf]
  %v33 = vld [vmem:[%s0 + $0x24] sm:$0xf]
  %34 = vst [vmem:[#allocation2] sm:$0xf] %v24
  %35 = vst [vmem:[#allocation2 + $0x24] sm:$0xf] %v25
  %36 = vst [vmem:[#allocation2 + $0x48] sm:$0xf] %v26
  %37 = vst [vmem:[#allocation2 + $0x6c] sm:$0xf] %v27
  %38 = vst [vmem:[#allocation2 + $0x90] sm:$0xf] %v28
  %39 = vst [vmem:[#allocation2 + $0xb4] sm:$0xf] %v29
  %40 = vst [vmem:[#allocation2 + $0xd8] sm:$0xf] %v30
  %41 = vst [vmem:[#allocation2 + $0xfc] sm:$0xf] %v31
  %42 = vst [vmem:[#allocation2 + $0x120] sm:$0xf] %v32
  %43 = vst [vmem:[#allocation2 + $0x144] sm:$0xf] %v33
  %v44 = vld [vmem:[%s0 + $0x30] sm:$0xc]
  %v45 = vld [vmem:[%s0 + $0x34] sm:$0xf]
  %v46 = vld [vmem:[%s0 + $0x38] sm:$0xf]
  %v47 = vld [vmem:[%s0 + $0x3c] sm:$0xf]
  %v48 = vld [vmem:[%s0 + $0x40] sm:$0xf]
  %v49 = vld [vmem:[%s0 + $0x44] sm:$0xf]
  %v50 = vld [vmem:[%s0 + $0x48] sm:$0xf]
  %v51 = vld [vmem:[%s0 + $0x4c] sm:$0xf]
  %v52 = vld [vmem:[%s0 + $0x50] sm:$0xf]
  %v53 = vld [vmem:[%s0 + $0x54] sm:$0xf]
  %v54 = vld [vmem:[%s0 + $0x58] sm:$0x3]
  %vm66 = vcmask 1041408
  %vm67 = vcmask 1045508
  %vm68 = vmor %vm66, %vm67
  %v69 = vrot.slane %v44, 6
  %v70 = vrot.slane %v69, 4
  %v71 = vrot.slane %v45, 6
  %v72 = vsel %vm68, %v70, %v71
  %v73 = vrot.slane %v71, 4
  %v74 = vrot.slane %v46, 6
  %v75 = vsel %vm68, %v73, %v74
  %v76 = vrot.slane %v74, 4
  %v77 = vrot.slane %v47, 6
  %v78 = vsel %vm68, %v76, %v77
  %v79 = vrot.slane %v77, 4
  %v80 = vrot.slane %v48, 6
  %v81 = vsel %vm68, %v79, %v80
  %v82 = vrot.slane %v80, 4
  %v83 = vrot.slane %v49, 6
  %v84 = vsel %vm68, %v82, %v83
  %v85 = vrot.slane %v83, 4
  %v86 = vrot.slane %v50, 6
  %v87 = vsel %vm68, %v85, %v86
  %v88 = vrot.slane %v86, 4
  %v89 = vrot.slane %v51, 6
  %v90 = vsel %vm68, %v88, %v89
  %v91 = vrot.slane %v89, 4
  %v92 = vrot.slane %v52, 6
  %v93 = vsel %vm68, %v91, %v92
  %v94 = vrot.slane %v92, 4
  %v95 = vrot.slane %v53, 6
  %v96 = vsel %vm68, %v94, %v95
  %v97 = vrot.slane %v95, 4
  %v98 = vrot.slane %v54, 6
  %v99 = vsel %vm68, %v97, %v98
  %110 = vst [vmem:[#allocation2 + $0x4] sm:$0xf] %v72
  %111 = vst [vmem:[#allocation2 + $0x28] sm:$0xf] %v75
  %112 = vst [vmem:[#allocation2 + $0x4c] sm:$0xf] %v78
  %113 = vst [vmem:[#allocation2 + $0x70] sm:$0xf] %v81
  %114 = vst [vmem:[#allocation2 + $0x94] sm:$0xf] %v84
  %115 = vst [vmem:[#allocation2 + $0xb8] sm:$0xf] %v87
  %116 = vst [vmem:[#allocation2 + $0xdc] sm:$0xf] %v90
  %117 = vst [vmem:[#allocation2 + $0x100] sm:$0xf] %v93
  %118 = vst [vmem:[#allocation2 + $0x124] sm:$0xf] %v96
  %119 = vst [vmem:[#allocation2 + $0x148] sm:$0xf] %v99
  %v120 = vld [vmem:[%s0] sm:$0xf]
  %v121 = vld [vmem:[%s0 + $0x4] sm:$0xf]
  %v122 = vld [vmem:[%s0 + $0x8] sm:$0xf]
  %v123 = vld [vmem:[%s0 + $0xc] sm:$0xf]
  %v124 = vld [vmem:[%s0 + $0x10] sm:$0xf]
  %v125 = vld [vmem:[%s0 + $0x14] sm:$0xf]
  %v126 = vld [vmem:[%s0 + $0x18] sm:$0xf]
  %v127 = vld [vmem:[%s0 + $0x1c] sm:$0xf]
  %v128 = vld [vmem:[%s0 + $0x20] sm:$0xf]
  %v129 = vld [vmem:[%s0 + $0x24] sm:$0xf]
  %v130 = vld [vmem:[%s0 + $0x28] sm:$0x1]
  %vm131 = vsmask.f32 3328
  %vm132 = vsmask.f32 7440
  %vm133 = vmor %vm131, %vm132
  %v135 = vshrl.u32 %v120, 16
  %v137 = vrot.slane %v135, 4
  %v138 = vshll.u32 %v120, 16
  %v140 = vrot.slane %v138, 5
  %v141 = vor.u32 %v137, %v140
  %v142 = vrot.slane %v141, 4
  %v144 = vshll.u32 %v121, 16
  %v146 = vrot.slane %v144, 5
  %v147 = vsel %vm133, %v142, %v146
  %v148 = vshrl.u32 %v121, 16
  %v150 = vrot.slane %v148, 4
  %v151 = vor.u32 %v150, %v146
  %v152 = vrot.slane %v151, 4
  %v154 = vshll.u32 %v122, 16
  %v156 = vrot.slane %v154, 5
  %v157 = vsel %vm133, %v152, %v156
  %v158 = vshrl.u32 %v122, 16
  %v160 = vrot.slane %v158, 4
  %v161 = vor.u32 %v160, %v156
  %v162 = vrot.slane %v161, 4
  %v164 = vshll.u32 %v123, 16
  %v166 = vrot.slane %v164, 5
  %v167 = vsel %vm133, %v162, %v166
  %v168 = vshrl.u32 %v123, 16
  %v170 = vrot.slane %v168, 4
  %v171 = vor.u32 %v170, %v166
  %v172 = vrot.slane %v171, 4
  %v174 = vshll.u32 %v124, 16
  %v176 = vrot.slane %v174, 5
  %v177 = vsel %vm133, %v172, %v176
  %v178 = vshrl.u32 %v124, 16
  %v180 = vrot.slane %v178, 4
  %v181 = vor.u32 %v180, %v176
  %v182 = vrot.slane %v181, 4
  %v184 = vshll.u32 %v125, 16
  %v186 = vrot.slane %v184, 5
  %v187 = vsel %vm133, %v182, %v186
  %v188 = vshrl.u32 %v125, 16
  %v190 = vrot.slane %v188, 4
  %v191 = vor.u32 %v190, %v186
  %v192 = vrot.slane %v191, 4
  %v194 = vshll.u32 %v126, 16
  %v196 = vrot.slane %v194, 5
  %v197 = vsel %vm133, %v192, %v196
  %v198 = vshrl.u32 %v126, 16
  %v200 = vrot.slane %v198, 4
  %v201 = vor.u32 %v200, %v196
  %v202 = vrot.slane %v201, 4
  %v204 = vshll.u32 %v127, 16
  %v206 = vrot.slane %v204, 5
  %v207 = vsel %vm133, %v202, %v206
  %v208 = vshrl.u32 %v127, 16
  %v210 = vrot.slane %v208, 4
  %v211 = vor.u32 %v210, %v206
  %v212 = vrot.slane %v211, 4
  %v214 = vshll.u32 %v128, 16
  %v216 = vrot.slane %v214, 5
  %v217 = vsel %vm133, %v212, %v216
  %v218 = vshrl.u32 %v128, 16
  %v220 = vrot.slane %v218, 4
  %v221 = vor.u32 %v220, %v216
  %v222 = vrot.slane %v221, 4
  %v224 = vshll.u32 %v129, 16
  %v226 = vrot.slane %v224, 5
  %v227 = vsel %vm133, %v222, %v226
  %v228 = vshrl.u32 %v129, 16
  %v230 = vrot.slane %v228, 4
  %v231 = vor.u32 %v230, %v226
  %v232 = vrot.slane %v231, 4
  %v234 = vshll.u32 %v130, 16
  %v236 = vrot.slane %v234, 5
  %v237 = vsel %vm133, %v232, %v236
  %248 = vst [vmem:[#allocation2 + $0x8] sm:$0xf] %v147
  %249 = vst [vmem:[#allocation2 + $0x2c] sm:$0xf] %v157
  %250 = vst [vmem:[#allocation2 + $0x50] sm:$0xf] %v167
  %251 = vst [vmem:[#allocation2 + $0x74] sm:$0xf] %v177
  %252 = vst [vmem:[#allocation2 + $0x98] sm:$0xf] %v187
  %253 = vst [vmem:[#allocation2 + $0xbc] sm:$0xf] %v197
  %254 = vst [vmem:[#allocation2 + $0xe0] sm:$0xf] %v207
  %255 = vst [vmem:[#allocation2 + $0x104] sm:$0xf] %v217
  %256 = vst [vmem:[#allocation2 + $0x128] sm:$0xf] %v227
  %257 = vst [vmem:[#allocation2 + $0x14c] sm:$0xf] %v237
  %v258 = vld [vmem:[%s0 + $0x64] sm:$0xf]
  %v259 = vld [vmem:[%s0 + $0x68] sm:$0xf]
  %v260 = vld [vmem:[%s0 + $0x6c] sm:$0xf]
  %v261 = vld [vmem:[%s0 + $0x70] sm:$0xf]
  %v262 = vld [vmem:[%s0 + $0x74] sm:$0xf]
  %v263 = vld [vmem:[%s0 + $0x78] sm:$0xf]
  %v264 = vld [vmem:[%s0 + $0x7c] sm:$0xf]
  %v265 = vld [vmem:[%s0 + $0x80] sm:$0xf]
  %v266 = vld [vmem:[%s0 + $0x84] sm:$0xf]
  %v267 = vld [vmem:[%s0 + $0x88] sm:$0xf]
  %268 = vst [vmem:[#allocation2 + $0xc] sm:$0xf] %v258
  %269 = vst [vmem:[#allocation2 + $0x30] sm:$0xf] %v259
  %270 = vst [vmem:[#allocation2 + $0x54] sm:$0xf] %v260
  %271 = vst [vmem:[#allocation2 + $0x78] sm:$0xf] %v261
  %272 = vst [vmem:[#allocation2 + $0x9c] sm:$0xf] %v262
  %273 = vst [vmem:[#allocation2 + $0xc0] sm:$0xf] %v263
  %274 = vst [vmem:[#allocation2 + $0xe4] sm:$0xf] %v264
  %275 = vst [vmem:[#allocation2 + $0x108] sm:$0xf] %v265
  %276 = vst [vmem:[#allocation2 + $0x12c] sm:$0xf] %v266
  %277 = vst [vmem:[#allocation2 + $0x150] sm:$0xf] %v267
  %v278 = vld [vmem:[%s0 + $0x94] sm:$0xc]
  %v279 = vld [vmem:[%s0 + $0x98] sm:$0xf]
  %v280 = vld [vmem:[%s0 + $0x9c] sm:$0xf]
  %v281 = vld [vmem:[%s0 + $0xa0] sm:$0xf]
  %v282 = vld [vmem:[%s0 + $0xa4] sm:$0xf]
  %v283 = vld [vmem:[%s0 + $0xa8] sm:$0xf]
  %v284 = vld [vmem:[%s0 + $0xac] sm:$0xf]
  %v285 = vld [vmem:[%s0 + $0xb0] sm:$0xf]
  %v286 = vld [vmem:[%s0 + $0xb4] sm:$0xf]
  %v287 = vld [vmem:[%s0 + $0xb8] sm:$0xf]
  %v288 = vld [vmem:[%s0 + $0xbc] sm:$0x3]
  %v300 = vrot.slane %v278, 6
  %v301 = vrot.slane %v300, 4
  %v302 = vrot.slane %v279, 6
  %v303 = vsel %vm68, %v301, %v302
  %v304 = vrot.slane %v302, 4
  %v305 = vrot.slane %v280, 6
  %v306 = vsel %vm68, %v304, %v305
  %v307 = vrot.slane %v305, 4
  %v308 = vrot.slane %v281, 6
  %v309 = vsel %vm68, %v307, %v308
  %v310 = vrot.slane %v308, 4
  %v311 = vrot.slane %v282, 6
  %v312 = vsel %vm68, %v310, %v311
  %v313 = vrot.slane %v311, 4
  %v314 = vrot.slane %v283, 6
  %v315 = vsel %vm68, %v313, %v314
  %v316 = vrot.slane %v314, 4
  %v317 = vrot.slane %v284, 6
  %v318 = vsel %vm68, %v316, %v317
  %v319 = vrot.slane %v317, 4
  %v320 = vrot.slane %v285, 6
  %v321 = vsel %vm68, %v319, %v320
  %v322 = vrot.slane %v320, 4
  %v323 = vrot.slane %v286, 6
  %v324 = vsel %vm68, %v322, %v323
  %v325 = vrot.slane %v323, 4
  %v326 = vrot.slane %v287, 6
  %v327 = vsel %vm68, %v325, %v326
  %v328 = vrot.slane %v326, 4
  %v329 = vrot.slane %v288, 6
  %v330 = vsel %vm68, %v328, %v329
  %341 = vst [vmem:[#allocation2 + $0x10] sm:$0xf] %v303
  %342 = vst [vmem:[#allocation2 + $0x34] sm:$0xf] %v306
  %343 = vst [vmem:[#allocation2 + $0x58] sm:$0xf] %v309
  %344 = vst [vmem:[#allocation2 + $0x7c] sm:$0xf] %v312
  %345 = vst [vmem:[#allocation2 + $0xa0] sm:$0xf] %v315
  %346 = vst [vmem:[#allocation2 + $0xc4] sm:$0xf] %v318
  %347 = vst [vmem:[#allocation2 + $0xe8] sm:$0xf] %v321
  %348 = vst [vmem:[#allocation2 + $0x10c] sm:$0xf] %v324
  %349 = vst [vmem:[#allocation2 + $0x130] sm:$0xf] %v327
  %350 = vst [vmem:[#allocation2 + $0x154] sm:$0xf] %v330
  %v351 = vld [vmem:[%s0 + $0x64] sm:$0xf]
  %v352 = vld [vmem:[%s0 + $0x68] sm:$0xf]
  %v353 = vld [vmem:[%s0 + $0x6c] sm:$0xf]
  %v354 = vld [vmem:[%s0 + $0x70] sm:$0xf]
  %v355 = vld [vmem:[%s0 + $0x74] sm:$0xf]
  %v356 = vld [vmem:[%s0 + $0x78] sm:$0xf]
  %v357 = vld [vmem:[%s0 + $0x7c] sm:$0xf]
  %v358 = vld [vmem:[%s0 + $0x80] sm:$0xf]
  %v359 = vld [vmem:[%s0 + $0x84] sm:$0xf]
  %v360 = vld [vmem:[%s0 + $0x88] sm:$0xf]
  %v361 = vld [vmem:[%s0 + $0x8c] sm:$0x1]
  %v363 = vshrl.u32 %v351, 16
  %v365 = vrot.slane %v363, 4
  %v366 = vshll.u32 %v351, 16
  %v368 = vrot.slane %v366, 5
  %v369 = vor.u32 %v365, %v368
  %v370 = vrot.slane %v369, 4
  %v372 = vshll.u32 %v352, 16
  %v374 = vrot.slane %v372, 5
  %v375 = vsel %vm133, %v370, %v374
  %v376 = vshrl.u32 %v352, 16
  %v378 = vrot.slane %v376, 4
  %v379 = vor.u32 %v378, %v374
  %v380 = vrot.slane %v379, 4
  %v382 = vshll.u32 %v353, 16
  %v384 = vrot.slane %v382, 5
  %v385 = vsel %vm133, %v380, %v384
  %v386 = vshrl.u32 %v353, 16
  %v388 = vrot.slane %v386, 4
  %v389 = vor.u32 %v388, %v384
  %v390 = vrot.slane %v389, 4
  %v392 = vshll.u32 %v354, 16
  %v394 = vrot.slane %v392, 5
  %v395 = vsel %vm133, %v390, %v394
  %v396 = vshrl.u32 %v354, 16
  %v398 = vrot.slane %v396, 4
  %v399 = vor.u32 %v398, %v394
  %v400 = vrot.slane %v399, 4
  %v402 = vshll.u32 %v355, 16
  %v404 = vrot.slane %v402, 5
  %v405 = vsel %vm133, %v400, %v404
  %v406 = vshrl.u32 %v355, 16
  %v408 = vrot.slane %v406, 4
  %v409 = vor.u32 %v408, %v404
  %v410 = vrot.slane %v409, 4
  %v412 = vshll.u32 %v356, 16
  %v414 = vrot.slane %v412, 5
  %v415 = vsel %vm133, %v410, %v414
  %v416 = vshrl.u32 %v356, 16
  %v418 = vrot.slane %v416, 4
  %v419 = vor.u32 %v418, %v414
  %v420 = vrot.slane %v419, 4
  %v422 = vshll.u32 %v357, 16
  %v424 = vrot.slane %v422, 5
  %v425 = vsel %vm133, %v420, %v424
  %v426 = vshrl.u32 %v357, 16
  %v428 = vrot.slane %v426, 4
  %v429 = vor.u32 %v428, %v424
  %v430 = vrot.slane %v429, 4
  %v432 = vshll.u32 %v358, 16
  %v434 = vrot.slane %v432, 5
  %v435 = vsel %vm133, %v430, %v434
  %v436 = vshrl.u32 %v358, 16
  %v438 = vrot.slane %v436, 4
  %v439 = vor.u32 %v438, %v434
  %v440 = vrot.slane %v439, 4
  %v442 = vshll.u32 %v359, 16
  %v444 = vrot.slane %v442, 5
  %v445 = vsel %vm133, %v440, %v444
  %v446 = vshrl.u32 %v359, 16
  %v448 = vrot.slane %v446, 4
  %v449 = vor.u32 %v448, %v444
  %v450 = vrot.slane %v449, 4
  %v452 = vshll.u32 %v360, 16
  %v454 = vrot.slane %v452, 5
  %v455 = vsel %vm133, %v450, %v454
  %v456 = vshrl.u32 %v360, 16
  %v458 = vrot.slane %v456, 4
  %v459 = vor.u32 %v458, %v454
  %v460 = vrot.slane %v459, 4
  %v462 = vshll.u32 %v361, 16
  %v464 = vrot.slane %v462, 5
  %v465 = vsel %vm133, %v460, %v464
  %476 = vst [vmem:[#allocation2 + $0x14] sm:$0xf] %v375
  %477 = vst [vmem:[#allocation2 + $0x38] sm:$0xf] %v385
  %478 = vst [vmem:[#allocation2 + $0x5c] sm:$0xf] %v395
  %479 = vst [vmem:[#allocation2 + $0x80] sm:$0xf] %v405
  %480 = vst [vmem:[#allocation2 + $0xa4] sm:$0xf] %v415
  %481 = vst [vmem:[#allocation2 + $0xc8] sm:$0xf] %v425
  %482 = vst [vmem:[#allocation2 + $0xec] sm:$0xf] %v435
  %483 = vst [vmem:[#allocation2 + $0x110] sm:$0xf] %v445
  %484 = vst [vmem:[#allocation2 + $0x134] sm:$0xf] %v455
  %485 = vst [vmem:[#allocation2 + $0x158] sm:$0xf] %v465
  %v486 = vld [vmem:[%s0 + $0x4] sm:$0xe]
  %v487 = vld [vmem:[%s0 + $0x8] sm:$0xf]
  %v488 = vld [vmem:[%s0 + $0xc] sm:$0xf]
  %v489 = vld [vmem:[%s0 + $0x10] sm:$0xf]
  %v490 = vld [vmem:[%s0 + $0x14] sm:$0xf]
  %v491 = vld [vmem:[%s0 + $0x18] sm:$0xf]
  %v492 = vld [vmem:[%s0 + $0x1c] sm:$0xf]
  %v493 = vld [vmem:[%s0 + $0x20] sm:$0xf]
  %v494 = vld [vmem:[%s0 + $0x24] sm:$0xf]
  %v495 = vld [vmem:[%s0 + $0x28] sm:$0xf]
  %v496 = vld [vmem:[%s0 + $0x2c] sm:$0x1]
  %vm508 = vcmask 1042432
  %vm509 = vcmask 1046532
  %vm510 = vmor %vm508, %vm509
  %v511 = vrot.slane %v486, 5
  %v512 = vrot.slane %v511, 4
  %v513 = vrot.slane %v487, 5
  %v514 = vsel %vm510, %v512, %v513
  %v515 = vrot.slane %v513, 4
  %v516 = vrot.slane %v488, 5
  %v517 = vsel %vm510, %v515, %v516
  %v518 = vrot.slane %v516, 4
  %v519 = vrot.slane %v489, 5
  %v520 = vsel %vm510, %v518, %v519
  %v521 = vrot.slane %v519, 4
  %v522 = vrot.slane %v490, 5
  %v523 = vsel %vm510, %v521, %v522
  %v524 = vrot.slane %v522, 4
  %v525 = vrot.slane %v491, 5
  %v526 = vsel %vm510, %v524, %v525
  %v527 = vrot.slane %v525, 4
  %v528 = vrot.slane %v492, 5
  %v529 = vsel %vm510, %v527, %v528
  %v530 = vrot.slane %v528, 4
  %v531 = vrot.slane %v493, 5
  %v532 = vsel %vm510, %v530, %v531
  %v533 = vrot.slane %v531, 4
  %v534 = vrot.slane %v494, 5
  %v535 = vsel %vm510, %v533, %v534
  %v536 = vrot.slane %v534, 4
  %v537 = vrot.slane %v495, 5
  %v538 = vsel %vm510, %v536, %v537
  %v539 = vrot.slane %v537, 4
  %v540 = vrot.slane %v496, 5
  %v541 = vsel %vm510, %v539, %v540
  %552 = vst [vmem:[#allocation2 + $0x18] sm:$0xf] %v514
  %553 = vst [vmem:[#allocation2 + $0x3c] sm:$0xf] %v517
  %554 = vst [vmem:[#allocation2 + $0x60] sm:$0xf] %v520
  %555 = vst [vmem:[#allocation2 + $0x84] sm:$0xf] %v523
  %556 = vst [vmem:[#allocation2 + $0xa8] sm:$0xf] %v526
  %557 = vst [vmem:[#allocation2 + $0xcc] sm:$0xf] %v529
  %558 = vst [vmem:[#allocation2 + $0xf0] sm:$0xf] %v532
  %559 = vst [vmem:[#allocation2 + $0x114] sm:$0xf] %v535
  %560 = vst [vmem:[#allocation2 + $0x138] sm:$0xf] %v538
  %561 = vst [vmem:[#allocation2 + $0x15c] sm:$0xf] %v541
  %v562 = vld [vmem:[%s0 + $0x34] sm:$0x8]
  %v563 = vld [vmem:[%s0 + $0x38] sm:$0xf]
  %v564 = vld [vmem:[%s0 + $0x3c] sm:$0xf]
  %v565 = vld [vmem:[%s0 + $0x40] sm:$0xf]
  %v566 = vld [vmem:[%s0 + $0x44] sm:$0xf]
  %v567 = vld [vmem:[%s0 + $0x48] sm:$0xf]
  %v568 = vld [vmem:[%s0 + $0x4c] sm:$0xf]
  %v569 = vld [vmem:[%s0 + $0x50] sm:$0xf]
  %v570 = vld [vmem:[%s0 + $0x54] sm:$0xf]
  %v571 = vld [vmem:[%s0 + $0x58] sm:$0xf]
  %v572 = vld [vmem:[%s0 + $0x5c] sm:$0x7]
  %vm584 = vcmask 1040384
  %vm585 = vcmask 1044484
  %vm586 = vmor %vm584, %vm585
  %v587 = vrot.slane %v562, 7
  %v588 = vrot.slane %v587, 4
  %v589 = vrot.slane %v563, 7
  %v590 = vsel %vm586, %v588, %v589
  %v591 = vrot.slane %v589, 4
  %v592 = vrot.slane %v564, 7
  %v593 = vsel %vm586, %v591, %v592
  %v594 = vrot.slane %v592, 4
  %v595 = vrot.slane %v565, 7
  %v596 = vsel %vm586, %v594, %v595
  %v597 = vrot.slane %v595, 4
  %v598 = vrot.slane %v566, 7
  %v599 = vsel %vm586, %v597, %v598
  %v600 = vrot.slane %v598, 4
  %v601 = vrot.slane %v567, 7
  %v602 = vsel %vm586, %v600, %v601
  %v603 = vrot.slane %v601, 4
  %v604 = vrot.slane %v568, 7
  %v605 = vsel %vm586, %v603, %v604
  %v606 = vrot.slane %v604, 4
  %v607 = vrot.slane %v569, 7
  %v608 = vsel %vm586, %v606, %v607
  %v609 = vrot.slane %v607, 4
  %v610 = vrot.slane %v570, 7
  %v611 = vsel %vm586, %v609, %v610
  %v612 = vrot.slane %v610, 4
  %v613 = vrot.slane %v571, 7
  %v614 = vsel %vm586, %v612, %v613
  %v615 = vrot.slane %v613, 4
  %v616 = vrot.slane %v572, 7
  %v617 = vsel %vm586, %v615, %v616
  %628 = vst [vmem:[#allocation2 + $0x1c] sm:$0xf] %v590
  %629 = vst [vmem:[#allocation2 + $0x40] sm:$0xf] %v593
  %630 = vst [vmem:[#allocation2 + $0x64] sm:$0xf] %v596
  %631 = vst [vmem:[#allocation2 + $0x88] sm:$0xf] %v599
  %632 = vst [vmem:[#allocation2 + $0xac] sm:$0xf] %v602
  %633 = vst [vmem:[#allocation2 + $0xd0] sm:$0xf] %v605
  %634 = vst [vmem:[#allocation2 + $0xf4] sm:$0xf] %v608
  %635 = vst [vmem:[#allocation2 + $0x118] sm:$0xf] %v611
  %636 = vst [vmem:[#allocation2 + $0x13c] sm:$0xf] %v614
  %637 = vst [vmem:[#allocation2 + $0x160] sm:$0xf] %v617
  %v638 = vld [vmem:[%s0 + $0x4] sm:$0xe]
  %v639 = vld [vmem:[%s0 + $0x8] sm:$0xf]
  %v640 = vld [vmem:[%s0 + $0xc] sm:$0xf]
  %v641 = vld [vmem:[%s0 + $0x10] sm:$0xf]
  %v642 = vld [vmem:[%s0 + $0x14] sm:$0xf]
  %v643 = vld [vmem:[%s0 + $0x18] sm:$0xf]
  %v644 = vld [vmem:[%s0 + $0x1c] sm:$0xf]
  %v645 = vld [vmem:[%s0 + $0x20] sm:$0xf]
  %v646 = vld [vmem:[%s0 + $0x24] sm:$0xf]
  %v647 = vld [vmem:[%s0 + $0x28] sm:$0xf]
  %v648 = vld [vmem:[%s0 + $0x2c] sm:$0x3]
  %vm649 = vsmask.f32 2304
  %vm650 = vsmask.f32 6416
  %vm651 = vmor %vm649, %vm650
  %v653 = vshrl.u32 %v638, 16
  %v655 = vrot.slane %v653, 5
  %v656 = vshll.u32 %v638, 16
  %v658 = vrot.slane %v656, 6
  %v659 = vor.u32 %v655, %v658
  %v660 = vrot.slane %v659, 4
  %v662 = vshrl.u32 %v639, 16
  %v664 = vrot.slane %v662, 5
  %v665 = vshll.u32 %v639, 16
  %v667 = vrot.slane %v665, 6
  %v668 = vor.u32 %v664, %v667
  %v669 = vsel %vm651, %v660, %v668
  %v670 = vrot.slane %v668, 4
  %v672 = vshrl.u32 %v640, 16
  %v674 = vrot.slane %v672, 5
  %v675 = vshll.u32 %v640, 16
  %v677 = vrot.slane %v675, 6
  %v678 = vor.u32 %v674, %v677
  %v679 = vsel %vm651, %v670, %v678
  %v680 = vrot.slane %v678, 4
  %v682 = vshrl.u32 %v641, 16
  %v684 = vrot.slane %v682, 5
  %v685 = vshll.u32 %v641, 16
  %v687 = vrot.slane %v685, 6
  %v688 = vor.u32 %v684, %v687
  %v689 = vsel %vm651, %v680, %v688
  %v690 = vrot.slane %v688, 4
  %v692 = vshrl.u32 %v642, 16
  %v694 = vrot.slane %v692, 5
  %v695 = vshll.u32 %v642, 16
  %v697 = vrot.slane %v695, 6
  %v698 = vor.u32 %v694, %v697
  %v699 = vsel %vm651, %v690, %v698
  %v700 = vrot.slane %v698, 4
  %v702 = vshrl.u32 %v643, 16
  %v704 = vrot.slane %v702, 5
  %v705 = vshll.u32 %v643, 16
  %v707 = vrot.slane %v705, 6
  %v708 = vor.u32 %v704, %v707
  %v709 = vsel %vm651, %v700, %v708
  %v710 = vrot.slane %v708, 4
  %v712 = vshrl.u32 %v644, 16
  %v714 = vrot.slane %v712, 5
  %v715 = vshll.u32 %v644, 16
  %v717 = vrot.slane %v715, 6
  %v718 = vor.u32 %v714, %v717
  %v719 = vsel %vm651, %v710, %v718
  %v720 = vrot.slane %v718, 4
  %v722 = vshrl.u32 %v645, 16
  %v724 = vrot.slane %v722, 5
  %v725 = vshll.u32 %v645, 16
  %v727 = vrot.slane %v725, 6
  %v728 = vor.u32 %v724, %v727
  %v729 = vsel %vm651, %v720, %v728
  %v730 = vrot.slane %v728, 4
  %v732 = vshrl.u32 %v646, 16
  %v734 = vrot.slane %v732, 5
  %v735 = vshll.u32 %v646, 16
  %v737 = vrot.slane %v735, 6
  %v738 = vor.u32 %v734, %v737
  %v739 = vsel %vm651, %v730, %v738
  %v740 = vrot.slane %v738, 4
  %v742 = vshrl.u32 %v647, 16
  %v744 = vrot.slane %v742, 5
  %v745 = vshll.u32 %v647, 16
  %v747 = vrot.slane %v745, 6
  %v748 = vor.u32 %v744, %v747
  %v749 = vsel %vm651, %v740, %v748
  %v750 = vrot.slane %v748, 4
  %v752 = vshrl.u32 %v648, 16
  %v754 = vrot.slane %v752, 5
  %v755 = vshll.u32 %v648, 16
  %v757 = vrot.slane %v755, 6
  %v758 = vor.u32 %v754, %v757
  %v759 = vsel %vm651, %v750, %v758
  %770 = vst [vmem:[#allocation2 + $0x20] sm:$0xf] %v669
  %771 = vst [vmem:[#allocation2 + $0x44] sm:$0xf] %v679
  %772 = vst [vmem:[#allocation2 + $0x68] sm:$0xf] %v689
  %773 = vst [vmem:[#allocation2 + $0x8c] sm:$0xf] %v699
  %774 = vst [vmem:[#allocation2 + $0xb0] sm:$0xf] %v709
  %775 = vst [vmem:[#allocation2 + $0xd4] sm:$0xf] %v719
  %776 = vst [vmem:[#allocation2 + $0xf8] sm:$0xf] %v729
  %777 = vst [vmem:[#allocation2 + $0x11c] sm:$0xf] %v739
  %778 = vst [vmem:[#allocation2 + $0x140] sm:$0xf] %v749
  %779 = vst [vmem:[#allocation2 + $0x164] sm:$0xf] %v759
  %s780 = scalar_lea.vmem %s0, 200
  %v781 = vld [vmem:[%s780] sm:$0xf]
  %v782 = vld [vmem:[%s780 + $0x4] sm:$0xf]
  %v783 = vld [vmem:[%s780 + $0x8] sm:$0xf]
  %v784 = vld [vmem:[%s780 + $0xc] sm:$0xf]
  %v785 = vld [vmem:[%s780 + $0x10] sm:$0xf]
  %v786 = vld [vmem:[%s780 + $0x14] sm:$0xf]
  %v787 = vld [vmem:[%s780 + $0x18] sm:$0xf]
  %v788 = vld [vmem:[%s780 + $0x1c] sm:$0xf]
  %v789 = vld [vmem:[%s780 + $0x20] sm:$0xf]
  %v790 = vld [vmem:[%s780 + $0x24] sm:$0xf]
  %791 = vst [vmem:[#allocation2 + $0x168] sm:$0xf] %v781
  %792 = vst [vmem:[#allocation2 + $0x18c] sm:$0xf] %v782
  %793 = vst [vmem:[#allocation2 + $0x1b0] sm:$0xf] %v783
  %794 = vst [vmem:[#allocation2 + $0x1d4] sm:$0xf] %v784
  %795 = vst [vmem:[#allocation2 + $0x1f8] sm:$0xf] %v785
  %796 = vst [vmem:[#allocation2 + $0x21c] sm:$0xf] %v786
  %797 = vst [vmem:[#allocation2 + $0x240] sm:$0xf] %v787
  %798 = vst [vmem:[#allocation2 + $0x264] sm:$0xf] %v788
  %799 = vst [vmem:[#allocation2 + $0x288] sm:$0xf] %v789
  %800 = vst [vmem:[#allocation2 + $0x2ac] sm:$0xf] %v790
  %v801 = vld [vmem:[%s780 + $0x30] sm:$0xc]
  %v802 = vld [vmem:[%s780 + $0x34] sm:$0xf]
  %v803 = vld [vmem:[%s780 + $0x38] sm:$0xf]
  %v804 = vld [vmem:[%s780 + $0x3c] sm:$0xf]
  %v805 = vld [vmem:[%s780 + $0x40] sm:$0xf]
  %v806 = vld [vmem:[%s780 + $0x44] sm:$0xf]
  %v807 = vld [vmem:[%s780 + $0x48] sm:$0xf]
  %v808 = vld [vmem:[%s780 + $0x4c] sm:$0xf]
  %v809 = vld [vmem:[%s780 + $0x50] sm:$0xf]
  %v810 = vld [vmem:[%s780 + $0x54] sm:$0xf]
  %v811 = vld [vmem:[%s780 + $0x58] sm:$0x3]
  %v823 = vrot.slane %v801, 6
  %v824 = vrot.slane %v823, 4
  %v825 = vrot.slane %v802, 6
  %v826 = vsel %vm68, %v824, %v825
  %v827 = vrot.slane %v825, 4
  %v828 = vrot.slane %v803, 6
  %v829 = vsel %vm68, %v827, %v828
  %v830 = vrot.slane %v828, 4
  %v831 = vrot.slane %v804, 6
  %v832 = vsel %vm68, %v830, %v831
  %v833 = vrot.slane %v831, 4
  %v834 = vrot.slane %v805, 6
  %v835 = vsel %vm68, %v833, %v834
  %v836 = vrot.slane %v834, 4
  %v837 = vrot.slane %v806, 6
  %v838 = vsel %vm68, %v836, %v837
  %v839 = vrot.slane %v837, 4
  %v840 = vrot.slane %v807, 6
  %v841 = vsel %vm68, %v839, %v840
  %v842 = vrot.slane %v840, 4
  %v843 = vrot.slane %v808, 6
  %v844 = vsel %vm68, %v842, %v843
  %v845 = vrot.slane %v843, 4
  %v846 = vrot.slane %v809, 6
  %v847 = vsel %vm68, %v845, %v846
  %v848 = vrot.slane %v846, 4
  %v849 = vrot.slane %v810, 6
  %v850 = vsel %vm68, %v848, %v849
  %v851 = vrot.slane %v849, 4
  %v852 = vrot.slane %v811, 6
  %v853 = vsel %vm68, %v851, %v852
  %864 = vst [vmem:[#allocation2 + $0x16c] sm:$0xf] %v826
  %865 = vst [vmem:[#allocation2 + $0x190] sm:$0xf] %v829
  %866 = vst [vmem:[#allocation2 + $0x1b4] sm:$0xf] %v832
  %867 = vst [vmem:[#allocation2 + $0x1d8] sm:$0xf] %v835
  %868 = vst [vmem:[#allocation2 + $0x1fc] sm:$0xf] %v838
  %869 = vst [vmem:[#allocation2 + $0x220] sm:$0xf] %v841
  %870 = vst [vmem:[#allocation2 + $0x244] sm:$0xf] %v844
  %871 = vst [vmem:[#allocation2 + $0x268] sm:$0xf] %v847
  %872 = vst [vmem:[#allocation2 + $0x28c] sm:$0xf] %v850
  %873 = vst [vmem:[#allocation2 + $0x2b0] sm:$0xf] %v853
  %v874 = vld [vmem:[%s780] sm:$0xf]
  %v875 = vld [vmem:[%s780 + $0x4] sm:$0xf]
  %v876 = vld [vmem:[%s780 + $0x8] sm:$0xf]
  %v877 = vld [vmem:[%s780 + $0xc] sm:$0xf]
  %v878 = vld [vmem:[%s780 + $0x10] sm:$0xf]
  %v879 = vld [vmem:[%s780 + $0x14] sm:$0xf]
  %v880 = vld [vmem:[%s780 + $0x18] sm:$0xf]
  %v881 = vld [vmem:[%s780 + $0x1c] sm:$0xf]
  %v882 = vld [vmem:[%s780 + $0x20] sm:$0xf]
  %v883 = vld [vmem:[%s780 + $0x24] sm:$0xf]
  %v884 = vld [vmem:[%s780 + $0x28] sm:$0x1]
  %v886 = vshrl.u32 %v874, 16
  %v888 = vrot.slane %v886, 4
  %v889 = vshll.u32 %v874, 16
  %v891 = vrot.slane %v889, 5
  %v892 = vor.u32 %v888, %v891
  %v893 = vrot.slane %v892, 4
  %v895 = vshll.u32 %v875, 16
  %v897 = vrot.slane %v895, 5
  %v898 = vsel %vm133, %v893, %v897
  %v899 = vshrl.u32 %v875, 16
  %v901 = vrot.slane %v899, 4
  %v902 = vor.u32 %v901, %v897
  %v903 = vrot.slane %v902, 4
  %v905 = vshll.u32 %v876, 16
  %v907 = vrot.slane %v905, 5
  %v908 = vsel %vm133, %v903, %v907
  %v909 = vshrl.u32 %v876, 16
  %v911 = vrot.slane %v909, 4
  %v912 = vor.u32 %v911, %v907
  %v913 = vrot.slane %v912, 4
  %v915 = vshll.u32 %v877, 16
  %v917 = vrot.slane %v915, 5
  %v918 = vsel %vm133, %v913, %v917
  %v919 = vshrl.u32 %v877, 16
  %v921 = vrot.slane %v919, 4
  %v922 = vor.u32 %v921, %v917
  %v923 = vrot.slane %v922, 4
  %v925 = vshll.u32 %v878, 16
  %v927 = vrot.slane %v925, 5
  %v928 = vsel %vm133, %v923, %v927
  %v929 = vshrl.u32 %v878, 16
  %v931 = vrot.slane %v929, 4
  %v932 = vor.u32 %v931, %v927
  %v933 = vrot.slane %v932, 4
  %v935 = vshll.u32 %v879, 16
  %v937 = vrot.slane %v935, 5
  %v938 = vsel %vm133, %v933, %v937
  %v939 = vshrl.u32 %v879, 16
  %v941 = vrot.slane %v939, 4
  %v942 = vor.u32 %v941, %v937
  %v943 = vrot.slane %v942, 4
  %v945 = vshll.u32 %v880, 16
  %v947 = vrot.slane %v945, 5
  %v948 = vsel %vm133, %v943, %v947
  %v949 = vshrl.u32 %v880, 16
  %v951 = vrot.slane %v949, 4
  %v952 = vor.u32 %v951, %v947
  %v953 = vrot.slane %v952, 4
  %v955 = vshll.u32 %v881, 16
  %v957 = vrot.slane %v955, 5
  %v958 = vsel %vm133, %v953, %v957
  %v959 = vshrl.u32 %v881, 16
  %v961 = vrot.slane %v959, 4
  %v962 = vor.u32 %v961, %v957
  %v963 = vrot.slane %v962, 4
  %v965 = vshll.u32 %v882, 16
  %v967 = vrot.slane %v965, 5
  %v968 = vsel %vm133, %v963, %v967
  %v969 = vshrl.u32 %v882, 16
  %v971 = vrot.slane %v969, 4
  %v972 = vor.u32 %v971, %v967
  %v973 = vrot.slane %v972, 4
  %v975 = vshll.u32 %v883, 16
  %v977 = vrot.slane %v975, 5
  %v978 = vsel %vm133, %v973, %v977
  %v979 = vshrl.u32 %v883, 16
  %v981 = vrot.slane %v979, 4
  %v982 = vor.u32 %v981, %v977
  %v983 = vrot.slane %v982, 4
  %v985 = vshll.u32 %v884, 16
  %v987 = vrot.slane %v985, 5
  %v988 = vsel %vm133, %v983, %v987
  %999 = vst [vmem:[#allocation2 + $0x170] sm:$0xf] %v898
  %1000 = vst [vmem:[#allocation2 + $0x194] sm:$0xf] %v908
  %1001 = vst [vmem:[#allocation2 + $0x1b8] sm:$0xf] %v918
  %1002 = vst [vmem:[#allocation2 + $0x1dc] sm:$0xf] %v928
  %1003 = vst [vmem:[#allocation2 + $0x200] sm:$0xf] %v938
  %1004 = vst [vmem:[#allocation2 + $0x224] sm:$0xf] %v948
  %1005 = vst [vmem:[#allocation2 + $0x248] sm:$0xf] %v958
  %1006 = vst [vmem:[#allocation2 + $0x26c] sm:$0xf] %v968
  %1007 = vst [vmem:[#allocation2 + $0x290] sm:$0xf] %v978
  %1008 = vst [vmem:[#allocation2 + $0x2b4] sm:$0xf] %v988
  %v1009 = vld [vmem:[%s780 + $0x64] sm:$0xf]
  %v1010 = vld [vmem:[%s780 + $0x68] sm:$0xf]
  %v1011 = vld [vmem:[%s780 + $0x6c] sm:$0xf]
  %v1012 = vld [vmem:[%s780 + $0x70] sm:$0xf]
  %v1013 = vld [vmem:[%s780 + $0x74] sm:$0xf]
  %v1014 = vld [vmem:[%s780 + $0x78] sm:$0xf]
  %v1015 = vld [vmem:[%s780 + $0x7c] sm:$0xf]
  %v1016 = vld [vmem:[%s780 + $0x80] sm:$0xf]
  %v1017 = vld [vmem:[%s780 + $0x84] sm:$0xf]
  %v1018 = vld [vmem:[%s780 + $0x88] sm:$0xf]
  %1019 = vst [vmem:[#allocation2 + $0x174] sm:$0xf] %v1009
  %1020 = vst [vmem:[#allocation2 + $0x198] sm:$0xf] %v1010
  %1021 = vst [vmem:[#allocation2 + $0x1bc] sm:$0xf] %v1011
  %1022 = vst [vmem:[#allocation2 + $0x1e0] sm:$0xf] %v1012
  %1023 = vst [vmem:[#allocation2 + $0x204] sm:$0xf] %v1013
  %1024 = vst [vmem:[#allocation2 + $0x228] sm:$0xf] %v1014
  %1025 = vst [vmem:[#allocation2 + $0x24c] sm:$0xf] %v1015
  %1026 = vst [vmem:[#allocation2 + $0x270] sm:$0xf] %v1016
  %1027 = vst [vmem:[#allocation2 + $0x294] sm:$0xf] %v1017
  %1028 = vst [vmem:[#allocation2 + $0x2b8] sm:$0xf] %v1018
  %v1029 = vld [vmem:[%s780 + $0x94] sm:$0xc]
  %v1030 = vld [vmem:[%s780 + $0x98] sm:$0xf]
  %v1031 = vld [vmem:[%s780 + $0x9c] sm:$0xf]
  %v1032 = vld [vmem:[%s780 + $0xa0] sm:$0xf]
  %v1033 = vld [vmem:[%s780 + $0xa4] sm:$0xf]
  %v1034 = vld [vmem:[%s780 + $0xa8] sm:$0xf]
  %v1035 = vld [vmem:[%s780 + $0xac] sm:$0xf]
  %v1036 = vld [vmem:[%s780 + $0xb0] sm:$0xf]
  %v1037 = vld [vmem:[%s780 + $0xb4] sm:$0xf]
  %v1038 = vld [vmem:[%s780 + $0xb8] sm:$0xf]
  %v1039 = vld [vmem:[%s780 + $0xbc] sm:$0x3]
  %v1051 = vrot.slane %v1029, 6
  %v1052 = vrot.slane %v1051, 4
  %v1053 = vrot.slane %v1030, 6
  %v1054 = vsel %vm68, %v1052, %v1053
  %v1055 = vrot.slane %v1053, 4
  %v1056 = vrot.slane %v1031, 6
  %v1057 = vsel %vm68, %v1055, %v1056
  %v1058 = vrot.slane %v1056, 4
  %v1059 = vrot.slane %v1032, 6
  %v1060 = vsel %vm68, %v1058, %v1059
  %v1061 = vrot.slane %v1059, 4
  %v1062 = vrot.slane %v1033, 6
  %v1063 = vsel %vm68, %v1061, %v1062
  %v1064 = vrot.slane %v1062, 4
  %v1065 = vrot.slane %v1034, 6
  %v1066 = vsel %vm68, %v1064, %v1065
  %v1067 = vrot.slane %v1065, 4
  %v1068 = vrot.slane %v1035, 6
  %v1069 = vsel %vm68, %v1067, %v1068
  %v1070 = vrot.slane %v1068, 4
  %v1071 = vrot.slane %v1036, 6
  %v1072 = vsel %vm68, %v1070, %v1071
  %v1073 = vrot.slane %v1071, 4
  %v1074 = vrot.slane %v1037, 6
  %v1075 = vsel %vm68, %v1073, %v1074
  %v1076 = vrot.slane %v1074, 4
  %v1077 = vrot.slane %v1038, 6
  %v1078 = vsel %vm68, %v1076, %v1077
  %v1079 = vrot.slane %v1077, 4
  %v1080 = vrot.slane %v1039, 6
  %v1081 = vsel %vm68, %v1079, %v1080
  %1092 = vst [vmem:[#allocation2 + $0x178] sm:$0xf] %v1054
  %1093 = vst [vmem:[#allocation2 + $0x19c] sm:$0xf] %v1057
  %1094 = vst [vmem:[#allocation2 + $0x1c0] sm:$0xf] %v1060
  %1095 = vst [vmem:[#allocation2 + $0x1e4] sm:$0xf] %v1063
  %1096 = vst [vmem:[#allocation2 + $0x208] sm:$0xf] %v1066
  %1097 = vst [vmem:[#allocation2 + $0x22c] sm:$0xf] %v1069
  %1098 = vst [vmem:[#allocation2 + $0x250] sm:$0xf] %v1072
  %1099 = vst [vmem:[#allocation2 + $0x274] sm:$0xf] %v1075
  %1100 = vst [vmem:[#allocation2 + $0x298] sm:$0xf] %v1078
  %1101 = vst [vmem:[#allocation2 + $0x2bc] sm:$0xf] %v1081
  %v1102 = vld [vmem:[%s780 + $0x64] sm:$0xf]
  %v1103 = vld [vmem:[%s780 + $0x68] sm:$0xf]
  %v1104 = vld [vmem:[%s780 + $0x6c] sm:$0xf]
  %v1105 = vld [vmem:[%s780 + $0x70] sm:$0xf]
  %v1106 = vld [vmem:[%s780 + $0x74] sm:$0xf]
  %v1107 = vld [vmem:[%s780 + $0x78] sm:$0xf]
  %v1108 = vld [vmem:[%s780 + $0x7c] sm:$0xf]
  %v1109 = vld [vmem:[%s780 + $0x80] sm:$0xf]
  %v1110 = vld [vmem:[%s780 + $0x84] sm:$0xf]
  %v1111 = vld [vmem:[%s780 + $0x88] sm:$0xf]
  %v1112 = vld [vmem:[%s780 + $0x8c] sm:$0x1]
  %v1114 = vshrl.u32 %v1102, 16
  %v1116 = vrot.slane %v1114, 4
  %v1117 = vshll.u32 %v1102, 16
  %v1119 = vrot.slane %v1117, 5
  %v1120 = vor.u32 %v1116, %v1119
  %v1121 = vrot.slane %v1120, 4
  %v1123 = vshll.u32 %v1103, 16
  %v1125 = vrot.slane %v1123, 5
  %v1126 = vsel %vm133, %v1121, %v1125
  %v1127 = vshrl.u32 %v1103, 16
  %v1129 = vrot.slane %v1127, 4
  %v1130 = vor.u32 %v1129, %v1125
  %v1131 = vrot.slane %v1130, 4
  %v1133 = vshll.u32 %v1104, 16
  %v1135 = vrot.slane %v1133, 5
  %v1136 = vsel %vm133, %v1131, %v1135
  %v1137 = vshrl.u32 %v1104, 16
  %v1139 = vrot.slane %v1137, 4
  %v1140 = vor.u32 %v1139, %v1135
  %v1141 = vrot.slane %v1140, 4
  %v1143 = vshll.u32 %v1105, 16
  %v1145 = vrot.slane %v1143, 5
  %v1146 = vsel %vm133, %v1141, %v1145
  %v1147 = vshrl.u32 %v1105, 16
  %v1149 = vrot.slane %v1147, 4
  %v1150 = vor.u32 %v1149, %v1145
  %v1151 = vrot.slane %v1150, 4
  %v1153 = vshll.u32 %v1106, 16
  %v1155 = vrot.slane %v1153, 5
  %v1156 = vsel %vm133, %v1151, %v1155
  %v1157 = vshrl.u32 %v1106, 16
  %v1159 = vrot.slane %v1157, 4
  %v1160 = vor.u32 %v1159, %v1155
  %v1161 = vrot.slane %v1160, 4
  %v1163 = vshll.u32 %v1107, 16
  %v1165 = vrot.slane %v1163, 5
  %v1166 = vsel %vm133, %v1161, %v1165
  %v1167 = vshrl.u32 %v1107, 16
  %v1169 = vrot.slane %v1167, 4
  %v1170 = vor.u32 %v1169, %v1165
  %v1171 = vrot.slane %v1170, 4
  %v1173 = vshll.u32 %v1108, 16
  %v1175 = vrot.slane %v1173, 5
  %v1176 = vsel %vm133, %v1171, %v1175
  %v1177 = vshrl.u32 %v1108, 16
  %v1179 = vrot.slane %v1177, 4
  %v1180 = vor.u32 %v1179, %v1175
  %v1181 = vrot.slane %v1180, 4
  %v1183 = vshll.u32 %v1109, 16
  %v1185 = vrot.slane %v1183, 5
  %v1186 = vsel %vm133, %v1181, %v1185
  %v1187 = vshrl.u32 %v1109, 16
  %v1189 = vrot.slane %v1187, 4
  %v1190 = vor.u32 %v1189, %v1185
  %v1191 = vrot.slane %v1190, 4
  %v1193 = vshll.u32 %v1110, 16
  %v1195 = vrot.slane %v1193, 5
  %v1196 = vsel %vm133, %v1191, %v1195
  %v1197 = vshrl.u32 %v1110, 16
  %v1199 = vrot.slane %v1197, 4
  %v1200 = vor.u32 %v1199, %v1195
  %v1201 = vrot.slane %v1200, 4
  %v1203 = vshll.u32 %v1111, 16
  %v1205 = vrot.slane %v1203, 5
  %v1206 = vsel %vm133, %v1201, %v1205
  %v1207 = vshrl.u32 %v1111, 16
  %v1209 = vrot.slane %v1207, 4
  %v1210 = vor.u32 %v1209, %v1205
  %v1211 = vrot.slane %v1210, 4
  %v1213 = vshll.u32 %v1112, 16
  %v1215 = vrot.slane %v1213, 5
  %v1216 = vsel %vm133, %v1211, %v1215
  %1227 = vst [vmem:[#allocation2 + $0x17c] sm:$0xf] %v1126
  %1228 = vst [vmem:[#allocation2 + $0x1a0] sm:$0xf] %v1136
  %1229 = vst [vmem:[#allocation2 + $0x1c4] sm:$0xf] %v1146
  %1230 = vst [vmem:[#allocation2 + $0x1e8] sm:$0xf] %v1156
  %1231 = vst [vmem:[#allocation2 + $0x20c] sm:$0xf] %v1166
  %1232 = vst [vmem:[#allocation2 + $0x230] sm:$0xf] %v1176
  %1233 = vst [vmem:[#allocation2 + $0x254] sm:$0xf] %v1186
  %1234 = vst [vmem:[#allocation2 + $0x278] sm:$0xf] %v1196
  %1235 = vst [vmem:[#allocation2 + $0x29c] sm:$0xf] %v1206
  %1236 = vst [vmem:[#allocation2 + $0x2c0] sm:$0xf] %v1216
  %v1237 = vld [vmem:[%s780 + $0x4] sm:$0xe]
  %v1238 = vld [vmem:[%s780 + $0x8] sm:$0xf]
  %v1239 = vld [vmem:[%s780 + $0xc] sm:$0xf]
  %v1240 = vld [vmem:[%s780 + $0x10] sm:$0xf]
  %v1241 = vld [vmem:[%s780 + $0x14] sm:$0xf]
  %v1242 = vld [vmem:[%s780 + $0x18] sm:$0xf]
  %v1243 = vld [vmem:[%s780 + $0x1c] sm:$0xf]
  %v1244 = vld [vmem:[%s780 + $0x20] sm:$0xf]
  %v1245 = vld [vmem:[%s780 + $0x24] sm:$0xf]
  %v1246 = vld [vmem:[%s780 + $0x28] sm:$0xf]
  %v1247 = vld [vmem:[%s780 + $0x2c] sm:$0x1]
  %v1259 = vrot.slane %v1237, 5
  %v1260 = vrot.slane %v1259, 4
  %v1261 = vrot.slane %v1238, 5
  %v1262 = vsel %vm510, %v1260, %v1261
  %v1263 = vrot.slane %v1261, 4
  %v1264 = vrot.slane %v1239, 5
  %v1265 = vsel %vm510, %v1263, %v1264
  %v1266 = vrot.slane %v1264, 4
  %v1267 = vrot.slane %v1240, 5
  %v1268 = vsel %vm510, %v1266, %v1267
  %v1269 = vrot.slane %v1267, 4
  %v1270 = vrot.slane %v1241, 5
  %v1271 = vsel %vm510, %v1269, %v1270
  %v1272 = vrot.slane %v1270, 4
  %v1273 = vrot.slane %v1242, 5
  %v1274 = vsel %vm510, %v1272, %v1273
  %v1275 = vrot.slane %v1273, 4
  %v1276 = vrot.slane %v1243, 5
  %v1277 = vsel %vm510, %v1275, %v1276
  %v1278 = vrot.slane %v1276, 4
  %v1279 = vrot.slane %v1244, 5
  %v1280 = vsel %vm510, %v1278, %v1279
  %v1281 = vrot.slane %v1279, 4
  %v1282 = vrot.slane %v1245, 5
  %v1283 = vsel %vm510, %v1281, %v1282
  %v1284 = vrot.slane %v1282, 4
  %v1285 = vrot.slane %v1246, 5
  %v1286 = vsel %vm510, %v1284, %v1285
  %v1287 = vrot.slane %v1285, 4
  %v1288 = vrot.slane %v1247, 5
  %v1289 = vsel %vm510, %v1287, %v1288
  %1300 = vst [vmem:[#allocation2 + $0x180] sm:$0xf] %v1262
  %1301 = vst [vmem:[#allocation2 + $0x1a4] sm:$0xf] %v1265
  %1302 = vst [vmem:[#allocation2 + $0x1c8] sm:$0xf] %v1268
  %1303 = vst [vmem:[#allocation2 + $0x1ec] sm:$0xf] %v1271
  %1304 = vst [vmem:[#allocation2 + $0x210] sm:$0xf] %v1274
  %1305 = vst [vmem:[#allocation2 + $0x234] sm:$0xf] %v1277
  %1306 = vst [vmem:[#allocation2 + $0x258] sm:$0xf] %v1280
  %1307 = vst [vmem:[#allocation2 + $0x27c] sm:$0xf] %v1283
  %1308 = vst [vmem:[#allocation2 + $0x2a0] sm:$0xf] %v1286
  %1309 = vst [vmem:[#allocation2 + $0x2c4] sm:$0xf] %v1289
  %v1310 = vld [vmem:[%s780 + $0x34] sm:$0x8]
  %v1311 = vld [vmem:[%s780 + $0x38] sm:$0xf]
  %v1312 = vld [vmem:[%s780 + $0x3c] sm:$0xf]
  %v1313 = vld [vmem:[%s780 + $0x40] sm:$0xf]
  %v1314 = vld [vmem:[%s780 + $0x44] sm:$0xf]
  %v1315 = vld [vmem:[%s780 + $0x48] sm:$0xf]
  %v1316 = vld [vmem:[%s780 + $0x4c] sm:$0xf]
  %v1317 = vld [vmem:[%s780 + $0x50] sm:$0xf]
  %v1318 = vld [vmem:[%s780 + $0x54] sm:$0xf]
  %v1319 = vld [vmem:[%s780 + $0x58] sm:$0xf]
  %v1320 = vld [vmem:[%s780 + $0x5c] sm:$0x7]
  %v1332 = vrot.slane %v1310, 7
  %v1333 = vrot.slane %v1332, 4
  %v1334 = vrot.slane %v1311, 7
  %v1335 = vsel %vm586, %v1333, %v1334
  %v1336 = vrot.slane %v1334, 4
  %v1337 = vrot.slane %v1312, 7
  %v1338 = vsel %vm586, %v1336, %v1337
  %v1339 = vrot.slane %v1337, 4
  %v1340 = vrot.slane %v1313, 7
  %v1341 = vsel %vm586, %v1339, %v1340
  %v1342 = vrot.slane %v1340, 4
  %v1343 = vrot.slane %v1314, 7
  %v1344 = vsel %vm586, %v1342, %v1343
  %v1345 = vrot.slane %v1343, 4
  %v1346 = vrot.slane %v1315, 7
  %v1347 = vsel %vm586, %v1345, %v1346
  %v1348 = vrot.slane %v1346, 4
  %v1349 = vrot.slane %v1316, 7
  %v1350 = vsel %vm586, %v1348, %v1349
  %v1351 = vrot.slane %v1349, 4
  %v1352 = vrot.slane %v1317, 7
  %v1353 = vsel %vm586, %v1351, %v1352
  %v1354 = vrot.slane %v1352, 4
  %v1355 = vrot.slane %v1318, 7
  %v1356 = vsel %vm586, %v1354, %v1355
  %v1357 = vrot.slane %v1355, 4
  %v1358 = vrot.slane %v1319, 7
  %v1359 = vsel %vm586, %v1357, %v1358
  %v1360 = vrot.slane %v1358, 4
  %v1361 = vrot.slane %v1320, 7
  %v1362 = vsel %vm586, %v1360, %v1361
  %1373 = vst [vmem:[#allocation2 + $0x184] sm:$0xf] %v1335
  %1374 = vst [vmem:[#allocation2 + $0x1a8] sm:$0xf] %v1338
  %1375 = vst [vmem:[#allocation2 + $0x1cc] sm:$0xf] %v1341
  %1376 = vst [vmem:[#allocation2 + $0x1f0] sm:$0xf] %v1344
  %1377 = vst [vmem:[#allocation2 + $0x214] sm:$0xf] %v1347
  %1378 = vst [vmem:[#allocation2 + $0x238] sm:$0xf] %v1350
  %1379 = vst [vmem:[#allocation2 + $0x25c] sm:$0xf] %v1353
  %1380 = vst [vmem:[#allocation2 + $0x280] sm:$0xf] %v1356
  %1381 = vst [vmem:[#allocation2 + $0x2a4] sm:$0xf] %v1359
  %1382 = vst [vmem:[#allocation2 + $0x2c8] sm:$0xf] %v1362
  %v1383 = vld [vmem:[%s780 + $0x4] sm:$0xe]
  %v1384 = vld [vmem:[%s780 + $0x8] sm:$0xf]
  %v1385 = vld [vmem:[%s780 + $0xc] sm:$0xf]
  %v1386 = vld [vmem:[%s780 + $0x10] sm:$0xf]
  %v1387 = vld [vmem:[%s780 + $0x14] sm:$0xf]
  %v1388 = vld [vmem:[%s780 + $0x18] sm:$0xf]
  %v1389 = vld [vmem:[%s780 + $0x1c] sm:$0xf]
  %v1390 = vld [vmem:[%s780 + $0x20] sm:$0xf]
  %v1391 = vld [vmem:[%s780 + $0x24] sm:$0xf]
  %v1392 = vld [vmem:[%s780 + $0x28] sm:$0xf]
  %v1393 = vld [vmem:[%s780 + $0x2c] sm:$0x3]
  %v1395 = vshrl.u32 %v1383, 16
  %v1397 = vrot.slane %v1395, 5
  %v1398 = vshll.u32 %v1383, 16
  %v1400 = vrot.slane %v1398, 6
  %v1401 = vor.u32 %v1397, %v1400
  %v1402 = vrot.slane %v1401, 4
  %v1404 = vshrl.u32 %v1384, 16
  %v1406 = vrot.slane %v1404, 5
  %v1407 = vshll.u32 %v1384, 16
  %v1409 = vrot.slane %v1407, 6
  %v1410 = vor.u32 %v1406, %v1409
  %v1411 = vsel %vm651, %v1402, %v1410
  %v1412 = vrot.slane %v1410, 4
  %v1414 = vshrl.u32 %v1385, 16
  %v1416 = vrot.slane %v1414, 5
  %v1417 = vshll.u32 %v1385, 16
  %v1419 = vrot.slane %v1417, 6
  %v1420 = vor.u32 %v1416, %v1419
  %v1421 = vsel %vm651, %v1412, %v1420
  %v1422 = vrot.slane %v1420, 4
  %v1424 = vshrl.u32 %v1386, 16
  %v1426 = vrot.slane %v1424, 5
  %v1427 = vshll.u32 %v1386, 16
  %v1429 = vrot.slane %v1427, 6
  %v1430 = vor.u32 %v1426, %v1429
  %v1431 = vsel %vm651, %v1422, %v1430
  %v1432 = vrot.slane %v1430, 4
  %v1434 = vshrl.u32 %v1387, 16
  %v1436 = vrot.slane %v1434, 5
  %v1437 = vshll.u32 %v1387, 16
  %v1439 = vrot.slane %v1437, 6
  %v1440 = vor.u32 %v1436, %v1439
  %v1441 = vsel %vm651, %v1432, %v1440
  %v1442 = vrot.slane %v1440, 4
  %v1444 = vshrl.u32 %v1388, 16
  %v1446 = vrot.slane %v1444, 5
  %v1447 = vshll.u32 %v1388, 16
  %v1449 = vrot.slane %v1447, 6
  %v1450 = vor.u32 %v1446, %v1449
  %v1451 = vsel %vm651, %v1442, %v1450
  %v1452 = vrot.slane %v1450, 4
  %v1454 = vshrl.u32 %v1389, 16
  %v1456 = vrot.slane %v1454, 5
  %v1457 = vshll.u32 %v1389, 16
  %v1459 = vrot.slane %v1457, 6
  %v1460 = vor.u32 %v1456, %v1459
  %v1461 = vsel %vm651, %v1452, %v1460
  %v1462 = vrot.slane %v1460, 4
  %v1464 = vshrl.u32 %v1390, 16
  %v1466 = vrot.slane %v1464, 5
  %v1467 = vshll.u32 %v1390, 16
  %v1469 = vrot.slane %v1467, 6
  %v1470 = vor.u32 %v1466, %v1469
  %v1471 = vsel %vm651, %v1462, %v1470
  %v1472 = vrot.slane %v1470, 4
  %v1474 = vshrl.u32 %v1391, 16
  %v1476 = vrot.slane %v1474, 5
  %v1477 = vshll.u32 %v1391, 16
  %v1479 = vrot.slane %v1477, 6
  %v1480 = vor.u32 %v1476, %v1479
  %v1481 = vsel %vm651, %v1472, %v1480
  %v1482 = vrot.slane %v1480, 4
  %v1484 = vshrl.u32 %v1392, 16
  %v1486 = vrot.slane %v1484, 5
  %v1487 = vshll.u32 %v1392, 16
  %v1489 = vrot.slane %v1487, 6
  %v1490 = vor.u32 %v1486, %v1489
  %v1491 = vsel %vm651, %v1482, %v1490
  %v1492 = vrot.slane %v1490, 4
  %v1494 = vshrl.u32 %v1393, 16
  %v1496 = vrot.slane %v1494, 5
  %v1497 = vshll.u32 %v1393, 16
  %v1499 = vrot.slane %v1497, 6
  %v1500 = vor.u32 %v1496, %v1499
  %v1501 = vsel %vm651, %v1492, %v1500
  %1512 = vst [vmem:[#allocation2 + $0x188] sm:$0xf] %v1411
  %1513 = vst [vmem:[#allocation2 + $0x1ac] sm:$0xf] %v1421
  %1514 = vst [vmem:[#allocation2 + $0x1d0] sm:$0xf] %v1431
  %1515 = vst [vmem:[#allocation2 + $0x1f4] sm:$0xf] %v1441
  %1516 = vst [vmem:[#allocation2 + $0x218] sm:$0xf] %v1451
  %1517 = vst [vmem:[#allocation2 + $0x23c] sm:$0xf] %v1461
  %1518 = vst [vmem:[#allocation2 + $0x260] sm:$0xf] %v1471
  %1519 = vst [vmem:[#allocation2 + $0x284] sm:$0xf] %v1481
  %1520 = vst [vmem:[#allocation2 + $0x2a8] sm:$0xf] %v1491
  %1521 = vst [vmem:[#allocation2 + $0x2cc] sm:$0xf] %v1501
  %v1522 = vld [vmem:[#allocation2] sm:$0xff]
  %v1523 = vld [vmem:[#allocation2 + $0x8] sm:$0xff]
  %v1524 = vld [vmem:[#allocation2 + $0x10] sm:$0xff]
  %v1525 = vld [vmem:[#allocation2 + $0x18] sm:$0xff]
  %v1526 = vld [vmem:[#allocation2 + $0x20] sm:$0xf]
  %v1527 = vld [vmem:[#allocation2 + $0x24] sm:$0xff]
  %v1528 = vld [vmem:[#allocation2 + $0x2c] sm:$0xff]
  %v1529 = vld [vmem:[#allocation2 + $0x34] sm:$0xff]
  %v1530 = vld [vmem:[#allocation2 + $0x3c] sm:$0xff]
  %v1531 = vld [vmem:[#allocation2 + $0x44] sm:$0xf]
  %v1532 = vld [vmem:[#allocation2 + $0x48] sm:$0xff]
  %v1533 = vld [vmem:[#allocation2 + $0x50] sm:$0xff]
  %v1534 = vld [vmem:[#allocation2 + $0x58] sm:$0xff]
  %v1535 = vld [vmem:[#allocation2 + $0x60] sm:$0xff]
  %v1536 = vld [vmem:[#allocation2 + $0x68] sm:$0xf]
  %v1537 = vld [vmem:[#allocation2 + $0x6c] sm:$0xff]
  %v1538 = vld [vmem:[#allocation2 + $0x74] sm:$0xff]
  %v1539 = vld [vmem:[#allocation2 + $0x7c] sm:$0xff]
  %v1540 = vld [vmem:[#allocation2 + $0x84] sm:$0xff]
  %v1541 = vld [vmem:[#allocation2 + $0x8c] sm:$0xf]
  %v1542 = vld [vmem:[#allocation2 + $0x90] sm:$0xff]
  %v1543 = vld [vmem:[#allocation2 + $0x98] sm:$0xff]
  %v1544 = vld [vmem:[#allocation2 + $0xa0] sm:$0xff]
  %v1545 = vld [vmem:[#allocation2 + $0xa8] sm:$0xff]
  %v1546 = vld [vmem:[#allocation2 + $0xb0] sm:$0xf]
  %v1547 = vld [vmem:[#allocation2 + $0xb4] sm:$0xff]
  %v1548 = vld [vmem:[#allocation2 + $0xbc] sm:$0xff]
  %v1549 = vld [vmem:[#allocation2 + $0xc4] sm:$0xff]
  %v1550 = vld [vmem:[#allocation2 + $0xcc] sm:$0xff]
  %v1551 = vld [vmem:[#allocation2 + $0xd4] sm:$0xf]
  %v1552 = vld [vmem:[#allocation2 + $0xd8] sm:$0xff]
  %v1553 = vld [vmem:[#allocation2 + $0xe0] sm:$0xff]
  %v1554 = vld [vmem:[#allocation2 + $0xe8] sm:$0xff]
  %v1555 = vld [vmem:[#allocation2 + $0xf0] sm:$0xff]
  %v1556 = vld [vmem:[#allocation2 + $0xf8] sm:$0xf]
  %v1557 = vld [vmem:[#allocation2 + $0xfc] sm:$0xff]
  %v1558 = vld [vmem:[#allocation2 + $0x104] sm:$0xff]
  %v1559 = vld [vmem:[#allocation2 + $0x10c] sm:$0xff]
  %v1560 = vld [vmem:[#allocation2 + $0x114] sm:$0xff]
  %v1561 = vld [vmem:[#allocation2 + $0x11c] sm:$0xf]
  %v1562 = vld [vmem:[#allocation2 + $0x120] sm:$0xff]
  %v1563 = vld [vmem:[#allocation2 + $0x128] sm:$0xff]
  %v1564 = vld [vmem:[#allocation2 + $0x130] sm:$0xff]
  %v1565 = vld [vmem:[#allocation2 + $0x138] sm:$0xff]
  %v1566 = vld [vmem:[#allocation2 + $0x140] sm:$0xf]
  %v1567 = vld [vmem:[#allocation2 + $0x144] sm:$0xff]
  %v1568 = vld [vmem:[#allocation2 + $0x14c] sm:$0xff]
  %v1569 = vld [vmem:[#allocation2 + $0x154] sm:$0xff]
  %v1570 = vld [vmem:[#allocation2 + $0x15c] sm:$0xff]
  %v1571 = vld [vmem:[#allocation2 + $0x164] sm:$0xf]
  %v1572 = vld [vmem:[#allocation2 + $0x168] sm:$0xff]
  %v1573 = vld [vmem:[#allocation2 + $0x170] sm:$0xff]
  %v1574 = vld [vmem:[#allocation2 + $0x178] sm:$0xff]
  %v1575 = vld [vmem:[#allocation2 + $0x180] sm:$0xff]
  %v1576 = vld [vmem:[#allocation2 + $0x188] sm:$0xf]
  %v1577 = vld [vmem:[#allocation2 + $0x18c] sm:$0xff]
  %v1578 = vld [vmem:[#allocation2 + $0x194] sm:$0xff]
  %v1579 = vld [vmem:[#allocation2 + $0x19c] sm:$0xff]
  %v1580 = vld [vmem:[#allocation2 + $0x1a4] sm:$0xff]
  %v1581 = vld [vmem:[#allocation2 + $0x1ac] sm:$0xf]
  %v1582 = vld [vmem:[#allocation2 + $0x1b0] sm:$0xff]
  %v1583 = vld [vmem:[#allocation2 + $0x1b8] sm:$0xff]
  %v1584 = vld [vmem:[#allocation2 + $0x1c0] sm:$0xff]
  %v1585 = vld [vmem:[#allocation2 + $0x1c8] sm:$0xff]
  %v1586 = vld [vmem:[#allocation2 + $0x1d0] sm:$0xf]
  %v1587 = vld [vmem:[#allocation2 + $0x1d4] sm:$0xff]
  %v1588 = vld [vmem:[#allocation2 + $0x1dc] sm:$0xff]
  %v1589 = vld [vmem:[#allocation2 + $0x1e4] sm:$0xff]
  %v1590 = vld [vmem:[#allocation2 + $0x1ec] sm:$0xff]
  %v1591 = vld [vmem:[#allocation2 + $0x1f4] sm:$0xf]
  %v1592 = vld [vmem:[#allocation2 + $0x1f8] sm:$0xff]
  %v1593 = vld [vmem:[#allocation2 + $0x200] sm:$0xff]
  %v1594 = vld [vmem:[#allocation2 + $0x208] sm:$0xff]
  %v1595 = vld [vmem:[#allocation2 + $0x210] sm:$0xff]
  %v1596 = vld [vmem:[#allocation2 + $0x218] sm:$0xf]
  %v1597 = vld [vmem:[#allocation2 + $0x21c] sm:$0xff]
  %v1598 = vld [vmem:[#allocation2 + $0x224] sm:$0xff]
  %v1599 = vld [vmem:[#allocation2 + $0x22c] sm:$0xff]
  %v1600 = vld [vmem:[#allocation2 + $0x234] sm:$0xff]
  %v1601 = vld [vmem:[#allocation2 + $0x23c] sm:$0xf]
  %v1602 = vld [vmem:[#allocation2 + $0x240] sm:$0xff]
  %v1603 = vld [vmem:[#allocation2 + $0x248] sm:$0xff]
  %v1604 = vld [vmem:[#allocation2 + $0x250] sm:$0xff]
  %v1605 = vld [vmem:[#allocation2 + $0x258] sm:$0xff]
  %v1606 = vld [vmem:[#allocation2 + $0x260] sm:$0xf]
  %v1607 = vld [vmem:[#allocation2 + $0x264] sm:$0xff]
  %v1608 = vld [vmem:[#allocation2 + $0x26c] sm:$0xff]
  %v1609 = vld [vmem:[#allocation2 + $0x274] sm:$0xff]
  %v1610 = vld [vmem:[#allocation2 + $0x27c] sm:$0xff]
  %v1611 = vld [vmem:[#allocation2 + $0x284] sm:$0xf]
  %v1612 = vld [vmem:[#allocation2 + $0x288] sm:$0xff]
  %v1613 = vld [vmem:[#allocation2 + $0x290] sm:$0xff]
  %v1614 = vld [vmem:[#allocation2 + $0x298] sm:$0xff]
  %v1615 = vld [vmem:[#allocation2 + $0x2a0] sm:$0xff]
  %v1616 = vld [vmem:[#allocation2 + $0x2a8] sm:$0xf]
  %v1617 = vld [vmem:[#allocation2 + $0x2ac] sm:$0xff]
  %v1618 = vld [vmem:[#allocation2 + $0x2b4] sm:$0xff]
  %v1619 = vld [vmem:[#allocation2 + $0x2bc] sm:$0xff]
  %v1620 = vld [vmem:[#allocation2 + $0x2c4] sm:$0xff]
  %v1621 = vld [vmem:[#allocation2 + $0x2cc] sm:$0xf]
  %v1622 = vld [vmem:[%s2] sm:$0xf]
  %v1623 = vld [vmem:[%s2 + $0x4] sm:$0xf]
  %v1624 = vld [vmem:[%s2 + $0x8] sm:$0xf]
  %v1625 = vld [vmem:[%s2 + $0xc] sm:$0xf]
  %v1626 = vld [vmem:[%s2 + $0x10] sm:$0xf]
  %v1627 = vld [vmem:[%s2 + $0x14] sm:$0xf]
  %v1628 = vld [vmem:[%s2 + $0x18] sm:$0xf]
  %v1629 = vld [vmem:[%s2 + $0x1c] sm:$0xf]
  %v1630 = vld [vmem:[%s2 + $0x20] sm:$0xf]
  %v1631 = vld [vmem:[%s2 + $0x24] sm:$0xf]
  %v1632 = vld [vmem:[%s2 + $0x28] sm:$0xf]
  %v1633 = vld [vmem:[%s2 + $0x2c] sm:$0xf]
  %v1634 = vld [vmem:[%s2 + $0x30] sm:$0xf]
  %v1635 = vld [vmem:[%s2 + $0x34] sm:$0xf]
  %v1636 = vld [vmem:[%s2 + $0x38] sm:$0xf]
  %v1637 = vld [vmem:[%s2 + $0x3c] sm:$0xf]
  %v1638 = vld [vmem:[%s2 + $0x40] sm:$0xf]
  %v1639 = vld [vmem:[%s2 + $0x44] sm:$0xf]
  %v1640 = vld [vmem:[%s2 + $0x48] sm:$0xf]
  %v1641 = vld [vmem:[%s2 + $0x4c] sm:$0xf]
  %v1642 = vld [vmem:[%s2 + $0x50] sm:$0xf]
  %v1643 = vld [vmem:[%s2 + $0x54] sm:$0xf]
  %v1644 = vld [vmem:[%s2 + $0x58] sm:$0xf]
  %v1645 = vld [vmem:[%s2 + $0x5c] sm:$0xf]
  %v1646 = vld [vmem:[%s2 + $0x60] sm:$0xf]
  %v1647 = vld [vmem:[%s2 + $0x64] sm:$0xf]
  %v1648 = vld [vmem:[%s2 + $0x68] sm:$0xf]
  %v1649 = vld [vmem:[%s2 + $0x6c] sm:$0xf]
  %v1650 = vld [vmem:[%s2 + $0x70] sm:$0xf]
  %v1651 = vld [vmem:[%s2 + $0x74] sm:$0xf]
  %v1652 = vld [vmem:[%s2 + $0x78] sm:$0xf]
  %v1653 = vld [vmem:[%s2 + $0x7c] sm:$0xf]
  %v1654 = vld [vmem:[%s2 + $0x80] sm:$0xf]
  %v1655 = vld [vmem:[%s2 + $0x84] sm:$0xf]
  %v1656 = vld [vmem:[%s2 + $0x88] sm:$0xf]
  %v1657 = vld [vmem:[%s2 + $0x8c] sm:$0xf]
  %v1658 = vld [vmem:[%s2 + $0x90] sm:$0xf]
  %v1659 = vld [vmem:[%s2 + $0x94] sm:$0xf]
  %v1660 = vld [vmem:[%s2 + $0x98] sm:$0xf]
  %v1661 = vld [vmem:[%s2 + $0x9c] sm:$0xf]
  %v1662 = vld [vmem:[%s2 + $0xa0] sm:$0xf]
  %v1663 = vld [vmem:[%s2 + $0xa4] sm:$0xf]
  %v1664 = vld [vmem:[%s2 + $0xa8] sm:$0xf]
  %v1665 = vld [vmem:[%s2 + $0xac] sm:$0xf]
  %v1666 = vld [vmem:[%s2 + $0xb0] sm:$0xf]
  %v1667 = vld [vmem:[%s2 + $0xb4] sm:$0xf]
  %v1668 = vld [vmem:[%s2 + $0xb8] sm:$0xf]
  %v1669 = vld [vmem:[%s2 + $0xbc] sm:$0xf]
  %v1670 = vld [vmem:[%s2 + $0xc0] sm:$0xf]
  %v1671 = vld [vmem:[%s2 + $0xc4] sm:$0xf]
  %v1672 = vld [vmem:[%s2 + $0xc8] sm:$0xf]
  %v1673 = vld [vmem:[%s2 + $0xcc] sm:$0xf]
  %v1674 = vld [vmem:[%s2 + $0xd0] sm:$0xf]
  %v1675 = vld [vmem:[%s2 + $0xd4] sm:$0xf]
  %v1676 = vld [vmem:[%s2 + $0xd8] sm:$0xf]
  %v1677 = vld [vmem:[%s2 + $0xdc] sm:$0xf]
  %v1678 = vld [vmem:[%s2 + $0xe0] sm:$0xf]
  %v1679 = vld [vmem:[%s2 + $0xe4] sm:$0xf]
  %v1680 = vld [vmem:[%s2 + $0xe8] sm:$0xf]
  %v1681 = vld [vmem:[%s2 + $0xec] sm:$0xf]
  %v1682 = vld [vmem:[%s2 + $0xf0] sm:$0xf]
  %v1683 = vld [vmem:[%s2 + $0xf4] sm:$0xf]
  %v1684 = vld [vmem:[%s2 + $0xf8] sm:$0xf]
  %v1685 = vld [vmem:[%s2 + $0xfc] sm:$0xf]
  %v1686 = vld [vmem:[%s2 + $0x100] sm:$0xf]
  %v1687 = vld [vmem:[%s2 + $0x104] sm:$0xf]
  %v1688 = vld [vmem:[%s2 + $0x108] sm:$0xf]
  %v1689 = vld [vmem:[%s2 + $0x10c] sm:$0xf]
  %v1690 = vld [vmem:[%s2 + $0x110] sm:$0xf]
  %v1691 = vld [vmem:[%s2 + $0x114] sm:$0xf]
  %v1692 = vld [vmem:[%s2 + $0x118] sm:$0xf]
  %v1693 = vld [vmem:[%s2 + $0x11c] sm:$0xf]
  %v1694 = vld [vmem:[%s2 + $0x120] sm:$0xf]
  %v1695 = vld [vmem:[%s2 + $0x124] sm:$0xf]
  %v1696 = vld [vmem:[%s2 + $0x128] sm:$0xf]
  %v1697 = vld [vmem:[%s2 + $0x12c] sm:$0xf]
  %v1698 = vld [vmem:[%s2 + $0x130] sm:$0xf]
  %v1699 = vld [vmem:[%s2 + $0x134] sm:$0xf]
  %v1700 = vld [vmem:[%s2 + $0x138] sm:$0xf]
  %v1701 = vld [vmem:[%s2 + $0x13c] sm:$0xf]
  %v1702 = vld [vmem:[%s2 + $0x140] sm:$0xf]
  %v1703 = vld [vmem:[%s2 + $0x144] sm:$0xf]
  %v1704 = vld [vmem:[%s2 + $0x148] sm:$0xf]
  %v1705 = vld [vmem:[%s2 + $0x14c] sm:$0xf]
  %v1706 = vld [vmem:[%s2 + $0x150] sm:$0xf]
  %v1707 = vld [vmem:[%s2 + $0x154] sm:$0xf]
  %v1708 = vld [vmem:[%s2 + $0x158] sm:$0xf]
  %v1709 = vld [vmem:[%s2 + $0x15c] sm:$0xf]
  %v1710 = vld [vmem:[%s2 + $0x160] sm:$0xf]
  %v1711 = vld [vmem:[%s2 + $0x164] sm:$0xf]
  %v1712 = vld [vmem:[%s2 + $0x168] sm:$0xf]
  %v1713 = vld [vmem:[%s2 + $0x16c] sm:$0xf]
  %v1714 = vld [vmem:[%s2 + $0x170] sm:$0xf]
  %v1715 = vld [vmem:[%s2 + $0x174] sm:$0xf]
  %v1716 = vld [vmem:[%s2 + $0x178] sm:$0xf]
  %v1717 = vld [vmem:[%s2 + $0x17c] sm:$0xf]
  %v1718 = vld [vmem:[%s2 + $0x180] sm:$0xf]
  %v1719 = vld [vmem:[%s2 + $0x184] sm:$0xf]
  %v1720 = vld [vmem:[%s2 + $0x188] sm:$0xf]
  %v1721 = vld [vmem:[%s2 + $0x18c] sm:$0xf]
  %v1722 = vld [vmem:[%s2 + $0x190] sm:$0xf]
  %v1723 = vld [vmem:[%s2 + $0x194] sm:$0xf]
  %v1724 = vld [vmem:[%s2 + $0x198] sm:$0xf]
  %v1725 = vld [vmem:[%s2 + $0x19c] sm:$0xf]
  %v1726 = vld [vmem:[%s2 + $0x1a0] sm:$0xf]
  %v1727 = vld [vmem:[%s2 + $0x1a4] sm:$0xf]
  %v1728 = vld [vmem:[%s2 + $0x1a8] sm:$0xf]
  %v1729 = vld [vmem:[%s2 + $0x1ac] sm:$0xf]
  %v1730 = vld [vmem:[%s2 + $0x1b0] sm:$0xf]
  %v1731 = vld [vmem:[%s2 + $0x1b4] sm:$0xf]
  %v1732 = vld [vmem:[%s2 + $0x1b8] sm:$0xf]
  %v1733 = vld [vmem:[%s2 + $0x1bc] sm:$0xf]
  %v1734 = vld [vmem:[%s2 + $0x1c0] sm:$0xf]
  %v1735 = vld [vmem:[%s2 + $0x1c4] sm:$0xf]
  %v1736 = vld [vmem:[%s2 + $0x1c8] sm:$0xf]
  %v1737 = vld [vmem:[%s2 + $0x1cc] sm:$0xf]
  %v1738 = vld [vmem:[%s2 + $0x1d0] sm:$0xf]
  %v1739 = vld [vmem:[%s2 + $0x1d4] sm:$0xf]
  %v1740 = vld [vmem:[%s2 + $0x1d8] sm:$0xf]
  %v1741 = vld [vmem:[%s2 + $0x1dc] sm:$0xf]
  %v1742 = vld [vmem:[%s2 + $0x1e0] sm:$0xf]
  %v1743 = vld [vmem:[%s2 + $0x1e4] sm:$0xf]
  %v1744 = vld [vmem:[%s2 + $0x1e8] sm:$0xf]
  %v1745 = vld [vmem:[%s2 + $0x1ec] sm:$0xf]
  %v1746 = vld [vmem:[%s2 + $0x1f0] sm:$0xf]
  %v1747 = vld [vmem:[%s2 + $0x1f4] sm:$0xf]
  %v1748 = vld [vmem:[%s2 + $0x1f8] sm:$0xf]
  %v1749 = vld [vmem:[%s2 + $0x1fc] sm:$0xf]
  %v1750 = vld [vmem:[%s2 + $0x200] sm:$0xf]
  %v1751 = vld [vmem:[%s2 + $0x204] sm:$0xf]
  %v1752 = vld [vmem:[%s2 + $0x208] sm:$0xf]
  %v1753 = vld [vmem:[%s2 + $0x20c] sm:$0xf]
  %v1754 = vld [vmem:[%s2 + $0x210] sm:$0xf]
  %v1755 = vld [vmem:[%s2 + $0x214] sm:$0xf]
  %v1756 = vld [vmem:[%s2 + $0x218] sm:$0xf]
  %v1757 = vld [vmem:[%s2 + $0x21c] sm:$0xf]
  %v1758 = vld [vmem:[%s2 + $0x220] sm:$0xf]
  %v1759 = vld [vmem:[%s2 + $0x224] sm:$0xf]
  %v1760 = vld [vmem:[%s2 + $0x228] sm:$0xf]
  %v1761 = vld [vmem:[%s2 + $0x22c] sm:$0xf]
  %v1762 = vld [vmem:[%s2 + $0x230] sm:$0xf]
  %v1763 = vld [vmem:[%s2 + $0x234] sm:$0xf]
  %v1764 = vld [vmem:[%s2 + $0x238] sm:$0xf]
  %v1765 = vld [vmem:[%s2 + $0x23c] sm:$0xf]
  %v1766 = vld [vmem:[%s4] sm:$0x1]
  %v1767 = vperm.slane %v1766, 0
  %v1868 = vunpack.c.l.b16 %v1522
  %v1869 = vunpack.c.h.b16 %v1522
  %v1870 = vunpack.c.l.b16 %v1523
  %v1871 = vunpack.c.h.b16 %v1523
  %v1872 = vunpack.c.l.b16 %v1524
  %v1873 = vunpack.c.h.b16 %v1524
  %v1874 = vunpack.c.l.b16 %v1525
  %v1875 = vunpack.c.h.b16 %v1525
  %v1876 = vunpack.c.l.b16 %v1526
  %v1877 = vunpack.c.l.b16 %v1527
  %v1878 = vunpack.c.h.b16 %v1527
  %v1879 = vunpack.c.l.b16 %v1528
  %v1880 = vunpack.c.h.b16 %v1528
  %v1881 = vunpack.c.l.b16 %v1529
  %v1882 = vunpack.c.h.b16 %v1529
  %v1883 = vunpack.c.l.b16 %v1530
  %v1884 = vunpack.c.h.b16 %v1530
  %v1885 = vunpack.c.l.b16 %v1531
  %v1886 = vunpack.c.l.b16 %v1532
  %v1887 = vunpack.c.h.b16 %v1532
  %v1888 = vunpack.c.l.b16 %v1533
  %v1889 = vunpack.c.h.b16 %v1533
  %v1890 = vunpack.c.l.b16 %v1534
  %v1891 = vunpack.c.h.b16 %v1534
  %v1892 = vunpack.c.l.b16 %v1535
  %v1893 = vunpack.c.h.b16 %v1535
  %v1894 = vunpack.c.l.b16 %v1536
  %v1895 = vunpack.c.l.b16 %v1537
  %v1896 = vunpack.c.h.b16 %v1537
  %v1897 = vunpack.c.l.b16 %v1538
  %v1898 = vunpack.c.h.b16 %v1538
  %v1899 = vunpack.c.l.b16 %v1539
  %v1900 = vunpack.c.h.b16 %v1539
  %v1901 = vunpack.c.l.b16 %v1540
  %v1902 = vunpack.c.h.b16 %v1540
  %v1903 = vunpack.c.l.b16 %v1541
  %v1904 = vunpack.c.l.b16 %v1542
  %v1905 = vunpack.c.h.b16 %v1542
  %v1906 = vunpack.c.l.b16 %v1543
  %v1907 = vunpack.c.h.b16 %v1543
  %v1908 = vunpack.c.l.b16 %v1544
  %v1909 = vunpack.c.h.b16 %v1544
  %v1910 = vunpack.c.l.b16 %v1545
  %v1911 = vunpack.c.h.b16 %v1545
  %v1912 = vunpack.c.l.b16 %v1546
  %v1913 = vunpack.c.l.b16 %v1547
  %v1914 = vunpack.c.h.b16 %v1547
  %v1915 = vunpack.c.l.b16 %v1548
  %v1916 = vunpack.c.h.b16 %v1548
  %v1917 = vunpack.c.l.b16 %v1549
  %v1918 = vunpack.c.h.b16 %v1549
  %v1919 = vunpack.c.l.b16 %v1550
  %v1920 = vunpack.c.h.b16 %v1550
  %v1921 = vunpack.c.l.b16 %v1551
  %v1922 = vunpack.c.l.b16 %v1552
  %v1923 = vunpack.c.h.b16 %v1552
  %v1924 = vunpack.c.l.b16 %v1553
  %v1925 = vunpack.c.h.b16 %v1553
  %v1926 = vunpack.c.l.b16 %v1554
  %v1927 = vunpack.c.h.b16 %v1554
  %v1928 = vunpack.c.l.b16 %v1555
  %v1929 = vunpack.c.h.b16 %v1555
  %v1930 = vunpack.c.l.b16 %v1556
  %v1931 = vunpack.c.l.b16 %v1557
  %v1932 = vunpack.c.h.b16 %v1557
  %v1933 = vunpack.c.l.b16 %v1558
  %v1934 = vunpack.c.h.b16 %v1558
  %v1935 = vunpack.c.l.b16 %v1559
  %v1936 = vunpack.c.h.b16 %v1559
  %v1937 = vunpack.c.l.b16 %v1560
  %v1938 = vunpack.c.h.b16 %v1560
  %v1939 = vunpack.c.l.b16 %v1561
  %v1940 = vunpack.c.l.b16 %v1562
  %v1941 = vunpack.c.h.b16 %v1562
  %v1942 = vunpack.c.l.b16 %v1563
  %v1943 = vunpack.c.h.b16 %v1563
  %v1944 = vunpack.c.l.b16 %v1564
  %v1945 = vunpack.c.h.b16 %v1564
  %v1946 = vunpack.c.l.b16 %v1565
  %v1947 = vunpack.c.h.b16 %v1565
  %v1948 = vunpack.c.l.b16 %v1566
  %v1949 = vunpack.c.l.b16 %v1567
  %v1950 = vunpack.c.h.b16 %v1567
  %v1951 = vunpack.c.l.b16 %v1568
  %v1952 = vunpack.c.h.b16 %v1568
  %v1953 = vunpack.c.l.b16 %v1569
  %v1954 = vunpack.c.h.b16 %v1569
  %v1955 = vunpack.c.l.b16 %v1570
  %v1956 = vunpack.c.h.b16 %v1570
  %v1957 = vunpack.c.l.b16 %v1571
  %v1958 = vunpack.c.l.b16 %v1572
  %v1959 = vunpack.c.h.b16 %v1572
  %v1960 = vunpack.c.l.b16 %v1573
  %v1961 = vunpack.c.h.b16 %v1573
  %v1962 = vunpack.c.l.b16 %v1574
  %v1963 = vunpack.c.h.b16 %v1574
  %v1964 = vunpack.c.l.b16 %v1575
  %v1965 = vunpack.c.h.b16 %v1575
  %v1966 = vunpack.c.l.b16 %v1576
  %v1967 = vunpack.c.l.b16 %v1577
  %v1968 = vunpack.c.h.b16 %v1577
  %v1969 = vunpack.c.l.b16 %v1578
  %v1970 = vunpack.c.h.b16 %v1578
  %v1971 = vunpack.c.l.b16 %v1579
  %v1972 = vunpack.c.h.b16 %v1579
  %v1973 = vunpack.c.l.b16 %v1580
  %v1974 = vunpack.c.h.b16 %v1580
  %v1975 = vunpack.c.l.b16 %v1581
  %v1976 = vunpack.c.l.b16 %v1582
  %v1977 = vunpack.c.h.b16 %v1582
  %v1978 = vunpack.c.l.b16 %v1583
  %v1979 = vunpack.c.h.b16 %v1583
  %v1980 = vunpack.c.l.b16 %v1584
  %v1981 = vunpack.c.h.b16 %v1584
  %v1982 = vunpack.c.l.b16 %v1585
  %v1983 = vunpack.c.h.b16 %v1585
  %v1984 = vunpack.c.l.b16 %v1586
  %v1985 = vunpack.c.l.b16 %v1587
  %v1986 = vunpack.c.h.b16 %v1587
  %v1987 = vunpack.c.l.b16 %v1588
  %v1988 = vunpack.c.h.b16 %v1588
  %v1989 = vunpack.c.l.b16 %v1589
  %v1990 = vunpack.c.h.b16 %v1589
  %v1991 = vunpack.c.l.b16 %v1590
  %v1992 = vunpack.c.h.b16 %v1590
  %v1993 = vunpack.c.l.b16 %v1591
  %v1994 = vunpack.c.l.b16 %v1592
  %v1995 = vunpack.c.h.b16 %v1592
  %v1996 = vunpack.c.l.b16 %v1593
  %v1997 = vunpack.c.h.b16 %v1593
  %v1998 = vunpack.c.l.b16 %v1594
  %v1999 = vunpack.c.h.b16 %v1594
  %v2000 = vunpack.c.l.b16 %v1595
  %v2001 = vunpack.c.h.b16 %v1595
  %v2002 = vunpack.c.l.b16 %v1596
  %v2003 = vunpack.c.l.b16 %v1597
  %v2004 = vunpack.c.h.b16 %v1597
  %v2005 = vunpack.c.l.b16 %v1598
  %v2006 = vunpack.c.h.b16 %v1598
  %v2007 = vunpack.c.l.b16 %v1599
  %v2008 = vunpack.c.h.b16 %v1599
  %v2009 = vunpack.c.l.b16 %v1600
  %v2010 = vunpack.c.h.b16 %v1600
  %v2011 = vunpack.c.l.b16 %v1601
  %v2012 = vunpack.c.l.b16 %v1602
  %v2013 = vunpack.c.h.b16 %v1602
  %v2014 = vunpack.c.l.b16 %v1603
  %v2015 = vunpack.c.h.b16 %v1603
  %v2016 = vunpack.c.l.b16 %v1604
  %v2017 = vunpack.c.h.b16 %v1604
  %v2018 = vunpack.c.l.b16 %v1605
  %v2019 = vunpack.c.h.b16 %v1605
  %v2020 = vunpack.c.l.b16 %v1606
  %v2021 = vunpack.c.l.b16 %v1607
  %v2022 = vunpack.c.h.b16 %v1607
  %v2023 = vunpack.c.l.b16 %v1608
  %v2024 = vunpack.c.h.b16 %v1608
  %v2025 = vunpack.c.l.b16 %v1609
  %v2026 = vunpack.c.h.b16 %v1609
  %v2027 = vunpack.c.l.b16 %v1610
  %v2028 = vunpack.c.h.b16 %v1610
  %v2029 = vunpack.c.l.b16 %v1611
  %v2030 = vunpack.c.l.b16 %v1612
  %v2031 = vunpack.c.h.b16 %v1612
  %v2032 = vunpack.c.l.b16 %v1613
  %v2033 = vunpack.c.h.b16 %v1613
  %v2034 = vunpack.c.l.b16 %v1614
  %v2035 = vunpack.c.h.b16 %v1614
  %v2036 = vunpack.c.l.b16 %v1615
  %v2037 = vunpack.c.h.b16 %v1615
  %v2038 = vunpack.c.l.b16 %v1616
  %v2039 = vunpack.c.l.b16 %v1617
  %v2040 = vunpack.c.h.b16 %v1617
  %v2041 = vunpack.c.l.b16 %v1618
  %v2042 = vunpack.c.h.b16 %v1618
  %v2043 = vunpack.c.l.b16 %v1619
  %v2044 = vunpack.c.h.b16 %v1619
  %v2045 = vunpack.c.l.b16 %v1620
  %v2046 = vunpack.c.h.b16 %v1620
  %v2047 = vunpack.c.l.b16 %v1621
  %v2048 = vpack.c.b16 %v1877, %v1868
  %v2049 = vpack.c.b16 %v1878, %v1869
  %v2050 = vpack.c.b16 %v1879, %v1870
  %v2051 = vpack.c.b16 %v1880, %v1871
  %v2052 = vpack.c.b16 %v1881, %v1872
  %v2053 = vpack.c.b16 %v1882, %v1873
  %v2054 = vpack.c.b16 %v1883, %v1874
  %v2055 = vpack.c.b16 %v1884, %v1875
  %v2056 = vpack.c.b16 %v1885, %v1876
  %v2057 = vpack.c.b16 %v1895, %v1886
  %v2058 = vpack.c.b16 %v1896, %v1887
  %v2059 = vpack.c.b16 %v1897, %v1888
  %v2060 = vpack.c.b16 %v1898, %v1889
  %v2061 = vpack.c.b16 %v1899, %v1890
  %v2062 = vpack.c.b16 %v1900, %v1891
  %v2063 = vpack.c.b16 %v1901, %v1892
  %v2064 = vpack.c.b16 %v1902, %v1893
  %v2065 = vpack.c.b16 %v1903, %v1894
  %v2066 = vpack.c.b16 %v1913, %v1904
  %v2067 = vpack.c.b16 %v1914, %v1905
  %v2068 = vpack.c.b16 %v1915, %v1906
  %v2069 = vpack.c.b16 %v1916, %v1907
  %v2070 = vpack.c.b16 %v1917, %v1908
  %v2071 = vpack.c.b16 %v1918, %v1909
  %v2072 = vpack.c.b16 %v1919, %v1910
  %v2073 = vpack.c.b16 %v1920, %v1911
  %v2074 = vpack.c.b16 %v1921, %v1912
  %v2075 = vpack.c.b16 %v1931, %v1922
  %v2076 = vpack.c.b16 %v1932, %v1923
  %v2077 = vpack.c.b16 %v1933, %v1924
  %v2078 = vpack.c.b16 %v1934, %v1925
  %v2079 = vpack.c.b16 %v1935, %v1926
  %v2080 = vpack.c.b16 %v1936, %v1927
  %v2081 = vpack.c.b16 %v1937, %v1928
  %v2082 = vpack.c.b16 %v1938, %v1929
  %v2083 = vpack.c.b16 %v1939, %v1930
  %v2084 = vpack.c.b16 %v1949, %v1940
  %v2085 = vpack.c.b16 %v1950, %v1941
  %v2086 = vpack.c.b16 %v1951, %v1942
  %v2087 = vpack.c.b16 %v1952, %v1943
  %v2088 = vpack.c.b16 %v1953, %v1944
  %v2089 = vpack.c.b16 %v1954, %v1945
  %v2090 = vpack.c.b16 %v1955, %v1946
  %v2091 = vpack.c.b16 %v1956, %v1947
  %v2092 = vpack.c.b16 %v1957, %v1948
  %v2093 = vpack.c.b16 %v1967, %v1958
  %v2094 = vpack.c.b16 %v1968, %v1959
  %v2095 = vpack.c.b16 %v1969, %v1960
  %v2096 = vpack.c.b16 %v1970, %v1961
  %v2097 = vpack.c.b16 %v1971, %v1962
  %v2098 = vpack.c.b16 %v1972, %v1963
  %v2099 = vpack.c.b16 %v1973, %v1964
  %v2100 = vpack.c.b16 %v1974, %v1965
  %v2101 = vpack.c.b16 %v1975, %v1966
  %v2102 = vpack.c.b16 %v1985, %v1976
  %v2103 = vpack.c.b16 %v1986, %v1977
  %v2104 = vpack.c.b16 %v1987, %v1978
  %v2105 = vpack.c.b16 %v1988, %v1979
  %v2106 = vpack.c.b16 %v1989, %v1980
  %v2107 = vpack.c.b16 %v1990, %v1981
  %v2108 = vpack.c.b16 %v1991, %v1982
  %v2109 = vpack.c.b16 %v1992, %v1983
  %v2110 = vpack.c.b16 %v1993, %v1984
  %v2111 = vpack.c.b16 %v2003, %v1994
  %v2112 = vpack.c.b16 %v2004, %v1995
  %v2113 = vpack.c.b16 %v2005, %v1996
  %v2114 = vpack.c.b16 %v2006, %v1997
  %v2115 = vpack.c.b16 %v2007, %v1998
  %v2116 = vpack.c.b16 %v2008, %v1999
  %v2117 = vpack.c.b16 %v2009, %v2000
  %v2118 = vpack.c.b16 %v2010, %v2001
  %v2119 = vpack.c.b16 %v2011, %v2002
  %v2120 = vpack.c.b16 %v2021, %v2012
  %v2121 = vpack.c.b16 %v2022, %v2013
  %v2122 = vpack.c.b16 %v2023, %v2014
  %v2123 = vpack.c.b16 %v2024, %v2015
  %v2124 = vpack.c.b16 %v2025, %v2016
  %v2125 = vpack.c.b16 %v2026, %v2017
  %v2126 = vpack.c.b16 %v2027, %v2018
  %v2127 = vpack.c.b16 %v2028, %v2019
  %v2128 = vpack.c.b16 %v2029, %v2020
  %v2129 = vpack.c.b16 %v2039, %v2030
  %v2130 = vpack.c.b16 %v2040, %v2031
  %v2131 = vpack.c.b16 %v2041, %v2032
  %v2132 = vpack.c.b16 %v2042, %v2033
  %v2133 = vpack.c.b16 %v2043, %v2034
  %v2134 = vpack.c.b16 %v2044, %v2035
  %v2135 = vpack.c.b16 %v2045, %v2036
  %v2136 = vpack.c.b16 %v2046, %v2037
  %v2137 = vpack.c.b16 %v2047, %v2038
  %v2372 = vunpack.c.l.b16 %v1622
  %v2373 = vunpack.c.l.b16 %v1623
  %v2374 = vunpack.c.l.b16 %v1624
  %v2375 = vunpack.c.l.b16 %v1625
  %v2376 = vunpack.c.l.b16 %v1626
  %v2377 = vunpack.c.l.b16 %v1627
  %v2378 = vunpack.c.l.b16 %v1628
  %v2379 = vunpack.c.l.b16 %v1629
  %v2380 = vunpack.c.l.b16 %v1630
  %v2381 = vunpack.c.l.b16 %v1631
  %v2382 = vunpack.c.l.b16 %v1632
  %v2383 = vunpack.c.l.b16 %v1633
  %v2384 = vunpack.c.l.b16 %v1634
  %v2385 = vunpack.c.l.b16 %v1635
  %v2386 = vunpack.c.l.b16 %v1636
  %v2387 = vunpack.c.l.b16 %v1637
  %v2388 = vunpack.c.l.b16 %v1638
  %v2389 = vunpack.c.l.b16 %v1639
  %v2390 = vunpack.c.l.b16 %v1640
  %v2391 = vunpack.c.l.b16 %v1641
  %v2392 = vunpack.c.l.b16 %v1642
  %v2393 = vunpack.c.l.b16 %v1643
  %v2394 = vunpack.c.l.b16 %v1644
  %v2395 = vunpack.c.l.b16 %v1645
  %v2396 = vunpack.c.l.b16 %v1646
  %v2397 = vunpack.c.l.b16 %v1647
  %v2398 = vunpack.c.l.b16 %v1648
  %v2399 = vunpack.c.l.b16 %v1649
  %v2400 = vunpack.c.l.b16 %v1650
  %v2401 = vunpack.c.l.b16 %v1651
  %v2402 = vunpack.c.l.b16 %v1652
  %v2403 = vunpack.c.l.b16 %v1653
  %v2404 = vunpack.c.l.b16 %v1654
  %v2405 = vunpack.c.l.b16 %v1655
  %v2406 = vunpack.c.l.b16 %v1656
  %v2407 = vunpack.c.l.b16 %v1657
  %v2408 = vunpack.c.l.b16 %v1658
  %v2409 = vunpack.c.l.b16 %v1659
  %v2410 = vunpack.c.l.b16 %v1660
  %v2411 = vunpack.c.l.b16 %v1661
  %v2412 = vunpack.c.l.b16 %v1662
  %v2413 = vunpack.c.l.b16 %v1663
  %v2414 = vunpack.c.l.b16 %v1664
  %v2415 = vunpack.c.l.b16 %v1665
  %v2416 = vunpack.c.l.b16 %v1666
  %v2417 = vunpack.c.l.b16 %v1667
  %v2418 = vunpack.c.l.b16 %v1668
  %v2419 = vunpack.c.l.b16 %v1669
  %v2420 = vunpack.c.l.b16 %v1670
  %v2421 = vunpack.c.l.b16 %v1671
  %v2422 = vunpack.c.l.b16 %v1672
  %v2423 = vunpack.c.l.b16 %v1673
  %v2424 = vunpack.c.l.b16 %v1674
  %v2425 = vunpack.c.l.b16 %v1675
  %v2426 = vunpack.c.l.b16 %v1676
  %v2427 = vunpack.c.l.b16 %v1677
  %v2428 = vunpack.c.l.b16 %v1678
  %v2429 = vunpack.c.l.b16 %v1679
  %v2430 = vunpack.c.l.b16 %v1680
  %v2431 = vunpack.c.l.b16 %v1681
  %v2432 = vunpack.c.l.b16 %v1682
  %v2433 = vunpack.c.l.b16 %v1683
  %v2434 = vunpack.c.l.b16 %v1684
  %v2435 = vunpack.c.l.b16 %v1685
  %v2436 = vunpack.c.l.b16 %v1686
  %v2437 = vunpack.c.l.b16 %v1687
  %v2438 = vunpack.c.l.b16 %v1688
  %v2439 = vunpack.c.l.b16 %v1689
  %v2440 = vunpack.c.l.b16 %v1690
  %v2441 = vunpack.c.l.b16 %v1691
  %v2442 = vunpack.c.l.b16 %v1692
  %v2443 = vunpack.c.l.b16 %v1693
  %v2444 = vunpack.c.l.b16 %v1694
  %v2445 = vunpack.c.l.b16 %v1695
  %v2446 = vunpack.c.l.b16 %v1696
  %v2447 = vunpack.c.l.b16 %v1697
  %v2448 = vunpack.c.l.b16 %v1698
  %v2449 = vunpack.c.l.b16 %v1699
  %v2450 = vunpack.c.l.b16 %v1700
  %v2451 = vunpack.c.l.b16 %v1701
  %v2452 = vunpack.c.l.b16 %v1702
  %v2453 = vunpack.c.l.b16 %v1703
  %v2454 = vunpack.c.l.b16 %v1704
  %v2455 = vunpack.c.l.b16 %v1705
  %v2456 = vunpack.c.l.b16 %v1706
  %v2457 = vunpack.c.l.b16 %v1707
  %v2458 = vunpack.c.l.b16 %v1708
  %v2459 = vunpack.c.l.b16 %v1709
  %v2460 = vunpack.c.l.b16 %v1710
  %v2461 = vunpack.c.l.b16 %v1711
  %v2462 = vunpack.c.l.b16 %v1712
  %v2463 = vunpack.c.l.b16 %v1713
  %v2464 = vunpack.c.l.b16 %v1714
  %v2465 = vunpack.c.l.b16 %v1715
  %v2466 = vunpack.c.l.b16 %v1716
  %v2467 = vunpack.c.l.b16 %v1717
  %v2468 = vunpack.c.l.b16 %v1718
  %v2469 = vunpack.c.l.b16 %v1719
  %v2470 = vunpack.c.l.b16 %v1720
  %v2471 = vunpack.c.l.b16 %v1721
  %v2472 = vunpack.c.l.b16 %v1722
  %v2473 = vunpack.c.l.b16 %v1723
  %v2474 = vunpack.c.l.b16 %v1724
  %v2475 = vunpack.c.l.b16 %v1725
  %v2476 = vunpack.c.l.b16 %v1726
  %v2477 = vunpack.c.l.b16 %v1727
  %v2478 = vunpack.c.l.b16 %v1728
  %v2479 = vunpack.c.l.b16 %v1729
  %v2480 = vunpack.c.l.b16 %v1730
  %v2481 = vunpack.c.l.b16 %v1731
  %v2482 = vunpack.c.l.b16 %v1732
  %v2483 = vunpack.c.l.b16 %v1733
  %v2484 = vunpack.c.l.b16 %v1734
  %v2485 = vunpack.c.l.b16 %v1735
  %v2486 = vunpack.c.l.b16 %v1736
  %v2487 = vunpack.c.l.b16 %v1737
  %v2488 = vunpack.c.l.b16 %v1738
  %v2489 = vunpack.c.l.b16 %v1739
  %v2490 = vunpack.c.l.b16 %v1740
  %v2491 = vunpack.c.l.b16 %v1741
  %v2492 = vunpack.c.l.b16 %v1742
  %v2493 = vunpack.c.l.b16 %v1743
  %v2494 = vunpack.c.l.b16 %v1744
  %v2495 = vunpack.c.l.b16 %v1745
  %v2496 = vunpack.c.l.b16 %v1746
  %v2497 = vunpack.c.l.b16 %v1747
  %v2498 = vunpack.c.l.b16 %v1748
  %v2499 = vunpack.c.l.b16 %v1749
  %v2500 = vunpack.c.l.b16 %v1750
  %v2501 = vunpack.c.l.b16 %v1751
  %v2502 = vunpack.c.l.b16 %v1752
  %v2503 = vunpack.c.l.b16 %v1753
  %v2504 = vunpack.c.l.b16 %v1754
  %v2505 = vunpack.c.l.b16 %v1755
  %v2506 = vunpack.c.l.b16 %v1756
  %v2507 = vunpack.c.l.b16 %v1757
  %v2508 = vunpack.c.l.b16 %v1758
  %v2509 = vunpack.c.l.b16 %v1759
  %v2510 = vunpack.c.l.b16 %v1760
  %v2511 = vunpack.c.l.b16 %v1761
  %v2512 = vunpack.c.l.b16 %v1762
  %v2513 = vunpack.c.l.b16 %v1763
  %v2514 = vunpack.c.l.b16 %v1764
  %v2515 = vunpack.c.l.b16 %v1765
  %v2516 = vpack.c.b16 %v2373, %v2372
  %v2517 = vpack.c.b16 %v2375, %v2374
  %v2518 = vpack.c.b16 %v2377, %v2376
  %v2519 = vpack.c.b16 %v2379, %v2378
  %v2520 = vpack.c.b16 %v2381, %v2380
  %v2521 = vpack.c.b16 %v2383, %v2382
  %v2522 = vpack.c.b16 %v2385, %v2384
  %v2523 = vpack.c.b16 %v2387, %v2386
  %v2524 = vpack.c.b16 %v2389, %v2388
  %v2525 = vpack.c.b16 %v2391, %v2390
  %v2526 = vpack.c.b16 %v2393, %v2392
  %v2527 = vpack.c.b16 %v2395, %v2394
  %v2528 = vpack.c.b16 %v2397, %v2396
  %v2529 = vpack.c.b16 %v2399, %v2398
  %v2530 = vpack.c.b16 %v2401, %v2400
  %v2531 = vpack.c.b16 %v2403, %v2402
  %v2532 = vpack.c.b16 %v2405, %v2404
  %v2533 = vpack.c.b16 %v2407, %v2406
  %v2534 = vpack.c.b16 %v2409, %v2408
  %v2535 = vpack.c.b16 %v2411, %v2410
  %v2536 = vpack.c.b16 %v2413, %v2412
  %v2537 = vpack.c.b16 %v2415, %v2414
  %v2538 = vpack.c.b16 %v2417, %v2416
  %v2539 = vpack.c.b16 %v2419, %v2418
  %v2540 = vpack.c.b16 %v2421, %v2420
  %v2541 = vpack.c.b16 %v2423, %v2422
  %v2542 = vpack.c.b16 %v2425, %v2424
  %v2543 = vpack.c.b16 %v2427, %v2426
  %v2544 = vpack.c.b16 %v2429, %v2428
  %v2545 = vpack.c.b16 %v2431, %v2430
  %v2546 = vpack.c.b16 %v2433, %v2432
  %v2547 = vpack.c.b16 %v2435, %v2434
  %v2548 = vpack.c.b16 %v2437, %v2436
  %v2549 = vpack.c.b16 %v2439, %v2438
  %v2550 = vpack.c.b16 %v2441, %v2440
  %v2551 = vpack.c.b16 %v2443, %v2442
  %v2552 = vpack.c.b16 %v2445, %v2444
  %v2553 = vpack.c.b16 %v2447, %v2446
  %v2554 = vpack.c.b16 %v2449, %v2448
  %v2555 = vpack.c.b16 %v2451, %v2450
  %v2556 = vpack.c.b16 %v2453, %v2452
  %v2557 = vpack.c.b16 %v2455, %v2454
  %v2558 = vpack.c.b16 %v2457, %v2456
  %v2559 = vpack.c.b16 %v2459, %v2458
  %v2560 = vpack.c.b16 %v2461, %v2460
  %v2561 = vpack.c.b16 %v2463, %v2462
  %v2562 = vpack.c.b16 %v2465, %v2464
  %v2563 = vpack.c.b16 %v2467, %v2466
  %v2564 = vpack.c.b16 %v2469, %v2468
  %v2565 = vpack.c.b16 %v2471, %v2470
  %v2566 = vpack.c.b16 %v2473, %v2472
  %v2567 = vpack.c.b16 %v2475, %v2474
  %v2568 = vpack.c.b16 %v2477, %v2476
  %v2569 = vpack.c.b16 %v2479, %v2478
  %v2570 = vpack.c.b16 %v2481, %v2480
  %v2571 = vpack.c.b16 %v2483, %v2482
  %v2572 = vpack.c.b16 %v2485, %v2484
  %v2573 = vpack.c.b16 %v2487, %v2486
  %v2574 = vpack.c.b16 %v2489, %v2488
  %v2575 = vpack.c.b16 %v2491, %v2490
  %v2576 = vpack.c.b16 %v2493, %v2492
  %v2577 = vpack.c.b16 %v2495, %v2494
  %v2578 = vpack.c.b16 %v2497, %v2496
  %v2579 = vpack.c.b16 %v2499, %v2498
  %v2580 = vpack.c.b16 %v2501, %v2500
  %v2581 = vpack.c.b16 %v2503, %v2502
  %v2582 = vpack.c.b16 %v2505, %v2504
  %v2583 = vpack.c.b16 %v2507, %v2506
  %v2584 = vpack.c.b16 %v2509, %v2508
  %v2585 = vpack.c.b16 %v2511, %v2510
  %v2586 = vpack.c.b16 %v2513, %v2512
  %v2587 = vpack.c.b16 %v2515, %v2514
  %2660 = vmatpush.bf16.msra.mxu0 %v2523
  %2661 = vmatpush.bf16.msra.mxu0 %v2522
  %2662 = vmatpush.bf16.msra.mxu0 %v2521
  %2663 = vmatpush.bf16.msra.mxu0 %v2520
  %2664 = vmatpush.bf16.msra.mxu0 %v2519
  %2665 = vmatpush.bf16.msra.mxu0 %v2518
  %2666 = vmatpush.bf16.msra.mxu0 %v2517
  %2667 = vmatpush.bf16.msra.mxu0 %v2516
  %2668 = vmatmul.bf16.gmra.mxu0 %v2048
  %v2669 = vpop.f32.mrf.mxu0
  %v2670 = vadd.f32 %v1767, %v2669
  %v2671 = vpop.f32.mrf.mxu0
  %v2672 = vadd.f32 %v1767, %v2671
  %2673 = vmatmul.bf16.gmra.mxu0 %v2057
  %v2674 = vpop.f32.mrf.mxu0
  %v2675 = vadd.f32 %v1767, %v2674
  %v2676 = vpop.f32.mrf.mxu0
  %v2677 = vadd.f32 %v1767, %v2676
  %2678 = vmatmul.bf16.gmra.mxu0 %v2066
  %v2679 = vpop.f32.mrf.mxu0
  %v2680 = vadd.f32 %v1767, %v2679
  %v2681 = vpop.f32.mrf.mxu0
  %v2682 = vadd.f32 %v1767, %v2681
  %2683 = vmatmul.bf16.gmra.mxu0 %v2075
  %v2684 = vpop.f32.mrf.mxu0
  %v2685 = vadd.f32 %v1767, %v2684
  %v2686 = vpop.f32.mrf.mxu0
  %v2687 = vadd.f32 %v1767, %v2686
  %2688 = vmatmul.bf16.gmra.mxu0 %v2084
  %v2689 = vpop.f32.mrf.mxu0
  %v2690 = vadd.f32 %v1767, %v2689
  %v2691 = vpop.f32.mrf.mxu0
  %v2692 = vadd.f32 %v1767, %v2691
  %2693 = vmatmul.bf16.gmra.mxu0 %v2093
  %v2694 = vpop.f32.mrf.mxu0
  %v2695 = vadd.f32 %v1767, %v2694
  %v2696 = vpop.f32.mrf.mxu0
  %v2697 = vadd.f32 %v1767, %v2696
  %2698 = vmatmul.bf16.gmra.mxu0 %v2102
  %v2699 = vpop.f32.mrf.mxu0
  %v2700 = vadd.f32 %v1767, %v2699
  %v2701 = vpop.f32.mrf.mxu0
  %v2702 = vadd.f32 %v1767, %v2701
  %2703 = vmatmul.bf16.gmra.mxu0 %v2111
  %v2704 = vpop.f32.mrf.mxu0
  %v2705 = vadd.f32 %v1767, %v2704
  %v2706 = vpop.f32.mrf.mxu0
  %v2707 = vadd.f32 %v1767, %v2706
  %2708 = vmatmul.bf16.gmra.mxu0 %v2120
  %v2709 = vpop.f32.mrf.mxu0
  %v2710 = vadd.f32 %v1767, %v2709
  %v2711 = vpop.f32.mrf.mxu0
  %v2712 = vadd.f32 %v1767, %v2711
  %2713 = vmatmul.bf16.gmra.mxu0 %v2129
  %v2714 = vpop.f32.mrf.mxu0
  %v2715 = vadd.f32 %v1767, %v2714
  %v2716 = vpop.f32.mrf.mxu0
  %v2717 = vadd.f32 %v1767, %v2716
  %2718 = vdwg.mxu0
  %2719 = vmatpush.bf16.msra.mxu0 %v2531
  %2720 = vmatpush.bf16.msra.mxu0 %v2530
  %2721 = vmatpush.bf16.msra.mxu0 %v2529
  %2722 = vmatpush.bf16.msra.mxu0 %v2528
  %2723 = vmatpush.bf16.msra.mxu0 %v2527
  %2724 = vmatpush.bf16.msra.mxu0 %v2526
  %2725 = vmatpush.bf16.msra.mxu0 %v2525
  %2726 = vmatpush.bf16.msra.mxu0 %v2524
  %2727 = vmatmul.bf16.gmra.mxu0 %v2049
  %v2728 = vpop.f32.mrf.mxu0
  %v2729 = vadd.f32 %v2670, %v2728
  %v2730 = vpop.f32.mrf.mxu0
  %v2731 = vadd.f32 %v2672, %v2730
  %2732 = vmatmul.bf16.gmra.mxu0 %v2058
  %v2733 = vpop.f32.mrf.mxu0
  %v2734 = vadd.f32 %v2675, %v2733
  %v2735 = vpop.f32.mrf.mxu0
  %v2736 = vadd.f32 %v2677, %v2735
  %2737 = vmatmul.bf16.gmra.mxu0 %v2067
  %v2738 = vpop.f32.mrf.mxu0
  %v2739 = vadd.f32 %v2680, %v2738
  %v2740 = vpop.f32.mrf.mxu0
  %v2741 = vadd.f32 %v2682, %v2740
  %2742 = vmatmul.bf16.gmra.mxu0 %v2076
  %v2743 = vpop.f32.mrf.mxu0
  %v2744 = vadd.f32 %v2685, %v2743
  %v2745 = vpop.f32.mrf.mxu0
  %v2746 = vadd.f32 %v2687, %v2745
  %2747 = vmatmul.bf16.gmra.mxu0 %v2085
  %v2748 = vpop.f32.mrf.mxu0
  %v2749 = vadd.f32 %v2690, %v2748
  %v2750 = vpop.f32.mrf.mxu0
  %v2751 = vadd.f32 %v2692, %v2750
  %2752 = vmatmul.bf16.gmra.mxu0 %v2094
  %v2753 = vpop.f32.mrf.mxu0
  %v2754 = vadd.f32 %v2695, %v2753
  %v2755 = vpop.f32.mrf.mxu0
  %v2756 = vadd.f32 %v2697, %v2755
  %2757 = vmatmul.bf16.gmra.mxu0 %v2103
  %v2758 = vpop.f32.mrf.mxu0
  %v2759 = vadd.f32 %v2700, %v2758
  %v2760 = vpop.f32.mrf.mxu0
  %v2761 = vadd.f32 %v2702, %v2760
  %2762 = vmatmul.bf16.gmra.mxu0 %v2112
  %v2763 = vpop.f32.mrf.mxu0
  %v2764 = vadd.f32 %v2705, %v2763
  %v2765 = vpop.f32.mrf.mxu0
  %v2766 = vadd.f32 %v2707, %v2765
  %2767 = vmatmul.bf16.gmra.mxu0 %v2121
  %v2768 = vpop.f32.mrf.mxu0
  %v2769 = vadd.f32 %v2710, %v2768
  %v2770 = vpop.f32.mrf.mxu0
  %v2771 = vadd.f32 %v2712, %v2770
  %2772 = vmatmul.bf16.gmra.mxu0 %v2130
  %v2773 = vpop.f32.mrf.mxu0
  %v2774 = vadd.f32 %v2715, %v2773
  %v2775 = vpop.f32.mrf.mxu0
  %v2776 = vadd.f32 %v2717, %v2775
  %2777 = vdwg.mxu0
  %2778 = vmatpush.bf16.msra.mxu0 %v2539
  %2779 = vmatpush.bf16.msra.mxu0 %v2538
  %2780 = vmatpush.bf16.msra.mxu0 %v2537
  %2781 = vmatpush.bf16.msra.mxu0 %v2536
  %2782 = vmatpush.bf16.msra.mxu0 %v2535
  %2783 = vmatpush.bf16.msra.mxu0 %v2534
  %2784 = vmatpush.bf16.msra.mxu0 %v2533
  %2785 = vmatpush.bf16.msra.mxu0 %v2532
  %2786 = vmatmul.bf16.gmra.mxu0 %v2050
  %v2787 = vpop.f32.mrf.mxu0
  %v2788 = vadd.f32 %v2729, %v2787
  %v2789 = vpop.f32.mrf.mxu0
  %v2790 = vadd.f32 %v2731, %v2789
  %2791 = vmatmul.bf16.gmra.mxu0 %v2059
  %v2792 = vpop.f32.mrf.mxu0
  %v2793 = vadd.f32 %v2734, %v2792
  %v2794 = vpop.f32.mrf.mxu0
  %v2795 = vadd.f32 %v2736, %v2794
  %2796 = vmatmul.bf16.gmra.mxu0 %v2068
  %v2797 = vpop.f32.mrf.mxu0
  %v2798 = vadd.f32 %v2739, %v2797
  %v2799 = vpop.f32.mrf.mxu0
  %v2800 = vadd.f32 %v2741, %v2799
  %2801 = vmatmul.bf16.gmra.mxu0 %v2077
  %v2802 = vpop.f32.mrf.mxu0
  %v2803 = vadd.f32 %v2744, %v2802
  %v2804 = vpop.f32.mrf.mxu0
  %v2805 = vadd.f32 %v2746, %v2804
  %2806 = vmatmul.bf16.gmra.mxu0 %v2086
  %v2807 = vpop.f32.mrf.mxu0
  %v2808 = vadd.f32 %v2749, %v2807
  %v2809 = vpop.f32.mrf.mxu0
  %v2810 = vadd.f32 %v2751, %v2809
  %2811 = vmatmul.bf16.gmra.mxu0 %v2095
  %v2812 = vpop.f32.mrf.mxu0
  %v2813 = vadd.f32 %v2754, %v2812
  %v2814 = vpop.f32.mrf.mxu0
  %v2815 = vadd.f32 %v2756, %v2814
  %2816 = vmatmul.bf16.gmra.mxu0 %v2104
  %v2817 = vpop.f32.mrf.mxu0
  %v2818 = vadd.f32 %v2759, %v2817
  %v2819 = vpop.f32.mrf.mxu0
  %v2820 = vadd.f32 %v2761, %v2819
  %2821 = vmatmul.bf16.gmra.mxu0 %v2113
  %v2822 = vpop.f32.mrf.mxu0
  %v2823 = vadd.f32 %v2764, %v2822
  %v2824 = vpop.f32.mrf.mxu0
  %v2825 = vadd.f32 %v2766, %v2824
  %2826 = vmatmul.bf16.gmra.mxu0 %v2122
  %v2827 = vpop.f32.mrf.mxu0
  %v2828 = vadd.f32 %v2769, %v2827
  %v2829 = vpop.f32.mrf.mxu0
  %v2830 = vadd.f32 %v2771, %v2829
  %2831 = vmatmul.bf16.gmra.mxu0 %v2131
  %v2832 = vpop.f32.mrf.mxu0
  %v2833 = vadd.f32 %v2774, %v2832
  %v2834 = vpop.f32.mrf.mxu0
  %v2835 = vadd.f32 %v2776, %v2834
  %2836 = vdwg.mxu0
  %2837 = vmatpush.bf16.msra.mxu0 %v2547
  %2838 = vmatpush.bf16.msra.mxu0 %v2546
  %2839 = vmatpush.bf16.msra.mxu0 %v2545
  %2840 = vmatpush.bf16.msra.mxu0 %v2544
  %2841 = vmatpush.bf16.msra.mxu0 %v2543
  %2842 = vmatpush.bf16.msra.mxu0 %v2542
  %2843 = vmatpush.bf16.msra.mxu0 %v2541
  %2844 = vmatpush.bf16.msra.mxu0 %v2540
  %2845 = vmatmul.bf16.gmra.mxu0 %v2051
  %v2846 = vpop.f32.mrf.mxu0
  %v2847 = vadd.f32 %v2788, %v2846
  %v2848 = vpop.f32.mrf.mxu0
  %v2849 = vadd.f32 %v2790, %v2848
  %2850 = vmatmul.bf16.gmra.mxu0 %v2060
  %v2851 = vpop.f32.mrf.mxu0
  %v2852 = vadd.f32 %v2793, %v2851
  %v2853 = vpop.f32.mrf.mxu0
  %v2854 = vadd.f32 %v2795, %v2853
  %2855 = vmatmul.bf16.gmra.mxu0 %v2069
  %v2856 = vpop.f32.mrf.mxu0
  %v2857 = vadd.f32 %v2798, %v2856
  %v2858 = vpop.f32.mrf.mxu0
  %v2859 = vadd.f32 %v2800, %v2858
  %2860 = vmatmul.bf16.gmra.mxu0 %v2078
  %v2861 = vpop.f32.mrf.mxu0
  %v2862 = vadd.f32 %v2803, %v2861
  %v2863 = vpop.f32.mrf.mxu0
  %v2864 = vadd.f32 %v2805, %v2863
  %2865 = vmatmul.bf16.gmra.mxu0 %v2087
  %v2866 = vpop.f32.mrf.mxu0
  %v2867 = vadd.f32 %v2808, %v2866
  %v2868 = vpop.f32.mrf.mxu0
  %v2869 = vadd.f32 %v2810, %v2868
  %2870 = vmatmul.bf16.gmra.mxu0 %v2096
  %v2871 = vpop.f32.mrf.mxu0
  %v2872 = vadd.f32 %v2813, %v2871
  %v2873 = vpop.f32.mrf.mxu0
  %v2874 = vadd.f32 %v2815, %v2873
  %2875 = vmatmul.bf16.gmra.mxu0 %v2105
  %v2876 = vpop.f32.mrf.mxu0
  %v2877 = vadd.f32 %v2818, %v2876
  %v2878 = vpop.f32.mrf.mxu0
  %v2879 = vadd.f32 %v2820, %v2878
  %2880 = vmatmul.bf16.gmra.mxu0 %v2114
  %v2881 = vpop.f32.mrf.mxu0
  %v2882 = vadd.f32 %v2823, %v2881
  %v2883 = vpop.f32.mrf.mxu0
  %v2884 = vadd.f32 %v2825, %v2883
  %2885 = vmatmul.bf16.gmra.mxu0 %v2123
  %v2886 = vpop.f32.mrf.mxu0
  %v2887 = vadd.f32 %v2828, %v2886
  %v2888 = vpop.f32.mrf.mxu0
  %v2889 = vadd.f32 %v2830, %v2888
  %2890 = vmatmul.bf16.gmra.mxu0 %v2132
  %v2891 = vpop.f32.mrf.mxu0
  %v2892 = vadd.f32 %v2833, %v2891
  %v2893 = vpop.f32.mrf.mxu0
  %v2894 = vadd.f32 %v2835, %v2893
  %2895 = vdwg.mxu0
  %2896 = vmatpush.bf16.msra.mxu0 %v2555
  %2897 = vmatpush.bf16.msra.mxu0 %v2554
  %2898 = vmatpush.bf16.msra.mxu0 %v2553
  %2899 = vmatpush.bf16.msra.mxu0 %v2552
  %2900 = vmatpush.bf16.msra.mxu0 %v2551
  %2901 = vmatpush.bf16.msra.mxu0 %v2550
  %2902 = vmatpush.bf16.msra.mxu0 %v2549
  %2903 = vmatpush.bf16.msra.mxu0 %v2548
  %2904 = vmatmul.bf16.gmra.mxu0 %v2052
  %v2905 = vpop.f32.mrf.mxu0
  %v2906 = vadd.f32 %v2847, %v2905
  %v2907 = vpop.f32.mrf.mxu0
  %v2908 = vadd.f32 %v2849, %v2907
  %2909 = vmatmul.bf16.gmra.mxu0 %v2061
  %v2910 = vpop.f32.mrf.mxu0
  %v2911 = vadd.f32 %v2852, %v2910
  %v2912 = vpop.f32.mrf.mxu0
  %v2913 = vadd.f32 %v2854, %v2912
  %2914 = vmatmul.bf16.gmra.mxu0 %v2070
  %v2915 = vpop.f32.mrf.mxu0
  %v2916 = vadd.f32 %v2857, %v2915
  %v2917 = vpop.f32.mrf.mxu0
  %v2918 = vadd.f32 %v2859, %v2917
  %2919 = vmatmul.bf16.gmra.mxu0 %v2079
  %v2920 = vpop.f32.mrf.mxu0
  %v2921 = vadd.f32 %v2862, %v2920
  %v2922 = vpop.f32.mrf.mxu0
  %v2923 = vadd.f32 %v2864, %v2922
  %2924 = vmatmul.bf16.gmra.mxu0 %v2088
  %v2925 = vpop.f32.mrf.mxu0
  %v2926 = vadd.f32 %v2867, %v2925
  %v2927 = vpop.f32.mrf.mxu0
  %v2928 = vadd.f32 %v2869, %v2927
  %2929 = vmatmul.bf16.gmra.mxu0 %v2097
  %v2930 = vpop.f32.mrf.mxu0
  %v2931 = vadd.f32 %v2872, %v2930
  %v2932 = vpop.f32.mrf.mxu0
  %v2933 = vadd.f32 %v2874, %v2932
  %2934 = vmatmul.bf16.gmra.mxu0 %v2106
  %v2935 = vpop.f32.mrf.mxu0
  %v2936 = vadd.f32 %v2877, %v2935
  %v2937 = vpop.f32.mrf.mxu0
  %v2938 = vadd.f32 %v2879, %v2937
  %2939 = vmatmul.bf16.gmra.mxu0 %v2115
  %v2940 = vpop.f32.mrf.mxu0
  %v2941 = vadd.f32 %v2882, %v2940
  %v2942 = vpop.f32.mrf.mxu0
  %v2943 = vadd.f32 %v2884, %v2942
  %2944 = vmatmul.bf16.gmra.mxu0 %v2124
  %v2945 = vpop.f32.mrf.mxu0
  %v2946 = vadd.f32 %v2887, %v2945
  %v2947 = vpop.f32.mrf.mxu0
  %v2948 = vadd.f32 %v2889, %v2947
  %2949 = vmatmul.bf16.gmra.mxu0 %v2133
  %v2950 = vpop.f32.mrf.mxu0
  %v2951 = vadd.f32 %v2892, %v2950
  %v2952 = vpop.f32.mrf.mxu0
  %v2953 = vadd.f32 %v2894, %v2952
  %2954 = vdwg.mxu0
  %2955 = vmatpush.bf16.msra.mxu0 %v2563
  %2956 = vmatpush.bf16.msra.mxu0 %v2562
  %2957 = vmatpush.bf16.msra.mxu0 %v2561
  %2958 = vmatpush.bf16.msra.mxu0 %v2560
  %2959 = vmatpush.bf16.msra.mxu0 %v2559
  %2960 = vmatpush.bf16.msra.mxu0 %v2558
  %2961 = vmatpush.bf16.msra.mxu0 %v2557
  %2962 = vmatpush.bf16.msra.mxu0 %v2556
  %2963 = vmatmul.bf16.gmra.mxu0 %v2053
  %v2964 = vpop.f32.mrf.mxu0
  %v2965 = vadd.f32 %v2906, %v2964
  %v2966 = vpop.f32.mrf.mxu0
  %v2967 = vadd.f32 %v2908, %v2966
  %2968 = vmatmul.bf16.gmra.mxu0 %v2062
  %v2969 = vpop.f32.mrf.mxu0
  %v2970 = vadd.f32 %v2911, %v2969
  %v2971 = vpop.f32.mrf.mxu0
  %v2972 = vadd.f32 %v2913, %v2971
  %2973 = vmatmul.bf16.gmra.mxu0 %v2071
  %v2974 = vpop.f32.mrf.mxu0
  %v2975 = vadd.f32 %v2916, %v2974
  %v2976 = vpop.f32.mrf.mxu0
  %v2977 = vadd.f32 %v2918, %v2976
  %2978 = vmatmul.bf16.gmra.mxu0 %v2080
  %v2979 = vpop.f32.mrf.mxu0
  %v2980 = vadd.f32 %v2921, %v2979
  %v2981 = vpop.f32.mrf.mxu0
  %v2982 = vadd.f32 %v2923, %v2981
  %2983 = vmatmul.bf16.gmra.mxu0 %v2089
  %v2984 = vpop.f32.mrf.mxu0
  %v2985 = vadd.f32 %v2926, %v2984
  %v2986 = vpop.f32.mrf.mxu0
  %v2987 = vadd.f32 %v2928, %v2986
  %2988 = vmatmul.bf16.gmra.mxu0 %v2098
  %v2989 = vpop.f32.mrf.mxu0
  %v2990 = vadd.f32 %v2931, %v2989
  %v2991 = vpop.f32.mrf.mxu0
  %v2992 = vadd.f32 %v2933, %v2991
  %2993 = vmatmul.bf16.gmra.mxu0 %v2107
  %v2994 = vpop.f32.mrf.mxu0
  %v2995 = vadd.f32 %v2936, %v2994
  %v2996 = vpop.f32.mrf.mxu0
  %v2997 = vadd.f32 %v2938, %v2996
  %2998 = vmatmul.bf16.gmra.mxu0 %v2116
  %v2999 = vpop.f32.mrf.mxu0
  %v3000 = vadd.f32 %v2941, %v2999
  %v3001 = vpop.f32.mrf.mxu0
  %v3002 = vadd.f32 %v2943, %v3001
  %3003 = vmatmul.bf16.gmra.mxu0 %v2125
  %v3004 = vpop.f32.mrf.mxu0
  %v3005 = vadd.f32 %v2946, %v3004
  %v3006 = vpop.f32.mrf.mxu0
  %v3007 = vadd.f32 %v2948, %v3006
  %3008 = vmatmul.bf16.gmra.mxu0 %v2134
  %v3009 = vpop.f32.mrf.mxu0
  %v3010 = vadd.f32 %v2951, %v3009
  %v3011 = vpop.f32.mrf.mxu0
  %v3012 = vadd.f32 %v2953, %v3011
  %3013 = vdwg.mxu0
  %3014 = vmatpush.bf16.msra.mxu0 %v2571
  %3015 = vmatpush.bf16.msra.mxu0 %v2570
  %3016 = vmatpush.bf16.msra.mxu0 %v2569
  %3017 = vmatpush.bf16.msra.mxu0 %v2568
  %3018 = vmatpush.bf16.msra.mxu0 %v2567
  %3019 = vmatpush.bf16.msra.mxu0 %v2566
  %3020 = vmatpush.bf16.msra.mxu0 %v2565
  %3021 = vmatpush.bf16.msra.mxu0 %v2564
  %3022 = vmatmul.bf16.gmra.mxu0 %v2054
  %v3023 = vpop.f32.mrf.mxu0
  %v3024 = vadd.f32 %v2965, %v3023
  %v3025 = vpop.f32.mrf.mxu0
  %v3026 = vadd.f32 %v2967, %v3025
  %3027 = vmatmul.bf16.gmra.mxu0 %v2063
  %v3028 = vpop.f32.mrf.mxu0
  %v3029 = vadd.f32 %v2970, %v3028
  %v3030 = vpop.f32.mrf.mxu0
  %v3031 = vadd.f32 %v2972, %v3030
  %3032 = vmatmul.bf16.gmra.mxu0 %v2072
  %v3033 = vpop.f32.mrf.mxu0
  %v3034 = vadd.f32 %v2975, %v3033
  %v3035 = vpop.f32.mrf.mxu0
  %v3036 = vadd.f32 %v2977, %v3035
  %3037 = vmatmul.bf16.gmra.mxu0 %v2081
  %v3038 = vpop.f32.mrf.mxu0
  %v3039 = vadd.f32 %v2980, %v3038
  %v3040 = vpop.f32.mrf.mxu0
  %v3041 = vadd.f32 %v2982, %v3040
  %3042 = vmatmul.bf16.gmra.mxu0 %v2090
  %v3043 = vpop.f32.mrf.mxu0
  %v3044 = vadd.f32 %v2985, %v3043
  %v3045 = vpop.f32.mrf.mxu0
  %v3046 = vadd.f32 %v2987, %v3045
  %3047 = vmatmul.bf16.gmra.mxu0 %v2099
  %v3048 = vpop.f32.mrf.mxu0
  %v3049 = vadd.f32 %v2990, %v3048
  %v3050 = vpop.f32.mrf.mxu0
  %v3051 = vadd.f32 %v2992, %v3050
  %3052 = vmatmul.bf16.gmra.mxu0 %v2108
  %v3053 = vpop.f32.mrf.mxu0
  %v3054 = vadd.f32 %v2995, %v3053
  %v3055 = vpop.f32.mrf.mxu0
  %v3056 = vadd.f32 %v2997, %v3055
  %3057 = vmatmul.bf16.gmra.mxu0 %v2117
  %v3058 = vpop.f32.mrf.mxu0
  %v3059 = vadd.f32 %v3000, %v3058
  %v3060 = vpop.f32.mrf.mxu0
  %v3061 = vadd.f32 %v3002, %v3060
  %3062 = vmatmul.bf16.gmra.mxu0 %v2126
  %v3063 = vpop.f32.mrf.mxu0
  %v3064 = vadd.f32 %v3005, %v3063
  %v3065 = vpop.f32.mrf.mxu0
  %v3066 = vadd.f32 %v3007, %v3065
  %3067 = vmatmul.bf16.gmra.mxu0 %v2135
  %v3068 = vpop.f32.mrf.mxu0
  %v3069 = vadd.f32 %v3010, %v3068
  %v3070 = vpop.f32.mrf.mxu0
  %v3071 = vadd.f32 %v3012, %v3070
  %3072 = vdwg.mxu0
  %3073 = vmatpush.bf16.msra.mxu0 %v2579
  %3074 = vmatpush.bf16.msra.mxu0 %v2578
  %3075 = vmatpush.bf16.msra.mxu0 %v2577
  %3076 = vmatpush.bf16.msra.mxu0 %v2576
  %3077 = vmatpush.bf16.msra.mxu0 %v2575
  %3078 = vmatpush.bf16.msra.mxu0 %v2574
  %3079 = vmatpush.bf16.msra.mxu0 %v2573
  %3080 = vmatpush.bf16.msra.mxu0 %v2572
  %3081 = vmatmul.bf16.gmra.mxu0 %v2055
  %v3082 = vpop.f32.mrf.mxu0
  %v3083 = vadd.f32 %v3024, %v3082
  %v3084 = vpop.f32.mrf.mxu0
  %v3085 = vadd.f32 %v3026, %v3084
  %3086 = vmatmul.bf16.gmra.mxu0 %v2064
  %v3087 = vpop.f32.mrf.mxu0
  %v3088 = vadd.f32 %v3029, %v3087
  %v3089 = vpop.f32.mrf.mxu0
  %v3090 = vadd.f32 %v3031, %v3089
  %3091 = vmatmul.bf16.gmra.mxu0 %v2073
  %v3092 = vpop.f32.mrf.mxu0
  %v3093 = vadd.f32 %v3034, %v3092
  %v3094 = vpop.f32.mrf.mxu0
  %v3095 = vadd.f32 %v3036, %v3094
  %3096 = vmatmul.bf16.gmra.mxu0 %v2082
  %v3097 = vpop.f32.mrf.mxu0
  %v3098 = vadd.f32 %v3039, %v3097
  %v3099 = vpop.f32.mrf.mxu0
  %v3100 = vadd.f32 %v3041, %v3099
  %3101 = vmatmul.bf16.gmra.mxu0 %v2091
  %v3102 = vpop.f32.mrf.mxu0
  %v3103 = vadd.f32 %v3044, %v3102
  %v3104 = vpop.f32.mrf.mxu0
  %v3105 = vadd.f32 %v3046, %v3104
  %3106 = vmatmul.bf16.gmra.mxu0 %v2100
  %v3107 = vpop.f32.mrf.mxu0
  %v3108 = vadd.f32 %v3049, %v3107
  %v3109 = vpop.f32.mrf.mxu0
  %v3110 = vadd.f32 %v3051, %v3109
  %3111 = vmatmul.bf16.gmra.mxu0 %v2109
  %v3112 = vpop.f32.mrf.mxu0
  %v3113 = vadd.f32 %v3054, %v3112
  %v3114 = vpop.f32.mrf.mxu0
  %v3115 = vadd.f32 %v3056, %v3114
  %3116 = vmatmul.bf16.gmra.mxu0 %v2118
  %v3117 = vpop.f32.mrf.mxu0
  %v3118 = vadd.f32 %v3059, %v3117
  %v3119 = vpop.f32.mrf.mxu0
  %v3120 = vadd.f32 %v3061, %v3119
  %3121 = vmatmul.bf16.gmra.mxu0 %v2127
  %v3122 = vpop.f32.mrf.mxu0
  %v3123 = vadd.f32 %v3064, %v3122
  %v3124 = vpop.f32.mrf.mxu0
  %v3125 = vadd.f32 %v3066, %v3124
  %3126 = vmatmul.bf16.gmra.mxu0 %v2136
  %v3127 = vpop.f32.mrf.mxu0
  %v3128 = vadd.f32 %v3069, %v3127
  %v3129 = vpop.f32.mrf.mxu0
  %v3130 = vadd.f32 %v3071, %v3129
  %3131 = vdwg.mxu0
  %3132 = vmatpush.bf16.msra.mxu0 %v2587
  %3133 = vmatpush.bf16.msra.mxu0 %v2586
  %3134 = vmatpush.bf16.msra.mxu0 %v2585
  %3135 = vmatpush.bf16.msra.mxu0 %v2584
  %3136 = vmatpush.bf16.msra.mxu0 %v2583
  %3137 = vmatpush.bf16.msra.mxu0 %v2582
  %3138 = vmatpush.bf16.msra.mxu0 %v2581
  %3139 = vmatpush.bf16.msra.mxu0 %v2580
  %3140 = vmatmul.bf16.gmra.mxu0 %v2056
  %v3141 = vpop.f32.mrf.mxu0
  %v3142 = vadd.f32 %v3083, %v3141
  %v3143 = vpop.f32.mrf.mxu0
  %v3144 = vadd.f32 %v3085, %v3143
  %3145 = vmatmul.bf16.gmra.mxu0 %v2065
  %v3146 = vpop.f32.mrf.mxu0
  %v3147 = vadd.f32 %v3088, %v3146
  %v3148 = vpop.f32.mrf.mxu0
  %v3149 = vadd.f32 %v3090, %v3148
  %3150 = vmatmul.bf16.gmra.mxu0 %v2074
  %v3151 = vpop.f32.mrf.mxu0
  %v3152 = vadd.f32 %v3093, %v3151
  %v3153 = vpop.f32.mrf.mxu0
  %v3154 = vadd.f32 %v3095, %v3153
  %3155 = vmatmul.bf16.gmra.mxu0 %v2083
  %v3156 = vpop.f32.mrf.mxu0
  %v3157 = vadd.f32 %v3098, %v3156
  %v3158 = vpop.f32.mrf.mxu0
  %v3159 = vadd.f32 %v3100, %v3158
  %3160 = vmatmul.bf16.gmra.mxu0 %v2092
  %v3161 = vpop.f32.mrf.mxu0
  %v3162 = vadd.f32 %v3103, %v3161
  %v3163 = vpop.f32.mrf.mxu0
  %v3164 = vadd.f32 %v3105, %v3163
  %3165 = vmatmul.bf16.gmra.mxu0 %v2101
  %v3166 = vpop.f32.mrf.mxu0
  %v3167 = vadd.f32 %v3108, %v3166
  %v3168 = vpop.f32.mrf.mxu0
  %v3169 = vadd.f32 %v3110, %v3168
  %3170 = vmatmul.bf16.gmra.mxu0 %v2110
  %v3171 = vpop.f32.mrf.mxu0
  %v3172 = vadd.f32 %v3113, %v3171
  %v3173 = vpop.f32.mrf.mxu0
  %v3174 = vadd.f32 %v3115, %v3173
  %3175 = vmatmul.bf16.gmra.mxu0 %v2119
  %v3176 = vpop.f32.mrf.mxu0
  %v3177 = vadd.f32 %v3118, %v3176
  %v3178 = vpop.f32.mrf.mxu0
  %v3179 = vadd.f32 %v3120, %v3178
  %3180 = vmatmul.bf16.gmra.mxu0 %v2128
  %v3181 = vpop.f32.mrf.mxu0
  %v3182 = vadd.f32 %v3123, %v3181
  %v3183 = vpop.f32.mrf.mxu0
  %v3184 = vadd.f32 %v3125, %v3183
  %3185 = vmatmul.bf16.gmra.mxu0 %v2137
  %v3186 = vpop.f32.mrf.mxu0
  %v3187 = vadd.f32 %v3128, %v3186
  %v3188 = vpop.f32.mrf.mxu0
  %v3189 = vadd.f32 %v3130, %v3188
  %3190 = vdwg.mxu0
  %v3191 = vmax.f32 %v3142, 0.0
  %v3192 = vmax.f32 %v3144, 0.0
  %v3193 = vmax.f32 %v3147, 0.0
  %v3194 = vmax.f32 %v3149, 0.0
  %v3195 = vmax.f32 %v3152, 0.0
  %v3196 = vmax.f32 %v3154, 0.0
  %v3197 = vmax.f32 %v3157, 0.0
  %v3198 = vmax.f32 %v3159, 0.0
  %v3199 = vmax.f32 %v3162, 0.0
  %v3200 = vmax.f32 %v3164, 0.0
  %v3201 = vmax.f32 %v3167, 0.0
  %v3202 = vmax.f32 %v3169, 0.0
  %v3203 = vmax.f32 %v3172, 0.0
  %v3204 = vmax.f32 %v3174, 0.0
  %v3205 = vmax.f32 %v3177, 0.0
  %v3206 = vmax.f32 %v3179, 0.0
  %v3207 = vmax.f32 %v3182, 0.0
  %v3208 = vmax.f32 %v3184, 0.0
  %v3209 = vmax.f32 %v3187, 0.0
  %v3210 = vmax.f32 %v3189, 0.0
  %v3211 = vld [vmem:[%s1] sm:$0xff]
  %v3212 = vld [vmem:[%s1 + $0x8] sm:$0xff]
  %v3213 = vld [vmem:[%s1 + $0x10] sm:$0xff]
  %v3214 = vld [vmem:[%s1 + $0x18] sm:$0xff]
  %v3215 = vld [vmem:[%s1 + $0x20] sm:$0xff]
  %v3216 = vld [vmem:[%s1 + $0x28] sm:$0xff]
  %v3217 = vld [vmem:[%s1 + $0x30] sm:$0xff]
  %v3218 = vld [vmem:[%s1 + $0x38] sm:$0xff]
  %v3219 = vld [vmem:[%s1 + $0x40] sm:$0xff]
  %v3220 = vld [vmem:[%s1 + $0x48] sm:$0xff]
  %v3221 = vld [vmem:[%s1 + $0x50] sm:$0xff]
  %v3222 = vld [vmem:[%s1 + $0x58] sm:$0xff]
  %v3223 = vld [vmem:[%s1 + $0x60] sm:$0xff]
  %v3224 = vld [vmem:[%s1 + $0x68] sm:$0xff]
  %v3225 = vld [vmem:[%s1 + $0x70] sm:$0xff]
  %v3226 = vld [vmem:[%s1 + $0x78] sm:$0xff]
  %v3227 = vld [vmem:[%s1 + $0x80] sm:$0xff]
  %v3228 = vld [vmem:[%s1 + $0x88] sm:$0xff]
  %v3229 = vld [vmem:[%s1 + $0x90] sm:$0xff]
  %v3230 = vld [vmem:[%s1 + $0x98] sm:$0xff]
  %3232 = vset.pattern.permute.xlu0 0
  %3233 = vperm.xlu0 %3232, %v3211
  %v3234 = vpop.permute.xlu0 %3233
  %3237 = vset.pattern.permute.xlu0 0
  %3238 = vperm.xlu0 %3237, %v3212
  %v3239 = vpop.permute.xlu0 %3238
  %3242 = vset.pattern.permute.xlu0 0
  %3243 = vperm.xlu0 %3242, %v3213
  %v3244 = vpop.permute.xlu0 %3243
  %3247 = vset.pattern.permute.xlu0 0
  %3248 = vperm.xlu0 %3247, %v3214
  %v3249 = vpop.permute.xlu0 %3248
  %3252 = vset.pattern.permute.xlu0 0
  %3253 = vperm.xlu0 %3252, %v3215
  %v3254 = vpop.permute.xlu0 %3253
  %3257 = vset.pattern.permute.xlu0 0
  %3258 = vperm.xlu0 %3257, %v3216
  %v3259 = vpop.permute.xlu0 %3258
  %3262 = vset.pattern.permute.xlu0 0
  %3263 = vperm.xlu0 %3262, %v3217
  %v3264 = vpop.permute.xlu0 %3263
  %3267 = vset.pattern.permute.xlu0 0
  %3268 = vperm.xlu0 %3267, %v3218
  %v3269 = vpop.permute.xlu0 %3268
  %3272 = vset.pattern.permute.xlu0 0
  %3273 = vperm.xlu0 %3272, %v3219
  %v3274 = vpop.permute.xlu0 %3273
  %3277 = vset.pattern.permute.xlu0 0
  %3278 = vperm.xlu0 %3277, %v3220
  %v3279 = vpop.permute.xlu0 %3278
  %3282 = vset.pattern.permute.xlu0 0
  %3283 = vperm.xlu0 %3282, %v3221
  %v3284 = vpop.permute.xlu0 %3283
  %3287 = vset.pattern.permute.xlu0 0
  %3288 = vperm.xlu0 %3287, %v3222
  %v3289 = vpop.permute.xlu0 %3288
  %3292 = vset.pattern.permute.xlu0 0
  %3293 = vperm.xlu0 %3292, %v3223
  %v3294 = vpop.permute.xlu0 %3293
  %3297 = vset.pattern.permute.xlu0 0
  %3298 = vperm.xlu0 %3297, %v3224
  %v3299 = vpop.permute.xlu0 %3298
  %3302 = vset.pattern.permute.xlu0 0
  %3303 = vperm.xlu0 %3302, %v3225
  %v3304 = vpop.permute.xlu0 %3303
  %3307 = vset.pattern.permute.xlu0 0
  %3308 = vperm.xlu0 %3307, %v3226
  %v3309 = vpop.permute.xlu0 %3308
  %3312 = vset.pattern.permute.xlu0 0
  %3313 = vperm.xlu0 %3312, %v3227
  %v3314 = vpop.permute.xlu0 %3313
  %3317 = vset.pattern.permute.xlu0 0
  %3318 = vperm.xlu0 %3317, %v3228
  %v3319 = vpop.permute.xlu0 %3318
  %3322 = vset.pattern.permute.xlu0 0
  %3323 = vperm.xlu0 %3322, %v3229
  %v3324 = vpop.permute.xlu0 %3323
  %3327 = vset.pattern.permute.xlu0 0
  %3328 = vperm.xlu0 %3327, %v3230
  %v3329 = vpop.permute.xlu0 %3328
  %v3331 = vmul.f32 %v3191, %v3234
  %v3332 = vmul.f32 %v3192, %v3239
  %v3333 = vmul.f32 %v3193, %v3244
  %v3334 = vmul.f32 %v3194, %v3249
  %v3335 = vmul.f32 %v3195, %v3254
  %v3336 = vmul.f32 %v3196, %v3259
  %v3337 = vmul.f32 %v3197, %v3264
  %v3338 = vmul.f32 %v3198, %v3269
  %v3339 = vmul.f32 %v3199, %v3274
  %v3340 = vmul.f32 %v3200, %v3279
  %v3341 = vmul.f32 %v3201, %v3284
  %v3342 = vmul.f32 %v3202, %v3289
  %v3343 = vmul.f32 %v3203, %v3294
  %v3344 = vmul.f32 %v3204, %v3299
  %v3345 = vmul.f32 %v3205, %v3304
  %v3346 = vmul.f32 %v3206, %v3309
  %v3347 = vmul.f32 %v3207, %v3314
  %v3348 = vmul.f32 %v3208, %v3319
  %v3349 = vmul.f32 %v3209, %v3324
  %v3350 = vmul.f32 %v3210, %v3329
  %v3351 = vpack.c.bf16 %v3331, %v3331
  %v3352 = vpack.c.bf16 %v3332, %v3332
  %v3353 = vpack.c.bf16 %v3333, %v3333
  %v3354 = vpack.c.bf16 %v3334, %v3334
  %v3355 = vpack.c.bf16 %v3335, %v3335
  %v3356 = vpack.c.bf16 %v3336, %v3336
  %v3357 = vpack.c.bf16 %v3337, %v3337
  %v3358 = vpack.c.bf16 %v3338, %v3338
  %v3359 = vpack.c.bf16 %v3339, %v3339
  %v3360 = vpack.c.bf16 %v3340, %v3340
  %v3361 = vpack.c.bf16 %v3341, %v3341
  %v3362 = vpack.c.bf16 %v3342, %v3342
  %v3363 = vpack.c.bf16 %v3343, %v3343
  %v3364 = vpack.c.bf16 %v3344, %v3344
  %v3365 = vpack.c.bf16 %v3345, %v3345
  %v3366 = vpack.c.bf16 %v3346, %v3346
  %v3367 = vpack.c.bf16 %v3347, %v3347
  %v3368 = vpack.c.bf16 %v3348, %v3348
  %v3369 = vpack.c.bf16 %v3349, %v3349
  %v3370 = vpack.c.bf16 %v3350, %v3350
  %3371 = vst [vmem:[#allocation3] sm:$0xf] 0
  %vm3372 = vsmask.f32 1280
  %vm3373 = vmand %vm66, %vm3372
  %v3374 = vld [vmem:[#allocation3 + $0x4] sm:$0x3]
  %v3375 = vsel %vm3373, 0, %v3374
  %3376 = vst [vmem:[#allocation3 + $0x4] sm:$0x3] %v3375
  %vm3377 = vcmask 1043457
  %vm3378 = vsmask.f32 7942
  %vm3379 = vmand %vm3377, %vm3378
  %v3380 = vld [vmem:[#allocation3 + $0x2c] sm:$0xe]
  %v3381 = vsel %vm3379, 0, %v3380
  %3382 = vst [vmem:[#allocation3 + $0x2c] sm:$0xe] %v3381
  %3383 = vst [vmem:[#allocation3 + $0x30] sm:$0xf] 0
  %3384 = vst [vmem:[#allocation3 + $0x34] sm:$0x7] 0
  %vm3385 = vsmask.f32 5392
  %vm3386 = vmor %vm3372, %vm3385
  %v3388 = vshrl.u32 %v3351, 16
  %v3390 = vrot.slane %v3388, 6
  %v3391 = vshll.u32 %v3351, 16
  %v3393 = vrot.slane %v3391, 7
  %v3394 = vor.u32 %v3390, %v3393
  %v3395 = vrot.slane %v3394, 4
  %v3397 = vshrl.u32 %v3352, 16
  %v3399 = vrot.slane %v3397, 6
  %v3400 = vshll.u32 %v3352, 16
  %v3402 = vrot.slane %v3400, 7
  %v3403 = vor.u32 %v3399, %v3402
  %v3404 = vsel %vm3386, %v3395, %v3403
  %v3405 = vrot.slane %v3403, 4
  %v3407 = vshrl.u32 %v3353, 16
  %v3409 = vrot.slane %v3407, 6
  %v3410 = vshll.u32 %v3353, 16
  %v3412 = vrot.slane %v3410, 7
  %v3413 = vor.u32 %v3409, %v3412
  %v3414 = vsel %vm3386, %v3405, %v3413
  %v3415 = vrot.slane %v3413, 4
  %v3417 = vshrl.u32 %v3354, 16
  %v3419 = vrot.slane %v3417, 6
  %v3420 = vshll.u32 %v3354, 16
  %v3422 = vrot.slane %v3420, 7
  %v3423 = vor.u32 %v3419, %v3422
  %v3424 = vsel %vm3386, %v3415, %v3423
  %v3425 = vrot.slane %v3423, 4
  %v3427 = vshrl.u32 %v3355, 16
  %v3429 = vrot.slane %v3427, 6
  %v3430 = vshll.u32 %v3355, 16
  %v3432 = vrot.slane %v3430, 7
  %v3433 = vor.u32 %v3429, %v3432
  %v3434 = vsel %vm3386, %v3425, %v3433
  %v3435 = vrot.slane %v3433, 4
  %v3437 = vshrl.u32 %v3356, 16
  %v3439 = vrot.slane %v3437, 6
  %v3440 = vshll.u32 %v3356, 16
  %v3442 = vrot.slane %v3440, 7
  %v3443 = vor.u32 %v3439, %v3442
  %v3444 = vsel %vm3386, %v3435, %v3443
  %v3445 = vrot.slane %v3443, 4
  %v3447 = vshrl.u32 %v3357, 16
  %v3449 = vrot.slane %v3447, 6
  %v3450 = vshll.u32 %v3357, 16
  %v3452 = vrot.slane %v3450, 7
  %v3453 = vor.u32 %v3449, %v3452
  %v3454 = vsel %vm3386, %v3445, %v3453
  %v3455 = vrot.slane %v3453, 4
  %v3457 = vshrl.u32 %v3358, 16
  %v3459 = vrot.slane %v3457, 6
  %v3460 = vshll.u32 %v3358, 16
  %v3462 = vrot.slane %v3460, 7
  %v3463 = vor.u32 %v3459, %v3462
  %v3464 = vsel %vm3386, %v3455, %v3463
  %v3465 = vrot.slane %v3463, 4
  %v3467 = vshrl.u32 %v3359, 16
  %v3469 = vrot.slane %v3467, 6
  %v3470 = vshll.u32 %v3359, 16
  %v3472 = vrot.slane %v3470, 7
  %v3473 = vor.u32 %v3469, %v3472
  %v3474 = vsel %vm3386, %v3465, %v3473
  %v3475 = vrot.slane %v3473, 4
  %v3477 = vshrl.u32 %v3360, 16
  %v3479 = vrot.slane %v3477, 6
  %v3480 = vshll.u32 %v3360, 16
  %v3482 = vrot.slane %v3480, 7
  %v3483 = vor.u32 %v3479, %v3482
  %v3484 = vsel %vm3386, %v3475, %v3483
  %v3485 = vrot.slane %v3483, 4
  %v3497 = vld [vmem:[#allocation3 + $0x4] sm:$0xe]
  %v3498 = vsel %vm3379, %v3394, %v3497
  %3499 = vst [vmem:[#allocation3 + $0x4] sm:$0xe] %v3498
  %3500 = vst [vmem:[#allocation3 + $0x8] sm:$0xf] %v3404
  %3501 = vst [vmem:[#allocation3 + $0xc] sm:$0xf] %v3414
  %3502 = vst [vmem:[#allocation3 + $0x10] sm:$0xf] %v3424
  %3503 = vst [vmem:[#allocation3 + $0x14] sm:$0xf] %v3434
  %3504 = vst [vmem:[#allocation3 + $0x18] sm:$0xf] %v3444
  %3505 = vst [vmem:[#allocation3 + $0x1c] sm:$0xf] %v3454
  %3506 = vst [vmem:[#allocation3 + $0x20] sm:$0xf] %v3464
  %3507 = vst [vmem:[#allocation3 + $0x24] sm:$0xf] %v3474
  %3508 = vst [vmem:[#allocation3 + $0x28] sm:$0xf] %v3484
  %v3509 = vld [vmem:[#allocation3 + $0x2c] sm:$0x3]
  %v3510 = vsel %vm3373, %v3485, %v3509
  %3511 = vst [vmem:[#allocation3 + $0x2c] sm:$0x3] %v3510
  %3512 = vst [vmem:[#allocation3 + $0x34] sm:$0x8] 0
  %3513 = vst [vmem:[#allocation3 + $0x38] sm:$0xf] 0
  %vm3514 = vsmask.f32 256
  %vm3515 = vmand %vm584, %vm3514
  %v3516 = vld [vmem:[#allocation3 + $0x3c] sm:$0x1]
  %v3517 = vsel %vm3515, 0, %v3516
  %3518 = vst [vmem:[#allocation3 + $0x3c] sm:$0x1] %v3517
  %vm3519 = vcmask 1043456
  %vm3520 = vsmask.f32 7938
  %vm3521 = vmand %vm3519, %vm3520
  %v3522 = vld [vmem:[#allocation3 + $0x64] sm:$0xf]
  %v3523 = vsel %vm3521, 0, %v3522
  %3524 = vst [vmem:[#allocation3 + $0x64] sm:$0xf] %v3523
  %3525 = vst [vmem:[#allocation3 + $0x68] sm:$0xf] 0
  %3526 = vst [vmem:[#allocation3 + $0x6c] sm:$0x3] 0
  %vm3527 = vsmask.f32 4368
  %vm3528 = vmor %vm3514, %vm3527
  %v3530 = vshrl.u32 %v3361, 16
  %v3532 = vrot.slane %v3530, 7
  %v3533 = vshll.u32 %v3361, 16
  %v3535 = vor.u32 %v3532, %v3533
  %v3536 = vrot.slane %v3532, 4
  %v3538 = vshrl.u32 %v3362, 16
  %v3540 = vrot.slane %v3538, 7
  %v3541 = vshll.u32 %v3362, 16
  %v3543 = vor.u32 %v3540, %v3541
  %v3544 = vsel %vm3528, %v3536, %v3543
  %v3545 = vrot.slane %v3540, 4
  %v3547 = vshrl.u32 %v3363, 16
  %v3549 = vrot.slane %v3547, 7
  %v3550 = vshll.u32 %v3363, 16
  %v3552 = vor.u32 %v3549, %v3550
  %v3553 = vsel %vm3528, %v3545, %v3552
  %v3554 = vrot.slane %v3549, 4
  %v3556 = vshrl.u32 %v3364, 16
  %v3558 = vrot.slane %v3556, 7
  %v3559 = vshll.u32 %v3364, 16
  %v3561 = vor.u32 %v3558, %v3559
  %v3562 = vsel %vm3528, %v3554, %v3561
  %v3563 = vrot.slane %v3558, 4
  %v3565 = vshrl.u32 %v3365, 16
  %v3567 = vrot.slane %v3565, 7
  %v3568 = vshll.u32 %v3365, 16
  %v3570 = vor.u32 %v3567, %v3568
  %v3571 = vsel %vm3528, %v3563, %v3570
  %v3572 = vrot.slane %v3567, 4
  %v3574 = vshrl.u32 %v3366, 16
  %v3576 = vrot.slane %v3574, 7
  %v3577 = vshll.u32 %v3366, 16
  %v3579 = vor.u32 %v3576, %v3577
  %v3580 = vsel %vm3528, %v3572, %v3579
  %v3581 = vrot.slane %v3576, 4
  %v3583 = vshrl.u32 %v3367, 16
  %v3585 = vrot.slane %v3583, 7
  %v3586 = vshll.u32 %v3367, 16
  %v3588 = vor.u32 %v3585, %v3586
  %v3589 = vsel %vm3528, %v3581, %v3588
  %v3590 = vrot.slane %v3585, 4
  %v3592 = vshrl.u32 %v3368, 16
  %v3594 = vrot.slane %v3592, 7
  %v3595 = vshll.u32 %v3368, 16
  %v3597 = vor.u32 %v3594, %v3595
  %v3598 = vsel %vm3528, %v3590, %v3597
  %v3599 = vrot.slane %v3594, 4
  %v3601 = vshrl.u32 %v3369, 16
  %v3603 = vrot.slane %v3601, 7
  %v3604 = vshll.u32 %v3369, 16
  %v3606 = vor.u32 %v3603, %v3604
  %v3607 = vsel %vm3528, %v3599, %v3606
  %v3608 = vrot.slane %v3603, 4
  %v3610 = vshrl.u32 %v3370, 16
  %v3612 = vrot.slane %v3610, 7
  %v3613 = vshll.u32 %v3370, 16
  %v3615 = vor.u32 %v3612, %v3613
  %v3616 = vsel %vm3528, %v3608, %v3615
  %v3617 = vrot.slane %v3612, 4
  %v3629 = vld [vmem:[#allocation3 + $0x3c] sm:$0xf]
  %v3630 = vsel %vm3521, %v3535, %v3629
  %3631 = vst [vmem:[#allocation3 + $0x3c] sm:$0xf] %v3630
  %3632 = vst [vmem:[#allocation3 + $0x40] sm:$0xf] %v3544
  %3633 = vst [vmem:[#allocation3 + $0x44] sm:$0xf] %v3553
  %3634 = vst [vmem:[#allocation3 + $0x48] sm:$0xf] %v3562
  %3635 = vst [vmem:[#allocation3 + $0x4c] sm:$0xf] %v3571
  %3636 = vst [vmem:[#allocation3 + $0x50] sm:$0xf] %v3580
  %3637 = vst [vmem:[#allocation3 + $0x54] sm:$0xf] %v3589
  %3638 = vst [vmem:[#allocation3 + $0x58] sm:$0xf] %v3598
  %3639 = vst [vmem:[#allocation3 + $0x5c] sm:$0xf] %v3607
  %3640 = vst [vmem:[#allocation3 + $0x60] sm:$0xf] %v3616
  %v3641 = vld [vmem:[#allocation3 + $0x64] sm:$0x1]
  %v3642 = vsel %vm3515, %v3617, %v3641
  %3643 = vst [vmem:[#allocation3 + $0x64] sm:$0x1] %v3642
  %v3644 = vld [vmem:[#allocation3] sm:$0xf]
  %v3645 = vld [vmem:[#allocation3 + $0x4] sm:$0xf]
  %v3646 = vld [vmem:[#allocation3 + $0x8] sm:$0xf]
  %v3647 = vld [vmem:[#allocation3 + $0xc] sm:$0xf]
  %v3648 = vld [vmem:[#allocation3 + $0x10] sm:$0xf]
  %v3649 = vld [vmem:[#allocation3 + $0x14] sm:$0xf]
  %v3650 = vld [vmem:[#allocation3 + $0x18] sm:$0xf]
  %v3651 = vld [vmem:[#allocation3 + $0x1c] sm:$0xf]
  %v3652 = vld [vmem:[#allocation3 + $0x20] sm:$0xf]
  %v3653 = vld [vmem:[#allocation3 + $0x24] sm:$0xf]
  %3654 = vst [vmem:[#allocation2] sm:$0xf] %v3644
  %3655 = vst [vmem:[#allocation2 + $0x24] sm:$0xf] %v3645
  %3656 = vst [vmem:[#allocation2 + $0x48] sm:$0xf] %v3646
  %3657 = vst [vmem:[#allocation2 + $0x6c] sm:$0xf] %v3647
  %3658 = vst [vmem:[#allocation2 + $0x90] sm:$0xf] %v3648
  %3659 = vst [vmem:[#allocation2 + $0xb4] sm:$0xf] %v3649
  %3660 = vst [vmem:[#allocation2 + $0xd8] sm:$0xf] %v3650
  %3661 = vst [vmem:[#allocation2 + $0xfc] sm:$0xf] %v3651
  %3662 = vst [vmem:[#allocation2 + $0x120] sm:$0xf] %v3652
  %3663 = vst [vmem:[#allocation2 + $0x144] sm:$0xf] %v3653
  %v3664 = vld [vmem:[#allocation3] sm:$0xf]
  %v3665 = vld [vmem:[#allocation3 + $0x4] sm:$0xf]
  %v3666 = vld [vmem:[#allocation3 + $0x8] sm:$0xf]
  %v3667 = vld [vmem:[#allocation3 + $0xc] sm:$0xf]
  %v3668 = vld [vmem:[#allocation3 + $0x10] sm:$0xf]
  %v3669 = vld [vmem:[#allocation3 + $0x14] sm:$0xf]
  %v3670 = vld [vmem:[#allocation3 + $0x18] sm:$0xf]
  %v3671 = vld [vmem:[#allocation3 + $0x1c] sm:$0xf]
  %v3672 = vld [vmem:[#allocation3 + $0x20] sm:$0xf]
  %v3673 = vld [vmem:[#allocation3 + $0x24] sm:$0xf]
  %v3674 = vld [vmem:[#allocation3 + $0x28] sm:$0x1]
  %v3676 = vshrl.u32 %v3664, 16
  %v3678 = vrot.slane %v3676, 4
  %v3679 = vshll.u32 %v3664, 16
  %v3681 = vrot.slane %v3679, 5
  %v3682 = vor.u32 %v3678, %v3681
  %v3683 = vrot.slane %v3682, 4
  %v3685 = vshll.u32 %v3665, 16
  %v3687 = vrot.slane %v3685, 5
  %v3688 = vsel %vm133, %v3683, %v3687
  %v3689 = vshrl.u32 %v3665, 16
  %v3691 = vrot.slane %v3689, 4
  %v3692 = vor.u32 %v3691, %v3687
  %v3693 = vrot.slane %v3692, 4
  %v3695 = vshll.u32 %v3666, 16
  %v3697 = vrot.slane %v3695, 5
  %v3698 = vsel %vm133, %v3693, %v3697
  %v3699 = vshrl.u32 %v3666, 16
  %v3701 = vrot.slane %v3699, 4
  %v3702 = vor.u32 %v3701, %v3697
  %v3703 = vrot.slane %v3702, 4
  %v3705 = vshll.u32 %v3667, 16
  %v3707 = vrot.slane %v3705, 5
  %v3708 = vsel %vm133, %v3703, %v3707
  %v3709 = vshrl.u32 %v3667, 16
  %v3711 = vrot.slane %v3709, 4
  %v3712 = vor.u32 %v3711, %v3707
  %v3713 = vrot.slane %v3712, 4
  %v3715 = vshll.u32 %v3668, 16
  %v3717 = vrot.slane %v3715, 5
  %v3718 = vsel %vm133, %v3713, %v3717
  %v3719 = vshrl.u32 %v3668, 16
  %v3721 = vrot.slane %v3719, 4
  %v3722 = vor.u32 %v3721, %v3717
  %v3723 = vrot.slane %v3722, 4
  %v3725 = vshll.u32 %v3669, 16
  %v3727 = vrot.slane %v3725, 5
  %v3728 = vsel %vm133, %v3723, %v3727
  %v3729 = vshrl.u32 %v3669, 16
  %v3731 = vrot.slane %v3729, 4
  %v3732 = vor.u32 %v3731, %v3727
  %v3733 = vrot.slane %v3732, 4
  %v3735 = vshll.u32 %v3670, 16
  %v3737 = vrot.slane %v3735, 5
  %v3738 = vsel %vm133, %v3733, %v3737
  %v3739 = vshrl.u32 %v3670, 16
  %v3741 = vrot.slane %v3739, 4
  %v3742 = vor.u32 %v3741, %v3737
  %v3743 = vrot.slane %v3742, 4
  %v3745 = vshll.u32 %v3671, 16
  %v3747 = vrot.slane %v3745, 5
  %v3748 = vsel %vm133, %v3743, %v3747
  %v3749 = vshrl.u32 %v3671, 16
  %v3751 = vrot.slane %v3749, 4
  %v3752 = vor.u32 %v3751, %v3747
  %v3753 = vrot.slane %v3752, 4
  %v3755 = vshll.u32 %v3672, 16
  %v3757 = vrot.slane %v3755, 5
  %v3758 = vsel %vm133, %v3753, %v3757
  %v3759 = vshrl.u32 %v3672, 16
  %v3761 = vrot.slane %v3759, 4
  %v3762 = vor.u32 %v3761, %v3757
  %v3763 = vrot.slane %v3762, 4
  %v3765 = vshll.u32 %v3673, 16
  %v3767 = vrot.slane %v3765, 5
  %v3768 = vsel %vm133, %v3763, %v3767
  %v3769 = vshrl.u32 %v3673, 16
  %v3771 = vrot.slane %v3769, 4
  %v3772 = vor.u32 %v3771, %v3767
  %v3773 = vrot.slane %v3772, 4
  %v3775 = vshll.u32 %v3674, 16
  %v3777 = vrot.slane %v3775, 5
  %v3778 = vsel %vm133, %v3773, %v3777
  %3789 = vst [vmem:[#allocation2 + $0x4] sm:$0xf] %v3688
  %3790 = vst [vmem:[#allocation2 + $0x28] sm:$0xf] %v3698
  %3791 = vst [vmem:[#allocation2 + $0x4c] sm:$0xf] %v3708
  %3792 = vst [vmem:[#allocation2 + $0x70] sm:$0xf] %v3718
  %3793 = vst [vmem:[#allocation2 + $0x94] sm:$0xf] %v3728
  %3794 = vst [vmem:[#allocation2 + $0xb8] sm:$0xf] %v3738
  %3795 = vst [vmem:[#allocation2 + $0xdc] sm:$0xf] %v3748
  %3796 = vst [vmem:[#allocation2 + $0x100] sm:$0xf] %v3758
  %3797 = vst [vmem:[#allocation2 + $0x124] sm:$0xf] %v3768
  %3798 = vst [vmem:[#allocation2 + $0x148] sm:$0xf] %v3778
  %v3799 = vld [vmem:[#allocation3] sm:$0xe]
  %v3800 = vld [vmem:[#allocation3 + $0x4] sm:$0xf]
  %v3801 = vld [vmem:[#allocation3 + $0x8] sm:$0xf]
  %v3802 = vld [vmem:[#allocation3 + $0xc] sm:$0xf]
  %v3803 = vld [vmem:[#allocation3 + $0x10] sm:$0xf]
  %v3804 = vld [vmem:[#allocation3 + $0x14] sm:$0xf]
  %v3805 = vld [vmem:[#allocation3 + $0x18] sm:$0xf]
  %v3806 = vld [vmem:[#allocation3 + $0x1c] sm:$0xf]
  %v3807 = vld [vmem:[#allocation3 + $0x20] sm:$0xf]
  %v3808 = vld [vmem:[#allocation3 + $0x24] sm:$0xf]
  %v3809 = vld [vmem:[#allocation3 + $0x28] sm:$0x1]
  %v3821 = vrot.slane %v3799, 5
  %v3822 = vrot.slane %v3821, 4
  %v3823 = vrot.slane %v3800, 5
  %v3824 = vsel %vm510, %v3822, %v3823
  %v3825 = vrot.slane %v3823, 4
  %v3826 = vrot.slane %v3801, 5
  %v3827 = vsel %vm510, %v3825, %v3826
  %v3828 = vrot.slane %v3826, 4
  %v3829 = vrot.slane %v3802, 5
  %v3830 = vsel %vm510, %v3828, %v3829
  %v3831 = vrot.slane %v3829, 4
  %v3832 = vrot.slane %v3803, 5
  %v3833 = vsel %vm510, %v3831, %v3832
  %v3834 = vrot.slane %v3832, 4
  %v3835 = vrot.slane %v3804, 5
  %v3836 = vsel %vm510, %v3834, %v3835
  %v3837 = vrot.slane %v3835, 4
  %v3838 = vrot.slane %v3805, 5
  %v3839 = vsel %vm510, %v3837, %v3838
  %v3840 = vrot.slane %v3838, 4
  %v3841 = vrot.slane %v3806, 5
  %v3842 = vsel %vm510, %v3840, %v3841
  %v3843 = vrot.slane %v3841, 4
  %v3844 = vrot.slane %v3807, 5
  %v3845 = vsel %vm510, %v3843, %v3844
  %v3846 = vrot.slane %v3844, 4
  %v3847 = vrot.slane %v3808, 5
  %v3848 = vsel %vm510, %v3846, %v3847
  %v3849 = vrot.slane %v3847, 4
  %v3850 = vrot.slane %v3809, 5
  %v3851 = vsel %vm510, %v3849, %v3850
  %3862 = vst [vmem:[#allocation2 + $0x8] sm:$0xf] %v3824
  %3863 = vst [vmem:[#allocation2 + $0x2c] sm:$0xf] %v3827
  %3864 = vst [vmem:[#allocation2 + $0x50] sm:$0xf] %v3830
  %3865 = vst [vmem:[#allocation2 + $0x74] sm:$0xf] %v3833
  %3866 = vst [vmem:[#allocation2 + $0x98] sm:$0xf] %v3836
  %3867 = vst [vmem:[#allocation2 + $0xbc] sm:$0xf] %v3839
  %3868 = vst [vmem:[#allocation2 + $0xe0] sm:$0xf] %v3842
  %3869 = vst [vmem:[#allocation2 + $0x104] sm:$0xf] %v3845
  %3870 = vst [vmem:[#allocation2 + $0x128] sm:$0xf] %v3848
  %3871 = vst [vmem:[#allocation2 + $0x14c] sm:$0xf] %v3851
  %v3872 = vld [vmem:[#allocation3 + $0x4] sm:$0xe]
  %v3873 = vld [vmem:[#allocation3 + $0x8] sm:$0xf]
  %v3874 = vld [vmem:[#allocation3 + $0xc] sm:$0xf]
  %v3875 = vld [vmem:[#allocation3 + $0x10] sm:$0xf]
  %v3876 = vld [vmem:[#allocation3 + $0x14] sm:$0xf]
  %v3877 = vld [vmem:[#allocation3 + $0x18] sm:$0xf]
  %v3878 = vld [vmem:[#allocation3 + $0x1c] sm:$0xf]
  %v3879 = vld [vmem:[#allocation3 + $0x20] sm:$0xf]
  %v3880 = vld [vmem:[#allocation3 + $0x24] sm:$0xf]
  %v3881 = vld [vmem:[#allocation3 + $0x28] sm:$0xf]
  %v3882 = vld [vmem:[#allocation3 + $0x2c] sm:$0x1]
  %v3894 = vrot.slane %v3872, 5
  %v3895 = vrot.slane %v3894, 4
  %v3896 = vrot.slane %v3873, 5
  %v3897 = vsel %vm510, %v3895, %v3896
  %v3898 = vrot.slane %v3896, 4
  %v3899 = vrot.slane %v3874, 5
  %v3900 = vsel %vm510, %v3898, %v3899
  %v3901 = vrot.slane %v3899, 4
  %v3902 = vrot.slane %v3875, 5
  %v3903 = vsel %vm510, %v3901, %v3902
  %v3904 = vrot.slane %v3902, 4
  %v3905 = vrot.slane %v3876, 5
  %v3906 = vsel %vm510, %v3904, %v3905
  %v3907 = vrot.slane %v3905, 4
  %v3908 = vrot.slane %v3877, 5
  %v3909 = vsel %vm510, %v3907, %v3908
  %v3910 = vrot.slane %v3908, 4
  %v3911 = vrot.slane %v3878, 5
  %v3912 = vsel %vm510, %v3910, %v3911
  %v3913 = vrot.slane %v3911, 4
  %v3914 = vrot.slane %v3879, 5
  %v3915 = vsel %vm510, %v3913, %v3914
  %v3916 = vrot.slane %v3914, 4
  %v3917 = vrot.slane %v3880, 5
  %v3918 = vsel %vm510, %v3916, %v3917
  %v3919 = vrot.slane %v3917, 4
  %v3920 = vrot.slane %v3881, 5
  %v3921 = vsel %vm510, %v3919, %v3920
  %v3922 = vrot.slane %v3920, 4
  %v3923 = vrot.slane %v3882, 5
  %v3924 = vsel %vm510, %v3922, %v3923
  %3935 = vst [vmem:[#allocation2 + $0xc] sm:$0xf] %v3897
  %3936 = vst [vmem:[#allocation2 + $0x30] sm:$0xf] %v3900
  %3937 = vst [vmem:[#allocation2 + $0x54] sm:$0xf] %v3903
  %3938 = vst [vmem:[#allocation2 + $0x78] sm:$0xf] %v3906
  %3939 = vst [vmem:[#allocation2 + $0x9c] sm:$0xf] %v3909
  %3940 = vst [vmem:[#allocation2 + $0xc0] sm:$0xf] %v3912
  %3941 = vst [vmem:[#allocation2 + $0xe4] sm:$0xf] %v3915
  %3942 = vst [vmem:[#allocation2 + $0x108] sm:$0xf] %v3918
  %3943 = vst [vmem:[#allocation2 + $0x12c] sm:$0xf] %v3921
  %3944 = vst [vmem:[#allocation2 + $0x150] sm:$0xf] %v3924
  %v3945 = vld [vmem:[#allocation3 + $0x4] sm:$0xe]
  %v3946 = vld [vmem:[#allocation3 + $0x8] sm:$0xf]
  %v3947 = vld [vmem:[#allocation3 + $0xc] sm:$0xf]
  %v3948 = vld [vmem:[#allocation3 + $0x10] sm:$0xf]
  %v3949 = vld [vmem:[#allocation3 + $0x14] sm:$0xf]
  %v3950 = vld [vmem:[#allocation3 + $0x18] sm:$0xf]
  %v3951 = vld [vmem:[#allocation3 + $0x1c] sm:$0xf]
  %v3952 = vld [vmem:[#allocation3 + $0x20] sm:$0xf]
  %v3953 = vld [vmem:[#allocation3 + $0x24] sm:$0xf]
  %v3954 = vld [vmem:[#allocation3 + $0x28] sm:$0xf]
  %v3955 = vld [vmem:[#allocation3 + $0x2c] sm:$0x3]
  %v3957 = vshrl.u32 %v3945, 16
  %v3959 = vrot.slane %v3957, 5
  %v3960 = vshll.u32 %v3945, 16
  %v3962 = vrot.slane %v3960, 6
  %v3963 = vor.u32 %v3959, %v3962
  %v3964 = vrot.slane %v3963, 4
  %v3966 = vshrl.u32 %v3946, 16
  %v3968 = vrot.slane %v3966, 5
  %v3969 = vshll.u32 %v3946, 16
  %v3971 = vrot.slane %v3969, 6
  %v3972 = vor.u32 %v3968, %v3971
  %v3973 = vsel %vm651, %v3964, %v3972
  %v3974 = vrot.slane %v3972, 4
  %v3976 = vshrl.u32 %v3947, 16
  %v3978 = vrot.slane %v3976, 5
  %v3979 = vshll.u32 %v3947, 16
  %v3981 = vrot.slane %v3979, 6
  %v3982 = vor.u32 %v3978, %v3981
  %v3983 = vsel %vm651, %v3974, %v3982
  %v3984 = vrot.slane %v3982, 4
  %v3986 = vshrl.u32 %v3948, 16
  %v3988 = vrot.slane %v3986, 5
  %v3989 = vshll.u32 %v3948, 16
  %v3991 = vrot.slane %v3989, 6
  %v3992 = vor.u32 %v3988, %v3991
  %v3993 = vsel %vm651, %v3984, %v3992
  %v3994 = vrot.slane %v3992, 4
  %v3996 = vshrl.u32 %v3949, 16
  %v3998 = vrot.slane %v3996, 5
  %v3999 = vshll.u32 %v3949, 16
  %v4001 = vrot.slane %v3999, 6
  %v4002 = vor.u32 %v3998, %v4001
  %v4003 = vsel %vm651, %v3994, %v4002
  %v4004 = vrot.slane %v4002, 4
  %v4006 = vshrl.u32 %v3950, 16
  %v4008 = vrot.slane %v4006, 5
  %v4009 = vshll.u32 %v3950, 16
  %v4011 = vrot.slane %v4009, 6
  %v4012 = vor.u32 %v4008, %v4011
  %v4013 = vsel %vm651, %v4004, %v4012
  %v4014 = vrot.slane %v4012, 4
  %v4016 = vshrl.u32 %v3951, 16
  %v4018 = vrot.slane %v4016, 5
  %v4019 = vshll.u32 %v3951, 16
  %v4021 = vrot.slane %v4019, 6
  %v4022 = vor.u32 %v4018, %v4021
  %v4023 = vsel %vm651, %v4014, %v4022
  %v4024 = vrot.slane %v4022, 4
  %v4026 = vshrl.u32 %v3952, 16
  %v4028 = vrot.slane %v4026, 5
  %v4029 = vshll.u32 %v3952, 16
  %v4031 = vrot.slane %v4029, 6
  %v4032 = vor.u32 %v4028, %v4031
  %v4033 = vsel %vm651, %v4024, %v4032
  %v4034 = vrot.slane %v4032, 4
  %v4036 = vshrl.u32 %v3953, 16
  %v4038 = vrot.slane %v4036, 5
  %v4039 = vshll.u32 %v3953, 16
  %v4041 = vrot.slane %v4039, 6
  %v4042 = vor.u32 %v4038, %v4041
  %v4043 = vsel %vm651, %v4034, %v4042
  %v4044 = vrot.slane %v4042, 4
  %v4046 = vshrl.u32 %v3954, 16
  %v4048 = vrot.slane %v4046, 5
  %v4049 = vshll.u32 %v3954, 16
  %v4051 = vrot.slane %v4049, 6
  %v4052 = vor.u32 %v4048, %v4051
  %v4053 = vsel %vm651, %v4044, %v4052
  %v4054 = vrot.slane %v4052, 4
  %v4056 = vshrl.u32 %v3955, 16
  %v4058 = vrot.slane %v4056, 5
  %v4059 = vshll.u32 %v3955, 16
  %v4061 = vrot.slane %v4059, 6
  %v4062 = vor.u32 %v4058, %v4061
  %v4063 = vsel %vm651, %v4054, %v4062
  %4074 = vst [vmem:[#allocation2 + $0x10] sm:$0xf] %v3973
  %4075 = vst [vmem:[#allocation2 + $0x34] sm:$0xf] %v3983
  %4076 = vst [vmem:[#allocation2 + $0x58] sm:$0xf] %v3993
  %4077 = vst [vmem:[#allocation2 + $0x7c] sm:$0xf] %v4003
  %4078 = vst [vmem:[#allocation2 + $0xa0] sm:$0xf] %v4013
  %4079 = vst [vmem:[#allocation2 + $0xc4] sm:$0xf] %v4023
  %4080 = vst [vmem:[#allocation2 + $0xe8] sm:$0xf] %v4033
  %4081 = vst [vmem:[#allocation2 + $0x10c] sm:$0xf] %v4043
  %4082 = vst [vmem:[#allocation2 + $0x130] sm:$0xf] %v4053
  %4083 = vst [vmem:[#allocation2 + $0x154] sm:$0xf] %v4063
  %v4084 = vld [vmem:[#allocation3 + $0x4] sm:$0xc]
  %v4085 = vld [vmem:[#allocation3 + $0x8] sm:$0xf]
  %v4086 = vld [vmem:[#allocation3 + $0xc] sm:$0xf]
  %v4087 = vld [vmem:[#allocation3 + $0x10] sm:$0xf]
  %v4088 = vld [vmem:[#allocation3 + $0x14] sm:$0xf]
  %v4089 = vld [vmem:[#allocation3 + $0x18] sm:$0xf]
  %v4090 = vld [vmem:[#allocation3 + $0x1c] sm:$0xf]
  %v4091 = vld [vmem:[#allocation3 + $0x20] sm:$0xf]
  %v4092 = vld [vmem:[#allocation3 + $0x24] sm:$0xf]
  %v4093 = vld [vmem:[#allocation3 + $0x28] sm:$0xf]
  %v4094 = vld [vmem:[#allocation3 + $0x2c] sm:$0x3]
  %v4106 = vrot.slane %v4084, 6
  %v4107 = vrot.slane %v4106, 4
  %v4108 = vrot.slane %v4085, 6
  %v4109 = vsel %vm68, %v4107, %v4108
  %v4110 = vrot.slane %v4108, 4
  %v4111 = vrot.slane %v4086, 6
  %v4112 = vsel %vm68, %v4110, %v4111
  %v4113 = vrot.slane %v4111, 4
  %v4114 = vrot.slane %v4087, 6
  %v4115 = vsel %vm68, %v4113, %v4114
  %v4116 = vrot.slane %v4114, 4
  %v4117 = vrot.slane %v4088, 6
  %v4118 = vsel %vm68, %v4116, %v4117
  %v4119 = vrot.slane %v4117, 4
  %v4120 = vrot.slane %v4089, 6
  %v4121 = vsel %vm68, %v4119, %v4120
  %v4122 = vrot.slane %v4120, 4
  %v4123 = vrot.slane %v4090, 6
  %v4124 = vsel %vm68, %v4122, %v4123
  %v4125 = vrot.slane %v4123, 4
  %v4126 = vrot.slane %v4091, 6
  %v4127 = vsel %vm68, %v4125, %v4126
  %v4128 = vrot.slane %v4126, 4
  %v4129 = vrot.slane %v4092, 6
  %v4130 = vsel %vm68, %v4128, %v4129
  %v4131 = vrot.slane %v4129, 4
  %v4132 = vrot.slane %v4093, 6
  %v4133 = vsel %vm68, %v4131, %v4132
  %v4134 = vrot.slane %v4132, 4
  %v4135 = vrot.slane %v4094, 6
  %v4136 = vsel %vm68, %v4134, %v4135
  %4147 = vst [vmem:[#allocation2 + $0x14] sm:$0xf] %v4109
  %4148 = vst [vmem:[#allocation2 + $0x38] sm:$0xf] %v4112
  %4149 = vst [vmem:[#allocation2 + $0x5c] sm:$0xf] %v4115
  %4150 = vst [vmem:[#allocation2 + $0x80] sm:$0xf] %v4118
  %4151 = vst [vmem:[#allocation2 + $0xa4] sm:$0xf] %v4121
  %4152 = vst [vmem:[#allocation2 + $0xc8] sm:$0xf] %v4124
  %4153 = vst [vmem:[#allocation2 + $0xec] sm:$0xf] %v4127
  %4154 = vst [vmem:[#allocation2 + $0x110] sm:$0xf] %v4130
  %4155 = vst [vmem:[#allocation2 + $0x134] sm:$0xf] %v4133
  %4156 = vst [vmem:[#allocation2 + $0x158] sm:$0xf] %v4136
  %v4157 = vld [vmem:[#allocation3 + $0x8] sm:$0xc]
  %v4158 = vld [vmem:[#allocation3 + $0xc] sm:$0xf]
  %v4159 = vld [vmem:[#allocation3 + $0x10] sm:$0xf]
  %v4160 = vld [vmem:[#allocation3 + $0x14] sm:$0xf]
  %v4161 = vld [vmem:[#allocation3 + $0x18] sm:$0xf]
  %v4162 = vld [vmem:[#allocation3 + $0x1c] sm:$0xf]
  %v4163 = vld [vmem:[#allocation3 + $0x20] sm:$0xf]
  %v4164 = vld [vmem:[#allocation3 + $0x24] sm:$0xf]
  %v4165 = vld [vmem:[#allocation3 + $0x28] sm:$0xf]
  %v4166 = vld [vmem:[#allocation3 + $0x2c] sm:$0xf]
  %v4167 = vld [vmem:[#allocation3 + $0x30] sm:$0x3]
  %v4179 = vrot.slane %v4157, 6
  %v4180 = vrot.slane %v4179, 4
  %v4181 = vrot.slane %v4158, 6
  %v4182 = vsel %vm68, %v4180, %v4181
  %v4183 = vrot.slane %v4181, 4
  %v4184 = vrot.slane %v4159, 6
  %v4185 = vsel %vm68, %v4183, %v4184
  %v4186 = vrot.slane %v4184, 4
  %v4187 = vrot.slane %v4160, 6
  %v4188 = vsel %vm68, %v4186, %v4187
  %v4189 = vrot.slane %v4187, 4
  %v4190 = vrot.slane %v4161, 6
  %v4191 = vsel %vm68, %v4189, %v4190
  %v4192 = vrot.slane %v4190, 4
  %v4193 = vrot.slane %v4162, 6
  %v4194 = vsel %vm68, %v4192, %v4193
  %v4195 = vrot.slane %v4193, 4
  %v4196 = vrot.slane %v4163, 6
  %v4197 = vsel %vm68, %v4195, %v4196
  %v4198 = vrot.slane %v4196, 4
  %v4199 = vrot.slane %v4164, 6
  %v4200 = vsel %vm68, %v4198, %v4199
  %v4201 = vrot.slane %v4199, 4
  %v4202 = vrot.slane %v4165, 6
  %v4203 = vsel %vm68, %v4201, %v4202
  %v4204 = vrot.slane %v4202, 4
  %v4205 = vrot.slane %v4166, 6
  %v4206 = vsel %vm68, %v4204, %v4205
  %v4207 = vrot.slane %v4205, 4
  %v4208 = vrot.slane %v4167, 6
  %v4209 = vsel %vm68, %v4207, %v4208
  %4220 = vst [vmem:[#allocation2 + $0x18] sm:$0xf] %v4182
  %4221 = vst [vmem:[#allocation2 + $0x3c] sm:$0xf] %v4185
  %4222 = vst [vmem:[#allocation2 + $0x60] sm:$0xf] %v4188
  %4223 = vst [vmem:[#allocation2 + $0x84] sm:$0xf] %v4191
  %4224 = vst [vmem:[#allocation2 + $0xa8] sm:$0xf] %v4194
  %4225 = vst [vmem:[#allocation2 + $0xcc] sm:$0xf] %v4197
  %4226 = vst [vmem:[#allocation2 + $0xf0] sm:$0xf] %v4200
  %4227 = vst [vmem:[#allocation2 + $0x114] sm:$0xf] %v4203
  %4228 = vst [vmem:[#allocation2 + $0x138] sm:$0xf] %v4206
  %4229 = vst [vmem:[#allocation2 + $0x15c] sm:$0xf] %v4209
  %v4230 = vld [vmem:[#allocation3 + $0x8] sm:$0xc]
  %v4231 = vld [vmem:[#allocation3 + $0xc] sm:$0xf]
  %v4232 = vld [vmem:[#allocation3 + $0x10] sm:$0xf]
  %v4233 = vld [vmem:[#allocation3 + $0x14] sm:$0xf]
  %v4234 = vld [vmem:[#allocation3 + $0x18] sm:$0xf]
  %v4235 = vld [vmem:[#allocation3 + $0x1c] sm:$0xf]
  %v4236 = vld [vmem:[#allocation3 + $0x20] sm:$0xf]
  %v4237 = vld [vmem:[#allocation3 + $0x24] sm:$0xf]
  %v4238 = vld [vmem:[#allocation3 + $0x28] sm:$0xf]
  %v4239 = vld [vmem:[#allocation3 + $0x2c] sm:$0xf]
  %v4240 = vld [vmem:[#allocation3 + $0x30] sm:$0x7]
  %v4242 = vshrl.u32 %v4230, 16
  %v4244 = vrot.slane %v4242, 6
  %v4245 = vshll.u32 %v4230, 16
  %v4247 = vrot.slane %v4245, 7
  %v4248 = vor.u32 %v4244, %v4247
  %v4249 = vrot.slane %v4248, 4
  %v4251 = vshrl.u32 %v4231, 16
  %v4253 = vrot.slane %v4251, 6
  %v4254 = vshll.u32 %v4231, 16
  %v4256 = vrot.slane %v4254, 7
  %v4257 = vor.u32 %v4253, %v4256
  %v4258 = vsel %vm3386, %v4249, %v4257
  %v4259 = vrot.slane %v4257, 4
  %v4261 = vshrl.u32 %v4232, 16
  %v4263 = vrot.slane %v4261, 6
  %v4264 = vshll.u32 %v4232, 16
  %v4266 = vrot.slane %v4264, 7
  %v4267 = vor.u32 %v4263, %v4266
  %v4268 = vsel %vm3386, %v4259, %v4267
  %v4269 = vrot.slane %v4267, 4
  %v4271 = vshrl.u32 %v4233, 16
  %v4273 = vrot.slane %v4271, 6
  %v4274 = vshll.u32 %v4233, 16
  %v4276 = vrot.slane %v4274, 7
  %v4277 = vor.u32 %v4273, %v4276
  %v4278 = vsel %vm3386, %v4269, %v4277
  %v4279 = vrot.slane %v4277, 4
  %v4281 = vshrl.u32 %v4234, 16
  %v4283 = vrot.slane %v4281, 6
  %v4284 = vshll.u32 %v4234, 16
  %v4286 = vrot.slane %v4284, 7
  %v4287 = vor.u32 %v4283, %v4286
  %v4288 = vsel %vm3386, %v4279, %v4287
  %v4289 = vrot.slane %v4287, 4
  %v4291 = vshrl.u32 %v4235, 16
  %v4293 = vrot.slane %v4291, 6
  %v4294 = vshll.u32 %v4235, 16
  %v4296 = vrot.slane %v4294, 7
  %v4297 = vor.u32 %v4293, %v4296
  %v4298 = vsel %vm3386, %v4289, %v4297
  %v4299 = vrot.slane %v4297, 4
  %v4301 = vshrl.u32 %v4236, 16
  %v4303 = vrot.slane %v4301, 6
  %v4304 = vshll.u32 %v4236, 16
  %v4306 = vrot.slane %v4304, 7
  %v4307 = vor.u32 %v4303, %v4306
  %v4308 = vsel %vm3386, %v4299, %v4307
  %v4309 = vrot.slane %v4307, 4
  %v4311 = vshrl.u32 %v4237, 16
  %v4313 = vrot.slane %v4311, 6
  %v4314 = vshll.u32 %v4237, 16
  %v4316 = vrot.slane %v4314, 7
  %v4317 = vor.u32 %v4313, %v4316
  %v4318 = vsel %vm3386, %v4309, %v4317
  %v4319 = vrot.slane %v4317, 4
  %v4321 = vshrl.u32 %v4238, 16
  %v4323 = vrot.slane %v4321, 6
  %v4324 = vshll.u32 %v4238, 16
  %v4326 = vrot.slane %v4324, 7
  %v4327 = vor.u32 %v4323, %v4326
  %v4328 = vsel %vm3386, %v4319, %v4327
  %v4329 = vrot.slane %v4327, 4
  %v4331 = vshrl.u32 %v4239, 16
  %v4333 = vrot.slane %v4331, 6
  %v4334 = vshll.u32 %v4239, 16
  %v4336 = vrot.slane %v4334, 7
  %v4337 = vor.u32 %v4333, %v4336
  %v4338 = vsel %vm3386, %v4329, %v4337
  %v4339 = vrot.slane %v4337, 4
  %v4341 = vshrl.u32 %v4240, 16
  %v4343 = vrot.slane %v4341, 6
  %v4344 = vshll.u32 %v4240, 16
  %v4346 = vrot.slane %v4344, 7
  %v4347 = vor.u32 %v4343, %v4346
  %v4348 = vsel %vm3386, %v4339, %v4347
  %4359 = vst [vmem:[#allocation2 + $0x1c] sm:$0xf] %v4258
  %4360 = vst [vmem:[#allocation2 + $0x40] sm:$0xf] %v4268
  %4361 = vst [vmem:[#allocation2 + $0x64] sm:$0xf] %v4278
  %4362 = vst [vmem:[#allocation2 + $0x88] sm:$0xf] %v4288
  %4363 = vst [vmem:[#allocation2 + $0xac] sm:$0xf] %v4298
  %4364 = vst [vmem:[#allocation2 + $0xd0] sm:$0xf] %v4308
  %4365 = vst [vmem:[#allocation2 + $0xf4] sm:$0xf] %v4318
  %4366 = vst [vmem:[#allocation2 + $0x118] sm:$0xf] %v4328
  %4367 = vst [vmem:[#allocation2 + $0x13c] sm:$0xf] %v4338
  %4368 = vst [vmem:[#allocation2 + $0x160] sm:$0xf] %v4348
  %v4369 = vld [vmem:[#allocation3 + $0x8] sm:$0x8]
  %v4370 = vld [vmem:[#allocation3 + $0xc] sm:$0xf]
  %v4371 = vld [vmem:[#allocation3 + $0x10] sm:$0xf]
  %v4372 = vld [vmem:[#allocation3 + $0x14] sm:$0xf]
  %v4373 = vld [vmem:[#allocation3 + $0x18] sm:$0xf]
  %v4374 = vld [vmem:[#allocation3 + $0x1c] sm:$0xf]
  %v4375 = vld [vmem:[#allocation3 + $0x20] sm:$0xf]
  %v4376 = vld [vmem:[#allocation3 + $0x24] sm:$0xf]
  %v4377 = vld [vmem:[#allocation3 + $0x28] sm:$0xf]
  %v4378 = vld [vmem:[#allocation3 + $0x2c] sm:$0xf]
  %v4379 = vld [vmem:[#allocation3 + $0x30] sm:$0x7]
  %v4391 = vrot.slane %v4369, 7
  %v4392 = vrot.slane %v4391, 4
  %v4393 = vrot.slane %v4370, 7
  %v4394 = vsel %vm586, %v4392, %v4393
  %v4395 = vrot.slane %v4393, 4
  %v4396 = vrot.slane %v4371, 7
  %v4397 = vsel %vm586, %v4395, %v4396
  %v4398 = vrot.slane %v4396, 4
  %v4399 = vrot.slane %v4372, 7
  %v4400 = vsel %vm586, %v4398, %v4399
  %v4401 = vrot.slane %v4399, 4
  %v4402 = vrot.slane %v4373, 7
  %v4403 = vsel %vm586, %v4401, %v4402
  %v4404 = vrot.slane %v4402, 4
  %v4405 = vrot.slane %v4374, 7
  %v4406 = vsel %vm586, %v4404, %v4405
  %v4407 = vrot.slane %v4405, 4
  %v4408 = vrot.slane %v4375, 7
  %v4409 = vsel %vm586, %v4407, %v4408
  %v4410 = vrot.slane %v4408, 4
  %v4411 = vrot.slane %v4376, 7
  %v4412 = vsel %vm586, %v4410, %v4411
  %v4413 = vrot.slane %v4411, 4
  %v4414 = vrot.slane %v4377, 7
  %v4415 = vsel %vm586, %v4413, %v4414
  %v4416 = vrot.slane %v4414, 4
  %v4417 = vrot.slane %v4378, 7
  %v4418 = vsel %vm586, %v4416, %v4417
  %v4419 = vrot.slane %v4417, 4
  %v4420 = vrot.slane %v4379, 7
  %v4421 = vsel %vm586, %v4419, %v4420
  %4432 = vst [vmem:[#allocation2 + $0x20] sm:$0xf] %v4394
  %4433 = vst [vmem:[#allocation2 + $0x44] sm:$0xf] %v4397
  %4434 = vst [vmem:[#allocation2 + $0x68] sm:$0xf] %v4400
  %4435 = vst [vmem:[#allocation2 + $0x8c] sm:$0xf] %v4403
  %4436 = vst [vmem:[#allocation2 + $0xb0] sm:$0xf] %v4406
  %4437 = vst [vmem:[#allocation2 + $0xd4] sm:$0xf] %v4409
  %4438 = vst [vmem:[#allocation2 + $0xf8] sm:$0xf] %v4412
  %4439 = vst [vmem:[#allocation2 + $0x11c] sm:$0xf] %v4415
  %4440 = vst [vmem:[#allocation2 + $0x140] sm:$0xf] %v4418
  %4441 = vst [vmem:[#allocation2 + $0x164] sm:$0xf] %v4421
  %v4442 = vld [vmem:[#allocation3 + $0x34] sm:$0x8]
  %v4443 = vld [vmem:[#allocation3 + $0x38] sm:$0xf]
  %v4444 = vld [vmem:[#allocation3 + $0x3c] sm:$0xf]
  %v4445 = vld [vmem:[#allocation3 + $0x40] sm:$0xf]
  %v4446 = vld [vmem:[#allocation3 + $0x44] sm:$0xf]
  %v4447 = vld [vmem:[#allocation3 + $0x48] sm:$0xf]
  %v4448 = vld [vmem:[#allocation3 + $0x4c] sm:$0xf]
  %v4449 = vld [vmem:[#allocation3 + $0x50] sm:$0xf]
  %v4450 = vld [vmem:[#allocation3 + $0x54] sm:$0xf]
  %v4451 = vld [vmem:[#allocation3 + $0x58] sm:$0xf]
  %v4452 = vld [vmem:[#allocation3 + $0x5c] sm:$0x7]
  %v4464 = vrot.slane %v4442, 7
  %v4465 = vrot.slane %v4464, 4
  %v4466 = vrot.slane %v4443, 7
  %v4467 = vsel %vm586, %v4465, %v4466
  %v4468 = vrot.slane %v4466, 4
  %v4469 = vrot.slane %v4444, 7
  %v4470 = vsel %vm586, %v4468, %v4469
  %v4471 = vrot.slane %v4469, 4
  %v4472 = vrot.slane %v4445, 7
  %v4473 = vsel %vm586, %v4471, %v4472
  %v4474 = vrot.slane %v4472, 4
  %v4475 = vrot.slane %v4446, 7
  %v4476 = vsel %vm586, %v4474, %v4475
  %v4477 = vrot.slane %v4475, 4
  %v4478 = vrot.slane %v4447, 7
  %v4479 = vsel %vm586, %v4477, %v4478
  %v4480 = vrot.slane %v4478, 4
  %v4481 = vrot.slane %v4448, 7
  %v4482 = vsel %vm586, %v4480, %v4481
  %v4483 = vrot.slane %v4481, 4
  %v4484 = vrot.slane %v4449, 7
  %v4485 = vsel %vm586, %v4483, %v4484
  %v4486 = vrot.slane %v4484, 4
  %v4487 = vrot.slane %v4450, 7
  %v4488 = vsel %vm586, %v4486, %v4487
  %v4489 = vrot.slane %v4487, 4
  %v4490 = vrot.slane %v4451, 7
  %v4491 = vsel %vm586, %v4489, %v4490
  %v4492 = vrot.slane %v4490, 4
  %v4493 = vrot.slane %v4452, 7
  %v4494 = vsel %vm586, %v4492, %v4493
  %4505 = vst [vmem:[#allocation2 + $0x168] sm:$0xf] %v4467
  %4506 = vst [vmem:[#allocation2 + $0x18c] sm:$0xf] %v4470
  %4507 = vst [vmem:[#allocation2 + $0x1b0] sm:$0xf] %v4473
  %4508 = vst [vmem:[#allocation2 + $0x1d4] sm:$0xf] %v4476
  %4509 = vst [vmem:[#allocation2 + $0x1f8] sm:$0xf] %v4479
  %4510 = vst [vmem:[#allocation2 + $0x21c] sm:$0xf] %v4482
  %4511 = vst [vmem:[#allocation2 + $0x240] sm:$0xf] %v4485
  %4512 = vst [vmem:[#allocation2 + $0x264] sm:$0xf] %v4488
  %4513 = vst [vmem:[#allocation2 + $0x288] sm:$0xf] %v4491
  %4514 = vst [vmem:[#allocation2 + $0x2ac] sm:$0xf] %v4494
  %v4515 = vld [vmem:[#allocation3 + $0x34] sm:$0x8]
  %v4516 = vld [vmem:[#allocation3 + $0x38] sm:$0xf]
  %v4517 = vld [vmem:[#allocation3 + $0x3c] sm:$0xf]
  %v4518 = vld [vmem:[#allocation3 + $0x40] sm:$0xf]
  %v4519 = vld [vmem:[#allocation3 + $0x44] sm:$0xf]
  %v4520 = vld [vmem:[#allocation3 + $0x48] sm:$0xf]
  %v4521 = vld [vmem:[#allocation3 + $0x4c] sm:$0xf]
  %v4522 = vld [vmem:[#allocation3 + $0x50] sm:$0xf]
  %v4523 = vld [vmem:[#allocation3 + $0x54] sm:$0xf]
  %v4524 = vld [vmem:[#allocation3 + $0x58] sm:$0xf]
  %v4525 = vld [vmem:[#allocation3 + $0x5c] sm:$0xf]
  %v4527 = vshrl.u32 %v4515, 16
  %v4529 = vrot.slane %v4527, 7
  %v4530 = vrot.slane %v4529, 4
  %v4532 = vshrl.u32 %v4516, 16
  %v4534 = vrot.slane %v4532, 7
  %v4535 = vshll.u32 %v4516, 16
  %v4537 = vor.u32 %v4534, %v4535
  %v4538 = vsel %vm3528, %v4530, %v4537
  %v4539 = vrot.slane %v4534, 4
  %v4541 = vshrl.u32 %v4517, 16
  %v4543 = vrot.slane %v4541, 7
  %v4544 = vshll.u32 %v4517, 16
  %v4546 = vor.u32 %v4543, %v4544
  %v4547 = vsel %vm3528, %v4539, %v4546
  %v4548 = vrot.slane %v4543, 4
  %v4550 = vshrl.u32 %v4518, 16
  %v4552 = vrot.slane %v4550, 7
  %v4553 = vshll.u32 %v4518, 16
  %v4555 = vor.u32 %v4552, %v4553
  %v4556 = vsel %vm3528, %v4548, %v4555
  %v4557 = vrot.slane %v4552, 4
  %v4559 = vshrl.u32 %v4519, 16
  %v4561 = vrot.slane %v4559, 7
  %v4562 = vshll.u32 %v4519, 16
  %v4564 = vor.u32 %v4561, %v4562
  %v4565 = vsel %vm3528, %v4557, %v4564
  %v4566 = vrot.slane %v4561, 4
  %v4568 = vshrl.u32 %v4520, 16
  %v4570 = vrot.slane %v4568, 7
  %v4571 = vshll.u32 %v4520, 16
  %v4573 = vor.u32 %v4570, %v4571
  %v4574 = vsel %vm3528, %v4566, %v4573
  %v4575 = vrot.slane %v4570, 4
  %v4577 = vshrl.u32 %v4521, 16
  %v4579 = vrot.slane %v4577, 7
  %v4580 = vshll.u32 %v4521, 16
  %v4582 = vor.u32 %v4579, %v4580
  %v4583 = vsel %vm3528, %v4575, %v4582
  %v4584 = vrot.slane %v4579, 4
  %v4586 = vshrl.u32 %v4522, 16
  %v4588 = vrot.slane %v4586, 7
  %v4589 = vshll.u32 %v4522, 16
  %v4591 = vor.u32 %v4588, %v4589
  %v4592 = vsel %vm3528, %v4584, %v4591
  %v4593 = vrot.slane %v4588, 4
  %v4595 = vshrl.u32 %v4523, 16
  %v4597 = vrot.slane %v4595, 7
  %v4598 = vshll.u32 %v4523, 16
  %v4600 = vor.u32 %v4597, %v4598
  %v4601 = vsel %vm3528, %v4593, %v4600
  %v4602 = vrot.slane %v4597, 4
  %v4604 = vshrl.u32 %v4524, 16
  %v4606 = vrot.slane %v4604, 7
  %v4607 = vshll.u32 %v4524, 16
  %v4609 = vor.u32 %v4606, %v4607
  %v4610 = vsel %vm3528, %v4602, %v4609
  %v4611 = vrot.slane %v4606, 4
  %v4613 = vshrl.u32 %v4525, 16
  %v4615 = vrot.slane %v4613, 7
  %v4616 = vshll.u32 %v4525, 16
  %v4618 = vor.u32 %v4615, %v4616
  %v4619 = vsel %vm3528, %v4611, %v4618
  %4630 = vst [vmem:[#allocation2 + $0x16c] sm:$0xf] %v4538
  %4631 = vst [vmem:[#allocation2 + $0x190] sm:$0xf] %v4547
  %4632 = vst [vmem:[#allocation2 + $0x1b4] sm:$0xf] %v4556
  %4633 = vst [vmem:[#allocation2 + $0x1d8] sm:$0xf] %v4565
  %4634 = vst [vmem:[#allocation2 + $0x1fc] sm:$0xf] %v4574
  %4635 = vst [vmem:[#allocation2 + $0x220] sm:$0xf] %v4583
  %4636 = vst [vmem:[#allocation2 + $0x244] sm:$0xf] %v4592
  %4637 = vst [vmem:[#allocation2 + $0x268] sm:$0xf] %v4601
  %4638 = vst [vmem:[#allocation2 + $0x28c] sm:$0xf] %v4610
  %4639 = vst [vmem:[#allocation2 + $0x2b0] sm:$0xf] %v4619
  %v4640 = vld [vmem:[#allocation3 + $0x38] sm:$0xf]
  %v4641 = vld [vmem:[#allocation3 + $0x3c] sm:$0xf]
  %v4642 = vld [vmem:[#allocation3 + $0x40] sm:$0xf]
  %v4643 = vld [vmem:[#allocation3 + $0x44] sm:$0xf]
  %v4644 = vld [vmem:[#allocation3 + $0x48] sm:$0xf]
  %v4645 = vld [vmem:[#allocation3 + $0x4c] sm:$0xf]
  %v4646 = vld [vmem:[#allocation3 + $0x50] sm:$0xf]
  %v4647 = vld [vmem:[#allocation3 + $0x54] sm:$0xf]
  %v4648 = vld [vmem:[#allocation3 + $0x58] sm:$0xf]
  %v4649 = vld [vmem:[#allocation3 + $0x5c] sm:$0xf]
  %4650 = vst [vmem:[#allocation2 + $0x170] sm:$0xf] %v4640
  %4651 = vst [vmem:[#allocation2 + $0x194] sm:$0xf] %v4641
  %4652 = vst [vmem:[#allocation2 + $0x1b8] sm:$0xf] %v4642
  %4653 = vst [vmem:[#allocation2 + $0x1dc] sm:$0xf] %v4643
  %4654 = vst [vmem:[#allocation2 + $0x200] sm:$0xf] %v4644
  %4655 = vst [vmem:[#allocation2 + $0x224] sm:$0xf] %v4645
  %4656 = vst [vmem:[#allocation2 + $0x248] sm:$0xf] %v4646
  %4657 = vst [vmem:[#allocation2 + $0x26c] sm:$0xf] %v4647
  %4658 = vst [vmem:[#allocation2 + $0x290] sm:$0xf] %v4648
  %4659 = vst [vmem:[#allocation2 + $0x2b4] sm:$0xf] %v4649
  %v4660 = vld [vmem:[#allocation3 + $0x3c] sm:$0xf]
  %v4661 = vld [vmem:[#allocation3 + $0x40] sm:$0xf]
  %v4662 = vld [vmem:[#allocation3 + $0x44] sm:$0xf]
  %v4663 = vld [vmem:[#allocation3 + $0x48] sm:$0xf]
  %v4664 = vld [vmem:[#allocation3 + $0x4c] sm:$0xf]
  %v4665 = vld [vmem:[#allocation3 + $0x50] sm:$0xf]
  %v4666 = vld [vmem:[#allocation3 + $0x54] sm:$0xf]
  %v4667 = vld [vmem:[#allocation3 + $0x58] sm:$0xf]
  %v4668 = vld [vmem:[#allocation3 + $0x5c] sm:$0xf]
  %v4669 = vld [vmem:[#allocation3 + $0x60] sm:$0xf]
  %4670 = vst [vmem:[#allocation2 + $0x174] sm:$0xf] %v4660
  %4671 = vst [vmem:[#allocation2 + $0x198] sm:$0xf] %v4661
  %4672 = vst [vmem:[#allocation2 + $0x1bc] sm:$0xf] %v4662
  %4673 = vst [vmem:[#allocation2 + $0x1e0] sm:$0xf] %v4663
  %4674 = vst [vmem:[#allocation2 + $0x204] sm:$0xf] %v4664
  %4675 = vst [vmem:[#allocation2 + $0x228] sm:$0xf] %v4665
  %4676 = vst [vmem:[#allocation2 + $0x24c] sm:$0xf] %v4666
  %4677 = vst [vmem:[#allocation2 + $0x270] sm:$0xf] %v4667
  %4678 = vst [vmem:[#allocation2 + $0x294] sm:$0xf] %v4668
  %4679 = vst [vmem:[#allocation2 + $0x2b8] sm:$0xf] %v4669
  %v4680 = vld [vmem:[#allocation3 + $0x3c] sm:$0xf]
  %v4681 = vld [vmem:[#allocation3 + $0x40] sm:$0xf]
  %v4682 = vld [vmem:[#allocation3 + $0x44] sm:$0xf]
  %v4683 = vld [vmem:[#allocation3 + $0x48] sm:$0xf]
  %v4684 = vld [vmem:[#allocation3 + $0x4c] sm:$0xf]
  %v4685 = vld [vmem:[#allocation3 + $0x50] sm:$0xf]
  %v4686 = vld [vmem:[#allocation3 + $0x54] sm:$0xf]
  %v4687 = vld [vmem:[#allocation3 + $0x58] sm:$0xf]
  %v4688 = vld [vmem:[#allocation3 + $0x5c] sm:$0xf]
  %v4689 = vld [vmem:[#allocation3 + $0x60] sm:$0xf]
  %v4690 = vld [vmem:[#allocation3 + $0x64] sm:$0x1]
  %v4692 = vshrl.u32 %v4680, 16
  %v4694 = vrot.slane %v4692, 4
  %v4695 = vshll.u32 %v4680, 16
  %v4697 = vrot.slane %v4695, 5
  %v4698 = vor.u32 %v4694, %v4697
  %v4699 = vrot.slane %v4698, 4
  %v4701 = vshll.u32 %v4681, 16
  %v4703 = vrot.slane %v4701, 5
  %v4704 = vsel %vm133, %v4699, %v4703
  %v4705 = vshrl.u32 %v4681, 16
  %v4707 = vrot.slane %v4705, 4
  %v4708 = vor.u32 %v4707, %v4703
  %v4709 = vrot.slane %v4708, 4
  %v4711 = vshll.u32 %v4682, 16
  %v4713 = vrot.slane %v4711, 5
  %v4714 = vsel %vm133, %v4709, %v4713
  %v4715 = vshrl.u32 %v4682, 16
  %v4717 = vrot.slane %v4715, 4
  %v4718 = vor.u32 %v4717, %v4713
  %v4719 = vrot.slane %v4718, 4
  %v4721 = vshll.u32 %v4683, 16
  %v4723 = vrot.slane %v4721, 5
  %v4724 = vsel %vm133, %v4719, %v4723
  %v4725 = vshrl.u32 %v4683, 16
  %v4727 = vrot.slane %v4725, 4
  %v4728 = vor.u32 %v4727, %v4723
  %v4729 = vrot.slane %v4728, 4
  %v4731 = vshll.u32 %v4684, 16
  %v4733 = vrot.slane %v4731, 5
  %v4734 = vsel %vm133, %v4729, %v4733
  %v4735 = vshrl.u32 %v4684, 16
  %v4737 = vrot.slane %v4735, 4
  %v4738 = vor.u32 %v4737, %v4733
  %v4739 = vrot.slane %v4738, 4
  %v4741 = vshll.u32 %v4685, 16
  %v4743 = vrot.slane %v4741, 5
  %v4744 = vsel %vm133, %v4739, %v4743
  %v4745 = vshrl.u32 %v4685, 16
  %v4747 = vrot.slane %v4745, 4
  %v4748 = vor.u32 %v4747, %v4743
  %v4749 = vrot.slane %v4748, 4
  %v4751 = vshll.u32 %v4686, 16
  %v4753 = vrot.slane %v4751, 5
  %v4754 = vsel %vm133, %v4749, %v4753
  %v4755 = vshrl.u32 %v4686, 16
  %v4757 = vrot.slane %v4755, 4
  %v4758 = vor.u32 %v4757, %v4753
  %v4759 = vrot.slane %v4758, 4
  %v4761 = vshll.u32 %v4687, 16
  %v4763 = vrot.slane %v4761, 5
  %v4764 = vsel %vm133, %v4759, %v4763
  %v4765 = vshrl.u32 %v4687, 16
  %v4767 = vrot.slane %v4765, 4
  %v4768 = vor.u32 %v4767, %v4763
  %v4769 = vrot.slane %v4768, 4
  %v4771 = vshll.u32 %v4688, 16
  %v4773 = vrot.slane %v4771, 5
  %v4774 = vsel %vm133, %v4769, %v4773
  %v4775 = vshrl.u32 %v4688, 16
  %v4777 = vrot.slane %v4775, 4
  %v4778 = vor.u32 %v4777, %v4773
  %v4779 = vrot.slane %v4778, 4
  %v4781 = vshll.u32 %v4689, 16
  %v4783 = vrot.slane %v4781, 5
  %v4784 = vsel %vm133, %v4779, %v4783
  %v4785 = vshrl.u32 %v4689, 16
  %v4787 = vrot.slane %v4785, 4
  %v4788 = vor.u32 %v4787, %v4783
  %v4789 = vrot.slane %v4788, 4
  %v4791 = vshll.u32 %v4690, 16
  %v4793 = vrot.slane %v4791, 5
  %v4794 = vsel %vm133, %v4789, %v4793
  %4805 = vst [vmem:[#allocation2 + $0x178] sm:$0xf] %v4704
  %4806 = vst [vmem:[#allocation2 + $0x19c] sm:$0xf] %v4714
  %4807 = vst [vmem:[#allocation2 + $0x1c0] sm:$0xf] %v4724
  %4808 = vst [vmem:[#allocation2 + $0x1e4] sm:$0xf] %v4734
  %4809 = vst [vmem:[#allocation2 + $0x208] sm:$0xf] %v4744
  %4810 = vst [vmem:[#allocation2 + $0x22c] sm:$0xf] %v4754
  %4811 = vst [vmem:[#allocation2 + $0x250] sm:$0xf] %v4764
  %4812 = vst [vmem:[#allocation2 + $0x274] sm:$0xf] %v4774
  %4813 = vst [vmem:[#allocation2 + $0x298] sm:$0xf] %v4784
  %4814 = vst [vmem:[#allocation2 + $0x2bc] sm:$0xf] %v4794
  %v4815 = vld [vmem:[#allocation3 + $0x3c] sm:$0xe]
  %v4816 = vld [vmem:[#allocation3 + $0x40] sm:$0xf]
  %v4817 = vld [vmem:[#allocation3 + $0x44] sm:$0xf]
  %v4818 = vld [vmem:[#allocation3 + $0x48] sm:$0xf]
  %v4819 = vld [vmem:[#allocation3 + $0x4c] sm:$0xf]
  %v4820 = vld [vmem:[#allocation3 + $0x50] sm:$0xf]
  %v4821 = vld [vmem:[#allocation3 + $0x54] sm:$0xf]
  %v4822 = vld [vmem:[#allocation3 + $0x58] sm:$0xf]
  %v4823 = vld [vmem:[#allocation3 + $0x5c] sm:$0xf]
  %v4824 = vld [vmem:[#allocation3 + $0x60] sm:$0xf]
  %v4825 = vld [vmem:[#allocation3 + $0x64] sm:$0x1]
  %v4837 = vrot.slane %v4815, 5
  %v4838 = vrot.slane %v4837, 4
  %v4839 = vrot.slane %v4816, 5
  %v4840 = vsel %vm510, %v4838, %v4839
  %v4841 = vrot.slane %v4839, 4
  %v4842 = vrot.slane %v4817, 5
  %v4843 = vsel %vm510, %v4841, %v4842
  %v4844 = vrot.slane %v4842, 4
  %v4845 = vrot.slane %v4818, 5
  %v4846 = vsel %vm510, %v4844, %v4845
  %v4847 = vrot.slane %v4845, 4
  %v4848 = vrot.slane %v4819, 5
  %v4849 = vsel %vm510, %v4847, %v4848
  %v4850 = vrot.slane %v4848, 4
  %v4851 = vrot.slane %v4820, 5
  %v4852 = vsel %vm510, %v4850, %v4851
  %v4853 = vrot.slane %v4851, 4
  %v4854 = vrot.slane %v4821, 5
  %v4855 = vsel %vm510, %v4853, %v4854
  %v4856 = vrot.slane %v4854, 4
  %v4857 = vrot.slane %v4822, 5
  %v4858 = vsel %vm510, %v4856, %v4857
  %v4859 = vrot.slane %v4857, 4
  %v4860 = vrot.slane %v4823, 5
  %v4861 = vsel %vm510, %v4859, %v4860
  %v4862 = vrot.slane %v4860, 4
  %v4863 = vrot.slane %v4824, 5
  %v4864 = vsel %vm510, %v4862, %v4863
  %v4865 = vrot.slane %v4863, 4
  %v4866 = vrot.slane %v4825, 5
  %v4867 = vsel %vm510, %v4865, %v4866
  %4878 = vst [vmem:[#allocation2 + $0x17c] sm:$0xf] %v4840
  %4879 = vst [vmem:[#allocation2 + $0x1a0] sm:$0xf] %v4843
  %4880 = vst [vmem:[#allocation2 + $0x1c4] sm:$0xf] %v4846
  %4881 = vst [vmem:[#allocation2 + $0x1e8] sm:$0xf] %v4849
  %4882 = vst [vmem:[#allocation2 + $0x20c] sm:$0xf] %v4852
  %4883 = vst [vmem:[#allocation2 + $0x230] sm:$0xf] %v4855
  %4884 = vst [vmem:[#allocation2 + $0x254] sm:$0xf] %v4858
  %4885 = vst [vmem:[#allocation2 + $0x278] sm:$0xf] %v4861
  %4886 = vst [vmem:[#allocation2 + $0x29c] sm:$0xf] %v4864
  %4887 = vst [vmem:[#allocation2 + $0x2c0] sm:$0xf] %v4867
  %v4888 = vld [vmem:[#allocation3 + $0x40] sm:$0xe]
  %v4889 = vld [vmem:[#allocation3 + $0x44] sm:$0xf]
  %v4890 = vld [vmem:[#allocation3 + $0x48] sm:$0xf]
  %v4891 = vld [vmem:[#allocation3 + $0x4c] sm:$0xf]
  %v4892 = vld [vmem:[#allocation3 + $0x50] sm:$0xf]
  %v4893 = vld [vmem:[#allocation3 + $0x54] sm:$0xf]
  %v4894 = vld [vmem:[#allocation3 + $0x58] sm:$0xf]
  %v4895 = vld [vmem:[#allocation3 + $0x5c] sm:$0xf]
  %v4896 = vld [vmem:[#allocation3 + $0x60] sm:$0xf]
  %v4897 = vld [vmem:[#allocation3 + $0x64] sm:$0xf]
  %v4898 = vld [vmem:[#allocation3 + $0x68] sm:$0x1]
  %v4910 = vrot.slane %v4888, 5
  %v4911 = vrot.slane %v4910, 4
  %v4912 = vrot.slane %v4889, 5
  %v4913 = vsel %vm510, %v4911, %v4912
  %v4914 = vrot.slane %v4912, 4
  %v4915 = vrot.slane %v4890, 5
  %v4916 = vsel %vm510, %v4914, %v4915
  %v4917 = vrot.slane %v4915, 4
  %v4918 = vrot.slane %v4891, 5
  %v4919 = vsel %vm510, %v4917, %v4918
  %v4920 = vrot.slane %v4918, 4
  %v4921 = vrot.slane %v4892, 5
  %v4922 = vsel %vm510, %v4920, %v4921
  %v4923 = vrot.slane %v4921, 4
  %v4924 = vrot.slane %v4893, 5
  %v4925 = vsel %vm510, %v4923, %v4924
  %v4926 = vrot.slane %v4924, 4
  %v4927 = vrot.slane %v4894, 5
  %v4928 = vsel %vm510, %v4926, %v4927
  %v4929 = vrot.slane %v4927, 4
  %v4930 = vrot.slane %v4895, 5
  %v4931 = vsel %vm510, %v4929, %v4930
  %v4932 = vrot.slane %v4930, 4
  %v4933 = vrot.slane %v4896, 5
  %v4934 = vsel %vm510, %v4932, %v4933
  %v4935 = vrot.slane %v4933, 4
  %v4936 = vrot.slane %v4897, 5
  %v4937 = vsel %vm510, %v4935, %v4936
  %v4938 = vrot.slane %v4936, 4
  %v4939 = vrot.slane %v4898, 5
  %v4940 = vsel %vm510, %v4938, %v4939
  %4951 = vst [vmem:[#allocation2 + $0x180] sm:$0xf] %v4913
  %4952 = vst [vmem:[#allocation2 + $0x1a4] sm:$0xf] %v4916
  %4953 = vst [vmem:[#allocation2 + $0x1c8] sm:$0xf] %v4919
  %4954 = vst [vmem:[#allocation2 + $0x1ec] sm:$0xf] %v4922
  %4955 = vst [vmem:[#allocation2 + $0x210] sm:$0xf] %v4925
  %4956 = vst [vmem:[#allocation2 + $0x234] sm:$0xf] %v4928
  %4957 = vst [vmem:[#allocation2 + $0x258] sm:$0xf] %v4931
  %4958 = vst [vmem:[#allocation2 + $0x27c] sm:$0xf] %v4934
  %4959 = vst [vmem:[#allocation2 + $0x2a0] sm:$0xf] %v4937
  %4960 = vst [vmem:[#allocation2 + $0x2c4] sm:$0xf] %v4940
  %v4961 = vld [vmem:[#allocation3 + $0x40] sm:$0xe]
  %v4962 = vld [vmem:[#allocation3 + $0x44] sm:$0xf]
  %v4963 = vld [vmem:[#allocation3 + $0x48] sm:$0xf]
  %v4964 = vld [vmem:[#allocation3 + $0x4c] sm:$0xf]
  %v4965 = vld [vmem:[#allocation3 + $0x50] sm:$0xf]
  %v4966 = vld [vmem:[#allocation3 + $0x54] sm:$0xf]
  %v4967 = vld [vmem:[#allocation3 + $0x58] sm:$0xf]
  %v4968 = vld [vmem:[#allocation3 + $0x5c] sm:$0xf]
  %v4969 = vld [vmem:[#allocation3 + $0x60] sm:$0xf]
  %v4970 = vld [vmem:[#allocation3 + $0x64] sm:$0xf]
  %v4971 = vld [vmem:[#allocation3 + $0x68] sm:$0x3]
  %v4973 = vshrl.u32 %v4961, 16
  %v4975 = vrot.slane %v4973, 5
  %v4976 = vshll.u32 %v4961, 16
  %v4978 = vrot.slane %v4976, 6
  %v4979 = vor.u32 %v4975, %v4978
  %v4980 = vrot.slane %v4979, 4
  %v4982 = vshrl.u32 %v4962, 16
  %v4984 = vrot.slane %v4982, 5
  %v4985 = vshll.u32 %v4962, 16
  %v4987 = vrot.slane %v4985, 6
  %v4988 = vor.u32 %v4984, %v4987
  %v4989 = vsel %vm651, %v4980, %v4988
  %v4990 = vrot.slane %v4988, 4
  %v4992 = vshrl.u32 %v4963, 16
  %v4994 = vrot.slane %v4992, 5
  %v4995 = vshll.u32 %v4963, 16
  %v4997 = vrot.slane %v4995, 6
  %v4998 = vor.u32 %v4994, %v4997
  %v4999 = vsel %vm651, %v4990, %v4998
  %v5000 = vrot.slane %v4998, 4
  %v5002 = vshrl.u32 %v4964, 16
  %v5004 = vrot.slane %v5002, 5
  %v5005 = vshll.u32 %v4964, 16
  %v5007 = vrot.slane %v5005, 6
  %v5008 = vor.u32 %v5004, %v5007
  %v5009 = vsel %vm651, %v5000, %v5008
  %v5010 = vrot.slane %v5008, 4
  %v5012 = vshrl.u32 %v4965, 16
  %v5014 = vrot.slane %v5012, 5
  %v5015 = vshll.u32 %v4965, 16
  %v5017 = vrot.slane %v5015, 6
  %v5018 = vor.u32 %v5014, %v5017
  %v5019 = vsel %vm651, %v5010, %v5018
  %v5020 = vrot.slane %v5018, 4
  %v5022 = vshrl.u32 %v4966, 16
  %v5024 = vrot.slane %v5022, 5
  %v5025 = vshll.u32 %v4966, 16
  %v5027 = vrot.slane %v5025, 6
  %v5028 = vor.u32 %v5024, %v5027
  %v5029 = vsel %vm651, %v5020, %v5028
  %v5030 = vrot.slane %v5028, 4
  %v5032 = vshrl.u32 %v4967, 16
  %v5034 = vrot.slane %v5032, 5
  %v5035 = vshll.u32 %v4967, 16
  %v5037 = vrot.slane %v5035, 6
  %v5038 = vor.u32 %v5034, %v5037
  %v5039 = vsel %vm651, %v5030, %v5038
  %v5040 = vrot.slane %v5038, 4
  %v5042 = vshrl.u32 %v4968, 16
  %v5044 = vrot.slane %v5042, 5
  %v5045 = vshll.u32 %v4968, 16
  %v5047 = vrot.slane %v5045, 6
  %v5048 = vor.u32 %v5044, %v5047
  %v5049 = vsel %vm651, %v5040, %v5048
  %v5050 = vrot.slane %v5048, 4
  %v5052 = vshrl.u32 %v4969, 16
  %v5054 = vrot.slane %v5052, 5
  %v5055 = vshll.u32 %v4969, 16
  %v5057 = vrot.slane %v5055, 6
  %v5058 = vor.u32 %v5054, %v5057
  %v5059 = vsel %vm651, %v5050, %v5058
  %v5060 = vrot.slane %v5058, 4
  %v5062 = vshrl.u32 %v4970, 16
  %v5064 = vrot.slane %v5062, 5
  %v5065 = vshll.u32 %v4970, 16
  %v5067 = vrot.slane %v5065, 6
  %v5068 = vor.u32 %v5064, %v5067
  %v5069 = vsel %vm651, %v5060, %v5068
  %v5070 = vrot.slane %v5068, 4
  %v5072 = vshrl.u32 %v4971, 16
  %v5074 = vrot.slane %v5072, 5
  %v5075 = vshll.u32 %v4971, 16
  %v5077 = vrot.slane %v5075, 6
  %v5078 = vor.u32 %v5074, %v5077
  %v5079 = vsel %vm651, %v5070, %v5078
  %5090 = vst [vmem:[#allocation2 + $0x184] sm:$0xf] %v4989
  %5091 = vst [vmem:[#allocation2 + $0x1a8] sm:$0xf] %v4999
  %5092 = vst [vmem:[#allocation2 + $0x1cc] sm:$0xf] %v5009
  %5093 = vst [vmem:[#allocation2 + $0x1f0] sm:$0xf] %v5019
  %5094 = vst [vmem:[#allocation2 + $0x214] sm:$0xf] %v5029
  %5095 = vst [vmem:[#allocation2 + $0x238] sm:$0xf] %v5039
  %5096 = vst [vmem:[#allocation2 + $0x25c] sm:$0xf] %v5049
  %5097 = vst [vmem:[#allocation2 + $0x280] sm:$0xf] %v5059
  %5098 = vst [vmem:[#allocation2 + $0x2a4] sm:$0xf] %v5069
  %5099 = vst [vmem:[#allocation2 + $0x2c8] sm:$0xf] %v5079
  %v5100 = vld [vmem:[#allocation3 + $0x40] sm:$0xc]
  %v5101 = vld [vmem:[#allocation3 + $0x44] sm:$0xf]
  %v5102 = vld [vmem:[#allocation3 + $0x48] sm:$0xf]
  %v5103 = vld [vmem:[#allocation3 + $0x4c] sm:$0xf]
  %v5104 = vld [vmem:[#allocation3 + $0x50] sm:$0xf]
  %v5105 = vld [vmem:[#allocation3 + $0x54] sm:$0xf]
  %v5106 = vld [vmem:[#allocation3 + $0x58] sm:$0xf]
  %v5107 = vld [vmem:[#allocation3 + $0x5c] sm:$0xf]
  %v5108 = vld [vmem:[#allocation3 + $0x60] sm:$0xf]
  %v5109 = vld [vmem:[#allocation3 + $0x64] sm:$0xf]
  %v5110 = vld [vmem:[#allocation3 + $0x68] sm:$0x3]
  %v5122 = vrot.slane %v5100, 6
  %v5123 = vrot.slane %v5122, 4
  %v5124 = vrot.slane %v5101, 6
  %v5125 = vsel %vm68, %v5123, %v5124
  %v5126 = vrot.slane %v5124, 4
  %v5127 = vrot.slane %v5102, 6
  %v5128 = vsel %vm68, %v5126, %v5127
  %v5129 = vrot.slane %v5127, 4
  %v5130 = vrot.slane %v5103, 6
  %v5131 = vsel %vm68, %v5129, %v5130
  %v5132 = vrot.slane %v5130, 4
  %v5133 = vrot.slane %v5104, 6
  %v5134 = vsel %vm68, %v5132, %v5133
  %v5135 = vrot.slane %v5133, 4
  %v5136 = vrot.slane %v5105, 6
  %v5137 = vsel %vm68, %v5135, %v5136
  %v5138 = vrot.slane %v5136, 4
  %v5139 = vrot.slane %v5106, 6
  %v5140 = vsel %vm68, %v5138, %v5139
  %v5141 = vrot.slane %v5139, 4
  %v5142 = vrot.slane %v5107, 6
  %v5143 = vsel %vm68, %v5141, %v5142
  %v5144 = vrot.slane %v5142, 4
  %v5145 = vrot.slane %v5108, 6
  %v5146 = vsel %vm68, %v5144, %v5145
  %v5147 = vrot.slane %v5145, 4
  %v5148 = vrot.slane %v5109, 6
  %v5149 = vsel %vm68, %v5147, %v5148
  %v5150 = vrot.slane %v5148, 4
  %v5151 = vrot.slane %v5110, 6
  %v5152 = vsel %vm68, %v5150, %v5151
  %5163 = vst [vmem:[#allocation2 + $0x188] sm:$0xf] %v5125
  %5164 = vst [vmem:[#allocation2 + $0x1ac] sm:$0xf] %v5128
  %5165 = vst [vmem:[#allocation2 + $0x1d0] sm:$0xf] %v5131
  %5166 = vst [vmem:[#allocation2 + $0x1f4] sm:$0xf] %v5134
  %5167 = vst [vmem:[#allocation2 + $0x218] sm:$0xf] %v5137
  %5168 = vst [vmem:[#allocation2 + $0x23c] sm:$0xf] %v5140
  %5169 = vst [vmem:[#allocation2 + $0x260] sm:$0xf] %v5143
  %5170 = vst [vmem:[#allocation2 + $0x284] sm:$0xf] %v5146
  %5171 = vst [vmem:[#allocation2 + $0x2a8] sm:$0xf] %v5149
  %5172 = vst [vmem:[#allocation2 + $0x2cc] sm:$0xf] %v5152
  %v5173 = vld [vmem:[#allocation2] sm:$0xff]
  %v5174 = vld [vmem:[#allocation2 + $0x8] sm:$0xff]
  %v5175 = vld [vmem:[#allocation2 + $0x10] sm:$0xff]
  %v5176 = vld [vmem:[#allocation2 + $0x18] sm:$0xff]
  %v5177 = vld [vmem:[#allocation2 + $0x20] sm:$0xf]
  %v5178 = vld [vmem:[#allocation2 + $0x24] sm:$0xff]
  %v5179 = vld [vmem:[#allocation2 + $0x2c] sm:$0xff]
  %v5180 = vld [vmem:[#allocation2 + $0x34] sm:$0xff]
  %v5181 = vld [vmem:[#allocation2 + $0x3c] sm:$0xff]
  %v5182 = vld [vmem:[#allocation2 + $0x44] sm:$0xf]
  %v5183 = vld [vmem:[#allocation2 + $0x48] sm:$0xff]
  %v5184 = vld [vmem:[#allocation2 + $0x50] sm:$0xff]
  %v5185 = vld [vmem:[#allocation2 + $0x58] sm:$0xff]
  %v5186 = vld [vmem:[#allocation2 + $0x60] sm:$0xff]
  %v5187 = vld [vmem:[#allocation2 + $0x68] sm:$0xf]
  %v5188 = vld [vmem:[#allocation2 + $0x6c] sm:$0xff]
  %v5189 = vld [vmem:[#allocation2 + $0x74] sm:$0xff]
  %v5190 = vld [vmem:[#allocation2 + $0x7c] sm:$0xff]
  %v5191 = vld [vmem:[#allocation2 + $0x84] sm:$0xff]
  %v5192 = vld [vmem:[#allocation2 + $0x8c] sm:$0xf]
  %v5193 = vld [vmem:[#allocation2 + $0x90] sm:$0xff]
  %v5194 = vld [vmem:[#allocation2 + $0x98] sm:$0xff]
  %v5195 = vld [vmem:[#allocation2 + $0xa0] sm:$0xff]
  %v5196 = vld [vmem:[#allocation2 + $0xa8] sm:$0xff]
  %v5197 = vld [vmem:[#allocation2 + $0xb0] sm:$0xf]
  %v5198 = vld [vmem:[#allocation2 + $0xb4] sm:$0xff]
  %v5199 = vld [vmem:[#allocation2 + $0xbc] sm:$0xff]
  %v5200 = vld [vmem:[#allocation2 + $0xc4] sm:$0xff]
  %v5201 = vld [vmem:[#allocation2 + $0xcc] sm:$0xff]
  %v5202 = vld [vmem:[#allocation2 + $0xd4] sm:$0xf]
  %v5203 = vld [vmem:[#allocation2 + $0xd8] sm:$0xff]
  %v5204 = vld [vmem:[#allocation2 + $0xe0] sm:$0xff]
  %v5205 = vld [vmem:[#allocation2 + $0xe8] sm:$0xff]
  %v5206 = vld [vmem:[#allocation2 + $0xf0] sm:$0xff]
  %v5207 = vld [vmem:[#allocation2 + $0xf8] sm:$0xf]
  %v5208 = vld [vmem:[#allocation2 + $0xfc] sm:$0xff]
  %v5209 = vld [vmem:[#allocation2 + $0x104] sm:$0xff]
  %v5210 = vld [vmem:[#allocation2 + $0x10c] sm:$0xff]
  %v5211 = vld [vmem:[#allocation2 + $0x114] sm:$0xff]
  %v5212 = vld [vmem:[#allocation2 + $0x11c] sm:$0xf]
  %v5213 = vld [vmem:[#allocation2 + $0x120] sm:$0xff]
  %v5214 = vld [vmem:[#allocation2 + $0x128] sm:$0xff]
  %v5215 = vld [vmem:[#allocation2 + $0x130] sm:$0xff]
  %v5216 = vld [vmem:[#allocation2 + $0x138] sm:$0xff]
  %v5217 = vld [vmem:[#allocation2 + $0x140] sm:$0xf]
  %v5218 = vld [vmem:[#allocation2 + $0x144] sm:$0xff]
  %v5219 = vld [vmem:[#allocation2 + $0x14c] sm:$0xff]
  %v5220 = vld [vmem:[#allocation2 + $0x154] sm:$0xff]
  %v5221 = vld [vmem:[#allocation2 + $0x15c] sm:$0xff]
  %v5222 = vld [vmem:[#allocation2 + $0x164] sm:$0xf]
  %v5223 = vld [vmem:[#allocation2 + $0x168] sm:$0xff]
  %v5224 = vld [vmem:[#allocation2 + $0x170] sm:$0xff]
  %v5225 = vld [vmem:[#allocation2 + $0x178] sm:$0xff]
  %v5226 = vld [vmem:[#allocation2 + $0x180] sm:$0xff]
  %v5227 = vld [vmem:[#allocation2 + $0x188] sm:$0xf]
  %v5228 = vld [vmem:[#allocation2 + $0x18c] sm:$0xff]
  %v5229 = vld [vmem:[#allocation2 + $0x194] sm:$0xff]
  %v5230 = vld [vmem:[#allocation2 + $0x19c] sm:$0xff]
  %v5231 = vld [vmem:[#allocation2 + $0x1a4] sm:$0xff]
  %v5232 = vld [vmem:[#allocation2 + $0x1ac] sm:$0xf]
  %v5233 = vld [vmem:[#allocation2 + $0x1b0] sm:$0xff]
  %v5234 = vld [vmem:[#allocation2 + $0x1b8] sm:$0xff]
  %v5235 = vld [vmem:[#allocation2 + $0x1c0] sm:$0xff]
  %v5236 = vld [vmem:[#allocation2 + $0x1c8] sm:$0xff]
  %v5237 = vld [vmem:[#allocation2 + $0x1d0] sm:$0xf]
  %v5238 = vld [vmem:[#allocation2 + $0x1d4] sm:$0xff]
  %v5239 = vld [vmem:[#allocation2 + $0x1dc] sm:$0xff]
  %v5240 = vld [vmem:[#allocation2 + $0x1e4] sm:$0xff]
  %v5241 = vld [vmem:[#allocation2 + $0x1ec] sm:$0xff]
  %v5242 = vld [vmem:[#allocation2 + $0x1f4] sm:$0xf]
  %v5243 = vld [vmem:[#allocation2 + $0x1f8] sm:$0xff]
  %v5244 = vld [vmem:[#allocation2 + $0x200] sm:$0xff]
  %v5245 = vld [vmem:[#allocation2 + $0x208] sm:$0xff]
  %v5246 = vld [vmem:[#allocation2 + $0x210] sm:$0xff]
  %v5247 = vld [vmem:[#allocation2 + $0x218] sm:$0xf]
  %v5248 = vld [vmem:[#allocation2 + $0x21c] sm:$0xff]
  %v5249 = vld [vmem:[#allocation2 + $0x224] sm:$0xff]
  %v5250 = vld [vmem:[#allocation2 + $0x22c] sm:$0xff]
  %v5251 = vld [vmem:[#allocation2 + $0x234] sm:$0xff]
  %v5252 = vld [vmem:[#allocation2 + $0x23c] sm:$0xf]
  %v5253 = vld [vmem:[#allocation2 + $0x240] sm:$0xff]
  %v5254 = vld [vmem:[#allocation2 + $0x248] sm:$0xff]
  %v5255 = vld [vmem:[#allocation2 + $0x250] sm:$0xff]
  %v5256 = vld [vmem:[#allocation2 + $0x258] sm:$0xff]
  %v5257 = vld [vmem:[#allocation2 + $0x260] sm:$0xf]
  %v5258 = vld [vmem:[#allocation2 + $0x264] sm:$0xff]
  %v5259 = vld [vmem:[#allocation2 + $0x26c] sm:$0xff]
  %v5260 = vld [vmem:[#allocation2 + $0x274] sm:$0xff]
  %v5261 = vld [vmem:[#allocation2 + $0x27c] sm:$0xff]
  %v5262 = vld [vmem:[#allocation2 + $0x284] sm:$0xf]
  %v5263 = vld [vmem:[#allocation2 + $0x288] sm:$0xff]
  %v5264 = vld [vmem:[#allocation2 + $0x290] sm:$0xff]
  %v5265 = vld [vmem:[#allocation2 + $0x298] sm:$0xff]
  %v5266 = vld [vmem:[#allocation2 + $0x2a0] sm:$0xff]
  %v5267 = vld [vmem:[#allocation2 + $0x2a8] sm:$0xf]
  %v5268 = vld [vmem:[#allocation2 + $0x2ac] sm:$0xff]
  %v5269 = vld [vmem:[#allocation2 + $0x2b4] sm:$0xff]
  %v5270 = vld [vmem:[#allocation2 + $0x2bc] sm:$0xff]
  %v5271 = vld [vmem:[#allocation2 + $0x2c4] sm:$0xff]
  %v5272 = vld [vmem:[#allocation2 + $0x2cc] sm:$0xf]
  %v5273 = vld [vmem:[%s3] sm:$0xf]
  %v5274 = vld [vmem:[%s3 + $0x4] sm:$0xf]
  %v5275 = vld [vmem:[%s3 + $0x8] sm:$0xf]
  %v5276 = vld [vmem:[%s3 + $0xc] sm:$0xf]
  %v5277 = vld [vmem:[%s3 + $0x10] sm:$0xf]
  %v5278 = vld [vmem:[%s3 + $0x14] sm:$0xf]
  %v5279 = vld [vmem:[%s3 + $0x18] sm:$0xf]
  %v5280 = vld [vmem:[%s3 + $0x1c] sm:$0xf]
  %v5281 = vld [vmem:[%s3 + $0x20] sm:$0xf]
  %v5282 = vld [vmem:[%s3 + $0x24] sm:$0xf]
  %v5283 = vld [vmem:[%s3 + $0x28] sm:$0xf]
  %v5284 = vld [vmem:[%s3 + $0x2c] sm:$0xf]
  %v5285 = vld [vmem:[%s3 + $0x30] sm:$0xf]
  %v5286 = vld [vmem:[%s3 + $0x34] sm:$0xf]
  %v5287 = vld [vmem:[%s3 + $0x38] sm:$0xf]
  %v5288 = vld [vmem:[%s3 + $0x3c] sm:$0xf]
  %v5289 = vld [vmem:[%s3 + $0x40] sm:$0xf]
  %v5290 = vld [vmem:[%s3 + $0x44] sm:$0xf]
  %v5291 = vld [vmem:[%s3 + $0x48] sm:$0xf]
  %v5292 = vld [vmem:[%s3 + $0x4c] sm:$0xf]
  %v5293 = vld [vmem:[%s3 + $0x50] sm:$0xf]
  %v5294 = vld [vmem:[%s3 + $0x54] sm:$0xf]
  %v5295 = vld [vmem:[%s3 + $0x58] sm:$0xf]
  %v5296 = vld [vmem:[%s3 + $0x5c] sm:$0xf]
  %v5297 = vld [vmem:[%s3 + $0x60] sm:$0xf]
  %v5298 = vld [vmem:[%s3 + $0x64] sm:$0xf]
  %v5299 = vld [vmem:[%s3 + $0x68] sm:$0xf]
  %v5300 = vld [vmem:[%s3 + $0x6c] sm:$0xf]
  %v5301 = vld [vmem:[%s3 + $0x70] sm:$0xf]
  %v5302 = vld [vmem:[%s3 + $0x74] sm:$0xf]
  %v5303 = vld [vmem:[%s3 + $0x78] sm:$0xf]
  %v5304 = vld [vmem:[%s3 + $0x7c] sm:$0xf]
  %v5305 = vld [vmem:[%s3 + $0x80] sm:$0xf]
  %v5306 = vld [vmem:[%s3 + $0x84] sm:$0xf]
  %v5307 = vld [vmem:[%s3 + $0x88] sm:$0xf]
  %v5308 = vld [vmem:[%s3 + $0x8c] sm:$0xf]
  %v5309 = vld [vmem:[%s3 + $0x90] sm:$0xf]
  %v5310 = vld [vmem:[%s3 + $0x94] sm:$0xf]
  %v5311 = vld [vmem:[%s3 + $0x98] sm:$0xf]
  %v5312 = vld [vmem:[%s3 + $0x9c] sm:$0xf]
  %v5313 = vld [vmem:[%s3 + $0xa0] sm:$0xf]
  %v5314 = vld [vmem:[%s3 + $0xa4] sm:$0xf]
  %v5315 = vld [vmem:[%s3 + $0xa8] sm:$0xf]
  %v5316 = vld [vmem:[%s3 + $0xac] sm:$0xf]
  %v5317 = vld [vmem:[%s3 + $0xb0] sm:$0xf]
  %v5318 = vld [vmem:[%s3 + $0xb4] sm:$0xf]
  %v5319 = vld [vmem:[%s3 + $0xb8] sm:$0xf]
  %v5320 = vld [vmem:[%s3 + $0xbc] sm:$0xf]
  %v5321 = vld [vmem:[%s3 + $0xc0] sm:$0xf]
  %v5322 = vld [vmem:[%s3 + $0xc4] sm:$0xf]
  %v5323 = vld [vmem:[%s3 + $0xc8] sm:$0xf]
  %v5324 = vld [vmem:[%s3 + $0xcc] sm:$0xf]
  %v5325 = vld [vmem:[%s3 + $0xd0] sm:$0xf]
  %v5326 = vld [vmem:[%s3 + $0xd4] sm:$0xf]
  %v5327 = vld [vmem:[%s3 + $0xd8] sm:$0xf]
  %v5328 = vld [vmem:[%s3 + $0xdc] sm:$0xf]
  %v5329 = vld [vmem:[%s3 + $0xe0] sm:$0xf]
  %v5330 = vld [vmem:[%s3 + $0xe4] sm:$0xf]
  %v5331 = vld [vmem:[%s3 + $0xe8] sm:$0xf]
  %v5332 = vld [vmem:[%s3 + $0xec] sm:$0xf]
  %v5333 = vld [vmem:[%s3 + $0xf0] sm:$0xf]
  %v5334 = vld [vmem:[%s3 + $0xf4] sm:$0xf]
  %v5335 = vld [vmem:[%s3 + $0xf8] sm:$0xf]
  %v5336 = vld [vmem:[%s3 + $0xfc] sm:$0xf]
  %v5337 = vld [vmem:[%s3 + $0x100] sm:$0xf]
  %v5338 = vld [vmem:[%s3 + $0x104] sm:$0xf]
  %v5339 = vld [vmem:[%s3 + $0x108] sm:$0xf]
  %v5340 = vld [vmem:[%s3 + $0x10c] sm:$0xf]
  %v5341 = vld [vmem:[%s3 + $0x110] sm:$0xf]
  %v5342 = vld [vmem:[%s3 + $0x114] sm:$0xf]
  %v5343 = vld [vmem:[%s3 + $0x118] sm:$0xf]
  %v5344 = vld [vmem:[%s3 + $0x11c] sm:$0xf]
  %v5345 = vld [vmem:[%s3 + $0x120] sm:$0xf]
  %v5346 = vld [vmem:[%s3 + $0x124] sm:$0xf]
  %v5347 = vld [vmem:[%s3 + $0x128] sm:$0xf]
  %v5348 = vld [vmem:[%s3 + $0x12c] sm:$0xf]
  %v5349 = vld [vmem:[%s3 + $0x130] sm:$0xf]
  %v5350 = vld [vmem:[%s3 + $0x134] sm:$0xf]
  %v5351 = vld [vmem:[%s3 + $0x138] sm:$0xf]
  %v5352 = vld [vmem:[%s3 + $0x13c] sm:$0xf]
  %v5353 = vld [vmem:[%s3 + $0x140] sm:$0xf]
  %v5354 = vld [vmem:[%s3 + $0x144] sm:$0xf]
  %v5355 = vld [vmem:[%s3 + $0x148] sm:$0xf]
  %v5356 = vld [vmem:[%s3 + $0x14c] sm:$0xf]
  %v5357 = vld [vmem:[%s3 + $0x150] sm:$0xf]
  %v5358 = vld [vmem:[%s3 + $0x154] sm:$0xf]
  %v5359 = vld [vmem:[%s3 + $0x158] sm:$0xf]
  %v5360 = vld [vmem:[%s3 + $0x15c] sm:$0xf]
  %v5361 = vld [vmem:[%s3 + $0x160] sm:$0xf]
  %v5362 = vld [vmem:[%s3 + $0x164] sm:$0xf]
  %v5363 = vld [vmem:[%s3 + $0x168] sm:$0xf]
  %v5364 = vld [vmem:[%s3 + $0x16c] sm:$0xf]
  %v5365 = vld [vmem:[%s3 + $0x170] sm:$0xf]
  %v5366 = vld [vmem:[%s3 + $0x174] sm:$0xf]
  %v5367 = vld [vmem:[%s3 + $0x178] sm:$0xf]
  %v5368 = vld [vmem:[%s3 + $0x17c] sm:$0xf]
  %v5369 = vld [vmem:[%s3 + $0x180] sm:$0xf]
  %v5370 = vld [vmem:[%s3 + $0x184] sm:$0xf]
  %v5371 = vld [vmem:[%s3 + $0x188] sm:$0xf]
  %v5372 = vld [vmem:[%s3 + $0x18c] sm:$0xf]
  %v5373 = vld [vmem:[%s3 + $0x190] sm:$0xf]
  %v5374 = vld [vmem:[%s3 + $0x194] sm:$0xf]
  %v5375 = vld [vmem:[%s3 + $0x198] sm:$0xf]
  %v5376 = vld [vmem:[%s3 + $0x19c] sm:$0xf]
  %v5377 = vld [vmem:[%s3 + $0x1a0] sm:$0xf]
  %v5378 = vld [vmem:[%s3 + $0x1a4] sm:$0xf]
  %v5379 = vld [vmem:[%s3 + $0x1a8] sm:$0xf]
  %v5380 = vld [vmem:[%s3 + $0x1ac] sm:$0xf]
  %v5381 = vld [vmem:[%s3 + $0x1b0] sm:$0xf]
  %v5382 = vld [vmem:[%s3 + $0x1b4] sm:$0xf]
  %v5383 = vld [vmem:[%s3 + $0x1b8] sm:$0xf]
  %v5384 = vld [vmem:[%s3 + $0x1bc] sm:$0xf]
  %v5385 = vld [vmem:[%s3 + $0x1c0] sm:$0xf]
  %v5386 = vld [vmem:[%s3 + $0x1c4] sm:$0xf]
  %v5387 = vld [vmem:[%s3 + $0x1c8] sm:$0xf]
  %v5388 = vld [vmem:[%s3 + $0x1cc] sm:$0xf]
  %v5389 = vld [vmem:[%s3 + $0x1d0] sm:$0xf]
  %v5390 = vld [vmem:[%s3 + $0x1d4] sm:$0xf]
  %v5391 = vld [vmem:[%s3 + $0x1d8] sm:$0xf]
  %v5392 = vld [vmem:[%s3 + $0x1dc] sm:$0xf]
  %v5393 = vld [vmem:[%s3 + $0x1e0] sm:$0xf]
  %v5394 = vld [vmem:[%s3 + $0x1e4] sm:$0xf]
  %v5395 = vld [vmem:[%s3 + $0x1e8] sm:$0xf]
  %v5396 = vld [vmem:[%s3 + $0x1ec] sm:$0xf]
  %v5397 = vld [vmem:[%s3 + $0x1f0] sm:$0xf]
  %v5398 = vld [vmem:[%s3 + $0x1f4] sm:$0xf]
  %v5399 = vld [vmem:[%s3 + $0x1f8] sm:$0xf]
  %v5400 = vld [vmem:[%s3 + $0x1fc] sm:$0xf]
  %v5401 = vld [vmem:[%s3 + $0x200] sm:$0xf]
  %v5402 = vld [vmem:[%s3 + $0x204] sm:$0xf]
  %v5403 = vld [vmem:[%s3 + $0x208] sm:$0xf]
  %v5404 = vld [vmem:[%s3 + $0x20c] sm:$0xf]
  %v5405 = vld [vmem:[%s3 + $0x210] sm:$0xf]
  %v5406 = vld [vmem:[%s3 + $0x214] sm:$0xf]
  %v5407 = vld [vmem:[%s3 + $0x218] sm:$0xf]
  %v5408 = vld [vmem:[%s3 + $0x21c] sm:$0xf]
  %v5409 = vld [vmem:[%s3 + $0x220] sm:$0xf]
  %v5410 = vld [vmem:[%s3 + $0x224] sm:$0xf]
  %v5411 = vld [vmem:[%s3 + $0x228] sm:$0xf]
  %v5412 = vld [vmem:[%s3 + $0x22c] sm:$0xf]
  %v5413 = vld [vmem:[%s3 + $0x230] sm:$0xf]
  %v5414 = vld [vmem:[%s3 + $0x234] sm:$0xf]
  %v5415 = vld [vmem:[%s3 + $0x238] sm:$0xf]
  %v5416 = vld [vmem:[%s3 + $0x23c] sm:$0xf]
  %v5417 = vld [vmem:[%s4 + $0x1] sm:$0x1]
  %v5418 = vperm.slane %v5417, 0
  %v5519 = vunpack.c.l.b16 %v5173
  %v5520 = vunpack.c.h.b16 %v5173
  %v5521 = vunpack.c.l.b16 %v5174
  %v5522 = vunpack.c.h.b16 %v5174
  %v5523 = vunpack.c.l.b16 %v5175
  %v5524 = vunpack.c.h.b16 %v5175
  %v5525 = vunpack.c.l.b16 %v5176
  %v5526 = vunpack.c.h.b16 %v5176
  %v5527 = vunpack.c.l.b16 %v5177
  %v5528 = vunpack.c.l.b16 %v5178
  %v5529 = vunpack.c.h.b16 %v5178
  %v5530 = vunpack.c.l.b16 %v5179
  %v5531 = vunpack.c.h.b16 %v5179
  %v5532 = vunpack.c.l.b16 %v5180
  %v5533 = vunpack.c.h.b16 %v5180
  %v5534 = vunpack.c.l.b16 %v5181
  %v5535 = vunpack.c.h.b16 %v5181
  %v5536 = vunpack.c.l.b16 %v5182
  %v5537 = vunpack.c.l.b16 %v5183
  %v5538 = vunpack.c.h.b16 %v5183
  %v5539 = vunpack.c.l.b16 %v5184
  %v5540 = vunpack.c.h.b16 %v5184
  %v5541 = vunpack.c.l.b16 %v5185
  %v5542 = vunpack.c.h.b16 %v5185
  %v5543 = vunpack.c.l.b16 %v5186
  %v5544 = vunpack.c.h.b16 %v5186
  %v5545 = vunpack.c.l.b16 %v5187
  %v5546 = vunpack.c.l.b16 %v5188
  %v5547 = vunpack.c.h.b16 %v5188
  %v5548 = vunpack.c.l.b16 %v5189
  %v5549 = vunpack.c.h.b16 %v5189
  %v5550 = vunpack.c.l.b16 %v5190
  %v5551 = vunpack.c.h.b16 %v5190
  %v5552 = vunpack.c.l.b16 %v5191
  %v5553 = vunpack.c.h.b16 %v5191
  %v5554 = vunpack.c.l.b16 %v5192
  %v5555 = vunpack.c.l.b16 %v5193
  %v5556 = vunpack.c.h.b16 %v5193
  %v5557 = vunpack.c.l.b16 %v5194
  %v5558 = vunpack.c.h.b16 %v5194
  %v5559 = vunpack.c.l.b16 %v5195
  %v5560 = vunpack.c.h.b16 %v5195
  %v5561 = vunpack.c.l.b16 %v5196
  %v5562 = vunpack.c.h.b16 %v5196
  %v5563 = vunpack.c.l.b16 %v5197
  %v5564 = vunpack.c.l.b16 %v5198
  %v5565 = vunpack.c.h.b16 %v5198
  %v5566 = vunpack.c.l.b16 %v5199
  %v5567 = vunpack.c.h.b16 %v5199
  %v5568 = vunpack.c.l.b16 %v5200
  %v5569 = vunpack.c.h.b16 %v5200
  %v5570 = vunpack.c.l.b16 %v5201
  %v5571 = vunpack.c.h.b16 %v5201
  %v5572 = vunpack.c.l.b16 %v5202
  %v5573 = vunpack.c.l.b16 %v5203
  %v5574 = vunpack.c.h.b16 %v5203
  %v5575 = vunpack.c.l.b16 %v5204
  %v5576 = vunpack.c.h.b16 %v5204
  %v5577 = vunpack.c.l.b16 %v5205
  %v5578 = vunpack.c.h.b16 %v5205
  %v5579 = vunpack.c.l.b16 %v5206
  %v5580 = vunpack.c.h.b16 %v5206
  %v5581 = vunpack.c.l.b16 %v5207
  %v5582 = vunpack.c.l.b16 %v5208
  %v5583 = vunpack.c.h.b16 %v5208
  %v5584 = vunpack.c.l.b16 %v5209
  %v5585 = vunpack.c.h.b16 %v5209
  %v5586 = vunpack.c.l.b16 %v5210
  %v5587 = vunpack.c.h.b16 %v5210
  %v5588 = vunpack.c.l.b16 %v5211
  %v5589 = vunpack.c.h.b16 %v5211
  %v5590 = vunpack.c.l.b16 %v5212
  %v5591 = vunpack.c.l.b16 %v5213
  %v5592 = vunpack.c.h.b16 %v5213
  %v5593 = vunpack.c.l.b16 %v5214
  %v5594 = vunpack.c.h.b16 %v5214
  %v5595 = vunpack.c.l.b16 %v5215
  %v5596 = vunpack.c.h.b16 %v5215
  %v5597 = vunpack.c.l.b16 %v5216
  %v5598 = vunpack.c.h.b16 %v5216
  %v5599 = vunpack.c.l.b16 %v5217
  %v5600 = vunpack.c.l.b16 %v5218
  %v5601 = vunpack.c.h.b16 %v5218
  %v5602 = vunpack.c.l.b16 %v5219
  %v5603 = vunpack.c.h.b16 %v5219
  %v5604 = vunpack.c.l.b16 %v5220
  %v5605 = vunpack.c.h.b16 %v5220
  %v5606 = vunpack.c.l.b16 %v5221
  %v5607 = vunpack.c.h.b16 %v5221
  %v5608 = vunpack.c.l.b16 %v5222
  %v5609 = vunpack.c.l.b16 %v5223
  %v5610 = vunpack.c.h.b16 %v5223
  %v5611 = vunpack.c.l.b16 %v5224
  %v5612 = vunpack.c.h.b16 %v5224
  %v5613 = vunpack.c.l.b16 %v5225
  %v5614 = vunpack.c.h.b16 %v5225
  %v5615 = vunpack.c.l.b16 %v5226
  %v5616 = vunpack.c.h.b16 %v5226
  %v5617 = vunpack.c.l.b16 %v5227
  %v5618 = vunpack.c.l.b16 %v5228
  %v5619 = vunpack.c.h.b16 %v5228
  %v5620 = vunpack.c.l.b16 %v5229
  %v5621 = vunpack.c.h.b16 %v5229
  %v5622 = vunpack.c.l.b16 %v5230
  %v5623 = vunpack.c.h.b16 %v5230
  %v5624 = vunpack.c.l.b16 %v5231
  %v5625 = vunpack.c.h.b16 %v5231
  %v5626 = vunpack.c.l.b16 %v5232
  %v5627 = vunpack.c.l.b16 %v5233
  %v5628 = vunpack.c.h.b16 %v5233
  %v5629 = vunpack.c.l.b16 %v5234
  %v5630 = vunpack.c.h.b16 %v5234
  %v5631 = vunpack.c.l.b16 %v5235
  %v5632 = vunpack.c.h.b16 %v5235
  %v5633 = vunpack.c.l.b16 %v5236
  %v5634 = vunpack.c.h.b16 %v5236
  %v5635 = vunpack.c.l.b16 %v5237
  %v5636 = vunpack.c.l.b16 %v5238
  %v5637 = vunpack.c.h.b16 %v5238
  %v5638 = vunpack.c.l.b16 %v5239
  %v5639 = vunpack.c.h.b16 %v5239
  %v5640 = vunpack.c.l.b16 %v5240
  %v5641 = vunpack.c.h.b16 %v5240
  %v5642 = vunpack.c.l.b16 %v5241
  %v5643 = vunpack.c.h.b16 %v5241
  %v5644 = vunpack.c.l.b16 %v5242
  %v5645 = vunpack.c.l.b16 %v5243
  %v5646 = vunpack.c.h.b16 %v5243
  %v5647 = vunpack.c.l.b16 %v5244
  %v5648 = vunpack.c.h.b16 %v5244
  %v5649 = vunpack.c.l.b16 %v5245
  %v5650 = vunpack.c.h.b16 %v5245
  %v5651 = vunpack.c.l.b16 %v5246
  %v5652 = vunpack.c.h.b16 %v5246
  %v5653 = vunpack.c.l.b16 %v5247
  %v5654 = vunpack.c.l.b16 %v5248
  %v5655 = vunpack.c.h.b16 %v5248
  %v5656 = vunpack.c.l.b16 %v5249
  %v5657 = vunpack.c.h.b16 %v5249
  %v5658 = vunpack.c.l.b16 %v5250
  %v5659 = vunpack.c.h.b16 %v5250
  %v5660 = vunpack.c.l.b16 %v5251
  %v5661 = vunpack.c.h.b16 %v5251
  %v5662 = vunpack.c.l.b16 %v5252
  %v5663 = vunpack.c.l.b16 %v5253
  %v5664 = vunpack.c.h.b16 %v5253
  %v5665 = vunpack.c.l.b16 %v5254
  %v5666 = vunpack.c.h.b16 %v5254
  %v5667 = vunpack.c.l.b16 %v5255
  %v5668 = vunpack.c.h.b16 %v5255
  %v5669 = vunpack.c.l.b16 %v5256
  %v5670 = vunpack.c.h.b16 %v5256
  %v5671 = vunpack.c.l.b16 %v5257
  %v5672 = vunpack.c.l.b16 %v5258
  %v5673 = vunpack.c.h.b16 %v5258
  %v5674 = vunpack.c.l.b16 %v5259
  %v5675 = vunpack.c.h.b16 %v5259
  %v5676 = vunpack.c.l.b16 %v5260
  %v5677 = vunpack.c.h.b16 %v5260
  %v5678 = vunpack.c.l.b16 %v5261
  %v5679 = vunpack.c.h.b16 %v5261
  %v5680 = vunpack.c.l.b16 %v5262
  %v5681 = vunpack.c.l.b16 %v5263
  %v5682 = vunpack.c.h.b16 %v5263
  %v5683 = vunpack.c.l.b16 %v5264
  %v5684 = vunpack.c.h.b16 %v5264
  %v5685 = vunpack.c.l.b16 %v5265
  %v5686 = vunpack.c.h.b16 %v5265
  %v5687 = vunpack.c.l.b16 %v5266
  %v5688 = vunpack.c.h.b16 %v5266
  %v5689 = vunpack.c.l.b16 %v5267
  %v5690 = vunpack.c.l.b16 %v5268
  %v5691 = vunpack.c.h.b16 %v5268
  %v5692 = vunpack.c.l.b16 %v5269
  %v5693 = vunpack.c.h.b16 %v5269
  %v5694 = vunpack.c.l.b16 %v5270
  %v5695 = vunpack.c.h.b16 %v5270
  %v5696 = vunpack.c.l.b16 %v5271
  %v5697 = vunpack.c.h.b16 %v5271
  %v5698 = vunpack.c.l.b16 %v5272
  %v5699 = vpack.c.b16 %v5528, %v5519
  %v5700 = vpack.c.b16 %v5529, %v5520
  %v5701 = vpack.c.b16 %v5530, %v5521
  %v5702 = vpack.c.b16 %v5531, %v5522
  %v5703 = vpack.c.b16 %v5532, %v5523
  %v5704 = vpack.c.b16 %v5533, %v5524
  %v5705 = vpack.c.b16 %v5534, %v5525
  %v5706 = vpack.c.b16 %v5535, %v5526
  %v5707 = vpack.c.b16 %v5536, %v5527
  %v5708 = vpack.c.b16 %v5546, %v5537
  %v5709 = vpack.c.b16 %v5547, %v5538
  %v5710 = vpack.c.b16 %v5548, %v5539
  %v5711 = vpack.c.b16 %v5549, %v5540
  %v5712 = vpack.c.b16 %v5550, %v5541
  %v5713 = vpack.c.b16 %v5551, %v5542
  %v5714 = vpack.c.b16 %v5552, %v5543
  %v5715 = vpack.c.b16 %v5553, %v5544
  %v5716 = vpack.c.b16 %v5554, %v5545
  %v5717 = vpack.c.b16 %v5564, %v5555
  %v5718 = vpack.c.b16 %v5565, %v5556
  %v5719 = vpack.c.b16 %v5566, %v5557
  %v5720 = vpack.c.b16 %v5567, %v5558
  %v5721 = vpack.c.b16 %v5568, %v5559
  %v5722 = vpack.c.b16 %v5569, %v5560
  %v5723 = vpack.c.b16 %v5570, %v5561
  %v5724 = vpack.c.b16 %v5571, %v5562
  %v5725 = vpack.c.b16 %v5572, %v5563
  %v5726 = vpack.c.b16 %v5582, %v5573
  %v5727 = vpack.c.b16 %v5583, %v5574
  %v5728 = vpack.c.b16 %v5584, %v5575
  %v5729 = vpack.c.b16 %v5585, %v5576
  %v5730 = vpack.c.b16 %v5586, %v5577
  %v5731 = vpack.c.b16 %v5587, %v5578
  %v5732 = vpack.c.b16 %v5588, %v5579
  %v5733 = vpack.c.b16 %v5589, %v5580
  %v5734 = vpack.c.b16 %v5590, %v5581
  %v5735 = vpack.c.b16 %v5600, %v5591
  %v5736 = vpack.c.b16 %v5601, %v5592
  %v5737 = vpack.c.b16 %v5602, %v5593
  %v5738 = vpack.c.b16 %v5603, %v5594
  %v5739 = vpack.c.b16 %v5604, %v5595
  %v5740 = vpack.c.b16 %v5605, %v5596
  %v5741 = vpack.c.b16 %v5606, %v5597
  %v5742 = vpack.c.b16 %v5607, %v5598
  %v5743 = vpack.c.b16 %v5608, %v5599
  %v5744 = vpack.c.b16 %v5618, %v5609
  %v5745 = vpack.c.b16 %v5619, %v5610
  %v5746 = vpack.c.b16 %v5620, %v5611
  %v5747 = vpack.c.b16 %v5621, %v5612
  %v5748 = vpack.c.b16 %v5622, %v5613
  %v5749 = vpack.c.b16 %v5623, %v5614
  %v5750 = vpack.c.b16 %v5624, %v5615
  %v5751 = vpack.c.b16 %v5625, %v5616
  %v5752 = vpack.c.b16 %v5626, %v5617
  %v5753 = vpack.c.b16 %v5636, %v5627
  %v5754 = vpack.c.b16 %v5637, %v5628
  %v5755 = vpack.c.b16 %v5638, %v5629
  %v5756 = vpack.c.b16 %v5639, %v5630
  %v5757 = vpack.c.b16 %v5640, %v5631
  %v5758 = vpack.c.b16 %v5641, %v5632
  %v5759 = vpack.c.b16 %v5642, %v5633
  %v5760 = vpack.c.b16 %v5643, %v5634
  %v5761 = vpack.c.b16 %v5644, %v5635
  %v5762 = vpack.c.b16 %v5654, %v5645
  %v5763 = vpack.c.b16 %v5655, %v5646
  %v5764 = vpack.c.b16 %v5656, %v5647
  %v5765 = vpack.c.b16 %v5657, %v5648
  %v5766 = vpack.c.b16 %v5658, %v5649
  %v5767 = vpack.c.b16 %v5659, %v5650
  %v5768 = vpack.c.b16 %v5660, %v5651
  %v5769 = vpack.c.b16 %v5661, %v5652
  %v5770 = vpack.c.b16 %v5662, %v5653
  %v5771 = vpack.c.b16 %v5672, %v5663
  %v5772 = vpack.c.b16 %v5673, %v5664
  %v5773 = vpack.c.b16 %v5674, %v5665
  %v5774 = vpack.c.b16 %v5675, %v5666
  %v5775 = vpack.c.b16 %v5676, %v5667
  %v5776 = vpack.c.b16 %v5677, %v5668
  %v5777 = vpack.c.b16 %v5678, %v5669
  %v5778 = vpack.c.b16 %v5679, %v5670
  %v5779 = vpack.c.b16 %v5680, %v5671
  %v5780 = vpack.c.b16 %v5690, %v5681
  %v5781 = vpack.c.b16 %v5691, %v5682
  %v5782 = vpack.c.b16 %v5692, %v5683
  %v5783 = vpack.c.b16 %v5693, %v5684
  %v5784 = vpack.c.b16 %v5694, %v5685
  %v5785 = vpack.c.b16 %v5695, %v5686
  %v5786 = vpack.c.b16 %v5696, %v5687
  %v5787 = vpack.c.b16 %v5697, %v5688
  %v5788 = vpack.c.b16 %v5698, %v5689
  %v6023 = vunpack.c.l.b16 %v5273
  %v6024 = vunpack.c.l.b16 %v5274
  %v6025 = vunpack.c.l.b16 %v5275
  %v6026 = vunpack.c.l.b16 %v5276
  %v6027 = vunpack.c.l.b16 %v5277
  %v6028 = vunpack.c.l.b16 %v5278
  %v6029 = vunpack.c.l.b16 %v5279
  %v6030 = vunpack.c.l.b16 %v5280
  %v6031 = vunpack.c.l.b16 %v5281
  %v6032 = vunpack.c.l.b16 %v5282
  %v6033 = vunpack.c.l.b16 %v5283
  %v6034 = vunpack.c.l.b16 %v5284
  %v6035 = vunpack.c.l.b16 %v5285
  %v6036 = vunpack.c.l.b16 %v5286
  %v6037 = vunpack.c.l.b16 %v5287
  %v6038 = vunpack.c.l.b16 %v5288
  %v6039 = vunpack.c.l.b16 %v5289
  %v6040 = vunpack.c.l.b16 %v5290
  %v6041 = vunpack.c.l.b16 %v5291
  %v6042 = vunpack.c.l.b16 %v5292
  %v6043 = vunpack.c.l.b16 %v5293
  %v6044 = vunpack.c.l.b16 %v5294
  %v6045 = vunpack.c.l.b16 %v5295
  %v6046 = vunpack.c.l.b16 %v5296
  %v6047 = vunpack.c.l.b16 %v5297
  %v6048 = vunpack.c.l.b16 %v5298
  %v6049 = vunpack.c.l.b16 %v5299
  %v6050 = vunpack.c.l.b16 %v5300
  %v6051 = vunpack.c.l.b16 %v5301
  %v6052 = vunpack.c.l.b16 %v5302
  %v6053 = vunpack.c.l.b16 %v5303
  %v6054 = vunpack.c.l.b16 %v5304
  %v6055 = vunpack.c.l.b16 %v5305
  %v6056 = vunpack.c.l.b16 %v5306
  %v6057 = vunpack.c.l.b16 %v5307
  %v6058 = vunpack.c.l.b16 %v5308
  %v6059 = vunpack.c.l.b16 %v5309
  %v6060 = vunpack.c.l.b16 %v5310
  %v6061 = vunpack.c.l.b16 %v5311
  %v6062 = vunpack.c.l.b16 %v5312
  %v6063 = vunpack.c.l.b16 %v5313
  %v6064 = vunpack.c.l.b16 %v5314
  %v6065 = vunpack.c.l.b16 %v5315
  %v6066 = vunpack.c.l.b16 %v5316
  %v6067 = vunpack.c.l.b16 %v5317
  %v6068 = vunpack.c.l.b16 %v5318
  %v6069 = vunpack.c.l.b16 %v5319
  %v6070 = vunpack.c.l.b16 %v5320
  %v6071 = vunpack.c.l.b16 %v5321
  %v6072 = vunpack.c.l.b16 %v5322
  %v6073 = vunpack.c.l.b16 %v5323
  %v6074 = vunpack.c.l.b16 %v5324
  %v6075 = vunpack.c.l.b16 %v5325
  %v6076 = vunpack.c.l.b16 %v5326
  %v6077 = vunpack.c.l.b16 %v5327
  %v6078 = vunpack.c.l.b16 %v5328
  %v6079 = vunpack.c.l.b16 %v5329
  %v6080 = vunpack.c.l.b16 %v5330
  %v6081 = vunpack.c.l.b16 %v5331
  %v6082 = vunpack.c.l.b16 %v5332
  %v6083 = vunpack.c.l.b16 %v5333
  %v6084 = vunpack.c.l.b16 %v5334
  %v6085 = vunpack.c.l.b16 %v5335
  %v6086 = vunpack.c.l.b16 %v5336
  %v6087 = vunpack.c.l.b16 %v5337
  %v6088 = vunpack.c.l.b16 %v5338
  %v6089 = vunpack.c.l.b16 %v5339
  %v6090 = vunpack.c.l.b16 %v5340
  %v6091 = vunpack.c.l.b16 %v5341
  %v6092 = vunpack.c.l.b16 %v5342
  %v6093 = vunpack.c.l.b16 %v5343
  %v6094 = vunpack.c.l.b16 %v5344
  %v6095 = vunpack.c.l.b16 %v5345
  %v6096 = vunpack.c.l.b16 %v5346
  %v6097 = vunpack.c.l.b16 %v5347
  %v6098 = vunpack.c.l.b16 %v5348
  %v6099 = vunpack.c.l.b16 %v5349
  %v6100 = vunpack.c.l.b16 %v5350
  %v6101 = vunpack.c.l.b16 %v5351
  %v6102 = vunpack.c.l.b16 %v5352
  %v6103 = vunpack.c.l.b16 %v5353
  %v6104 = vunpack.c.l.b16 %v5354
  %v6105 = vunpack.c.l.b16 %v5355
  %v6106 = vunpack.c.l.b16 %v5356
  %v6107 = vunpack.c.l.b16 %v5357
  %v6108 = vunpack.c.l.b16 %v5358
  %v6109 = vunpack.c.l.b16 %v5359
  %v6110 = vunpack.c.l.b16 %v5360
  %v6111 = vunpack.c.l.b16 %v5361
  %v6112 = vunpack.c.l.b16 %v5362
  %v6113 = vunpack.c.l.b16 %v5363
  %v6114 = vunpack.c.l.b16 %v5364
  %v6115 = vunpack.c.l.b16 %v5365
  %v6116 = vunpack.c.l.b16 %v5366
  %v6117 = vunpack.c.l.b16 %v5367
  %v6118 = vunpack.c.l.b16 %v5368
  %v6119 = vunpack.c.l.b16 %v5369
  %v6120 = vunpack.c.l.b16 %v5370
  %v6121 = vunpack.c.l.b16 %v5371
  %v6122 = vunpack.c.l.b16 %v5372
  %v6123 = vunpack.c.l.b16 %v5373
  %v6124 = vunpack.c.l.b16 %v5374
  %v6125 = vunpack.c.l.b16 %v5375
  %v6126 = vunpack.c.l.b16 %v5376
  %v6127 = vunpack.c.l.b16 %v5377
  %v6128 = vunpack.c.l.b16 %v5378
  %v6129 = vunpack.c.l.b16 %v5379
  %v6130 = vunpack.c.l.b16 %v5380
  %v6131 = vunpack.c.l.b16 %v5381
  %v6132 = vunpack.c.l.b16 %v5382
  %v6133 = vunpack.c.l.b16 %v5383
  %v6134 = vunpack.c.l.b16 %v5384
  %v6135 = vunpack.c.l.b16 %v5385
  %v6136 = vunpack.c.l.b16 %v5386
  %v6137 = vunpack.c.l.b16 %v5387
  %v6138 = vunpack.c.l.b16 %v5388
  %v6139 = vunpack.c.l.b16 %v5389
  %v6140 = vunpack.c.l.b16 %v5390
  %v6141 = vunpack.c.l.b16 %v5391
  %v6142 = vunpack.c.l.b16 %v5392
  %v6143 = vunpack.c.l.b16 %v5393
  %v6144 = vunpack.c.l.b16 %v5394
  %v6145 = vunpack.c.l.b16 %v5395
  %v6146 = vunpack.c.l.b16 %v5396
  %v6147 = vunpack.c.l.b16 %v5397
  %v6148 = vunpack.c.l.b16 %v5398
  %v6149 = vunpack.c.l.b16 %v5399
  %v6150 = vunpack.c.l.b16 %v5400
  %v6151 = vunpack.c.l.b16 %v5401
  %v6152 = vunpack.c.l.b16 %v5402
  %v6153 = vunpack.c.l.b16 %v5403
  %v6154 = vunpack.c.l.b16 %v5404
  %v6155 = vunpack.c.l.b16 %v5405
  %v6156 = vunpack.c.l.b16 %v5406
  %v6157 = vunpack.c.l.b16 %v5407
  %v6158 = vunpack.c.l.b16 %v5408
  %v6159 = vunpack.c.l.b16 %v5409
  %v6160 = vunpack.c.l.b16 %v5410
  %v6161 = vunpack.c.l.b16 %v5411
  %v6162 = vunpack.c.l.b16 %v5412
  %v6163 = vunpack.c.l.b16 %v5413
  %v6164 = vunpack.c.l.b16 %v5414
  %v6165 = vunpack.c.l.b16 %v5415
  %v6166 = vunpack.c.l.b16 %v5416
  %v6167 = vpack.c.b16 %v6024, %v6023
  %v6168 = vpack.c.b16 %v6026, %v6025
  %v6169 = vpack.c.b16 %v6028, %v6027
  %v6170 = vpack.c.b16 %v6030, %v6029
  %v6171 = vpack.c.b16 %v6032, %v6031
  %v6172 = vpack.c.b16 %v6034, %v6033
  %v6173 = vpack.c.b16 %v6036, %v6035
  %v6174 = vpack.c.b16 %v6038, %v6037
  %v6175 = vpack.c.b16 %v6040, %v6039
  %v6176 = vpack.c.b16 %v6042, %v6041
  %v6177 = vpack.c.b16 %v6044, %v6043
  %v6178 = vpack.c.b16 %v6046, %v6045
  %v6179 = vpack.c.b16 %v6048, %v6047
  %v6180 = vpack.c.b16 %v6050, %v6049
  %v6181 = vpack.c.b16 %v6052, %v6051
  %v6182 = vpack.c.b16 %v6054, %v6053
  %v6183 = vpack.c.b16 %v6056, %v6055
  %v6184 = vpack.c.b16 %v6058, %v6057
  %v6185 = vpack.c.b16 %v6060, %v6059
  %v6186 = vpack.c.b16 %v6062, %v6061
  %v6187 = vpack.c.b16 %v6064, %v6063
  %v6188 = vpack.c.b16 %v6066, %v6065
  %v6189 = vpack.c.b16 %v6068, %v6067
  %v6190 = vpack.c.b16 %v6070, %v6069
  %v6191 = vpack.c.b16 %v6072, %v6071
  %v6192 = vpack.c.b16 %v6074, %v6073
  %v6193 = vpack.c.b16 %v6076, %v6075
  %v6194 = vpack.c.b16 %v6078, %v6077
  %v6195 = vpack.c.b16 %v6080, %v6079
  %v6196 = vpack.c.b16 %v6082, %v6081
  %v6197 = vpack.c.b16 %v6084, %v6083
  %v6198 = vpack.c.b16 %v6086, %v6085
  %v6199 = vpack.c.b16 %v6088, %v6087
  %v6200 = vpack.c.b16 %v6090, %v6089
  %v6201 = vpack.c.b16 %v6092, %v6091
  %v6202 = vpack.c.b16 %v6094, %v6093
  %v6203 = vpack.c.b16 %v6096, %v6095
  %v6204 = vpack.c.b16 %v6098, %v6097
  %v6205 = vpack.c.b16 %v6100, %v6099
  %v6206 = vpack.c.b16 %v6102, %v6101
  %v6207 = vpack.c.b16 %v6104, %v6103
  %v6208 = vpack.c.b16 %v6106, %v6105
  %v6209 = vpack.c.b16 %v6108, %v6107
  %v6210 = vpack.c.b16 %v6110, %v6109
  %v6211 = vpack.c.b16 %v6112, %v6111
  %v6212 = vpack.c.b16 %v6114, %v6113
  %v6213 = vpack.c.b16 %v6116, %v6115
  %v6214 = vpack.c.b16 %v6118, %v6117
  %v6215 = vpack.c.b16 %v6120, %v6119
  %v6216 = vpack.c.b16 %v6122, %v6121
  %v6217 = vpack.c.b16 %v6124, %v6123
  %v6218 = vpack.c.b16 %v6126, %v6125
  %v6219 = vpack.c.b16 %v6128, %v6127
  %v6220 = vpack.c.b16 %v6130, %v6129
  %v6221 = vpack.c.b16 %v6132, %v6131
  %v6222 = vpack.c.b16 %v6134, %v6133
  %v6223 = vpack.c.b16 %v6136, %v6135
  %v6224 = vpack.c.b16 %v6138, %v6137
  %v6225 = vpack.c.b16 %v6140, %v6139
  %v6226 = vpack.c.b16 %v6142, %v6141
  %v6227 = vpack.c.b16 %v6144, %v6143
  %v6228 = vpack.c.b16 %v6146, %v6145
  %v6229 = vpack.c.b16 %v6148, %v6147
  %v6230 = vpack.c.b16 %v6150, %v6149
  %v6231 = vpack.c.b16 %v6152, %v6151
  %v6232 = vpack.c.b16 %v6154, %v6153
  %v6233 = vpack.c.b16 %v6156, %v6155
  %v6234 = vpack.c.b16 %v6158, %v6157
  %v6235 = vpack.c.b16 %v6160, %v6159
  %v6236 = vpack.c.b16 %v6162, %v6161
  %v6237 = vpack.c.b16 %v6164, %v6163
  %v6238 = vpack.c.b16 %v6166, %v6165
  %6311 = vmatpush.bf16.msra.mxu0 %v6174
  %6312 = vmatpush.bf16.msra.mxu0 %v6173
  %6313 = vmatpush.bf16.msra.mxu0 %v6172
  %6314 = vmatpush.bf16.msra.mxu0 %v6171
  %6315 = vmatpush.bf16.msra.mxu0 %v6170
  %6316 = vmatpush.bf16.msra.mxu0 %v6169
  %6317 = vmatpush.bf16.msra.mxu0 %v6168
  %6318 = vmatpush.bf16.msra.mxu0 %v6167
  %6319 = vmatmul.bf16.gmra.mxu0 %v5699
  %v6320 = vpop.f32.mrf.mxu0
  %v6321 = vadd.f32 %v5418, %v6320
  %v6322 = vpop.f32.mrf.mxu0
  %v6323 = vadd.f32 %v5418, %v6322
  %6324 = vmatmul.bf16.gmra.mxu0 %v5708
  %v6325 = vpop.f32.mrf.mxu0
  %v6326 = vadd.f32 %v5418, %v6325
  %v6327 = vpop.f32.mrf.mxu0
  %v6328 = vadd.f32 %v5418, %v6327
  %6329 = vmatmul.bf16.gmra.mxu0 %v5717
  %v6330 = vpop.f32.mrf.mxu0
  %v6331 = vadd.f32 %v5418, %v6330
  %v6332 = vpop.f32.mrf.mxu0
  %v6333 = vadd.f32 %v5418, %v6332
  %6334 = vmatmul.bf16.gmra.mxu0 %v5726
  %v6335 = vpop.f32.mrf.mxu0
  %v6336 = vadd.f32 %v5418, %v6335
  %v6337 = vpop.f32.mrf.mxu0
  %v6338 = vadd.f32 %v5418, %v6337
  %6339 = vmatmul.bf16.gmra.mxu0 %v5735
  %v6340 = vpop.f32.mrf.mxu0
  %v6341 = vadd.f32 %v5418, %v6340
  %v6342 = vpop.f32.mrf.mxu0
  %v6343 = vadd.f32 %v5418, %v6342
  %6344 = vmatmul.bf16.gmra.mxu0 %v5744
  %v6345 = vpop.f32.mrf.mxu0
  %v6346 = vadd.f32 %v5418, %v6345
  %v6347 = vpop.f32.mrf.mxu0
  %v6348 = vadd.f32 %v5418, %v6347
  %6349 = vmatmul.bf16.gmra.mxu0 %v5753
  %v6350 = vpop.f32.mrf.mxu0
  %v6351 = vadd.f32 %v5418, %v6350
  %v6352 = vpop.f32.mrf.mxu0
  %v6353 = vadd.f32 %v5418, %v6352
  %6354 = vmatmul.bf16.gmra.mxu0 %v5762
  %v6355 = vpop.f32.mrf.mxu0
  %v6356 = vadd.f32 %v5418, %v6355
  %v6357 = vpop.f32.mrf.mxu0
  %v6358 = vadd.f32 %v5418, %v6357
  %6359 = vmatmul.bf16.gmra.mxu0 %v5771
  %v6360 = vpop.f32.mrf.mxu0
  %v6361 = vadd.f32 %v5418, %v6360
  %v6362 = vpop.f32.mrf.mxu0
  %v6363 = vadd.f32 %v5418, %v6362
  %6364 = vmatmul.bf16.gmra.mxu0 %v5780
  %v6365 = vpop.f32.mrf.mxu0
  %v6366 = vadd.f32 %v5418, %v6365
  %v6367 = vpop.f32.mrf.mxu0
  %v6368 = vadd.f32 %v5418, %v6367
  %6369 = vdwg.mxu0
  %6370 = vmatpush.bf16.msra.mxu0 %v6182
  %6371 = vmatpush.bf16.msra.mxu0 %v6181
  %6372 = vmatpush.bf16.msra.mxu0 %v6180
  %6373 = vmatpush.bf16.msra.mxu0 %v6179
  %6374 = vmatpush.bf16.msra.mxu0 %v6178
  %6375 = vmatpush.bf16.msra.mxu0 %v6177
  %6376 = vmatpush.bf16.msra.mxu0 %v6176
  %6377 = vmatpush.bf16.msra.mxu0 %v6175
  %6378 = vmatmul.bf16.gmra.mxu0 %v5700
  %v6379 = vpop.f32.mrf.mxu0
  %v6380 = vadd.f32 %v6321, %v6379
  %v6381 = vpop.f32.mrf.mxu0
  %v6382 = vadd.f32 %v6323, %v6381
  %6383 = vmatmul.bf16.gmra.mxu0 %v5709
  %v6384 = vpop.f32.mrf.mxu0
  %v6385 = vadd.f32 %v6326, %v6384
  %v6386 = vpop.f32.mrf.mxu0
  %v6387 = vadd.f32 %v6328, %v6386
  %6388 = vmatmul.bf16.gmra.mxu0 %v5718
  %v6389 = vpop.f32.mrf.mxu0
  %v6390 = vadd.f32 %v6331, %v6389
  %v6391 = vpop.f32.mrf.mxu0
  %v6392 = vadd.f32 %v6333, %v6391
  %6393 = vmatmul.bf16.gmra.mxu0 %v5727
  %v6394 = vpop.f32.mrf.mxu0
  %v6395 = vadd.f32 %v6336, %v6394
  %v6396 = vpop.f32.mrf.mxu0
  %v6397 = vadd.f32 %v6338, %v6396
  %6398 = vmatmul.bf16.gmra.mxu0 %v5736
  %v6399 = vpop.f32.mrf.mxu0
  %v6400 = vadd.f32 %v6341, %v6399
  %v6401 = vpop.f32.mrf.mxu0
  %v6402 = vadd.f32 %v6343, %v6401
  %6403 = vmatmul.bf16.gmra.mxu0 %v5745
  %v6404 = vpop.f32.mrf.mxu0
  %v6405 = vadd.f32 %v6346, %v6404
  %v6406 = vpop.f32.mrf.mxu0
  %v6407 = vadd.f32 %v6348, %v6406
  %6408 = vmatmul.bf16.gmra.mxu0 %v5754
  %v6409 = vpop.f32.mrf.mxu0
  %v6410 = vadd.f32 %v6351, %v6409
  %v6411 = vpop.f32.mrf.mxu0
  %v6412 = vadd.f32 %v6353, %v6411
  %6413 = vmatmul.bf16.gmra.mxu0 %v5763
  %v6414 = vpop.f32.mrf.mxu0
  %v6415 = vadd.f32 %v6356, %v6414
  %v6416 = vpop.f32.mrf.mxu0
  %v6417 = vadd.f32 %v6358, %v6416
  %6418 = vmatmul.bf16.gmra.mxu0 %v5772
  %v6419 = vpop.f32.mrf.mxu0
  %v6420 = vadd.f32 %v6361, %v6419
  %v6421 = vpop.f32.mrf.mxu0
  %v6422 = vadd.f32 %v6363, %v6421
  %6423 = vmatmul.bf16.gmra.mxu0 %v5781
  %v6424 = vpop.f32.mrf.mxu0
  %v6425 = vadd.f32 %v6366, %v6424
  %v6426 = vpop.f32.mrf.mxu0
  %v6427 = vadd.f32 %v6368, %v6426
  %6428 = vdwg.mxu0
  %6429 = vmatpush.bf16.msra.mxu0 %v6190
  %6430 = vmatpush.bf16.msra.mxu0 %v6189
  %6431 = vmatpush.bf16.msra.mxu0 %v6188
  %6432 = vmatpush.bf16.msra.mxu0 %v6187
  %6433 = vmatpush.bf16.msra.mxu0 %v6186
  %6434 = vmatpush.bf16.msra.mxu0 %v6185
  %6435 = vmatpush.bf16.msra.mxu0 %v6184
  %6436 = vmatpush.bf16.msra.mxu0 %v6183
  %6437 = vmatmul.bf16.gmra.mxu0 %v5701
  %v6438 = vpop.f32.mrf.mxu0
  %v6439 = vadd.f32 %v6380, %v6438
  %v6440 = vpop.f32.mrf.mxu0
  %v6441 = vadd.f32 %v6382, %v6440
  %6442 = vmatmul.bf16.gmra.mxu0 %v5710
  %v6443 = vpop.f32.mrf.mxu0
  %v6444 = vadd.f32 %v6385, %v6443
  %v6445 = vpop.f32.mrf.mxu0
  %v6446 = vadd.f32 %v6387, %v6445
  %6447 = vmatmul.bf16.gmra.mxu0 %v5719
  %v6448 = vpop.f32.mrf.mxu0
  %v6449 = vadd.f32 %v6390, %v6448
  %v6450 = vpop.f32.mrf.mxu0
  %v6451 = vadd.f32 %v6392, %v6450
  %6452 = vmatmul.bf16.gmra.mxu0 %v5728
  %v6453 = vpop.f32.mrf.mxu0
  %v6454 = vadd.f32 %v6395, %v6453
  %v6455 = vpop.f32.mrf.mxu0
  %v6456 = vadd.f32 %v6397, %v6455
  %6457 = vmatmul.bf16.gmra.mxu0 %v5737
  %v6458 = vpop.f32.mrf.mxu0
  %v6459 = vadd.f32 %v6400, %v6458
  %v6460 = vpop.f32.mrf.mxu0
  %v6461 = vadd.f32 %v6402, %v6460
  %6462 = vmatmul.bf16.gmra.mxu0 %v5746
  %v6463 = vpop.f32.mrf.mxu0
  %v6464 = vadd.f32 %v6405, %v6463
  %v6465 = vpop.f32.mrf.mxu0
  %v6466 = vadd.f32 %v6407, %v6465
  %6467 = vmatmul.bf16.gmra.mxu0 %v5755
  %v6468 = vpop.f32.mrf.mxu0
  %v6469 = vadd.f32 %v6410, %v6468
  %v6470 = vpop.f32.mrf.mxu0
  %v6471 = vadd.f32 %v6412, %v6470
  %6472 = vmatmul.bf16.gmra.mxu0 %v5764
  %v6473 = vpop.f32.mrf.mxu0
  %v6474 = vadd.f32 %v6415, %v6473
  %v6475 = vpop.f32.mrf.mxu0
  %v6476 = vadd.f32 %v6417, %v6475
  %6477 = vmatmul.bf16.gmra.mxu0 %v5773
  %v6478 = vpop.f32.mrf.mxu0
  %v6479 = vadd.f32 %v6420, %v6478
  %v6480 = vpop.f32.mrf.mxu0
  %v6481 = vadd.f32 %v6422, %v6480
  %6482 = vmatmul.bf16.gmra.mxu0 %v5782
  %v6483 = vpop.f32.mrf.mxu0
  %v6484 = vadd.f32 %v6425, %v6483
  %v6485 = vpop.f32.mrf.mxu0
  %v6486 = vadd.f32 %v6427, %v6485
  %6487 = vdwg.mxu0
  %6488 = vmatpush.bf16.msra.mxu0 %v6198
  %6489 = vmatpush.bf16.msra.mxu0 %v6197
  %6490 = vmatpush.bf16.msra.mxu0 %v6196
  %6491 = vmatpush.bf16.msra.mxu0 %v6195
  %6492 = vmatpush.bf16.msra.mxu0 %v6194
  %6493 = vmatpush.bf16.msra.mxu0 %v6193
  %6494 = vmatpush.bf16.msra.mxu0 %v6192
  %6495 = vmatpush.bf16.msra.mxu0 %v6191
  %6496 = vmatmul.bf16.gmra.mxu0 %v5702
  %v6497 = vpop.f32.mrf.mxu0
  %v6498 = vadd.f32 %v6439, %v6497
  %v6499 = vpop.f32.mrf.mxu0
  %v6500 = vadd.f32 %v6441, %v6499
  %6501 = vmatmul.bf16.gmra.mxu0 %v5711
  %v6502 = vpop.f32.mrf.mxu0
  %v6503 = vadd.f32 %v6444, %v6502
  %v6504 = vpop.f32.mrf.mxu0
  %v6505 = vadd.f32 %v6446, %v6504
  %6506 = vmatmul.bf16.gmra.mxu0 %v5720
  %v6507 = vpop.f32.mrf.mxu0
  %v6508 = vadd.f32 %v6449, %v6507
  %v6509 = vpop.f32.mrf.mxu0
  %v6510 = vadd.f32 %v6451, %v6509
  %6511 = vmatmul.bf16.gmra.mxu0 %v5729
  %v6512 = vpop.f32.mrf.mxu0
  %v6513 = vadd.f32 %v6454, %v6512
  %v6514 = vpop.f32.mrf.mxu0
  %v6515 = vadd.f32 %v6456, %v6514
  %6516 = vmatmul.bf16.gmra.mxu0 %v5738
  %v6517 = vpop.f32.mrf.mxu0
  %v6518 = vadd.f32 %v6459, %v6517
  %v6519 = vpop.f32.mrf.mxu0
  %v6520 = vadd.f32 %v6461, %v6519
  %6521 = vmatmul.bf16.gmra.mxu0 %v5747
  %v6522 = vpop.f32.mrf.mxu0
  %v6523 = vadd.f32 %v6464, %v6522
  %v6524 = vpop.f32.mrf.mxu0
  %v6525 = vadd.f32 %v6466, %v6524
  %6526 = vmatmul.bf16.gmra.mxu0 %v5756
  %v6527 = vpop.f32.mrf.mxu0
  %v6528 = vadd.f32 %v6469, %v6527
  %v6529 = vpop.f32.mrf.mxu0
  %v6530 = vadd.f32 %v6471, %v6529
  %6531 = vmatmul.bf16.gmra.mxu0 %v5765
  %v6532 = vpop.f32.mrf.mxu0
  %v6533 = vadd.f32 %v6474, %v6532
  %v6534 = vpop.f32.mrf.mxu0
  %v6535 = vadd.f32 %v6476, %v6534
  %6536 = vmatmul.bf16.gmra.mxu0 %v5774
  %v6537 = vpop.f32.mrf.mxu0
  %v6538 = vadd.f32 %v6479, %v6537
  %v6539 = vpop.f32.mrf.mxu0
  %v6540 = vadd.f32 %v6481, %v6539
  %6541 = vmatmul.bf16.gmra.mxu0 %v5783
  %v6542 = vpop.f32.mrf.mxu0
  %v6543 = vadd.f32 %v6484, %v6542
  %v6544 = vpop.f32.mrf.mxu0
  %v6545 = vadd.f32 %v6486, %v6544
  %6546 = vdwg.mxu0
  %6547 = vmatpush.bf16.msra.mxu0 %v6206
  %6548 = vmatpush.bf16.msra.mxu0 %v6205
  %6549 = vmatpush.bf16.msra.mxu0 %v6204
  %6550 = vmatpush.bf16.msra.mxu0 %v6203
  %6551 = vmatpush.bf16.msra.mxu0 %v6202
  %6552 = vmatpush.bf16.msra.mxu0 %v6201
  %6553 = vmatpush.bf16.msra.mxu0 %v6200
  %6554 = vmatpush.bf16.msra.mxu0 %v6199
  %6555 = vmatmul.bf16.gmra.mxu0 %v5703
  %v6556 = vpop.f32.mrf.mxu0
  %v6557 = vadd.f32 %v6498, %v6556
  %v6558 = vpop.f32.mrf.mxu0
  %v6559 = vadd.f32 %v6500, %v6558
  %6560 = vmatmul.bf16.gmra.mxu0 %v5712
  %v6561 = vpop.f32.mrf.mxu0
  %v6562 = vadd.f32 %v6503, %v6561
  %v6563 = vpop.f32.mrf.mxu0
  %v6564 = vadd.f32 %v6505, %v6563
  %6565 = vmatmul.bf16.gmra.mxu0 %v5721
  %v6566 = vpop.f32.mrf.mxu0
  %v6567 = vadd.f32 %v6508, %v6566
  %v6568 = vpop.f32.mrf.mxu0
  %v6569 = vadd.f32 %v6510, %v6568
  %6570 = vmatmul.bf16.gmra.mxu0 %v5730
  %v6571 = vpop.f32.mrf.mxu0
  %v6572 = vadd.f32 %v6513, %v6571
  %v6573 = vpop.f32.mrf.mxu0
  %v6574 = vadd.f32 %v6515, %v6573
  %6575 = vmatmul.bf16.gmra.mxu0 %v5739
  %v6576 = vpop.f32.mrf.mxu0
  %v6577 = vadd.f32 %v6518, %v6576
  %v6578 = vpop.f32.mrf.mxu0
  %v6579 = vadd.f32 %v6520, %v6578
  %6580 = vmatmul.bf16.gmra.mxu0 %v5748
  %v6581 = vpop.f32.mrf.mxu0
  %v6582 = vadd.f32 %v6523, %v6581
  %v6583 = vpop.f32.mrf.mxu0
  %v6584 = vadd.f32 %v6525, %v6583
  %6585 = vmatmul.bf16.gmra.mxu0 %v5757
  %v6586 = vpop.f32.mrf.mxu0
  %v6587 = vadd.f32 %v6528, %v6586
  %v6588 = vpop.f32.mrf.mxu0
  %v6589 = vadd.f32 %v6530, %v6588
  %6590 = vmatmul.bf16.gmra.mxu0 %v5766
  %v6591 = vpop.f32.mrf.mxu0
  %v6592 = vadd.f32 %v6533, %v6591
  %v6593 = vpop.f32.mrf.mxu0
  %v6594 = vadd.f32 %v6535, %v6593
  %6595 = vmatmul.bf16.gmra.mxu0 %v5775
  %v6596 = vpop.f32.mrf.mxu0
  %v6597 = vadd.f32 %v6538, %v6596
  %v6598 = vpop.f32.mrf.mxu0
  %v6599 = vadd.f32 %v6540, %v6598
  %6600 = vmatmul.bf16.gmra.mxu0 %v5784
  %v6601 = vpop.f32.mrf.mxu0
  %v6602 = vadd.f32 %v6543, %v6601
  %v6603 = vpop.f32.mrf.mxu0
  %v6604 = vadd.f32 %v6545, %v6603
  %6605 = vdwg.mxu0
  %6606 = vmatpush.bf16.msra.mxu0 %v6214
  %6607 = vmatpush.bf16.msra.mxu0 %v6213
  %6608 = vmatpush.bf16.msra.mxu0 %v6212
  %6609 = vmatpush.bf16.msra.mxu0 %v6211
  %6610 = vmatpush.bf16.msra.mxu0 %v6210
  %6611 = vmatpush.bf16.msra.mxu0 %v6209
  %6612 = vmatpush.bf16.msra.mxu0 %v6208
  %6613 = vmatpush.bf16.msra.mxu0 %v6207
  %6614 = vmatmul.bf16.gmra.mxu0 %v5704
  %v6615 = vpop.f32.mrf.mxu0
  %v6616 = vadd.f32 %v6557, %v6615
  %v6617 = vpop.f32.mrf.mxu0
  %v6618 = vadd.f32 %v6559, %v6617
  %6619 = vmatmul.bf16.gmra.mxu0 %v5713
  %v6620 = vpop.f32.mrf.mxu0
  %v6621 = vadd.f32 %v6562, %v6620
  %v6622 = vpop.f32.mrf.mxu0
  %v6623 = vadd.f32 %v6564, %v6622
  %6624 = vmatmul.bf16.gmra.mxu0 %v5722
  %v6625 = vpop.f32.mrf.mxu0
  %v6626 = vadd.f32 %v6567, %v6625
  %v6627 = vpop.f32.mrf.mxu0
  %v6628 = vadd.f32 %v6569, %v6627
  %6629 = vmatmul.bf16.gmra.mxu0 %v5731
  %v6630 = vpop.f32.mrf.mxu0
  %v6631 = vadd.f32 %v6572, %v6630
  %v6632 = vpop.f32.mrf.mxu0
  %v6633 = vadd.f32 %v6574, %v6632
  %6634 = vmatmul.bf16.gmra.mxu0 %v5740
  %v6635 = vpop.f32.mrf.mxu0
  %v6636 = vadd.f32 %v6577, %v6635
  %v6637 = vpop.f32.mrf.mxu0
  %v6638 = vadd.f32 %v6579, %v6637
  %6639 = vmatmul.bf16.gmra.mxu0 %v5749
  %v6640 = vpop.f32.mrf.mxu0
  %v6641 = vadd.f32 %v6582, %v6640
  %v6642 = vpop.f32.mrf.mxu0
  %v6643 = vadd.f32 %v6584, %v6642
  %6644 = vmatmul.bf16.gmra.mxu0 %v5758
  %v6645 = vpop.f32.mrf.mxu0
  %v6646 = vadd.f32 %v6587, %v6645
  %v6647 = vpop.f32.mrf.mxu0
  %v6648 = vadd.f32 %v6589, %v6647
  %6649 = vmatmul.bf16.gmra.mxu0 %v5767
  %v6650 = vpop.f32.mrf.mxu0
  %v6651 = vadd.f32 %v6592, %v6650
  %v6652 = vpop.f32.mrf.mxu0
  %v6653 = vadd.f32 %v6594, %v6652
  %6654 = vmatmul.bf16.gmra.mxu0 %v5776
  %v6655 = vpop.f32.mrf.mxu0
  %v6656 = vadd.f32 %v6597, %v6655
  %v6657 = vpop.f32.mrf.mxu0
  %v6658 = vadd.f32 %v6599, %v6657
  %6659 = vmatmul.bf16.gmra.mxu0 %v5785
  %v6660 = vpop.f32.mrf.mxu0
  %v6661 = vadd.f32 %v6602, %v6660
  %v6662 = vpop.f32.mrf.mxu0
  %v6663 = vadd.f32 %v6604, %v6662
  %6664 = vdwg.mxu0
  %6665 = vmatpush.bf16.msra.mxu0 %v6222
  %6666 = vmatpush.bf16.msra.mxu0 %v6221
  %6667 = vmatpush.bf16.msra.mxu0 %v6220
  %6668 = vmatpush.bf16.msra.mxu0 %v6219
  %6669 = vmatpush.bf16.msra.mxu0 %v6218
  %6670 = vmatpush.bf16.msra.mxu0 %v6217
  %6671 = vmatpush.bf16.msra.mxu0 %v6216
  %6672 = vmatpush.bf16.msra.mxu0 %v6215
  %6673 = vmatmul.bf16.gmra.mxu0 %v5705
  %v6674 = vpop.f32.mrf.mxu0
  %v6675 = vadd.f32 %v6616, %v6674
  %v6676 = vpop.f32.mrf.mxu0
  %v6677 = vadd.f32 %v6618, %v6676
  %6678 = vmatmul.bf16.gmra.mxu0 %v5714
  %v6679 = vpop.f32.mrf.mxu0
  %v6680 = vadd.f32 %v6621, %v6679
  %v6681 = vpop.f32.mrf.mxu0
  %v6682 = vadd.f32 %v6623, %v6681
  %6683 = vmatmul.bf16.gmra.mxu0 %v5723
  %v6684 = vpop.f32.mrf.mxu0
  %v6685 = vadd.f32 %v6626, %v6684
  %v6686 = vpop.f32.mrf.mxu0
  %v6687 = vadd.f32 %v6628, %v6686
  %6688 = vmatmul.bf16.gmra.mxu0 %v5732
  %v6689 = vpop.f32.mrf.mxu0
  %v6690 = vadd.f32 %v6631, %v6689
  %v6691 = vpop.f32.mrf.mxu0
  %v6692 = vadd.f32 %v6633, %v6691
  %6693 = vmatmul.bf16.gmra.mxu0 %v5741
  %v6694 = vpop.f32.mrf.mxu0
  %v6695 = vadd.f32 %v6636, %v6694
  %v6696 = vpop.f32.mrf.mxu0
  %v6697 = vadd.f32 %v6638, %v6696
  %6698 = vmatmul.bf16.gmra.mxu0 %v5750
  %v6699 = vpop.f32.mrf.mxu0
  %v6700 = vadd.f32 %v6641, %v6699
  %v6701 = vpop.f32.mrf.mxu0
  %v6702 = vadd.f32 %v6643, %v6701
  %6703 = vmatmul.bf16.gmra.mxu0 %v5759
  %v6704 = vpop.f32.mrf.mxu0
  %v6705 = vadd.f32 %v6646, %v6704
  %v6706 = vpop.f32.mrf.mxu0
  %v6707 = vadd.f32 %v6648, %v6706
  %6708 = vmatmul.bf16.gmra.mxu0 %v5768
  %v6709 = vpop.f32.mrf.mxu0
  %v6710 = vadd.f32 %v6651, %v6709
  %v6711 = vpop.f32.mrf.mxu0
  %v6712 = vadd.f32 %v6653, %v6711
  %6713 = vmatmul.bf16.gmra.mxu0 %v5777
  %v6714 = vpop.f32.mrf.mxu0
  %v6715 = vadd.f32 %v6656, %v6714
  %v6716 = vpop.f32.mrf.mxu0
  %v6717 = vadd.f32 %v6658, %v6716
  %6718 = vmatmul.bf16.gmra.mxu0 %v5786
  %v6719 = vpop.f32.mrf.mxu0
  %v6720 = vadd.f32 %v6661, %v6719
  %v6721 = vpop.f32.mrf.mxu0
  %v6722 = vadd.f32 %v6663, %v6721
  %6723 = vdwg.mxu0
  %6724 = vmatpush.bf16.msra.mxu0 %v6230
  %6725 = vmatpush.bf16.msra.mxu0 %v6229
  %6726 = vmatpush.bf16.msra.mxu0 %v6228
  %6727 = vmatpush.bf16.msra.mxu0 %v6227
  %6728 = vmatpush.bf16.msra.mxu0 %v6226
  %6729 = vmatpush.bf16.msra.mxu0 %v6225
  %6730 = vmatpush.bf16.msra.mxu0 %v6224
  %6731 = vmatpush.bf16.msra.mxu0 %v6223
  %6732 = vmatmul.bf16.gmra.mxu0 %v5706
  %v6733 = vpop.f32.mrf.mxu0
  %v6734 = vadd.f32 %v6675, %v6733
  %v6735 = vpop.f32.mrf.mxu0
  %v6736 = vadd.f32 %v6677, %v6735
  %6737 = vmatmul.bf16.gmra.mxu0 %v5715
  %v6738 = vpop.f32.mrf.mxu0
  %v6739 = vadd.f32 %v6680, %v6738
  %v6740 = vpop.f32.mrf.mxu0
  %v6741 = vadd.f32 %v6682, %v6740
  %6742 = vmatmul.bf16.gmra.mxu0 %v5724
  %v6743 = vpop.f32.mrf.mxu0
  %v6744 = vadd.f32 %v6685, %v6743
  %v6745 = vpop.f32.mrf.mxu0
  %v6746 = vadd.f32 %v6687, %v6745
  %6747 = vmatmul.bf16.gmra.mxu0 %v5733
  %v6748 = vpop.f32.mrf.mxu0
  %v6749 = vadd.f32 %v6690, %v6748
  %v6750 = vpop.f32.mrf.mxu0
  %v6751 = vadd.f32 %v6692, %v6750
  %6752 = vmatmul.bf16.gmra.mxu0 %v5742
  %v6753 = vpop.f32.mrf.mxu0
  %v6754 = vadd.f32 %v6695, %v6753
  %v6755 = vpop.f32.mrf.mxu0
  %v6756 = vadd.f32 %v6697, %v6755
  %6757 = vmatmul.bf16.gmra.mxu0 %v5751
  %v6758 = vpop.f32.mrf.mxu0
  %v6759 = vadd.f32 %v6700, %v6758
  %v6760 = vpop.f32.mrf.mxu0
  %v6761 = vadd.f32 %v6702, %v6760
  %6762 = vmatmul.bf16.gmra.mxu0 %v5760
  %v6763 = vpop.f32.mrf.mxu0
  %v6764 = vadd.f32 %v6705, %v6763
  %v6765 = vpop.f32.mrf.mxu0
  %v6766 = vadd.f32 %v6707, %v6765
  %6767 = vmatmul.bf16.gmra.mxu0 %v5769
  %v6768 = vpop.f32.mrf.mxu0
  %v6769 = vadd.f32 %v6710, %v6768
  %v6770 = vpop.f32.mrf.mxu0
  %v6771 = vadd.f32 %v6712, %v6770
  %6772 = vmatmul.bf16.gmra.mxu0 %v5778
  %v6773 = vpop.f32.mrf.mxu0
  %v6774 = vadd.f32 %v6715, %v6773
  %v6775 = vpop.f32.mrf.mxu0
  %v6776 = vadd.f32 %v6717, %v6775
  %6777 = vmatmul.bf16.gmra.mxu0 %v5787
  %v6778 = vpop.f32.mrf.mxu0
  %v6779 = vadd.f32 %v6720, %v6778
  %v6780 = vpop.f32.mrf.mxu0
  %v6781 = vadd.f32 %v6722, %v6780
  %6782 = vdwg.mxu0
  %6783 = vmatpush.bf16.msra.mxu0 %v6238
  %6784 = vmatpush.bf16.msra.mxu0 %v6237
  %6785 = vmatpush.bf16.msra.mxu0 %v6236
  %6786 = vmatpush.bf16.msra.mxu0 %v6235
  %6787 = vmatpush.bf16.msra.mxu0 %v6234
  %6788 = vmatpush.bf16.msra.mxu0 %v6233
  %6789 = vmatpush.bf16.msra.mxu0 %v6232
  %6790 = vmatpush.bf16.msra.mxu0 %v6231
  %6791 = vmatmul.bf16.gmra.mxu0 %v5707
  %v6792 = vpop.f32.mrf.mxu0
  %v6793 = vadd.f32 %v6734, %v6792
  %v6794 = vpop.f32.mrf.mxu0
  %v6795 = vadd.f32 %v6736, %v6794
  %6796 = vmatmul.bf16.gmra.mxu0 %v5716
  %v6797 = vpop.f32.mrf.mxu0
  %v6798 = vadd.f32 %v6739, %v6797
  %v6799 = vpop.f32.mrf.mxu0
  %v6800 = vadd.f32 %v6741, %v6799
  %6801 = vmatmul.bf16.gmra.mxu0 %v5725
  %v6802 = vpop.f32.mrf.mxu0
  %v6803 = vadd.f32 %v6744, %v6802
  %v6804 = vpop.f32.mrf.mxu0
  %v6805 = vadd.f32 %v6746, %v6804
  %6806 = vmatmul.bf16.gmra.mxu0 %v5734
  %v6807 = vpop.f32.mrf.mxu0
  %v6808 = vadd.f32 %v6749, %v6807
  %v6809 = vpop.f32.mrf.mxu0
  %v6810 = vadd.f32 %v6751, %v6809
  %6811 = vmatmul.bf16.gmra.mxu0 %v5743
  %v6812 = vpop.f32.mrf.mxu0
  %v6813 = vadd.f32 %v6754, %v6812
  %v6814 = vpop.f32.mrf.mxu0
  %v6815 = vadd.f32 %v6756, %v6814
  %6816 = vmatmul.bf16.gmra.mxu0 %v5752
  %v6817 = vpop.f32.mrf.mxu0
  %v6818 = vadd.f32 %v6759, %v6817
  %v6819 = vpop.f32.mrf.mxu0
  %v6820 = vadd.f32 %v6761, %v6819
  %6821 = vmatmul.bf16.gmra.mxu0 %v5761
  %v6822 = vpop.f32.mrf.mxu0
  %v6823 = vadd.f32 %v6764, %v6822
  %v6824 = vpop.f32.mrf.mxu0
  %v6825 = vadd.f32 %v6766, %v6824
  %6826 = vmatmul.bf16.gmra.mxu0 %v5770
  %v6827 = vpop.f32.mrf.mxu0
  %v6828 = vadd.f32 %v6769, %v6827
  %v6829 = vpop.f32.mrf.mxu0
  %v6830 = vadd.f32 %v6771, %v6829
  %6831 = vmatmul.bf16.gmra.mxu0 %v5779
  %v6832 = vpop.f32.mrf.mxu0
  %v6833 = vadd.f32 %v6774, %v6832
  %v6834 = vpop.f32.mrf.mxu0
  %v6835 = vadd.f32 %v6776, %v6834
  %6836 = vmatmul.bf16.gmra.mxu0 %v5788
  %v6837 = vpop.f32.mrf.mxu0
  %v6838 = vadd.f32 %v6779, %v6837
  %v6839 = vpop.f32.mrf.mxu0
  %v6840 = vadd.f32 %v6781, %v6839
  %6841 = vdwg.mxu0
  %v6842 = vld [vmem:[%s0 + $0x94] sm:$0xc]
  %v6843 = vld [vmem:[%s0 + $0x98] sm:$0xf]
  %v6844 = vld [vmem:[%s0 + $0x9c] sm:$0xf]
  %v6845 = vld [vmem:[%s0 + $0xa0] sm:$0xf]
  %v6846 = vld [vmem:[%s0 + $0xa4] sm:$0xf]
  %v6847 = vld [vmem:[%s0 + $0xa8] sm:$0xf]
  %v6848 = vld [vmem:[%s0 + $0xac] sm:$0xf]
  %v6849 = vld [vmem:[%s0 + $0xb0] sm:$0xf]
  %v6850 = vld [vmem:[%s0 + $0xb4] sm:$0xf]
  %v6851 = vld [vmem:[%s0 + $0xb8] sm:$0xf]
  %v6852 = vld [vmem:[%s0 + $0xbc] sm:$0x3]
  %v6853 = vld [vmem:[%s5] sm:$0xf]
  %v6854 = vld [vmem:[%s5 + $0x4] sm:$0xf]
  %v6855 = vld [vmem:[%s5 + $0x8] sm:$0xf]
  %v6856 = vld [vmem:[%s5 + $0xc] sm:$0xf]
  %v6857 = vld [vmem:[%s5 + $0x10] sm:$0xf]
  %v6858 = vld [vmem:[%s5 + $0x14] sm:$0xf]
  %v6859 = vld [vmem:[%s5 + $0x18] sm:$0xf]
  %v6860 = vld [vmem:[%s5 + $0x1c] sm:$0xf]
  %v6861 = vld [vmem:[%s5 + $0x20] sm:$0xf]
  %v6862 = vld [vmem:[%s5 + $0x24] sm:$0xf]
  %v6863 = vld [vmem:[%s5 + $0x28] sm:$0xf]
  %v6864 = vld [vmem:[%s5 + $0x2c] sm:$0xf]
  %v6865 = vld [vmem:[%s5 + $0x30] sm:$0xf]
  %v6866 = vld [vmem:[%s5 + $0x34] sm:$0xf]
  %v6867 = vld [vmem:[%s5 + $0x38] sm:$0xf]
  %v6868 = vld [vmem:[%s5 + $0x3c] sm:$0xf]
  %v6869 = vld [vmem:[%s4 + $0x2] sm:$0x1]
  %v6870 = vperm.slane %v6869, 0
  %v6882 = vunpack.c.l.b16 %v6842
  %v6883 = vunpack.c.l.b16 %v6843
  %v6884 = vunpack.c.l.b16 %v6844
  %v6885 = vunpack.c.l.b16 %v6845
  %v6886 = vunpack.c.l.b16 %v6846
  %v6887 = vunpack.c.l.b16 %v6847
  %v6888 = vunpack.c.l.b16 %v6848
  %v6889 = vunpack.c.l.b16 %v6849
  %v6890 = vunpack.c.l.b16 %v6850
  %v6891 = vunpack.c.l.b16 %v6851
  %v6892 = vunpack.c.l.b16 %v6852
  %v6893 = vpack.c.b16 %v6883, %v6882
  %v6894 = vpack.c.b16 %v6885, %v6884
  %v6895 = vpack.c.b16 %v6887, %v6886
  %v6896 = vpack.c.b16 %v6889, %v6888
  %v6897 = vpack.c.b16 %v6891, %v6890
  %v6898 = vpack.c.b16 %v6892, %v6892
  %vm6899 = vcmask 1045504
  %v6900 = vrot.slane %v6893, 2
  %v6901 = vrot.slane %v6894, 2
  %v6902 = vsel %vm6899, %v6900, %v6901
  %v6903 = vrot.slane %v6895, 2
  %v6904 = vsel %vm6899, %v6901, %v6903
  %v6905 = vrot.slane %v6896, 2
  %v6906 = vsel %vm6899, %v6903, %v6905
  %v6907 = vrot.slane %v6897, 2
  %v6908 = vsel %vm6899, %v6905, %v6907
  %v6909 = vrot.slane %v6898, 2
  %v6910 = vsel %vm6899, %v6907, %v6909
  %v6932 = vunpack.c.l.b16 %v6853
  %v6933 = vunpack.c.l.b16 %v6854
  %v6934 = vunpack.c.l.b16 %v6855
  %v6935 = vunpack.c.l.b16 %v6856
  %v6936 = vunpack.c.l.b16 %v6857
  %v6937 = vunpack.c.l.b16 %v6858
  %v6938 = vunpack.c.l.b16 %v6859
  %v6939 = vunpack.c.l.b16 %v6860
  %v6940 = vunpack.c.l.b16 %v6861
  %v6941 = vunpack.c.l.b16 %v6862
  %v6942 = vunpack.c.l.b16 %v6863
  %v6943 = vunpack.c.l.b16 %v6864
  %v6944 = vunpack.c.l.b16 %v6865
  %v6945 = vunpack.c.l.b16 %v6866
  %v6946 = vunpack.c.l.b16 %v6867
  %v6947 = vunpack.c.l.b16 %v6868
  %v6948 = vpack.c.b16 %v6933, %v6932
  %v6949 = vpack.c.b16 %v6935, %v6934
  %v6950 = vpack.c.b16 %v6937, %v6936
  %v6951 = vpack.c.b16 %v6939, %v6938
  %v6952 = vpack.c.b16 %v6941, %v6940
  %v6953 = vpack.c.b16 %v6943, %v6942
  %v6954 = vpack.c.b16 %v6945, %v6944
  %v6955 = vpack.c.b16 %v6947, %v6946
  %6964 = vmatpush.bf16.msra.mxu0 %v6955
  %6965 = vmatpush.bf16.msra.mxu0 %v6954
  %6966 = vmatpush.bf16.msra.mxu0 %v6953
  %6967 = vmatpush.bf16.msra.mxu0 %v6952
  %6968 = vmatpush.bf16.msra.mxu0 %v6951
  %6969 = vmatpush.bf16.msra.mxu0 %v6950
  %6970 = vmatpush.bf16.msra.mxu0 %v6949
  %6971 = vmatpush.bf16.msra.mxu0 %v6948
  %6972 = vmatmul.bf16.gmra.mxu0 %v6902
  %v6973 = vpop.f32.mrf.mxu0
  %v6974 = vadd.f32 %v6870, %v6973
  %v6975 = vpop.f32.mrf.mxu0
  %v6976 = vadd.f32 %v6870, %v6975
  %6977 = vmatmul.bf16.gmra.mxu0 %v6904
  %v6978 = vpop.f32.mrf.mxu0
  %v6979 = vadd.f32 %v6870, %v6978
  %v6980 = vpop.f32.mrf.mxu0
  %v6981 = vadd.f32 %v6870, %v6980
  %6982 = vmatmul.bf16.gmra.mxu0 %v6906
  %v6983 = vpop.f32.mrf.mxu0
  %v6984 = vadd.f32 %v6870, %v6983
  %v6985 = vpop.f32.mrf.mxu0
  %v6986 = vadd.f32 %v6870, %v6985
  %6987 = vmatmul.bf16.gmra.mxu0 %v6908
  %v6988 = vpop.f32.mrf.mxu0
  %v6989 = vadd.f32 %v6870, %v6988
  %v6990 = vpop.f32.mrf.mxu0
  %v6991 = vadd.f32 %v6870, %v6990
  %6992 = vmatmul.bf16.gmra.mxu0 %v6910
  %v6993 = vpop.f32.mrf.mxu0
  %v6994 = vadd.f32 %v6870, %v6993
  %v6995 = vpop.f32.mrf.mxu0
  %v6996 = vadd.f32 %v6870, %v6995
  %6997 = vdwg.mxu0
  %v6998 = vadd.f32 %v6793, %v6974
  %v6999 = vadd.f32 %v6795, %v6976
  %v7000 = vadd.f32 %v6798, %v6979
  %v7001 = vadd.f32 %v6800, %v6981
  %v7002 = vadd.f32 %v6803, %v6984
  %v7003 = vadd.f32 %v6805, %v6986
  %v7004 = vadd.f32 %v6808, %v6989
  %v7005 = vadd.f32 %v6810, %v6991
  %v7006 = vadd.f32 %v6813, %v6994
  %v7007 = vadd.f32 %v6815, %v6996
  %v7008 = vmax.f32 %v6998, 0.0
  %v7009 = vmax.f32 %v6999, 0.0
  %v7010 = vmax.f32 %v7000, 0.0
  %v7011 = vmax.f32 %v7001, 0.0
  %v7012 = vmax.f32 %v7002, 0.0
  %v7013 = vmax.f32 %v7003, 0.0
  %v7014 = vmax.f32 %v7004, 0.0
  %v7015 = vmax.f32 %v7005, 0.0
  %v7016 = vmax.f32 %v7006, 0.0
  %v7017 = vmax.f32 %v7007, 0.0
  %v7018 = vpack.c.bf16 %v7008, %v7008
  %v7019 = vpack.c.bf16 %v7009, %v7009
  %v7020 = vpack.c.bf16 %v7010, %v7010
  %v7021 = vpack.c.bf16 %v7011, %v7011
  %v7022 = vpack.c.bf16 %v7012, %v7012
  %v7023 = vpack.c.bf16 %v7013, %v7013
  %v7024 = vpack.c.bf16 %v7014, %v7014
  %v7025 = vpack.c.bf16 %v7015, %v7015
  %v7026 = vpack.c.bf16 %v7016, %v7016
  %v7027 = vpack.c.bf16 %v7017, %v7017
  %7028 = vst [vmem:[%s6] sm:$0xf] %v7018
  %7029 = vst [vmem:[%s6 + $0x4] sm:$0xf] %v7019
  %7030 = vst [vmem:[%s6 + $0x8] sm:$0xf] %v7020
  %7031 = vst [vmem:[%s6 + $0xc] sm:$0xf] %v7021
  %7032 = vst [vmem:[%s6 + $0x10] sm:$0xf] %v7022
  %7033 = vst [vmem:[%s6 + $0x14] sm:$0xf] %v7023
  %7034 = vst [vmem:[%s6 + $0x18] sm:$0xf] %v7024
  %7035 = vst [vmem:[%s6 + $0x1c] sm:$0xf] %v7025
  %7036 = vst [vmem:[%s6 + $0x20] sm:$0xf] %v7026
  %7037 = vst [vmem:[%s6 + $0x24] sm:$0xf] %v7027
  %v7038 = vld [vmem:[%s780 + $0x94] sm:$0xc]
  %v7039 = vld [vmem:[%s780 + $0x98] sm:$0xf]
  %v7040 = vld [vmem:[%s780 + $0x9c] sm:$0xf]
  %v7041 = vld [vmem:[%s780 + $0xa0] sm:$0xf]
  %v7042 = vld [vmem:[%s780 + $0xa4] sm:$0xf]
  %v7043 = vld [vmem:[%s780 + $0xa8] sm:$0xf]
  %v7044 = vld [vmem:[%s780 + $0xac] sm:$0xf]
  %v7045 = vld [vmem:[%s780 + $0xb0] sm:$0xf]
  %v7046 = vld [vmem:[%s780 + $0xb4] sm:$0xf]
  %v7047 = vld [vmem:[%s780 + $0xb8] sm:$0xf]
  %v7048 = vld [vmem:[%s780 + $0xbc] sm:$0x3]
  %v7049 = vld [vmem:[%s5] sm:$0xf]
  %v7050 = vld [vmem:[%s5 + $0x4] sm:$0xf]
  %v7051 = vld [vmem:[%s5 + $0x8] sm:$0xf]
  %v7052 = vld [vmem:[%s5 + $0xc] sm:$0xf]
  %v7053 = vld [vmem:[%s5 + $0x10] sm:$0xf]
  %v7054 = vld [vmem:[%s5 + $0x14] sm:$0xf]
  %v7055 = vld [vmem:[%s5 + $0x18] sm:$0xf]
  %v7056 = vld [vmem:[%s5 + $0x1c] sm:$0xf]
  %v7057 = vld [vmem:[%s5 + $0x20] sm:$0xf]
  %v7058 = vld [vmem:[%s5 + $0x24] sm:$0xf]
  %v7059 = vld [vmem:[%s5 + $0x28] sm:$0xf]
  %v7060 = vld [vmem:[%s5 + $0x2c] sm:$0xf]
  %v7061 = vld [vmem:[%s5 + $0x30] sm:$0xf]
  %v7062 = vld [vmem:[%s5 + $0x34] sm:$0xf]
  %v7063 = vld [vmem:[%s5 + $0x38] sm:$0xf]
  %v7064 = vld [vmem:[%s5 + $0x3c] sm:$0xf]
  %v7065 = vld [vmem:[%s4 + $0x2] sm:$0x1]
  %v7066 = vperm.slane %v7065, 0
  %v7078 = vunpack.c.l.b16 %v7038
  %v7079 = vunpack.c.l.b16 %v7039
  %v7080 = vunpack.c.l.b16 %v7040
  %v7081 = vunpack.c.l.b16 %v7041
  %v7082 = vunpack.c.l.b16 %v7042
  %v7083 = vunpack.c.l.b16 %v7043
  %v7084 = vunpack.c.l.b16 %v7044
  %v7085 = vunpack.c.l.b16 %v7045
  %v7086 = vunpack.c.l.b16 %v7046
  %v7087 = vunpack.c.l.b16 %v7047
  %v7088 = vunpack.c.l.b16 %v7048
  %v7089 = vpack.c.b16 %v7079, %v7078
  %v7090 = vpack.c.b16 %v7081, %v7080
  %v7091 = vpack.c.b16 %v7083, %v7082
  %v7092 = vpack.c.b16 %v7085, %v7084
  %v7093 = vpack.c.b16 %v7087, %v7086
  %v7094 = vpack.c.b16 %v7088, %v7088
  %v7095 = vrot.slane %v7089, 2
  %v7096 = vrot.slane %v7090, 2
  %v7097 = vsel %vm6899, %v7095, %v7096
  %v7098 = vrot.slane %v7091, 2
  %v7099 = vsel %vm6899, %v7096, %v7098
  %v7100 = vrot.slane %v7092, 2
  %v7101 = vsel %vm6899, %v7098, %v7100
  %v7102 = vrot.slane %v7093, 2
  %v7103 = vsel %vm6899, %v7100, %v7102
  %v7104 = vrot.slane %v7094, 2
  %v7105 = vsel %vm6899, %v7102, %v7104
  %v7127 = vunpack.c.l.b16 %v7049
  %v7128 = vunpack.c.l.b16 %v7050
  %v7129 = vunpack.c.l.b16 %v7051
  %v7130 = vunpack.c.l.b16 %v7052
  %v7131 = vunpack.c.l.b16 %v7053
  %v7132 = vunpack.c.l.b16 %v7054
  %v7133 = vunpack.c.l.b16 %v7055
  %v7134 = vunpack.c.l.b16 %v7056
  %v7135 = vunpack.c.l.b16 %v7057
  %v7136 = vunpack.c.l.b16 %v7058
  %v7137 = vunpack.c.l.b16 %v7059
  %v7138 = vunpack.c.l.b16 %v7060
  %v7139 = vunpack.c.l.b16 %v7061
  %v7140 = vunpack.c.l.b16 %v7062
  %v7141 = vunpack.c.l.b16 %v7063
  %v7142 = vunpack.c.l.b16 %v7064
  %v7143 = vpack.c.b16 %v7128, %v7127
  %v7144 = vpack.c.b16 %v7130, %v7129
  %v7145 = vpack.c.b16 %v7132, %v7131
  %v7146 = vpack.c.b16 %v7134, %v7133
  %v7147 = vpack.c.b16 %v7136, %v7135
  %v7148 = vpack.c.b16 %v7138, %v7137
  %v7149 = vpack.c.b16 %v7140, %v7139
  %v7150 = vpack.c.b16 %v7142, %v7141
  %7159 = vmatpush.bf16.msra.mxu0 %v7150
  %7160 = vmatpush.bf16.msra.mxu0 %v7149
  %7161 = vmatpush.bf16.msra.mxu0 %v7148
  %7162 = vmatpush.bf16.msra.mxu0 %v7147
  %7163 = vmatpush.bf16.msra.mxu0 %v7146
  %7164 = vmatpush.bf16.msra.mxu0 %v7145
  %7165 = vmatpush.bf16.msra.mxu0 %v7144
  %7166 = vmatpush.bf16.msra.mxu0 %v7143
  %7167 = vmatmul.bf16.gmra.mxu0 %v7097
  %v7168 = vpop.f32.mrf.mxu0
  %v7169 = vadd.f32 %v7066, %v7168
  %v7170 = vpop.f32.mrf.mxu0
  %v7171 = vadd.f32 %v7066, %v7170
  %7172 = vmatmul.bf16.gmra.mxu0 %v7099
  %v7173 = vpop.f32.mrf.mxu0
  %v7174 = vadd.f32 %v7066, %v7173
  %v7175 = vpop.f32.mrf.mxu0
  %v7176 = vadd.f32 %v7066, %v7175
  %7177 = vmatmul.bf16.gmra.mxu0 %v7101
  %v7178 = vpop.f32.mrf.mxu0
  %v7179 = vadd.f32 %v7066, %v7178
  %v7180 = vpop.f32.mrf.mxu0
  %v7181 = vadd.f32 %v7066, %v7180
  %7182 = vmatmul.bf16.gmra.mxu0 %v7103
  %v7183 = vpop.f32.mrf.mxu0
  %v7184 = vadd.f32 %v7066, %v7183
  %v7185 = vpop.f32.mrf.mxu0
  %v7186 = vadd.f32 %v7066, %v7185
  %7187 = vmatmul.bf16.gmra.mxu0 %v7105
  %v7188 = vpop.f32.mrf.mxu0
  %v7189 = vadd.f32 %v7066, %v7188
  %v7190 = vpop.f32.mrf.mxu0
  %v7191 = vadd.f32 %v7066, %v7190
  %7192 = vdwg.mxu0
  %v7193 = vadd.f32 %v6818, %v7169
  %v7194 = vadd.f32 %v6820, %v7171
  %v7195 = vadd.f32 %v6823, %v7174
  %v7196 = vadd.f32 %v6825, %v7176
  %v7197 = vadd.f32 %v6828, %v7179
  %v7198 = vadd.f32 %v6830, %v7181
  %v7199 = vadd.f32 %v6833, %v7184
  %v7200 = vadd.f32 %v6835, %v7186
  %v7201 = vadd.f32 %v6838, %v7189
  %v7202 = vadd.f32 %v6840, %v7191
  %v7203 = vmax.f32 %v7193, 0.0
  %v7204 = vmax.f32 %v7194, 0.0
  %v7205 = vmax.f32 %v7195, 0.0
  %v7206 = vmax.f32 %v7196, 0.0
  %v7207 = vmax.f32 %v7197, 0.0
  %v7208 = vmax.f32 %v7198, 0.0
  %v7209 = vmax.f32 %v7199, 0.0
  %v7210 = vmax.f32 %v7200, 0.0
  %v7211 = vmax.f32 %v7201, 0.0
  %v7212 = vmax.f32 %v7202, 0.0
  %v7213 = vpack.c.bf16 %v7203, %v7203
  %v7214 = vpack.c.bf16 %v7204, %v7204
  %v7215 = vpack.c.bf16 %v7205, %v7205
  %v7216 = vpack.c.bf16 %v7206, %v7206
  %v7217 = vpack.c.bf16 %v7207, %v7207
  %v7218 = vpack.c.bf16 %v7208, %v7208
  %v7219 = vpack.c.bf16 %v7209, %v7209
  %v7220 = vpack.c.bf16 %v7210, %v7210
  %v7221 = vpack.c.bf16 %v7211, %v7211
  %v7222 = vpack.c.bf16 %v7212, %v7212
  %s7223 = scalar_lea.vmem %s6, 40
  %7224 = vst [vmem:[%s7223] sm:$0xf] %v7213
  %7225 = vst [vmem:[%s7223 + $0x4] sm:$0xf] %v7214
  %7226 = vst [vmem:[%s7223 + $0x8] sm:$0xf] %v7215
  %7227 = vst [vmem:[%s7223 + $0xc] sm:$0xf] %v7216
  %7228 = vst [vmem:[%s7223 + $0x10] sm:$0xf] %v7217
  %7229 = vst [vmem:[%s7223 + $0x14] sm:$0xf] %v7218
  %7230 = vst [vmem:[%s7223 + $0x18] sm:$0xf] %v7219
  %7231 = vst [vmem:[%s7223 + $0x1c] sm:$0xf] %v7220
  %7232 = vst [vmem:[%s7223 + $0x20] sm:$0xf] %v7221
  %7233 = vst [vmem:[%s7223 + $0x24] sm:$0xf] %v7222
  // Predicated region
  $region26: #{basic_block_forward.1} parent=0 // pred_check
    _
  $region27: #{basic_block_forward.1} parent=0 // pred_check_branch
    %7235 = sbr.rel (0) target = $region29
  $region28: #{basic_block_forward.1} parent=0 // pred_region
    _
  $region29: #{basic_block_forward.1} parent=0 // pred_fallthru
    _
  // Predicated region
  $region30: #{basic_block_forward.1} parent=0 // pred_check
    _
  $region31: #{basic_block_forward.1} parent=0 // pred_check_branch
    %7237 = sbr.rel (0) target = $region33
  $region32: #{basic_block_forward.1} parent=0 // pred_region
    _
  $region33: #{basic_block_forward.1} parent=0 // pred_fallthru
    _

</llo_original>
